<compile_context>
chip_gen: v7x
topology: tpu7x:2x2x1
jax: 0.10.0
libtpu: 0.0.40
codegen_flags: <defaults>
</compile_context>

<pallas_src>
import numpy as np

import jax
import jax.numpy as jnp
from jax.experimental import pallas as pl


# ----------------------------------------------------------------------------
# Model configuration
# ----------------------------------------------------------------------------
IN_CHANNELS = 4
LATENT_DIM = 16
RES = 16
STAGE_COUNT = 3
LAYER_MULT = 8
HIDDEN_DIMS = [LAYER_MULT * 2 ** i for i in range(STAGE_COUNT)]   # [8, 16, 32]
CODE_LEN = RES // 2 ** (STAGE_COUNT - 1)                          # 4 (CIFAR)
P_ZLEN = HIDDEN_DIMS[-1] * CODE_LEN ** 2                          # 512
LAST_HDIM = HIDDEN_DIMS[-1]                                       # 32

MATMUL_DTYPE = jnp.bfloat16   # MXU-native operand dtype; accumulate in f32


# ----------------------------------------------------------------------------
# Parameter construction (deterministic synthetic init, same conventions as
# the previous version: conv weights OIHW, linear weights (din, dout)).
# ----------------------------------------------------------------------------
def _conv_p(key, cin, cout):
    kw, kb = jax.random.split(key)
    return (jax.random.normal(kw, (cout, cin, 3, 3), jnp.float32) * 0.05,
            jax.random.normal(kb, (cout,), jnp.float32) * 0.05)


def _lin_p(key, din, dout):
    kw, kb = jax.random.split(key)
    return (jax.random.normal(kw, (din, dout), jnp.float32) * 0.05,
            jax.random.normal(kb, (dout,), jnp.float32) * 0.05)


def init_params(key):
    keys = jax.random.split(key, 9)
    params = {}
    params["stem"] = _conv_p(keys[0], IN_CHANNELS, HIDDEN_DIMS[0])       # s=1
    params["enc0"] = _conv_p(keys[1], HIDDEN_DIMS[0], HIDDEN_DIMS[0])    # s=1
    params["enc1"] = _conv_p(keys[2], HIDDEN_DIMS[0], HIDDEN_DIMS[1])    # s=2
    params["enc2"] = _conv_p(keys[3], HIDDEN_DIMS[1], HIDDEN_DIMS[2])    # s=2
    params["fc_mu"] = _lin_p(keys[4], P_ZLEN, LATENT_DIM)
    params["fc_var"] = _lin_p(keys[5], P_ZLEN, LATENT_DIM)
    params["decoder_input"] = _lin_p(keys[6], LATENT_DIM, P_ZLEN)
    params["decA"] = _conv_p(keys[7], HIDDEN_DIMS[2], HIDDEN_DIMS[2] * 2)  # 32->64
    params["decB"] = _conv_p(keys[8], HIDDEN_DIMS[1], IN_CHANNELS * 4)     # 16->16
    return params


# ----------------------------------------------------------------------------
# Host-side folding of weights / layout ops into small constant matrices.
# Activation layout inside the kernel: rows = (b, h), lanes = (w, c).
# ----------------------------------------------------------------------------
def _row_shift_matrix(batch, s_in, s_out, stride, di):
    """(B*s_out, B*s_in) 0/1 matrix selecting input row h_in = stride*h_out+di-1."""
    m = np.zeros((batch * s_out, batch * s_in), np.float32)
    for b in range(batch):
        for ho in range(s_out):
            hi = stride * ho + di - 1
            if 0 <= hi < s_in:
                m[b * s_out + ho, b * s_in + hi] = 1.0
    return m


def _conv_lane_matrix(w_oihw, s_in, s_out, stride, di):
    """(s_in*Cin, s_out*Cout) lane-mixing matrix for kernel row `di`."""
    c_out, c_in = w_oihw.shape[0], w_oihw.shape[1]
    w_np = np.asarray(w_oihw, np.float32)
    m = np.zeros((s_in * c_in, s_out * c_out), np.float32)
    for wo in range(s_out):
        for dj in range(3):
            wi = stride * wo + dj - 1
            if 0 <= wi < s_in:
                m[wi * c_in:(wi + 1) * c_in, wo * c_out:(wo + 1) * c_out] = \
                    w_np[:, :, di, dj].T
    return m


def _pack_conv(w_oihw, bias, batch, s_in, stride):
    s_out = s_in // stride
    sh = np.stack([_row_shift_matrix(batch, s_in, s_out, stride, di)
                   for di in range(3)])
    lane = np.stack([_conv_lane_matrix(w_oihw, s_in, s_out, stride, di)
                     for di in range(3)])
    bias_row = np.tile(np.asarray(bias, np.float32), s_out)[None, :]
    return sh, lane, bias_row


def _fold_fc_for_nchw_flatten(w_din_dout, code_len, ch):
    """G[h, w*ch + c, l] = W[c*code_len^2 + h*code_len + w, l]."""
    d_out = w_din_dout.shape[1]
    w_np = np.asarray(w_din_dout, np.float32).reshape(ch, code_len, code_len,
                                                      d_out)
    g = np.zeros((code_len, code_len * ch, d_out), np.float32)
    for h in range(code_len):
        for w in range(code_len):
            g[h, w * ch:(w + 1) * ch, :] = w_np[:, h, w, :]
    return g


def _fold_decoder_input(w_lat_p, bias_p, code_len, ch):
    """D[h, l, w*ch + c] = W[l, c*code_len^2 + h*code_len + w] (same for bias)."""
    lat = w_lat_p.shape[0]
    w_np = np.asarray(w_lat_p, np.float32).reshape(lat, ch, code_len, code_len)
    b_np = np.asarray(bias_p, np.float32).reshape(ch, code_len, code_len)
    d = np.zeros((code_len, lat, code_len * ch), np.float32)
    brow = np.zeros((code_len, 1, code_len * ch), np.float32)
    for h in range(code_len):
        for w in range(code_len):
            d[h, :, w * ch:(w + 1) * ch] = w_np[:, :, h, w]
            brow[h, 0, w * ch:(w + 1) * ch] = b_np[:, h, w]
    return d, brow


def _pack_pixel_shuffle(batch, s, c_out):
    """A_out = sum_i R[i] @ (A_in @ PS[i])  (PyTorch nn.PixelShuffle(2))."""
    c4 = 4 * c_out
    ps = np.zeros((2, s * c4, 2 * s * c_out), np.float32)
    rs = np.zeros((2, batch * 2 * s, batch * s), np.float32)
    for i in range(2):
        for w in range(s):
            for j in range(2):
                for c in range(c_out):
                    ps[i, w * c4 + c * 4 + 2 * i + j,
                       (2 * w + j) * c_out + c] = 1.0
        for b in range(batch):
            for h in range(s):
                rs[i, b * 2 * s + 2 * h + i, b * s + h] = 1.0
    return ps, rs


def _nchw_lane_selectors():
    """F[c]: NCHW plane -> (w,c) lanes;  E[c]: (w,c) lanes -> NCHW plane."""
    f = np.zeros((IN_CHANNELS, RES, RES * IN_CHANNELS), np.float32)
    e = np.zeros((IN_CHANNELS, RES * IN_CHANNELS, RES), np.float32)
    for c in range(IN_CHANNELS):
        for w in range(RES):
            f[c, w, w * IN_CHANNELS + c] = 1.0
            e[c, w * IN_CHANNELS + c, w] = 1.0
    return f, e


def pack_constants(params, batch):
    """Fold all weights / layout ops into the kernel's constant operand list."""
    def mx(a):    # bf16 matmul operand
        return jnp.asarray(np.asarray(a, np.float32), dtype=MATMUL_DTYPE)

    def f32(a):
        return jnp.asarray(np.asarray(a, np.float32))

    consts = []
    f_sel, e_sel = _nchw_lane_selectors()
    consts.append(mx(f_sel))

    # encoder: stem (s=1), enc0 (s=1), enc1 (s=2, 16->8), enc2 (s=2, 8->4)
    for name, s_in, stride in [("stem", RES, 1), ("enc0", RES, 1),
                               ("enc1", RES, 2), ("enc2", RES // 2, 2)]:
        w_l, b_l = params[name]
        sh, lane, bias_row = _pack_conv(w_l, b_l, batch, s_in, stride)
        consts += [mx(sh), mx(lane), f32(bias_row)]

    # fc_mu / fc_var with torch.flatten (NCHW order) folded into the weights
    t_sel = np.zeros((CODE_LEN, batch, batch * CODE_LEN), np.float32)
    for h in range(CODE_LEN):
        for b in range(batch):
            t_sel[h, b, b * CODE_LEN + h] = 1.0
    g_mu = _fold_fc_for_nchw_flatten(params["fc_mu"][0], CODE_LEN, LAST_HDIM)
    g_var = _fold_fc_for_nchw_flatten(params["fc_var"][0], CODE_LEN, LAST_HDIM)
    consts += [mx(t_sel), mx(g_mu), mx(g_var),
               f32(np.asarray(params["fc_mu"][1])[None, :]),
               f32(np.asarray(params["fc_var"][1])[None, :])]

    # decoder_input with the NCHW .view() folded into the weights
    r_sel = np.zeros((CODE_LEN, batch * CODE_LEN, batch), np.float32)
    for h in range(CODE_LEN):
        for b in range(batch):
            r_sel[h, b * CODE_LEN + h, b] = 1.0
    d_fold, b_fold = _fold_decoder_input(params["decoder_input"][0],
                                         params["decoder_input"][1],
                                         CODE_LEN, LAST_HDIM)
    consts += [mx(r_sel), mx(d_fold), f32(b_fold)]

    # decoder stage A (32 -> 64 @ 4x4, skip_relu) + PixelShuffle(2)
    w_l, b_l = params["decA"]
    sh, lane, bias_row = _pack_conv(w_l, b_l, batch, CODE_LEN, 1)
    consts += [mx(sh), mx(lane), f32(bias_row)]
    ps, rs = _pack_pixel_shuffle(batch, CODE_LEN, HIDDEN_DIMS[1])
    consts += [mx(ps), mx(rs)]

    # decoder stage B (16 -> 16 @ 8x8, skip_relu) + PixelShuffle(2)
    w_l, b_l = params["decB"]
    sh, lane, bias_row = _pack_conv(w_l, b_l, batch, 2 * CODE_LEN, 1)
    consts += [mx(sh), mx(lane), f32(bias_row)]
    ps, rs = _pack_pixel_shuffle(batch, 2 * CODE_LEN, IN_CHANNELS)
    consts += [mx(ps), mx(rs)]

    consts.append(mx(e_sel))
    return tuple(consts)


# ----------------------------------------------------------------------------
# The single fused Pallas kernel
# ----------------------------------------------------------------------------
def _vae_fused_kernel(*refs):
    (x_ref, eps_ref, f_in_ref,
     sh_stem, m_stem, b_stem,
     sh_enc0, m_enc0, b_enc0,
     sh_enc1, m_enc1, b_enc1,
     sh_enc2, m_enc2, b_enc2,
     t_enc, g_mu, g_var, b_mu, b_var,
     r_dec, d_dec, b_dec,
     sh_deca, m_deca, b_deca,
     ps1, rps1,
     sh_decb, m_decb, b_decb,
     ps2, rps2,
     e_out,
     recon_ref, mu_out_ref, logvar_out_ref) = refs

    batch, c_img, height, width = x_ref.shape

    def mm(a, b):  # bf16 MXU matmul, f32 accumulation
        return jnp.dot(a.astype(MATMUL_DTYPE), b.astype(MATMUL_DTYPE),
                       preferred_element_type=jnp.float32)

    # ---- NCHW input -> lane-dense (B*H, W*C) layout (stays in vregs) -------
    act = None
    for c in range(c_img):
        plane = x_ref[:, c:c + 1, :, :].reshape(batch * height, width)
        term = mm(plane, f_in_ref[c])
        act = term if act is None else act + term

    # ---- 3x3 conv (pad=1) = 3 row-shift taps x lane-mixing matmul ----------
    def conv(a, sh_ref, m_ref, bias_ref, relu):
        out = None
        for di in range(3):
            t = mm(mm(sh_ref[di], a), m_ref[di])
            out = t if out is None else out + t
        out = out + bias_ref[...]
        if relu:
            out = jnp.maximum(out, 0.0)
        return out

    act = conv(act, sh_stem, m_stem, b_stem, True)    # (B*16, 16*8)
    act = conv(act, sh_enc0, m_enc0, b_enc0, True)    # (B*16, 16*8)
    act = conv(act, sh_enc1, m_enc1, b_enc1, True)    # (B*8,  8*16)
    act = conv(act, sh_enc2, m_enc2, b_enc2, True)    # (B*4,  4*32)

    # ---- fc_mu / fc_var (torch NCHW flatten folded into G matrices) --------
    mu = None
    logvar = None
    for h in range(CODE_LEN):
        row = mm(t_enc[h], act)                        # (B, 128)
        dmu = mm(row, g_mu[h])
        dvar = mm(row, g_var[h])
        mu = dmu if mu is None else mu + dmu
        logvar = dvar if logvar is None else logvar + dvar
    mu = mu + b_mu[...]
    logvar = logvar + b_var[...]
    mu_out_ref[...] = mu
    logvar_out_ref[...] = logvar

    # ---- reparameterize (training mode): z = eps * exp(0.5*logvar) + mu ----
    z = eps_ref[...] * jnp.exp(0.5 * logvar) + mu

    # ---- decoder_input (NCHW .view() folded into D matrices) ---------------
    act = None
    for h in range(CODE_LEN):
        row = mm(z, d_dec[h]) + b_dec[h]               # (B, 128)
        t = mm(r_dec[h], row)                          # (B*4, 128)
        act = t if act is None else act + t

    # ---- decoder: conv (skip_relu) + PixelShuffle, twice --------------------
    def pixel_shuffle(a, ps_ref, r_ref):
        out = None
        for i in range(2):
            t = mm(r_ref[i], mm(a, ps_ref[i]))
            out = t if out is None else out + t
        return out

    act = conv(act, sh_deca, m_deca, b_deca, False)    # (B*4,  4*64)
    act = pixel_shuffle(act, ps1, rps1)                # (B*8,  8*16)
    act = conv(act, sh_decb, m_decb, b_decb, False)    # (B*8,  8*16)
    act = pixel_shuffle(act, ps2, rps2)                # (B*16, 16*4)

    # ---- lane layout -> NCHW output -----------------------------------------
    for c in range(c_img):
        plane = mm(act, e_out[c])                      # (B*16, 16)
        recon_ref[:, c:c + 1, :, :] = plane.reshape(batch, 1, height, width)


def make_forward(batch):
    out_shape = (
        jax.ShapeDtypeStruct((batch, IN_CHANNELS, RES, RES), jnp.float32),
        jax.ShapeDtypeStruct((batch, LATENT_DIM), jnp.float32),
        jax.ShapeDtypeStruct((batch, LATENT_DIM), jnp.float32),
    )
    # No grid, no BlockSpecs: whole-array VMEM blocks, single invocation.
    # (Total operands << 1 MiB, far under the default scoped-VMEM limit on
    # v5e/v6e/v7x, so no vmem_limit_bytes override is needed.)
    fused = pl.pallas_call(_vae_fused_kernel, out_shape=out_shape)
    return jax.jit(fused)


# ----------------------------------------------------------------------------
# Pure-JAX f32 reference (for numerical validation of the fused kernel)
# ----------------------------------------------------------------------------
def _conv_ref(x, w, b, stride, relu):
    y = jax.lax.conv_general_dilated(
        x, w, window_strides=(stride, stride), padding=((1, 1), (1, 1)),
        dimension_numbers=("NCHW", "OIHW", "NCHW"),
        precision=jax.lax.Precision.HIGHEST)
    y = y + b[None, :, None, None]
    return jnp.maximum(y, 0.0) if relu else y


def _pixel_shuffle_ref(x, r=2):
    n, crr, h, w = x.shape
    c = crr // (r * r)
    x = x.reshape(n, c, r, r, h, w)
    x = jnp.transpose(x, (0, 1, 4, 2, 5, 3))
    return x.reshape(n, c, h * r, w * r)


def reference_forward(params, x, eps):
    hp = jax.lax.Precision.HIGHEST
    h = _conv_ref(x, *params["stem"], 1, True)
    h = _conv_ref(h, *params["enc0"], 1, True)
    h = _conv_ref(h, *params["enc1"], 2, True)
    h = _conv_ref(h, *params["enc2"], 2, True)
    flat = h.reshape(h.shape[0], -1)                      # torch.flatten (NCHW)
    mu = jnp.dot(flat, params["fc_mu"][0], precision=hp) + params["fc_mu"][1]
    log_var = jnp.dot(flat, params["fc_var"][0], precision=hp) + params["fc_var"][1]
    z = eps * jnp.exp(0.5 * log_var) + mu
    d = jnp.dot(z, params["decoder_input"][0], precision=hp) + params["decoder_input"][1]
    d = d.reshape(z.shape[0], LAST_HDIM, CODE_LEN, CODE_LEN)
    d = _conv_ref(d, *params["decA"], 1, False)
    d = _pixel_shuffle_ref(d, 2)
    d = _conv_ref(d, *params["decB"], 1, False)
    d = _pixel_shuffle_ref(d, 2)
    return d, mu, log_var


# ----------------------------------------------------------------------------
if __name__ == "__main__":
    root = jax.random.PRNGKey(0)
    k_params, k_x, k_eps = jax.random.split(root, 3)

    batch = 2
    params = init_params(k_params)
    x = jax.random.normal(k_x, (batch, IN_CHANNELS, RES, RES), jnp.float32)
    eps = jax.random.normal(k_eps, (batch, LATENT_DIM), jnp.float32)

    consts = pack_constants(params, batch)          # folded once, on the host
    forward = make_forward(batch)

    recon, mu, log_var = forward(x, eps, *consts)
    jax.block_until_ready((recon, mu, log_var))

    assert recon.shape == (batch, IN_CHANNELS, RES, RES), recon.shape
    assert mu.shape == (batch, LATENT_DIM), mu.shape
    assert log_var.shape == (batch, LATENT_DIM), log_var.shape
    assert recon.dtype == jnp.float32
    assert bool(jnp.all(jnp.isfinite(recon)))

    # Numerical sanity check against a pure-JAX f32 reference
    # (loose tolerance: the kernel uses bf16 MXU operands with f32 accum).
    r_ref, mu_ref, lv_ref = jax.jit(reference_forward)(params, x, eps)
    np.testing.assert_allclose(np.asarray(mu), np.asarray(mu_ref),
                               rtol=0.1, atol=2e-3)
    np.testing.assert_allclose(np.asarray(log_var), np.asarray(lv_ref),
                               rtol=0.1, atol=2e-3)
    np.testing.assert_allclose(np.asarray(recon), np.asarray(r_ref),
                               rtol=0.1, atol=2e-2)

    print("KERNEL_OK")
</pallas_src>

<mosaic_0001>
module attributes {stable_mosaic.version = 11 : i64} {
  func.func @_vae_fused_kernel(%arg0: memref<2x4x16x16xf32, #tpu.memory_space<vmem>>, %arg1: memref<2x16xf32, #tpu.memory_space<vmem>>, %arg2: memref<4x16x64xbf16, #tpu.memory_space<vmem>>, %arg3: memref<3x32x32xbf16, #tpu.memory_space<vmem>>, %arg4: memref<3x64x128xbf16, #tpu.memory_space<vmem>>, %arg5: memref<1x128xf32, #tpu.memory_space<vmem>>, %arg6: memref<3x32x32xbf16, #tpu.memory_space<vmem>>, %arg7: memref<3x128x128xbf16, #tpu.memory_space<vmem>>, %arg8: memref<1x128xf32, #tpu.memory_space<vmem>>, %arg9: memref<3x16x32xbf16, #tpu.memory_space<vmem>>, %arg10: memref<3x128x128xbf16, #tpu.memory_space<vmem>>, %arg11: memref<1x128xf32, #tpu.memory_space<vmem>>, %arg12: memref<3x8x16xbf16, #tpu.memory_space<vmem>>, %arg13: memref<3x128x128xbf16, #tpu.memory_space<vmem>>, %arg14: memref<1x128xf32, #tpu.memory_space<vmem>>, %arg15: memref<4x2x8xbf16, #tpu.memory_space<vmem>>, %arg16: memref<4x128x16xbf16, #tpu.memory_space<vmem>>, %arg17: memref<4x128x16xbf16, #tpu.memory_space<vmem>>, %arg18: memref<1x16xf32, #tpu.memory_space<vmem>>, %arg19: memref<1x16xf32, #tpu.memory_space<vmem>>, %arg20: memref<4x8x2xbf16, #tpu.memory_space<vmem>>, %arg21: memref<4x16x128xbf16, #tpu.memory_space<vmem>>, %arg22: memref<4x1x128xf32, #tpu.memory_space<vmem>>, %arg23: memref<3x8x8xbf16, #tpu.memory_space<vmem>>, %arg24: memref<3x128x256xbf16, #tpu.memory_space<vmem>>, %arg25: memref<1x256xf32, #tpu.memory_space<vmem>>, %arg26: memref<2x256x128xbf16, #tpu.memory_space<vmem>>, %arg27: memref<2x16x8xbf16, #tpu.memory_space<vmem>>, %arg28: memref<3x16x16xbf16, #tpu.memory_space<vmem>>, %arg29: memref<3x128x128xbf16, #tpu.memory_space<vmem>>, %arg30: memref<1x128xf32, #tpu.memory_space<vmem>>, %arg31: memref<2x128x64xbf16, #tpu.memory_space<vmem>>, %arg32: memref<2x32x16xbf16, #tpu.memory_space<vmem>>, %arg33: memref<4x64x16xbf16, #tpu.memory_space<vmem>>, %arg34: memref<2x4x16x16xf32, #tpu.memory_space<vmem>>, %arg35: memref<2x16xf32, #tpu.memory_space<vmem>>, %arg36: memref<2x16xf32, #tpu.memory_space<vmem>>) attributes {dimension_semantics = [], scalar_prefetch = 0 : i64, scratch_operands = 0 : i64, tpu.core_type = #tpu.core_type<tc>} {
    %c0 = arith.constant 0 : index
    %c0_0 = arith.constant 0 : index
    %c0_1 = arith.constant 0 : index
    %c0_2 = arith.constant 0 : index
    %0 = vector.load %arg0[%c0, %c0_0, %c0_1, %c0_2] : memref<2x4x16x16xf32, #tpu.memory_space<vmem>>, vector<2x1x16x16xf32>
    %1 = vector.shape_cast %0 : vector<2x1x16x16xf32> to vector<32x16xf32>
    %c0_3 = arith.constant 0 : index
    %c0_4 = arith.constant 0 : index
    %c0_5 = arith.constant 0 : index
    %2 = vector.load %arg2[%c0_3, %c0_4, %c0_5] : memref<4x16x64xbf16, #tpu.memory_space<vmem>>, vector<1x16x64xbf16>
    %3 = vector.shape_cast %2 : vector<1x16x64xbf16> to vector<16x64xbf16>
    %4 = arith.truncf %1 : vector<32x16xf32> to vector<32x16xbf16>
    %cst = arith.constant dense<0.000000e+00> : vector<32x64xf32>
    %5 = tpu.matmul %4, %3, %cst {dimension_numbers = #tpu.dot_dimension_numbers<[1], [0], [0], [1], [0, 0, 1, 1], [], []>} : vector<32x16xbf16>, vector<16x64xbf16>, vector<32x64xf32> -> vector<32x64xf32>
    %c0_6 = arith.constant 0 : index
    %c1 = arith.constant 1 : index
    %c0_7 = arith.constant 0 : index
    %c0_8 = arith.constant 0 : index
    %6 = vector.load %arg0[%c0_6, %c1, %c0_7, %c0_8] : memref<2x4x16x16xf32, #tpu.memory_space<vmem>>, vector<2x1x16x16xf32>
    %7 = vector.shape_cast %6 : vector<2x1x16x16xf32> to vector<32x16xf32>
    %c1_9 = arith.constant 1 : index
    %c0_10 = arith.constant 0 : index
    %c0_11 = arith.constant 0 : index
    %8 = vector.load %arg2[%c1_9, %c0_10, %c0_11] : memref<4x16x64xbf16, #tpu.memory_space<vmem>>, vector<1x16x64xbf16>
    %9 = vector.shape_cast %8 : vector<1x16x64xbf16> to vector<16x64xbf16>
    %10 = arith.truncf %7 : vector<32x16xf32> to vector<32x16xbf16>
    %cst_12 = arith.constant dense<0.000000e+00> : vector<32x64xf32>
    %11 = tpu.matmul %10, %9, %cst_12 {dimension_numbers = #tpu.dot_dimension_numbers<[1], [0], [0], [1], [0, 0, 1, 1], [], []>} : vector<32x16xbf16>, vector<16x64xbf16>, vector<32x64xf32> -> vector<32x64xf32>
    %12 = arith.addf %5, %11 : vector<32x64xf32>
    %c0_13 = arith.constant 0 : index
    %c2 = arith.constant 2 : index
    %c0_14 = arith.constant 0 : index
    %c0_15 = arith.constant 0 : index
    %13 = vector.load %arg0[%c0_13, %c2, %c0_14, %c0_15] : memref<2x4x16x16xf32, #tpu.memory_space<vmem>>, vector<2x1x16x16xf32>
    %14 = vector.shape_cast %13 : vector<2x1x16x16xf32> to vector<32x16xf32>
    %c2_16 = arith.constant 2 : index
    %c0_17 = arith.constant 0 : index
    %c0_18 = arith.constant 0 : index
    %15 = vector.load %arg2[%c2_16, %c0_17, %c0_18] : memref<4x16x64xbf16, #tpu.memory_space<vmem>>, vector<1x16x64xbf16>
    %16 = vector.shape_cast %15 : vector<1x16x64xbf16> to vector<16x64xbf16>
    %17 = arith.truncf %14 : vector<32x16xf32> to vector<32x16xbf16>
    %cst_19 = arith.constant dense<0.000000e+00> : vector<32x64xf32>
    %18 = tpu.matmul %17, %16, %cst_19 {dimension_numbers = #tpu.dot_dimension_numbers<[1], [0], [0], [1], [0, 0, 1, 1], [], []>} : vector<32x16xbf16>, vector<16x64xbf16>, vector<32x64xf32> -> vector<32x64xf32>
    %19 = arith.addf %12, %18 : vector<32x64xf32>
    %c0_20 = arith.constant 0 : index
    %c3 = arith.constant 3 : index
    %c0_21 = arith.constant 0 : index
    %c0_22 = arith.constant 0 : index
    %20 = vector.load %arg0[%c0_20, %c3, %c0_21, %c0_22] : memref<2x4x16x16xf32, #tpu.memory_space<vmem>>, vector<2x1x16x16xf32>
    %21 = vector.shape_cast %20 : vector<2x1x16x16xf32> to vector<32x16xf32>
    %c3_23 = arith.constant 3 : index
    %c0_24 = arith.constant 0 : index
    %c0_25 = arith.constant 0 : index
    %22 = vector.load %arg2[%c3_23, %c0_24, %c0_25] : memref<4x16x64xbf16, #tpu.memory_space<vmem>>, vector<1x16x64xbf16>
    %23 = vector.shape_cast %22 : vector<1x16x64xbf16> to vector<16x64xbf16>
    %24 = arith.truncf %21 : vector<32x16xf32> to vector<32x16xbf16>
    %cst_26 = arith.constant dense<0.000000e+00> : vector<32x64xf32>
    %25 = tpu.matmul %24, %23, %cst_26 {dimension_numbers = #tpu.dot_dimension_numbers<[1], [0], [0], [1], [0, 0, 1, 1], [], []>} : vector<32x16xbf16>, vector<16x64xbf16>, vector<32x64xf32> -> vector<32x64xf32>
    %26 = arith.addf %19, %25 : vector<32x64xf32>
    %c0_27 = arith.constant 0 : index
    %c0_28 = arith.constant 0 : index
    %c0_29 = arith.constant 0 : index
    %27 = vector.load %arg3[%c0_27, %c0_28, %c0_29] : memref<3x32x32xbf16, #tpu.memory_space<vmem>>, vector<1x32x32xbf16>
    %28 = vector.shape_cast %27 : vector<1x32x32xbf16> to vector<32x32xbf16>
    %29 = arith.truncf %26 : vector<32x64xf32> to vector<32x64xbf16>
    %cst_30 = arith.constant dense<0.000000e+00> : vector<32x64xf32>
    %30 = tpu.matmul %28, %29, %cst_30 {dimension_numbers = #tpu.dot_dimension_numbers<[1], [0], [0], [1], [0, 0, 1, 1], [], []>} : vector<32x32xbf16>, vector<32x64xbf16>, vector<32x64xf32> -> vector<32x64xf32>
    %c0_31 = arith.constant 0 : index
    %c0_32 = arith.constant 0 : index
    %c0_33 = arith.constant 0 : index
    %31 = vector.load %arg4[%c0_31, %c0_32, %c0_33] : memref<3x64x128xbf16, #tpu.memory_space<vmem>>, vector<1x64x128xbf16>
    %32 = vector.shape_cast %31 : vector<1x64x128xbf16> to vector<64x128xbf16>
    %33 = arith.truncf %30 : vector<32x64xf32> to vector<32x64xbf16>
    %cst_34 = arith.constant dense<0.000000e+00> : vector<32x128xf32>
    %34 = tpu.matmul %33, %32, %cst_34 {dimension_numbers = #tpu.dot_dimension_numbers<[1], [0], [0], [1], [0, 0, 1, 1], [], []>} : vector<32x64xbf16>, vector<64x128xbf16>, vector<32x128xf32> -> vector<32x128xf32>
    %c1_35 = arith.constant 1 : index
    %c0_36 = arith.constant 0 : index
    %c0_37 = arith.constant 0 : index
    %35 = vector.load %arg3[%c1_35, %c0_36, %c0_37] : memref<3x32x32xbf16, #tpu.memory_space<vmem>>, vector<1x32x32xbf16>
    %36 = vector.shape_cast %35 : vector<1x32x32xbf16> to vector<32x32xbf16>
    %37 = arith.truncf %26 : vector<32x64xf32> to vector<32x64xbf16>
    %cst_38 = arith.constant dense<0.000000e+00> : vector<32x64xf32>
    %38 = tpu.matmul %36, %37, %cst_38 {dimension_numbers = #tpu.dot_dimension_numbers<[1], [0], [0], [1], [0, 0, 1, 1], [], []>} : vector<32x32xbf16>, vector<32x64xbf16>, vector<32x64xf32> -> vector<32x64xf32>
    %c1_39 = arith.constant 1 : index
    %c0_40 = arith.constant 0 : index
    %c0_41 = arith.constant 0 : index
    %39 = vector.load %arg4[%c1_39, %c0_40, %c0_41] : memref<3x64x128xbf16, #tpu.memory_space<vmem>>, vector<1x64x128xbf16>
    %40 = vector.shape_cast %39 : vector<1x64x128xbf16> to vector<64x128xbf16>
    %41 = arith.truncf %38 : vector<32x64xf32> to vector<32x64xbf16>
    %cst_42 = arith.constant dense<0.000000e+00> : vector<32x128xf32>
    %42 = tpu.matmul %41, %40, %cst_42 {dimension_numbers = #tpu.dot_dimension_numbers<[1], [0], [0], [1], [0, 0, 1, 1], [], []>} : vector<32x64xbf16>, vector<64x128xbf16>, vector<32x128xf32> -> vector<32x128xf32>
    %43 = arith.addf %34, %42 : vector<32x128xf32>
    %c2_43 = arith.constant 2 : index
    %c0_44 = arith.constant 0 : index
    %c0_45 = arith.constant 0 : index
    %44 = vector.load %arg3[%c2_43, %c0_44, %c0_45] : memref<3x32x32xbf16, #tpu.memory_space<vmem>>, vector<1x32x32xbf16>
    %45 = vector.shape_cast %44 : vector<1x32x32xbf16> to vector<32x32xbf16>
    %46 = arith.truncf %26 : vector<32x64xf32> to vector<32x64xbf16>
    %cst_46 = arith.constant dense<0.000000e+00> : vector<32x64xf32>
    %47 = tpu.matmul %45, %46, %cst_46 {dimension_numbers = #tpu.dot_dimension_numbers<[1], [0], [0], [1], [0, 0, 1, 1], [], []>} : vector<32x32xbf16>, vector<32x64xbf16>, vector<32x64xf32> -> vector<32x64xf32>
    %c2_47 = arith.constant 2 : index
    %c0_48 = arith.constant 0 : index
    %c0_49 = arith.constant 0 : index
    %48 = vector.load %arg4[%c2_47, %c0_48, %c0_49] : memref<3x64x128xbf16, #tpu.memory_space<vmem>>, vector<1x64x128xbf16>
    %49 = vector.shape_cast %48 : vector<1x64x128xbf16> to vector<64x128xbf16>
    %50 = arith.truncf %47 : vector<32x64xf32> to vector<32x64xbf16>
    %cst_50 = arith.constant dense<0.000000e+00> : vector<32x128xf32>
    %51 = tpu.matmul %50, %49, %cst_50 {dimension_numbers = #tpu.dot_dimension_numbers<[1], [0], [0], [1], [0, 0, 1, 1], [], []>} : vector<32x64xbf16>, vector<64x128xbf16>, vector<32x128xf32> -> vector<32x128xf32>
    %52 = arith.addf %43, %51 : vector<32x128xf32>
    %c0_51 = arith.constant 0 : index
    %c0_52 = arith.constant 0 : index
    %53 = vector.load %arg5[%c0_51, %c0_52] : memref<1x128xf32, #tpu.memory_space<vmem>>, vector<1x128xf32>
    %54 = vector.broadcast %53 : vector<1x128xf32> to vector<32x128xf32>
    %55 = arith.addf %52, %54 : vector<32x128xf32>
    %cst_53 = arith.constant 0.000000e+00 : f32
    %56 = vector.broadcast %cst_53 : f32 to vector<32x128xf32>
    %57 = arith.maximumf %55, %56 : vector<32x128xf32>
    %c0_54 = arith.constant 0 : index
    %c0_55 = arith.constant 0 : index
    %c0_56 = arith.constant 0 : index
    %58 = vector.load %arg6[%c0_54, %c0_55, %c0_56] : memref<3x32x32xbf16, #tpu.memory_space<vmem>>, vector<1x32x32xbf16>
    %59 = vector.shape_cast %58 : vector<1x32x32xbf16> to vector<32x32xbf16>
    %60 = arith.truncf %57 : vector<32x128xf32> to vector<32x128xbf16>
    %cst_57 = arith.constant dense<0.000000e+00> : vector<32x128xf32>
    %61 = tpu.matmul %59, %60, %cst_57 {dimension_numbers = #tpu.dot_dimension_numbers<[1], [0], [0], [1], [0, 0, 1, 1], [], []>} : vector<32x32xbf16>, vector<32x128xbf16>, vector<32x128xf32> -> vector<32x128xf32>
    %c0_58 = arith.constant 0 : index
    %c0_59 = arith.constant 0 : index
    %c0_60 = arith.constant 0 : index
    %62 = vector.load %arg7[%c0_58, %c0_59, %c0_60] : memref<3x128x128xbf16, #tpu.memory_space<vmem>>, vector<1x128x128xbf16>
    %63 = vector.shape_cast %62 : vector<1x128x128xbf16> to vector<128x128xbf16>
    %64 = arith.truncf %61 : vector<32x128xf32> to vector<32x128xbf16>
    %cst_61 = arith.constant dense<0.000000e+00> : vector<32x128xf32>
    %65 = tpu.matmul %64, %63, %cst_61 {dimension_numbers = #tpu.dot_dimension_numbers<[1], [0], [0], [1], [0, 0, 1, 1], [], []>} : vector<32x128xbf16>, vector<128x128xbf16>, vector<32x128xf32> -> vector<32x128xf32>
    %c1_62 = arith.constant 1 : index
    %c0_63 = arith.constant 0 : index
    %c0_64 = arith.constant 0 : index
    %66 = vector.load %arg6[%c1_62, %c0_63, %c0_64] : memref<3x32x32xbf16, #tpu.memory_space<vmem>>, vector<1x32x32xbf16>
    %67 = vector.shape_cast %66 : vector<1x32x32xbf16> to vector<32x32xbf16>
    %68 = arith.truncf %57 : vector<32x128xf32> to vector<32x128xbf16>
    %cst_65 = arith.constant dense<0.000000e+00> : vector<32x128xf32>
    %69 = tpu.matmul %67, %68, %cst_65 {dimension_numbers = #tpu.dot_dimension_numbers<[1], [0], [0], [1], [0, 0, 1, 1], [], []>} : vector<32x32xbf16>, vector<32x128xbf16>, vector<32x128xf32> -> vector<32x128xf32>
    %c1_66 = arith.constant 1 : index
    %c0_67 = arith.constant 0 : index
    %c0_68 = arith.constant 0 : index
    %70 = vector.load %arg7[%c1_66, %c0_67, %c0_68] : memref<3x128x128xbf16, #tpu.memory_space<vmem>>, vector<1x128x128xbf16>
    %71 = vector.shape_cast %70 : vector<1x128x128xbf16> to vector<128x128xbf16>
    %72 = arith.truncf %69 : vector<32x128xf32> to vector<32x128xbf16>
    %cst_69 = arith.constant dense<0.000000e+00> : vector<32x128xf32>
    %73 = tpu.matmul %72, %71, %cst_69 {dimension_numbers = #tpu.dot_dimension_numbers<[1], [0], [0], [1], [0, 0, 1, 1], [], []>} : vector<32x128xbf16>, vector<128x128xbf16>, vector<32x128xf32> -> vector<32x128xf32>
    %74 = arith.addf %65, %73 : vector<32x128xf32>
    %c2_70 = arith.constant 2 : index
    %c0_71 = arith.constant 0 : index
    %c0_72 = arith.constant 0 : index
    %75 = vector.load %arg6[%c2_70, %c0_71, %c0_72] : memref<3x32x32xbf16, #tpu.memory_space<vmem>>, vector<1x32x32xbf16>
    %76 = vector.shape_cast %75 : vector<1x32x32xbf16> to vector<32x32xbf16>
    %77 = arith.truncf %57 : vector<32x128xf32> to vector<32x128xbf16>
    %cst_73 = arith.constant dense<0.000000e+00> : vector<32x128xf32>
    %78 = tpu.matmul %76, %77, %cst_73 {dimension_numbers = #tpu.dot_dimension_numbers<[1], [0], [0], [1], [0, 0, 1, 1], [], []>} : vector<32x32xbf16>, vector<32x128xbf16>, vector<32x128xf32> -> vector<32x128xf32>
    %c2_74 = arith.constant 2 : index
    %c0_75 = arith.constant 0 : index
    %c0_76 = arith.constant 0 : index
    %79 = vector.load %arg7[%c2_74, %c0_75, %c0_76] : memref<3x128x128xbf16, #tpu.memory_space<vmem>>, vector<1x128x128xbf16>
    %80 = vector.shape_cast %79 : vector<1x128x128xbf16> to vector<128x128xbf16>
    %81 = arith.truncf %78 : vector<32x128xf32> to vector<32x128xbf16>
    %cst_77 = arith.constant dense<0.000000e+00> : vector<32x128xf32>
    %82 = tpu.matmul %81, %80, %cst_77 {dimension_numbers = #tpu.dot_dimension_numbers<[1], [0], [0], [1], [0, 0, 1, 1], [], []>} : vector<32x128xbf16>, vector<128x128xbf16>, vector<32x128xf32> -> vector<32x128xf32>
    %83 = arith.addf %74, %82 : vector<32x128xf32>
    %c0_78 = arith.constant 0 : index
    %c0_79 = arith.constant 0 : index
    %84 = vector.load %arg8[%c0_78, %c0_79] : memref<1x128xf32, #tpu.memory_space<vmem>>, vector<1x128xf32>
    %85 = vector.broadcast %84 : vector<1x128xf32> to vector<32x128xf32>
    %86 = arith.addf %83, %85 : vector<32x128xf32>
    %cst_80 = arith.constant 0.000000e+00 : f32
    %87 = vector.broadcast %cst_80 : f32 to vector<32x128xf32>
    %88 = arith.maximumf %86, %87 : vector<32x128xf32>
    %c0_81 = arith.constant 0 : index
    %c0_82 = arith.constant 0 : index
    %c0_83 = arith.constant 0 : index
    %89 = vector.load %arg9[%c0_81, %c0_82, %c0_83] : memref<3x16x32xbf16, #tpu.memory_space<vmem>>, vector<1x16x32xbf16>
    %90 = vector.shape_cast %89 : vector<1x16x32xbf16> to vector<16x32xbf16>
    %91 = arith.truncf %88 : vector<32x128xf32> to vector<32x128xbf16>
    %cst_84 = arith.constant dense<0.000000e+00> : vector<16x128xf32>
    %92 = tpu.matmul %90, %91, %cst_84 {dimension_numbers = #tpu.dot_dimension_numbers<[1], [0], [0], [1], [0, 0, 1, 1], [], []>} : vector<16x32xbf16>, vector<32x128xbf16>, vector<16x128xf32> -> vector<16x128xf32>
    %c0_85 = arith.constant 0 : index
    %c0_86 = arith.constant 0 : index
    %c0_87 = arith.constant 0 : index
    %93 = vector.load %arg10[%c0_85, %c0_86, %c0_87] : memref<3x128x128xbf16, #tpu.memory_space<vmem>>, vector<1x128x128xbf16>
    %94 = vector.shape_cast %93 : vector<1x128x128xbf16> to vector<128x128xbf16>
    %95 = arith.truncf %92 : vector<16x128xf32> to vector<16x128xbf16>
    %cst_88 = arith.constant dense<0.000000e+00> : vector<16x128xf32>
    %96 = tpu.matmul %95, %94, %cst_88 {dimension_numbers = #tpu.dot_dimension_numbers<[1], [0], [0], [1], [0, 0, 1, 1], [], []>} : vector<16x128xbf16>, vector<128x128xbf16>, vector<16x128xf32> -> vector<16x128xf32>
    %c1_89 = arith.constant 1 : index
    %c0_90 = arith.constant 0 : index
    %c0_91 = arith.constant 0 : index
    %97 = vector.load %arg9[%c1_89, %c0_90, %c0_91] : memref<3x16x32xbf16, #tpu.memory_space<vmem>>, vector<1x16x32xbf16>
    %98 = vector.shape_cast %97 : vector<1x16x32xbf16> to vector<16x32xbf16>
    %99 = arith.truncf %88 : vector<32x128xf32> to vector<32x128xbf16>
    %cst_92 = arith.constant dense<0.000000e+00> : vector<16x128xf32>
    %100 = tpu.matmul %98, %99, %cst_92 {dimension_numbers = #tpu.dot_dimension_numbers<[1], [0], [0], [1], [0, 0, 1, 1], [], []>} : vector<16x32xbf16>, vector<32x128xbf16>, vector<16x128xf32> -> vector<16x128xf32>
    %c1_93 = arith.constant 1 : index
    %c0_94 = arith.constant 0 : index
    %c0_95 = arith.constant 0 : index
    %101 = vector.load %arg10[%c1_93, %c0_94, %c0_95] : memref<3x128x128xbf16, #tpu.memory_space<vmem>>, vector<1x128x128xbf16>
    %102 = vector.shape_cast %101 : vector<1x128x128xbf16> to vector<128x128xbf16>
    %103 = arith.truncf %100 : vector<16x128xf32> to vector<16x128xbf16>
    %cst_96 = arith.constant dense<0.000000e+00> : vector<16x128xf32>
    %104 = tpu.matmul %103, %102, %cst_96 {dimension_numbers = #tpu.dot_dimension_numbers<[1], [0], [0], [1], [0, 0, 1, 1], [], []>} : vector<16x128xbf16>, vector<128x128xbf16>, vector<16x128xf32> -> vector<16x128xf32>
    %105 = arith.addf %96, %104 : vector<16x128xf32>
    %c2_97 = arith.constant 2 : index
    %c0_98 = arith.constant 0 : index
    %c0_99 = arith.constant 0 : index
    %106 = vector.load %arg9[%c2_97, %c0_98, %c0_99] : memref<3x16x32xbf16, #tpu.memory_space<vmem>>, vector<1x16x32xbf16>
    %107 = vector.shape_cast %106 : vector<1x16x32xbf16> to vector<16x32xbf16>
    %108 = arith.truncf %88 : vector<32x128xf32> to vector<32x128xbf16>
    %cst_100 = arith.constant dense<0.000000e+00> : vector<16x128xf32>
    %109 = tpu.matmul %107, %108, %cst_100 {dimension_numbers = #tpu.dot_dimension_numbers<[1], [0], [0], [1], [0, 0, 1, 1], [], []>} : vector<16x32xbf16>, vector<32x128xbf16>, vector<16x128xf32> -> vector<16x128xf32>
    %c2_101 = arith.constant 2 : index
    %c0_102 = arith.constant 0 : index
    %c0_103 = arith.constant 0 : index
    %110 = vector.load %arg10[%c2_101, %c0_102, %c0_103] : memref<3x128x128xbf16, #tpu.memory_space<vmem>>, vector<1x128x128xbf16>
    %111 = vector.shape_cast %110 : vector<1x128x128xbf16> to vector<128x128xbf16>
    %112 = arith.truncf %109 : vector<16x128xf32> to vector<16x128xbf16>
    %cst_104 = arith.constant dense<0.000000e+00> : vector<16x128xf32>
    %113 = tpu.matmul %112, %111, %cst_104 {dimension_numbers = #tpu.dot_dimension_numbers<[1], [0], [0], [1], [0, 0, 1, 1], [], []>} : vector<16x128xbf16>, vector<128x128xbf16>, vector<16x128xf32> -> vector<16x128xf32>
    %114 = arith.addf %105, %113 : vector<16x128xf32>
    %c0_105 = arith.constant 0 : index
    %c0_106 = arith.constant 0 : index
    %115 = vector.load %arg11[%c0_105, %c0_106] : memref<1x128xf32, #tpu.memory_space<vmem>>, vector<1x128xf32>
    %116 = vector.broadcast %115 : vector<1x128xf32> to vector<16x128xf32>
    %117 = arith.addf %114, %116 : vector<16x128xf32>
    %cst_107 = arith.constant 0.000000e+00 : f32
    %118 = vector.broadcast %cst_107 : f32 to vector<16x128xf32>
    %119 = arith.maximumf %117, %118 : vector<16x128xf32>
    %c0_108 = arith.constant 0 : index
    %c0_109 = arith.constant 0 : index
    %c0_110 = arith.constant 0 : index
    %120 = vector.load %arg12[%c0_108, %c0_109, %c0_110] : memref<3x8x16xbf16, #tpu.memory_space<vmem>>, vector<1x8x16xbf16>
    %121 = vector.shape_cast %120 : vector<1x8x16xbf16> to vector<8x16xbf16>
    %122 = arith.truncf %119 : vector<16x128xf32> to vector<16x128xbf16>
    %cst_111 = arith.constant dense<0.000000e+00> : vector<8x128xf32>
    %123 = tpu.matmul %121, %122, %cst_111 {dimension_numbers = #tpu.dot_dimension_numbers<[1], [0], [0], [1], [0, 0, 1, 1], [], []>} : vector<8x16xbf16>, vector<16x128xbf16>, vector<8x128xf32> -> vector<8x128xf32>
    %c0_112 = arith.constant 0 : index
    %c0_113 = arith.constant 0 : index
    %c0_114 = arith.constant 0 : index
    %124 = vector.load %arg13[%c0_112, %c0_113, %c0_114] : memref<3x128x128xbf16, #tpu.memory_space<vmem>>, vector<1x128x128xbf16>
    %125 = vector.shape_cast %124 : vector<1x128x128xbf16> to vector<128x128xbf16>
    %126 = arith.truncf %123 : vector<8x128xf32> to vector<8x128xbf16>
    %cst_115 = arith.constant dense<0.000000e+00> : vector<8x128xf32>
    %127 = tpu.matmul %126, %125, %cst_115 {dimension_numbers = #tpu.dot_dimension_numbers<[1], [0], [0], [1], [0, 0, 1, 1], [], []>} : vector<8x128xbf16>, vector<128x128xbf16>, vector<8x128xf32> -> vector<8x128xf32>
    %c1_116 = arith.constant 1 : index
    %c0_117 = arith.constant 0 : index
    %c0_118 = arith.constant 0 : index
    %128 = vector.load %arg12[%c1_116, %c0_117, %c0_118] : memref<3x8x16xbf16, #tpu.memory_space<vmem>>, vector<1x8x16xbf16>
    %129 = vector.shape_cast %128 : vector<1x8x16xbf16> to vector<8x16xbf16>
    %130 = arith.truncf %119 : vector<16x128xf32> to vector<16x128xbf16>
    %cst_119 = arith.constant dense<0.000000e+00> : vector<8x128xf32>
    %131 = tpu.matmul %129, %130, %cst_119 {dimension_numbers = #tpu.dot_dimension_numbers<[1], [0], [0], [1], [0, 0, 1, 1], [], []>} : vector<8x16xbf16>, vector<16x128xbf16>, vector<8x128xf32> -> vector<8x128xf32>
    %c1_120 = arith.constant 1 : index
    %c0_121 = arith.constant 0 : index
    %c0_122 = arith.constant 0 : index
    %132 = vector.load %arg13[%c1_120, %c0_121, %c0_122] : memref<3x128x128xbf16, #tpu.memory_space<vmem>>, vector<1x128x128xbf16>
    %133 = vector.shape_cast %132 : vector<1x128x128xbf16> to vector<128x128xbf16>
    %134 = arith.truncf %131 : vector<8x128xf32> to vector<8x128xbf16>
    %cst_123 = arith.constant dense<0.000000e+00> : vector<8x128xf32>
    %135 = tpu.matmul %134, %133, %cst_123 {dimension_numbers = #tpu.dot_dimension_numbers<[1], [0], [0], [1], [0, 0, 1, 1], [], []>} : vector<8x128xbf16>, vector<128x128xbf16>, vector<8x128xf32> -> vector<8x128xf32>
    %136 = arith.addf %127, %135 : vector<8x128xf32>
    %c2_124 = arith.constant 2 : index
    %c0_125 = arith.constant 0 : index
    %c0_126 = arith.constant 0 : index
    %137 = vector.load %arg12[%c2_124, %c0_125, %c0_126] : memref<3x8x16xbf16, #tpu.memory_space<vmem>>, vector<1x8x16xbf16>
    %138 = vector.shape_cast %137 : vector<1x8x16xbf16> to vector<8x16xbf16>
    %139 = arith.truncf %119 : vector<16x128xf32> to vector<16x128xbf16>
    %cst_127 = arith.constant dense<0.000000e+00> : vector<8x128xf32>
    %140 = tpu.matmul %138, %139, %cst_127 {dimension_numbers = #tpu.dot_dimension_numbers<[1], [0], [0], [1], [0, 0, 1, 1], [], []>} : vector<8x16xbf16>, vector<16x128xbf16>, vector<8x128xf32> -> vector<8x128xf32>
    %c2_128 = arith.constant 2 : index
    %c0_129 = arith.constant 0 : index
    %c0_130 = arith.constant 0 : index
    %141 = vector.load %arg13[%c2_128, %c0_129, %c0_130] : memref<3x128x128xbf16, #tpu.memory_space<vmem>>, vector<1x128x128xbf16>
    %142 = vector.shape_cast %141 : vector<1x128x128xbf16> to vector<128x128xbf16>
    %143 = arith.truncf %140 : vector<8x128xf32> to vector<8x128xbf16>
    %cst_131 = arith.constant dense<0.000000e+00> : vector<8x128xf32>
    %144 = tpu.matmul %143, %142, %cst_131 {dimension_numbers = #tpu.dot_dimension_numbers<[1], [0], [0], [1], [0, 0, 1, 1], [], []>} : vector<8x128xbf16>, vector<128x128xbf16>, vector<8x128xf32> -> vector<8x128xf32>
    %145 = arith.addf %136, %144 : vector<8x128xf32>
    %c0_132 = arith.constant 0 : index
    %c0_133 = arith.constant 0 : index
    %146 = vector.load %arg14[%c0_132, %c0_133] : memref<1x128xf32, #tpu.memory_space<vmem>>, vector<1x128xf32>
    %147 = vector.broadcast %146 : vector<1x128xf32> to vector<8x128xf32>
    %148 = arith.addf %145, %147 : vector<8x128xf32>
    %cst_134 = arith.constant 0.000000e+00 : f32
    %149 = vector.broadcast %cst_134 : f32 to vector<8x128xf32>
    %150 = arith.maximumf %148, %149 : vector<8x128xf32>
    %c0_135 = arith.constant 0 : index
    %c0_136 = arith.constant 0 : index
    %c0_137 = arith.constant 0 : index
    %151 = vector.load %arg15[%c0_135, %c0_136, %c0_137] : memref<4x2x8xbf16, #tpu.memory_space<vmem>>, vector<1x2x8xbf16>
    %152 = vector.shape_cast %151 : vector<1x2x8xbf16> to vector<2x8xbf16>
    %153 = arith.truncf %150 : vector<8x128xf32> to vector<8x128xbf16>
    %cst_138 = arith.constant dense<0.000000e+00> : vector<2x128xf32>
    %154 = tpu.matmul %152, %153, %cst_138 {dimension_numbers = #tpu.dot_dimension_numbers<[1], [0], [0], [1], [0, 0, 1, 1], [], []>} : vector<2x8xbf16>, vector<8x128xbf16>, vector<2x128xf32> -> vector<2x128xf32>
    %c0_139 = arith.constant 0 : index
    %c0_140 = arith.constant 0 : index
    %c0_141 = arith.constant 0 : index
    %155 = vector.load %arg16[%c0_139, %c0_140, %c0_141] : memref<4x128x16xbf16, #tpu.memory_space<vmem>>, vector<1x128x16xbf16>
    %156 = vector.shape_cast %155 : vector<1x128x16xbf16> to vector<128x16xbf16>
    %157 = arith.truncf %154 : vector<2x128xf32> to vector<2x128xbf16>
    %cst_142 = arith.constant dense<0.000000e+00> : vector<2x16xf32>
    %158 = tpu.matmul %157, %156, %cst_142 {dimension_numbers = #tpu.dot_dimension_numbers<[1], [0], [0], [1], [0, 0, 1, 1], [], []>} : vector<2x128xbf16>, vector<128x16xbf16>, vector<2x16xf32> -> vector<2x16xf32>
    %c0_143 = arith.constant 0 : index
    %c0_144 = arith.constant 0 : index
    %c0_145 = arith.constant 0 : index
    %159 = vector.load %arg17[%c0_143, %c0_144, %c0_145] : memref<4x128x16xbf16, #tpu.memory_space<vmem>>, vector<1x128x16xbf16>
    %160 = vector.shape_cast %159 : vector<1x128x16xbf16> to vector<128x16xbf16>
    %161 = arith.truncf %154 : vector<2x128xf32> to vector<2x128xbf16>
    %cst_146 = arith.constant dense<0.000000e+00> : vector<2x16xf32>
    %162 = tpu.matmul %161, %160, %cst_146 {dimension_numbers = #tpu.dot_dimension_numbers<[1], [0], [0], [1], [0, 0, 1, 1], [], []>} : vector<2x128xbf16>, vector<128x16xbf16>, vector<2x16xf32> -> vector<2x16xf32>
    %c1_147 = arith.constant 1 : index
    %c0_148 = arith.constant 0 : index
    %c0_149 = arith.constant 0 : index
    %163 = vector.load %arg15[%c1_147, %c0_148, %c0_149] : memref<4x2x8xbf16, #tpu.memory_space<vmem>>, vector<1x2x8xbf16>
    %164 = vector.shape_cast %163 : vector<1x2x8xbf16> to vector<2x8xbf16>
    %165 = arith.truncf %150 : vector<8x128xf32> to vector<8x128xbf16>
    %cst_150 = arith.constant dense<0.000000e+00> : vector<2x128xf32>
    %166 = tpu.matmul %164, %165, %cst_150 {dimension_numbers = #tpu.dot_dimension_numbers<[1], [0], [0], [1], [0, 0, 1, 1], [], []>} : vector<2x8xbf16>, vector<8x128xbf16>, vector<2x128xf32> -> vector<2x128xf32>
    %c1_151 = arith.constant 1 : index
    %c0_152 = arith.constant 0 : index
    %c0_153 = arith.constant 0 : index
    %167 = vector.load %arg16[%c1_151, %c0_152, %c0_153] : memref<4x128x16xbf16, #tpu.memory_space<vmem>>, vector<1x128x16xbf16>
    %168 = vector.shape_cast %167 : vector<1x128x16xbf16> to vector<128x16xbf16>
    %169 = arith.truncf %166 : vector<2x128xf32> to vector<2x128xbf16>
    %cst_154 = arith.constant dense<0.000000e+00> : vector<2x16xf32>
    %170 = tpu.matmul %169, %168, %cst_154 {dimension_numbers = #tpu.dot_dimension_numbers<[1], [0], [0], [1], [0, 0, 1, 1], [], []>} : vector<2x128xbf16>, vector<128x16xbf16>, vector<2x16xf32> -> vector<2x16xf32>
    %c1_155 = arith.constant 1 : index
    %c0_156 = arith.constant 0 : index
    %c0_157 = arith.constant 0 : index
    %171 = vector.load %arg17[%c1_155, %c0_156, %c0_157] : memref<4x128x16xbf16, #tpu.memory_space<vmem>>, vector<1x128x16xbf16>
    %172 = vector.shape_cast %171 : vector<1x128x16xbf16> to vector<128x16xbf16>
    %173 = arith.truncf %166 : vector<2x128xf32> to vector<2x128xbf16>
    %cst_158 = arith.constant dense<0.000000e+00> : vector<2x16xf32>
    %174 = tpu.matmul %173, %172, %cst_158 {dimension_numbers = #tpu.dot_dimension_numbers<[1], [0], [0], [1], [0, 0, 1, 1], [], []>} : vector<2x128xbf16>, vector<128x16xbf16>, vector<2x16xf32> -> vector<2x16xf32>
    %175 = arith.addf %158, %170 : vector<2x16xf32>
    %176 = arith.addf %162, %174 : vector<2x16xf32>
    %c2_159 = arith.constant 2 : index
    %c0_160 = arith.constant 0 : index
    %c0_161 = arith.constant 0 : index
    %177 = vector.load %arg15[%c2_159, %c0_160, %c0_161] : memref<4x2x8xbf16, #tpu.memory_space<vmem>>, vector<1x2x8xbf16>
    %178 = vector.shape_cast %177 : vector<1x2x8xbf16> to vector<2x8xbf16>
    %179 = arith.truncf %150 : vector<8x128xf32> to vector<8x128xbf16>
    %cst_162 = arith.constant dense<0.000000e+00> : vector<2x128xf32>
    %180 = tpu.matmul %178, %179, %cst_162 {dimension_numbers = #tpu.dot_dimension_numbers<[1], [0], [0], [1], [0, 0, 1, 1], [], []>} : vector<2x8xbf16>, vector<8x128xbf16>, vector<2x128xf32> -> vector<2x128xf32>
    %c2_163 = arith.constant 2 : index
    %c0_164 = arith.constant 0 : index
    %c0_165 = arith.constant 0 : index
    %181 = vector.load %arg16[%c2_163, %c0_164, %c0_165] : memref<4x128x16xbf16, #tpu.memory_space<vmem>>, vector<1x128x16xbf16>
    %182 = vector.shape_cast %181 : vector<1x128x16xbf16> to vector<128x16xbf16>
    %183 = arith.truncf %180 : vector<2x128xf32> to vector<2x128xbf16>
    %cst_166 = arith.constant dense<0.000000e+00> : vector<2x16xf32>
    %184 = tpu.matmul %183, %182, %cst_166 {dimension_numbers = #tpu.dot_dimension_numbers<[1], [0], [0], [1], [0, 0, 1, 1], [], []>} : vector<2x128xbf16>, vector<128x16xbf16>, vector<2x16xf32> -> vector<2x16xf32>
    %c2_167 = arith.constant 2 : index
    %c0_168 = arith.constant 0 : index
    %c0_169 = arith.constant 0 : index
    %185 = vector.load %arg17[%c2_167, %c0_168, %c0_169] : memref<4x128x16xbf16, #tpu.memory_space<vmem>>, vector<1x128x16xbf16>
    %186 = vector.shape_cast %185 : vector<1x128x16xbf16> to vector<128x16xbf16>
    %187 = arith.truncf %180 : vector<2x128xf32> to vector<2x128xbf16>
    %cst_170 = arith.constant dense<0.000000e+00> : vector<2x16xf32>
    %188 = tpu.matmul %187, %186, %cst_170 {dimension_numbers = #tpu.dot_dimension_numbers<[1], [0], [0], [1], [0, 0, 1, 1], [], []>} : vector<2x128xbf16>, vector<128x16xbf16>, vector<2x16xf32> -> vector<2x16xf32>
    %189 = arith.addf %175, %184 : vector<2x16xf32>
    %190 = arith.addf %176, %188 : vector<2x16xf32>
    %c3_171 = arith.constant 3 : index
    %c0_172 = arith.constant 0 : index
    %c0_173 = arith.constant 0 : index
    %191 = vector.load %arg15[%c3_171, %c0_172, %c0_173] : memref<4x2x8xbf16, #tpu.memory_space<vmem>>, vector<1x2x8xbf16>
    %192 = vector.shape_cast %191 : vector<1x2x8xbf16> to vector<2x8xbf16>
    %193 = arith.truncf %150 : vector<8x128xf32> to vector<8x128xbf16>
    %cst_174 = arith.constant dense<0.000000e+00> : vector<2x128xf32>
    %194 = tpu.matmul %192, %193, %cst_174 {dimension_numbers = #tpu.dot_dimension_numbers<[1], [0], [0], [1], [0, 0, 1, 1], [], []>} : vector<2x8xbf16>, vector<8x128xbf16>, vector<2x128xf32> -> vector<2x128xf32>
    %c3_175 = arith.constant 3 : index
    %c0_176 = arith.constant 0 : index
    %c0_177 = arith.constant 0 : index
    %195 = vector.load %arg16[%c3_175, %c0_176, %c0_177] : memref<4x128x16xbf16, #tpu.memory_space<vmem>>, vector<1x128x16xbf16>
    %196 = vector.shape_cast %195 : vector<1x128x16xbf16> to vector<128x16xbf16>
    %197 = arith.truncf %194 : vector<2x128xf32> to vector<2x128xbf16>
    %cst_178 = arith.constant dense<0.000000e+00> : vector<2x16xf32>
    %198 = tpu.matmul %197, %196, %cst_178 {dimension_numbers = #tpu.dot_dimension_numbers<[1], [0], [0], [1], [0, 0, 1, 1], [], []>} : vector<2x128xbf16>, vector<128x16xbf16>, vector<2x16xf32> -> vector<2x16xf32>
    %c3_179 = arith.constant 3 : index
    %c0_180 = arith.constant 0 : index
    %c0_181 = arith.constant 0 : index
    %199 = vector.load %arg17[%c3_179, %c0_180, %c0_181] : memref<4x128x16xbf16, #tpu.memory_space<vmem>>, vector<1x128x16xbf16>
    %200 = vector.shape_cast %199 : vector<1x128x16xbf16> to vector<128x16xbf16>
    %201 = arith.truncf %194 : vector<2x128xf32> to vector<2x128xbf16>
    %cst_182 = arith.constant dense<0.000000e+00> : vector<2x16xf32>
    %202 = tpu.matmul %201, %200, %cst_182 {dimension_numbers = #tpu.dot_dimension_numbers<[1], [0], [0], [1], [0, 0, 1, 1], [], []>} : vector<2x128xbf16>, vector<128x16xbf16>, vector<2x16xf32> -> vector<2x16xf32>
    %203 = arith.addf %189, %198 : vector<2x16xf32>
    %204 = arith.addf %190, %202 : vector<2x16xf32>
    %c0_183 = arith.constant 0 : index
    %c0_184 = arith.constant 0 : index
    %205 = vector.load %arg18[%c0_183, %c0_184] : memref<1x16xf32, #tpu.memory_space<vmem>>, vector<1x16xf32>
    %206 = vector.broadcast %205 : vector<1x16xf32> to vector<2x16xf32>
    %207 = arith.addf %203, %206 : vector<2x16xf32>
    %c0_185 = arith.constant 0 : index
    %c0_186 = arith.constant 0 : index
    %208 = vector.load %arg19[%c0_185, %c0_186] : memref<1x16xf32, #tpu.memory_space<vmem>>, vector<1x16xf32>
    %209 = vector.broadcast %208 : vector<1x16xf32> to vector<2x16xf32>
    %210 = arith.addf %204, %209 : vector<2x16xf32>
    %c0_187 = arith.constant 0 : index
    %c0_188 = arith.constant 0 : index
    %211 = vector.load %arg35[%c0_187, %c0_188] : memref<2x16xf32, #tpu.memory_space<vmem>>, vector<2x16xf32>
    tpu.vector_store %arg35[%c0_187, %c0_188], %207 {strides = array<i32>} : memref<2x16xf32, #tpu.memory_space<vmem>>, vector<2x16xf32>,
    %c0_189 = arith.constant 0 : index
    %c0_190 = arith.constant 0 : index
    %212 = vector.load %arg36[%c0_189, %c0_190] : memref<2x16xf32, #tpu.memory_space<vmem>>, vector<2x16xf32>
    tpu.vector_store %arg36[%c0_189, %c0_190], %210 {strides = array<i32>} : memref<2x16xf32, #tpu.memory_space<vmem>>, vector<2x16xf32>,
    %c0_191 = arith.constant 0 : index
    %c0_192 = arith.constant 0 : index
    %213 = vector.load %arg1[%c0_191, %c0_192] : memref<2x16xf32, #tpu.memory_space<vmem>>, vector<2x16xf32>
    %cst_193 = arith.constant 5.000000e-01 : f32
    %214 = vector.broadcast %cst_193 : f32 to vector<2x16xf32>
    %215 = arith.mulf %214, %210 : vector<2x16xf32>
    %216 = math.exp %215 : vector<2x16xf32>
    %217 = arith.mulf %213, %216 : vector<2x16xf32>
    %218 = arith.addf %217, %207 : vector<2x16xf32>
    %c0_194 = arith.constant 0 : index
    %c0_195 = arith.constant 0 : index
    %c0_196 = arith.constant 0 : index
    %219 = vector.load %arg21[%c0_194, %c0_195, %c0_196] : memref<4x16x128xbf16, #tpu.memory_space<vmem>>, vector<1x16x128xbf16>
    %220 = vector.shape_cast %219 : vector<1x16x128xbf16> to vector<16x128xbf16>
    %221 = arith.truncf %218 : vector<2x16xf32> to vector<2x16xbf16>
    %cst_197 = arith.constant dense<0.000000e+00> : vector<2x128xf32>
    %222 = tpu.matmul %221, %220, %cst_197 {dimension_numbers = #tpu.dot_dimension_numbers<[1], [0], [0], [1], [0, 0, 1, 1], [], []>} : vector<2x16xbf16>, vector<16x128xbf16>, vector<2x128xf32> -> vector<2x128xf32>
    %c0_198 = arith.constant 0 : index
    %c0_199 = arith.constant 0 : index
    %c0_200 = arith.constant 0 : index
    %223 = vector.load %arg22[%c0_198, %c0_199, %c0_200] : memref<4x1x128xf32, #tpu.memory_space<vmem>>, vector<1x1x128xf32>
    %224 = vector.shape_cast %223 : vector<1x1x128xf32> to vector<1x128xf32>
    %225 = vector.broadcast %224 : vector<1x128xf32> to vector<2x128xf32>
    %226 = arith.addf %222, %225 : vector<2x128xf32>
    %c0_201 = arith.constant 0 : index
    %c0_202 = arith.constant 0 : index
    %c0_203 = arith.constant 0 : index
    %227 = vector.load %arg20[%c0_201, %c0_202, %c0_203] : memref<4x8x2xbf16, #tpu.memory_space<vmem>>, vector<1x8x2xbf16>
    %228 = vector.shape_cast %227 : vector<1x8x2xbf16> to vector<8x2xbf16>
    %229 = arith.truncf %226 : vector<2x128xf32> to vector<2x128xbf16>
    %cst_204 = arith.constant dense<0.000000e+00> : vector<8x128xf32>
    %230 = tpu.matmul %228, %229, %cst_204 {dimension_numbers = #tpu.dot_dimension_numbers<[1], [0], [0], [1], [0, 0, 1, 1], [], []>} : vector<8x2xbf16>, vector<2x128xbf16>, vector<8x128xf32> -> vector<8x128xf32>
    %c1_205 = arith.constant 1 : index
    %c0_206 = arith.constant 0 : index
    %c0_207 = arith.constant 0 : index
    %231 = vector.load %arg21[%c1_205, %c0_206, %c0_207] : memref<4x16x128xbf16, #tpu.memory_space<vmem>>, vector<1x16x128xbf16>
    %232 = vector.shape_cast %231 : vector<1x16x128xbf16> to vector<16x128xbf16>
    %233 = arith.truncf %218 : vector<2x16xf32> to vector<2x16xbf16>
    %cst_208 = arith.constant dense<0.000000e+00> : vector<2x128xf32>
    %234 = tpu.matmul %233, %232, %cst_208 {dimension_numbers = #tpu.dot_dimension_numbers<[1], [0], [0], [1], [0, 0, 1, 1], [], []>} : vector<2x16xbf16>, vector<16x128xbf16>, vector<2x128xf32> -> vector<2x128xf32>
    %c1_209 = arith.constant 1 : index
    %c0_210 = arith.constant 0 : index
    %c0_211 = arith.constant 0 : index
    %235 = vector.load %arg22[%c1_209, %c0_210, %c0_211] : memref<4x1x128xf32, #tpu.memory_space<vmem>>, vector<1x1x128xf32>
    %236 = vector.shape_cast %235 : vector<1x1x128xf32> to vector<1x128xf32>
    %237 = vector.broadcast %236 : vector<1x128xf32> to vector<2x128xf32>
    %238 = arith.addf %234, %237 : vector<2x128xf32>
    %c1_212 = arith.constant 1 : index
    %c0_213 = arith.constant 0 : index
    %c0_214 = arith.constant 0 : index
    %239 = vector.load %arg20[%c1_212, %c0_213, %c0_214] : memref<4x8x2xbf16, #tpu.memory_space<vmem>>, vector<1x8x2xbf16>
    %240 = vector.shape_cast %239 : vector<1x8x2xbf16> to vector<8x2xbf16>
    %241 = arith.truncf %238 : vector<2x128xf32> to vector<2x128xbf16>
    %cst_215 = arith.constant dense<0.000000e+00> : vector<8x128xf32>
    %242 = tpu.matmul %240, %241, %cst_215 {dimension_numbers = #tpu.dot_dimension_numbers<[1], [0], [0], [1], [0, 0, 1, 1], [], []>} : vector<8x2xbf16>, vector<2x128xbf16>, vector<8x128xf32> -> vector<8x128xf32>
    %243 = arith.addf %230, %242 : vector<8x128xf32>
    %c2_216 = arith.constant 2 : index
    %c0_217 = arith.constant 0 : index
    %c0_218 = arith.constant 0 : index
    %244 = vector.load %arg21[%c2_216, %c0_217, %c0_218] : memref<4x16x128xbf16, #tpu.memory_space<vmem>>, vector<1x16x128xbf16>
    %245 = vector.shape_cast %244 : vector<1x16x128xbf16> to vector<16x128xbf16>
    %246 = arith.truncf %218 : vector<2x16xf32> to vector<2x16xbf16>
    %cst_219 = arith.constant dense<0.000000e+00> : vector<2x128xf32>
    %247 = tpu.matmul %246, %245, %cst_219 {dimension_numbers = #tpu.dot_dimension_numbers<[1], [0], [0], [1], [0, 0, 1, 1], [], []>} : vector<2x16xbf16>, vector<16x128xbf16>, vector<2x128xf32> -> vector<2x128xf32>
    %c2_220 = arith.constant 2 : index
    %c0_221 = arith.constant 0 : index
    %c0_222 = arith.constant 0 : index
    %248 = vector.load %arg22[%c2_220, %c0_221, %c0_222] : memref<4x1x128xf32, #tpu.memory_space<vmem>>, vector<1x1x128xf32>
    %249 = vector.shape_cast %248 : vector<1x1x128xf32> to vector<1x128xf32>
    %250 = vector.broadcast %249 : vector<1x128xf32> to vector<2x128xf32>
    %251 = arith.addf %247, %250 : vector<2x128xf32>
    %c2_223 = arith.constant 2 : index
    %c0_224 = arith.constant 0 : index
    %c0_225 = arith.constant 0 : index
    %252 = vector.load %arg20[%c2_223, %c0_224, %c0_225] : memref<4x8x2xbf16, #tpu.memory_space<vmem>>, vector<1x8x2xbf16>
    %253 = vector.shape_cast %252 : vector<1x8x2xbf16> to vector<8x2xbf16>
    %254 = arith.truncf %251 : vector<2x128xf32> to vector<2x128xbf16>
    %cst_226 = arith.constant dense<0.000000e+00> : vector<8x128xf32>
    %255 = tpu.matmul %253, %254, %cst_226 {dimension_numbers = #tpu.dot_dimension_numbers<[1], [0], [0], [1], [0, 0, 1, 1], [], []>} : vector<8x2xbf16>, vector<2x128xbf16>, vector<8x128xf32> -> vector<8x128xf32>
    %256 = arith.addf %243, %255 : vector<8x128xf32>
    %c3_227 = arith.constant 3 : index
    %c0_228 = arith.constant 0 : index
    %c0_229 = arith.constant 0 : index
    %257 = vector.load %arg21[%c3_227, %c0_228, %c0_229] : memref<4x16x128xbf16, #tpu.memory_space<vmem>>, vector<1x16x128xbf16>
    %258 = vector.shape_cast %257 : vector<1x16x128xbf16> to vector<16x128xbf16>
    %259 = arith.truncf %218 : vector<2x16xf32> to vector<2x16xbf16>
    %cst_230 = arith.constant dense<0.000000e+00> : vector<2x128xf32>
    %260 = tpu.matmul %259, %258, %cst_230 {dimension_numbers = #tpu.dot_dimension_numbers<[1], [0], [0], [1], [0, 0, 1, 1], [], []>} : vector<2x16xbf16>, vector<16x128xbf16>, vector<2x128xf32> -> vector<2x128xf32>
    %c3_231 = arith.constant 3 : index
    %c0_232 = arith.constant 0 : index
    %c0_233 = arith.constant 0 : index
    %261 = vector.load %arg22[%c3_231, %c0_232, %c0_233] : memref<4x1x128xf32, #tpu.memory_space<vmem>>, vector<1x1x128xf32>
    %262 = vector.shape_cast %261 : vector<1x1x128xf32> to vector<1x128xf32>
    %263 = vector.broadcast %262 : vector<1x128xf32> to vector<2x128xf32>
    %264 = arith.addf %260, %263 : vector<2x128xf32>
    %c3_234 = arith.constant 3 : index
    %c0_235 = arith.constant 0 : index
    %c0_236 = arith.constant 0 : index
    %265 = vector.load %arg20[%c3_234, %c0_235, %c0_236] : memref<4x8x2xbf16, #tpu.memory_space<vmem>>, vector<1x8x2xbf16>
    %266 = vector.shape_cast %265 : vector<1x8x2xbf16> to vector<8x2xbf16>
    %267 = arith.truncf %264 : vector<2x128xf32> to vector<2x128xbf16>
    %cst_237 = arith.constant dense<0.000000e+00> : vector<8x128xf32>
    %268 = tpu.matmul %266, %267, %cst_237 {dimension_numbers = #tpu.dot_dimension_numbers<[1], [0], [0], [1], [0, 0, 1, 1], [], []>} : vector<8x2xbf16>, vector<2x128xbf16>, vector<8x128xf32> -> vector<8x128xf32>
    %269 = arith.addf %256, %268 : vector<8x128xf32>
    %c0_238 = arith.constant 0 : index
    %c0_239 = arith.constant 0 : index
    %c0_240 = arith.constant 0 : index
    %270 = vector.load %arg23[%c0_238, %c0_239, %c0_240] : memref<3x8x8xbf16, #tpu.memory_space<vmem>>, vector<1x8x8xbf16>
    %271 = vector.shape_cast %270 : vector<1x8x8xbf16> to vector<8x8xbf16>
    %272 = arith.truncf %269 : vector<8x128xf32> to vector<8x128xbf16>
    %cst_241 = arith.constant dense<0.000000e+00> : vector<8x128xf32>
    %273 = tpu.matmul %271, %272, %cst_241 {dimension_numbers = #tpu.dot_dimension_numbers<[1], [0], [0], [1], [0, 0, 1, 1], [], []>} : vector<8x8xbf16>, vector<8x128xbf16>, vector<8x128xf32> -> vector<8x128xf32>
    %c0_242 = arith.constant 0 : index
    %c0_243 = arith.constant 0 : index
    %c0_244 = arith.constant 0 : index
    %274 = vector.load %arg24[%c0_242, %c0_243, %c0_244] : memref<3x128x256xbf16, #tpu.memory_space<vmem>>, vector<1x128x256xbf16>
    %275 = vector.shape_cast %274 : vector<1x128x256xbf16> to vector<128x256xbf16>
    %276 = arith.truncf %273 : vector<8x128xf32> to vector<8x128xbf16>
    %cst_245 = arith.constant dense<0.000000e+00> : vector<8x256xf32>
    %277 = tpu.matmul %276, %275, %cst_245 {dimension_numbers = #tpu.dot_dimension_numbers<[1], [0], [0], [1], [0, 0, 1, 1], [], []>} : vector<8x128xbf16>, vector<128x256xbf16>, vector<8x256xf32> -> vector<8x256xf32>
    %c1_246 = arith.constant 1 : index
    %c0_247 = arith.constant 0 : index
    %c0_248 = arith.constant 0 : index
    %278 = vector.load %arg23[%c1_246, %c0_247, %c0_248] : memref<3x8x8xbf16, #tpu.memory_space<vmem>>, vector<1x8x8xbf16>
    %279 = vector.shape_cast %278 : vector<1x8x8xbf16> to vector<8x8xbf16>
    %280 = arith.truncf %269 : vector<8x128xf32> to vector<8x128xbf16>
    %cst_249 = arith.constant dense<0.000000e+00> : vector<8x128xf32>
    %281 = tpu.matmul %279, %280, %cst_249 {dimension_numbers = #tpu.dot_dimension_numbers<[1], [0], [0], [1], [0, 0, 1, 1], [], []>} : vector<8x8xbf16>, vector<8x128xbf16>, vector<8x128xf32> -> vector<8x128xf32>
    %c1_250 = arith.constant 1 : index
    %c0_251 = arith.constant 0 : index
    %c0_252 = arith.constant 0 : index
    %282 = vector.load %arg24[%c1_250, %c0_251, %c0_252] : memref<3x128x256xbf16, #tpu.memory_space<vmem>>, vector<1x128x256xbf16>
    %283 = vector.shape_cast %282 : vector<1x128x256xbf16> to vector<128x256xbf16>
    %284 = arith.truncf %281 : vector<8x128xf32> to vector<8x128xbf16>
    %cst_253 = arith.constant dense<0.000000e+00> : vector<8x256xf32>
    %285 = tpu.matmul %284, %283, %cst_253 {dimension_numbers = #tpu.dot_dimension_numbers<[1], [0], [0], [1], [0, 0, 1, 1], [], []>} : vector<8x128xbf16>, vector<128x256xbf16>, vector<8x256xf32> -> vector<8x256xf32>
    %286 = arith.addf %277, %285 : vector<8x256xf32>
    %c2_254 = arith.constant 2 : index
    %c0_255 = arith.constant 0 : index
    %c0_256 = arith.constant 0 : index
    %287 = vector.load %arg23[%c2_254, %c0_255, %c0_256] : memref<3x8x8xbf16, #tpu.memory_space<vmem>>, vector<1x8x8xbf16>
    %288 = vector.shape_cast %287 : vector<1x8x8xbf16> to vector<8x8xbf16>
    %289 = arith.truncf %269 : vector<8x128xf32> to vector<8x128xbf16>
    %cst_257 = arith.constant dense<0.000000e+00> : vector<8x128xf32>
    %290 = tpu.matmul %288, %289, %cst_257 {dimension_numbers = #tpu.dot_dimension_numbers<[1], [0], [0], [1], [0, 0, 1, 1], [], []>} : vector<8x8xbf16>, vector<8x128xbf16>, vector<8x128xf32> -> vector<8x128xf32>
    %c2_258 = arith.constant 2 : index
    %c0_259 = arith.constant 0 : index
    %c0_260 = arith.constant 0 : index
    %291 = vector.load %arg24[%c2_258, %c0_259, %c0_260] : memref<3x128x256xbf16, #tpu.memory_space<vmem>>, vector<1x128x256xbf16>
    %292 = vector.shape_cast %291 : vector<1x128x256xbf16> to vector<128x256xbf16>
    %293 = arith.truncf %290 : vector<8x128xf32> to vector<8x128xbf16>
    %cst_261 = arith.constant dense<0.000000e+00> : vector<8x256xf32>
    %294 = tpu.matmul %293, %292, %cst_261 {dimension_numbers = #tpu.dot_dimension_numbers<[1], [0], [0], [1], [0, 0, 1, 1], [], []>} : vector<8x128xbf16>, vector<128x256xbf16>, vector<8x256xf32> -> vector<8x256xf32>
    %295 = arith.addf %286, %294 : vector<8x256xf32>
    %c0_262 = arith.constant 0 : index
    %c0_263 = arith.constant 0 : index
    %296 = vector.load %arg25[%c0_262, %c0_263] : memref<1x256xf32, #tpu.memory_space<vmem>>, vector<1x256xf32>
    %297 = vector.broadcast %296 : vector<1x256xf32> to vector<8x256xf32>
    %298 = arith.addf %295, %297 : vector<8x256xf32>
    %c0_264 = arith.constant 0 : index
    %c0_265 = arith.constant 0 : index
    %c0_266 = arith.constant 0 : index
    %299 = vector.load %arg27[%c0_264, %c0_265, %c0_266] : memref<2x16x8xbf16, #tpu.memory_space<vmem>>, vector<1x16x8xbf16>
    %300 = vector.shape_cast %299 : vector<1x16x8xbf16> to vector<16x8xbf16>
    %c0_267 = arith.constant 0 : index
    %c0_268 = arith.constant 0 : index
    %c0_269 = arith.constant 0 : index
    %301 = vector.load %arg26[%c0_267, %c0_268, %c0_269] : memref<2x256x128xbf16, #tpu.memory_space<vmem>>, vector<1x256x128xbf16>
    %302 = vector.shape_cast %301 : vector<1x256x128xbf16> to vector<256x128xbf16>
    %303 = arith.truncf %298 : vector<8x256xf32> to vector<8x256xbf16>
    %cst_270 = arith.constant dense<0.000000e+00> : vector<8x128xf32>
    %304 = tpu.matmul %303, %302, %cst_270 {dimension_numbers = #tpu.dot_dimension_numbers<[1], [0], [0], [1], [0, 0, 1, 1], [], []>} : vector<8x256xbf16>, vector<256x128xbf16>, vector<8x128xf32> -> vector<8x128xf32>
    %305 = arith.truncf %304 : vector<8x128xf32> to vector<8x128xbf16>
    %cst_271 = arith.constant dense<0.000000e+00> : vector<16x128xf32>
    %306 = tpu.matmul %300, %305, %cst_271 {dimension_numbers = #tpu.dot_dimension_numbers<[1], [0], [0], [1], [0, 0, 1, 1], [], []>} : vector<16x8xbf16>, vector<8x128xbf16>, vector<16x128xf32> -> vector<16x128xf32>
    %c1_272 = arith.constant 1 : index
    %c0_273 = arith.constant 0 : index
    %c0_274 = arith.constant 0 : index
    %307 = vector.load %arg27[%c1_272, %c0_273, %c0_274] : memref<2x16x8xbf16, #tpu.memory_space<vmem>>, vector<1x16x8xbf16>
    %308 = vector.shape_cast %307 : vector<1x16x8xbf16> to vector<16x8xbf16>
    %c1_275 = arith.constant 1 : index
    %c0_276 = arith.constant 0 : index
    %c0_277 = arith.constant 0 : index
    %309 = vector.load %arg26[%c1_275, %c0_276, %c0_277] : memref<2x256x128xbf16, #tpu.memory_space<vmem>>, vector<1x256x128xbf16>
    %310 = vector.shape_cast %309 : vector<1x256x128xbf16> to vector<256x128xbf16>
    %311 = arith.truncf %298 : vector<8x256xf32> to vector<8x256xbf16>
    %cst_278 = arith.constant dense<0.000000e+00> : vector<8x128xf32>
    %312 = tpu.matmul %311, %310, %cst_278 {dimension_numbers = #tpu.dot_dimension_numbers<[1], [0], [0], [1], [0, 0, 1, 1], [], []>} : vector<8x256xbf16>, vector<256x128xbf16>, vector<8x128xf32> -> vector<8x128xf32>
    %313 = arith.truncf %312 : vector<8x128xf32> to vector<8x128xbf16>
    %cst_279 = arith.constant dense<0.000000e+00> : vector<16x128xf32>
    %314 = tpu.matmul %308, %313, %cst_279 {dimension_numbers = #tpu.dot_dimension_numbers<[1], [0], [0], [1], [0, 0, 1, 1], [], []>} : vector<16x8xbf16>, vector<8x128xbf16>, vector<16x128xf32> -> vector<16x128xf32>
    %315 = arith.addf %306, %314 : vector<16x128xf32>
    %c0_280 = arith.constant 0 : index
    %c0_281 = arith.constant 0 : index
    %c0_282 = arith.constant 0 : index
    %316 = vector.load %arg28[%c0_280, %c0_281, %c0_282] : memref<3x16x16xbf16, #tpu.memory_space<vmem>>, vector<1x16x16xbf16>
    %317 = vector.shape_cast %316 : vector<1x16x16xbf16> to vector<16x16xbf16>
    %318 = arith.truncf %315 : vector<16x128xf32> to vector<16x128xbf16>
    %cst_283 = arith.constant dense<0.000000e+00> : vector<16x128xf32>
    %319 = tpu.matmul %317, %318, %cst_283 {dimension_numbers = #tpu.dot_dimension_numbers<[1], [0], [0], [1], [0, 0, 1, 1], [], []>} : vector<16x16xbf16>, vector<16x128xbf16>, vector<16x128xf32> -> vector<16x128xf32>
    %c0_284 = arith.constant 0 : index
    %c0_285 = arith.constant 0 : index
    %c0_286 = arith.constant 0 : index
    %320 = vector.load %arg29[%c0_284, %c0_285, %c0_286] : memref<3x128x128xbf16, #tpu.memory_space<vmem>>, vector<1x128x128xbf16>
    %321 = vector.shape_cast %320 : vector<1x128x128xbf16> to vector<128x128xbf16>
    %322 = arith.truncf %319 : vector<16x128xf32> to vector<16x128xbf16>
    %cst_287 = arith.constant dense<0.000000e+00> : vector<16x128xf32>
    %323 = tpu.matmul %322, %321, %cst_287 {dimension_numbers = #tpu.dot_dimension_numbers<[1], [0], [0], [1], [0, 0, 1, 1], [], []>} : vector<16x128xbf16>, vector<128x128xbf16>, vector<16x128xf32> -> vector<16x128xf32>
    %c1_288 = arith.constant 1 : index
    %c0_289 = arith.constant 0 : index
    %c0_290 = arith.constant 0 : index
    %324 = vector.load %arg28[%c1_288, %c0_289, %c0_290] : memref<3x16x16xbf16, #tpu.memory_space<vmem>>, vector<1x16x16xbf16>
    %325 = vector.shape_cast %324 : vector<1x16x16xbf16> to vector<16x16xbf16>
    %326 = arith.truncf %315 : vector<16x128xf32> to vector<16x128xbf16>
    %cst_291 = arith.constant dense<0.000000e+00> : vector<16x128xf32>
    %327 = tpu.matmul %325, %326, %cst_291 {dimension_numbers = #tpu.dot_dimension_numbers<[1], [0], [0], [1], [0, 0, 1, 1], [], []>} : vector<16x16xbf16>, vector<16x128xbf16>, vector<16x128xf32> -> vector<16x128xf32>
    %c1_292 = arith.constant 1 : index
    %c0_293 = arith.constant 0 : index
    %c0_294 = arith.constant 0 : index
    %328 = vector.load %arg29[%c1_292, %c0_293, %c0_294] : memref<3x128x128xbf16, #tpu.memory_space<vmem>>, vector<1x128x128xbf16>
    %329 = vector.shape_cast %328 : vector<1x128x128xbf16> to vector<128x128xbf16>
    %330 = arith.truncf %327 : vector<16x128xf32> to vector<16x128xbf16>
    %cst_295 = arith.constant dense<0.000000e+00> : vector<16x128xf32>
    %331 = tpu.matmul %330, %329, %cst_295 {dimension_numbers = #tpu.dot_dimension_numbers<[1], [0], [0], [1], [0, 0, 1, 1], [], []>} : vector<16x128xbf16>, vector<128x128xbf16>, vector<16x128xf32> -> vector<16x128xf32>
    %332 = arith.addf %323, %331 : vector<16x128xf32>
    %c2_296 = arith.constant 2 : index
    %c0_297 = arith.constant 0 : index
    %c0_298 = arith.constant 0 : index
    %333 = vector.load %arg28[%c2_296, %c0_297, %c0_298] : memref<3x16x16xbf16, #tpu.memory_space<vmem>>, vector<1x16x16xbf16>
    %334 = vector.shape_cast %333 : vector<1x16x16xbf16> to vector<16x16xbf16>
    %335 = arith.truncf %315 : vector<16x128xf32> to vector<16x128xbf16>
    %cst_299 = arith.constant dense<0.000000e+00> : vector<16x128xf32>
    %336 = tpu.matmul %334, %335, %cst_299 {dimension_numbers = #tpu.dot_dimension_numbers<[1], [0], [0], [1], [0, 0, 1, 1], [], []>} : vector<16x16xbf16>, vector<16x128xbf16>, vector<16x128xf32> -> vector<16x128xf32>
    %c2_300 = arith.constant 2 : index
    %c0_301 = arith.constant 0 : index
    %c0_302 = arith.constant 0 : index
    %337 = vector.load %arg29[%c2_300, %c0_301, %c0_302] : memref<3x128x128xbf16, #tpu.memory_space<vmem>>, vector<1x128x128xbf16>
    %338 = vector.shape_cast %337 : vector<1x128x128xbf16> to vector<128x128xbf16>
    %339 = arith.truncf %336 : vector<16x128xf32> to vector<16x128xbf16>
    %cst_303 = arith.constant dense<0.000000e+00> : vector<16x128xf32>
    %340 = tpu.matmul %339, %338, %cst_303 {dimension_numbers = #tpu.dot_dimension_numbers<[1], [0], [0], [1], [0, 0, 1, 1], [], []>} : vector<16x128xbf16>, vector<128x128xbf16>, vector<16x128xf32> -> vector<16x128xf32>
    %341 = arith.addf %332, %340 : vector<16x128xf32>
    %c0_304 = arith.constant 0 : index
    %c0_305 = arith.constant 0 : index
    %342 = vector.load %arg30[%c0_304, %c0_305] : memref<1x128xf32, #tpu.memory_space<vmem>>, vector<1x128xf32>
    %343 = vector.broadcast %342 : vector<1x128xf32> to vector<16x128xf32>
    %344 = arith.addf %341, %343 : vector<16x128xf32>
    %c0_306 = arith.constant 0 : index
    %c0_307 = arith.constant 0 : index
    %c0_308 = arith.constant 0 : index
    %345 = vector.load %arg32[%c0_306, %c0_307, %c0_308] : memref<2x32x16xbf16, #tpu.memory_space<vmem>>, vector<1x32x16xbf16>
    %346 = vector.shape_cast %345 : vector<1x32x16xbf16> to vector<32x16xbf16>
    %c0_309 = arith.constant 0 : index
    %c0_310 = arith.constant 0 : index
    %c0_311 = arith.constant 0 : index
    %347 = vector.load %arg31[%c0_309, %c0_310, %c0_311] : memref<2x128x64xbf16, #tpu.memory_space<vmem>>, vector<1x128x64xbf16>
    %348 = vector.shape_cast %347 : vector<1x128x64xbf16> to vector<128x64xbf16>
    %349 = arith.truncf %344 : vector<16x128xf32> to vector<16x128xbf16>
    %cst_312 = arith.constant dense<0.000000e+00> : vector<16x64xf32>
    %350 = tpu.matmul %349, %348, %cst_312 {dimension_numbers = #tpu.dot_dimension_numbers<[1], [0], [0], [1], [0, 0, 1, 1], [], []>} : vector<16x128xbf16>, vector<128x64xbf16>, vector<16x64xf32> -> vector<16x64xf32>
    %351 = arith.truncf %350 : vector<16x64xf32> to vector<16x64xbf16>
    %cst_313 = arith.constant dense<0.000000e+00> : vector<32x64xf32>
    %352 = tpu.matmul %346, %351, %cst_313 {dimension_numbers = #tpu.dot_dimension_numbers<[1], [0], [0], [1], [0, 0, 1, 1], [], []>} : vector<32x16xbf16>, vector<16x64xbf16>, vector<32x64xf32> -> vector<32x64xf32>
    %c1_314 = arith.constant 1 : index
    %c0_315 = arith.constant 0 : index
    %c0_316 = arith.constant 0 : index
    %353 = vector.load %arg32[%c1_314, %c0_315, %c0_316] : memref<2x32x16xbf16, #tpu.memory_space<vmem>>, vector<1x32x16xbf16>
    %354 = vector.shape_cast %353 : vector<1x32x16xbf16> to vector<32x16xbf16>
    %c1_317 = arith.constant 1 : index
    %c0_318 = arith.constant 0 : index
    %c0_319 = arith.constant 0 : index
    %355 = vector.load %arg31[%c1_317, %c0_318, %c0_319] : memref<2x128x64xbf16, #tpu.memory_space<vmem>>, vector<1x128x64xbf16>
    %356 = vector.shape_cast %355 : vector<1x128x64xbf16> to vector<128x64xbf16>
    %357 = arith.truncf %344 : vector<16x128xf32> to vector<16x128xbf16>
    %cst_320 = arith.constant dense<0.000000e+00> : vector<16x64xf32>
    %358 = tpu.matmul %357, %356, %cst_320 {dimension_numbers = #tpu.dot_dimension_numbers<[1], [0], [0], [1], [0, 0, 1, 1], [], []>} : vector<16x128xbf16>, vector<128x64xbf16>, vector<16x64xf32> -> vector<16x64xf32>
    %359 = arith.truncf %358 : vector<16x64xf32> to vector<16x64xbf16>
    %cst_321 = arith.constant dense<0.000000e+00> : vector<32x64xf32>
    %360 = tpu.matmul %354, %359, %cst_321 {dimension_numbers = #tpu.dot_dimension_numbers<[1], [0], [0], [1], [0, 0, 1, 1], [], []>} : vector<32x16xbf16>, vector<16x64xbf16>, vector<32x64xf32> -> vector<32x64xf32>
    %361 = arith.addf %352, %360 : vector<32x64xf32>
    %c0_322 = arith.constant 0 : index
    %c0_323 = arith.constant 0 : index
    %c0_324 = arith.constant 0 : index
    %362 = vector.load %arg33[%c0_322, %c0_323, %c0_324] : memref<4x64x16xbf16, #tpu.memory_space<vmem>>, vector<1x64x16xbf16>
    %363 = vector.shape_cast %362 : vector<1x64x16xbf16> to vector<64x16xbf16>
    %364 = arith.truncf %361 : vector<32x64xf32> to vector<32x64xbf16>
    %cst_325 = arith.constant dense<0.000000e+00> : vector<32x16xf32>
    %365 = tpu.matmul %364, %363, %cst_325 {dimension_numbers = #tpu.dot_dimension_numbers<[1], [0], [0], [1], [0, 0, 1, 1], [], []>} : vector<32x64xbf16>, vector<64x16xbf16>, vector<32x16xf32> -> vector<32x16xf32>
    %366 = vector.shape_cast %365 : vector<32x16xf32> to vector<2x1x16x16xf32>
    %c0_326 = arith.constant 0 : index
    %c0_327 = arith.constant 0 : index
    %c0_328 = arith.constant 0 : index
    %c0_329 = arith.constant 0 : index
    %367 = vector.load %arg34[%c0_326, %c0_327, %c0_328, %c0_329] : memref<2x4x16x16xf32, #tpu.memory_space<vmem>>, vector<2x1x16x16xf32>
    tpu.vector_store %arg34[%c0_326, %c0_327, %c0_328, %c0_329], %366 {strides = array<i32>} : memref<2x4x16x16xf32, #tpu.memory_space<vmem>>, vector<2x1x16x16xf32>,
    %c1_330 = arith.constant 1 : index
    %c0_331 = arith.constant 0 : index
    %c0_332 = arith.constant 0 : index
    %368 = vector.load %arg33[%c1_330, %c0_331, %c0_332] : memref<4x64x16xbf16, #tpu.memory_space<vmem>>, vector<1x64x16xbf16>
    %369 = vector.shape_cast %368 : vector<1x64x16xbf16> to vector<64x16xbf16>
    %370 = arith.truncf %361 : vector<32x64xf32> to vector<32x64xbf16>
    %cst_333 = arith.constant dense<0.000000e+00> : vector<32x16xf32>
    %371 = tpu.matmul %370, %369, %cst_333 {dimension_numbers = #tpu.dot_dimension_numbers<[1], [0], [0], [1], [0, 0, 1, 1], [], []>} : vector<32x64xbf16>, vector<64x16xbf16>, vector<32x16xf32> -> vector<32x16xf32>
    %372 = vector.shape_cast %371 : vector<32x16xf32> to vector<2x1x16x16xf32>
    %c0_334 = arith.constant 0 : index
    %c1_335 = arith.constant 1 : index
    %c0_336 = arith.constant 0 : index
    %c0_337 = arith.constant 0 : index
    %373 = vector.load %arg34[%c0_334, %c1_335, %c0_336, %c0_337] : memref<2x4x16x16xf32, #tpu.memory_space<vmem>>, vector<2x1x16x16xf32>
    tpu.vector_store %arg34[%c0_334, %c1_335, %c0_336, %c0_337], %372 {strides = array<i32>} : memref<2x4x16x16xf32, #tpu.memory_space<vmem>>, vector<2x1x16x16xf32>,
    %c2_338 = arith.constant 2 : index
    %c0_339 = arith.constant 0 : index
    %c0_340 = arith.constant 0 : index
    %374 = vector.load %arg33[%c2_338, %c0_339, %c0_340] : memref<4x64x16xbf16, #tpu.memory_space<vmem>>, vector<1x64x16xbf16>
    %375 = vector.shape_cast %374 : vector<1x64x16xbf16> to vector<64x16xbf16>
    %376 = arith.truncf %361 : vector<32x64xf32> to vector<32x64xbf16>
    %cst_341 = arith.constant dense<0.000000e+00> : vector<32x16xf32>
    %377 = tpu.matmul %376, %375, %cst_341 {dimension_numbers = #tpu.dot_dimension_numbers<[1], [0], [0], [1], [0, 0, 1, 1], [], []>} : vector<32x64xbf16>, vector<64x16xbf16>, vector<32x16xf32> -> vector<32x16xf32>
    %378 = vector.shape_cast %377 : vector<32x16xf32> to vector<2x1x16x16xf32>
    %c0_342 = arith.constant 0 : index
    %c2_343 = arith.constant 2 : index
    %c0_344 = arith.constant 0 : index
    %c0_345 = arith.constant 0 : index
    %379 = vector.load %arg34[%c0_342, %c2_343, %c0_344, %c0_345] : memref<2x4x16x16xf32, #tpu.memory_space<vmem>>, vector<2x1x16x16xf32>
    tpu.vector_store %arg34[%c0_342, %c2_343, %c0_344, %c0_345], %378 {strides = array<i32>} : memref<2x4x16x16xf32, #tpu.memory_space<vmem>>, vector<2x1x16x16xf32>,
    %c3_346 = arith.constant 3 : index
    %c0_347 = arith.constant 0 : index
    %c0_348 = arith.constant 0 : index
    %380 = vector.load %arg33[%c3_346, %c0_347, %c0_348] : memref<4x64x16xbf16, #tpu.memory_space<vmem>>, vector<1x64x16xbf16>
    %381 = vector.shape_cast %380 : vector<1x64x16xbf16> to vector<64x16xbf16>
    %382 = arith.truncf %361 : vector<32x64xf32> to vector<32x64xbf16>
    %cst_349 = arith.constant dense<0.000000e+00> : vector<32x16xf32>
    %383 = tpu.matmul %382, %381, %cst_349 {dimension_numbers = #tpu.dot_dimension_numbers<[1], [0], [0], [1], [0, 0, 1, 1], [], []>} : vector<32x64xbf16>, vector<64x16xbf16>, vector<32x16xf32> -> vector<32x16xf32>
    %384 = vector.shape_cast %383 : vector<32x16xf32> to vector<2x1x16x16xf32>
    %c0_350 = arith.constant 0 : index
    %c3_351 = arith.constant 3 : index
    %c0_352 = arith.constant 0 : index
    %c0_353 = arith.constant 0 : index
    %385 = vector.load %arg34[%c0_350, %c3_351, %c0_352, %c0_353] : memref<2x4x16x16xf32, #tpu.memory_space<vmem>>, vector<2x1x16x16xf32>
    tpu.vector_store %arg34[%c0_350, %c3_351, %c0_352, %c0_353], %384 {strides = array<i32>} : memref<2x4x16x16xf32, #tpu.memory_space<vmem>>, vector<2x1x16x16xf32>,
    return
  }
}

</mosaic_0001>

<llo_original>
// kernel: tpu_custom_call.1
$region0: #{tpu_custom_call.1}
  #allocation0 [shape = 'u32[]', space=smem, size = 0x4, offset = 0x4, fixed_abs, tag = 'smem constant byte address 0x4 - core index']
  #allocation1 [shape = 'u32[144,128]{1,0:T(1,128)}', space=vmem, size = 0x12000, scoped, tag = 'internal scratch']
  %s0 = inlined_call_operand.smem [shape: u32[37], index: -1, kind: input, shape index: {}]
  %s1 = sld [smem:[%s0]]
  %s2 = scalar_lea.smem %s0, 1
  %s3 = sld [smem:[%s2]]
  %s4 = scalar_lea.smem %s0, 2
  %s5 = sld [smem:[%s4]]
  %s6 = scalar_lea.smem %s0, 3
  %s7 = sld [smem:[%s6]]
  %s8 = scalar_lea.smem %s0, 4
  %s9 = sld [smem:[%s8]]
  %s10 = scalar_lea.smem %s0, 5
  %s11 = sld [smem:[%s10]]
  %s12 = scalar_lea.smem %s0, 6
  %s13 = sld [smem:[%s12]]
  %s14 = scalar_lea.smem %s0, 7
  %s15 = sld [smem:[%s14]]
  %s16 = scalar_lea.smem %s0, 8
  %s17 = sld [smem:[%s16]]
  %s18 = scalar_lea.smem %s0, 9
  %s19 = sld [smem:[%s18]]
  %s20 = scalar_lea.smem %s0, 10
  %s21 = sld [smem:[%s20]]
  %s22 = scalar_lea.smem %s0, 11
  %s23 = sld [smem:[%s22]]
  %s24 = scalar_lea.smem %s0, 12
  %s25 = sld [smem:[%s24]]
  %s26 = scalar_lea.smem %s0, 13
  %s27 = sld [smem:[%s26]]
  %s28 = scalar_lea.smem %s0, 14
  %s29 = sld [smem:[%s28]]
  %s30 = scalar_lea.smem %s0, 15
  %s31 = sld [smem:[%s30]]
  %s32 = scalar_lea.smem %s0, 16
  %s33 = sld [smem:[%s32]]
  %s34 = scalar_lea.smem %s0, 17
  %s35 = sld [smem:[%s34]]
  %s36 = scalar_lea.smem %s0, 18
  %s37 = sld [smem:[%s36]]
  %s38 = scalar_lea.smem %s0, 19
  %s39 = sld [smem:[%s38]]
  %s40 = scalar_lea.smem %s0, 20
  %s41 = sld [smem:[%s40]]
  %s42 = scalar_lea.smem %s0, 21
  %s43 = sld [smem:[%s42]]
  %s44 = scalar_lea.smem %s0, 22
  %s45 = sld [smem:[%s44]]
  %s46 = scalar_lea.smem %s0, 23
  %s47 = sld [smem:[%s46]]
  %s48 = scalar_lea.smem %s0, 24
  %s49 = sld [smem:[%s48]]
  %s50 = scalar_lea.smem %s0, 25
  %s51 = sld [smem:[%s50]]
  %s52 = scalar_lea.smem %s0, 26
  %s53 = sld [smem:[%s52]]
  %s54 = scalar_lea.smem %s0, 27
  %s55 = sld [smem:[%s54]]
  %s56 = scalar_lea.smem %s0, 28
  %s57 = sld [smem:[%s56]]
  %s58 = scalar_lea.smem %s0, 29
  %s59 = sld [smem:[%s58]]
  %s60 = scalar_lea.smem %s0, 30
  %s61 = sld [smem:[%s60]]
  %s62 = scalar_lea.smem %s0, 31
  %s63 = sld [smem:[%s62]]
  %s64 = scalar_lea.smem %s0, 32
  %s65 = sld [smem:[%s64]]
  %s66 = scalar_lea.smem %s0, 33
  %s67 = sld [smem:[%s66]]
  %s68 = scalar_lea.smem %s0, 34
  %s69 = sld [smem:[%s68]]
  %s70 = scalar_lea.smem %s0, 35
  %s71 = sld [smem:[%s70]]
  %s72 = scalar_lea.smem %s0, 36
  %s73 = sld [smem:[%s72]]
  %74 = xla_tuple %s69, %s71, %s73
  %s75 = sld [smem:[#allocation0]]
  $region250: #{tpu_custom_call.1} parent=0
    _
  %s77 = ssub.s32 1, %s75
  %s78 = scalar_select 0, %s77, %s75
  $region1: #{tpu_custom_call.1} parent=0
    #allocation2 [shape = 'u8[65536]{0}', space=vmem, size = 0x10000, scoped, tag = 'input window, operand 0, single buffered']
    #allocation3 [shape = 's32[1]{0}', space=sflag, size = 0x4, scoped, tag = 'scoped memory for tpu_custom_call.1']
    #allocation4 [shape = 's32[1]{0}', space=sflag, size = 0x4, scoped, tag = 'scoped memory for tpu_custom_call.1']
    #allocation5 [shape = 'u8[1024]{0}', space=vmem, size = 0x400, scoped, tag = 'input window, operand 1, single buffered']
    #allocation6 [shape = 's32[1]{0}', space=sflag, size = 0x4, scoped, tag = 'scoped memory for tpu_custom_call.1']
    #allocation7 [shape = 'u8[16384]{0}', space=vmem, size = 0x4000, scoped, tag = 'input window, operand 2, single buffered']
    #allocation8 [shape = 'u8[24576]{0}', space=vmem, size = 0x6000, scoped, tag = 'input window, operand 3, single buffered']
    #allocation9 [shape = 's32[1]{0}', space=sflag, size = 0x4, scoped, tag = 'scoped memory for tpu_custom_call.1']
    #allocation10 [shape = 'u8[49152]{0}', space=vmem, size = 0xc000, scoped, tag = 'input window, operand 4, single buffered']
    #allocation11 [shape = 'u8[512]{0}', space=vmem, size = 0x400, scoped, tag = 'input window, operand 5, single buffered']
    #allocation12 [shape = 's32[1]{0}', space=sflag, size = 0x4, scoped, tag = 'scoped memory for tpu_custom_call.1']
    #allocation13 [shape = 'u8[24576]{0}', space=vmem, size = 0x6000, scoped, tag = 'input window, operand 6, single buffered']
    #allocation14 [shape = 'u8[512]{0}', space=vmem, size = 0x400, scoped, tag = 'input window, operand 8, single buffered']
    #allocation15 [shape = 's32[1]{0}', space=sflag, size = 0x4, scoped, tag = 'scoped memory for tpu_custom_call.1']
    #allocation16 [shape = 'u8[12288]{0}', space=vmem, size = 0x3000, scoped, tag = 'input window, operand 9, single buffered']
    #allocation17 [shape = 'u8[512]{0}', space=vmem, size = 0x400, scoped, tag = 'input window, operand 11, single buffered']
    #allocation18 [shape = 's32[1]{0}', space=sflag, size = 0x4, scoped, tag = 'scoped memory for tpu_custom_call.1']
    #allocation19 [shape = 'u8[6144]{0}', space=vmem, size = 0x1800, scoped, tag = 'input window, operand 12, single buffered']
    #allocation20 [shape = 'u8[98304]{0}', space=vmem, size = 0x18000, scoped, tag = 'input window, operand 13, single buffered']
    #allocation21 [shape = 's32[1]{0}', space=sflag, size = 0x4, scoped, tag = 'scoped memory for tpu_custom_call.1']
    #allocation22 [shape = 'u8[512]{0}', space=vmem, size = 0x400, scoped, tag = 'input window, operand 14, single buffered']
    #allocation23 [shape = 'u8[2048]{0}', space=vmem, size = 0x800, scoped, tag = 'input window, operand 15, single buffered']
    #allocation24 [shape = 's32[1]{0}', space=sflag, size = 0x4, scoped, tag = 'scoped memory for tpu_custom_call.1']
    #allocation25 [shape = 'u8[512]{0}', space=vmem, size = 0x400, scoped, tag = 'input window, operand 18, single buffered']
    #allocation26 [shape = 'u8[512]{0}', space=vmem, size = 0x400, scoped, tag = 'input window, operand 19, single buffered']
    #allocation27 [shape = 's32[1]{0}', space=sflag, size = 0x4, scoped, tag = 'scoped memory for tpu_custom_call.1']
    #allocation28 [shape = 'u8[16384]{0}', space=vmem, size = 0x4000, scoped, tag = 'input window, operand 21, single buffered']
    #allocation29 [shape = 'u8[2048]{0}', space=vmem, size = 0x800, scoped, tag = 'input window, operand 22, single buffered']
    #allocation30 [shape = 's32[1]{0}', space=sflag, size = 0x4, scoped, tag = 'scoped memory for tpu_custom_call.1']
    #allocation31 [shape = 'u8[6144]{0}', space=vmem, size = 0x1800, scoped, tag = 'input window, operand 23, single buffered']
    #allocation32 [shape = 'u8[1024]{0}', space=vmem, size = 0x400, scoped, tag = 'input window, operand 25, single buffered']
    #allocation33 [shape = 's32[1]{0}', space=sflag, size = 0x4, scoped, tag = 'scoped memory for tpu_custom_call.1']
    #allocation34 [shape = 'u8[12288]{0}', space=vmem, size = 0x3000, scoped, tag = 'input window, operand 28, single buffered']
    #allocation35 [shape = 'u8[98304]{0}', space=vmem, size = 0x18000, scoped, tag = 'input window, operand 29, single buffered']
    #allocation36 [shape = 's32[1]{0}', space=sflag, size = 0x4, scoped, tag = 'scoped memory for tpu_custom_call.1']
    #allocation37 [shape = 'u8[65536]{0}', space=vmem, size = 0x10000, scoped, tag = 'output window, operand 0, single buffered']
    #allocation38 [shape = 'u8[1024]{0}', space=vmem, size = 0x400, scoped, tag = 'output window, operand 1, single buffered']
    #allocation39 [shape = 's32[1]{0}', space=sflag, size = 0x4, scoped, tag = 'scoped memory for tpu_custom_call.1']
    #allocation40 [shape = 'u8[1024]{0}', space=vmem, size = 0x400, scoped, tag = 'output window, operand 2, single buffered']
    %79 = vsyncpa [#allocation3], 0
    %80 = vsyncpa [#allocation6], 0
    %81 = vsyncpa [#allocation9], 0
    %82 = vsyncpa [#allocation12], 0
    %83 = vsyncpa [#allocation15], 0
    %84 = vsyncpa [#allocation18], 0
    %85 = vsyncpa [#allocation21], 0
    %86 = vsyncpa [#allocation24], 0
    %87 = vsyncpa [#allocation27], 0
    %88 = vsyncpa [#allocation30], 0
    %89 = vsyncpa [#allocation33], 0
    %90 = vsyncpa [#allocation36], 0
    %91 = vsyncpa [#allocation4], 0
    %92 = vsyncpa [#allocation39], 0
    // Predicated region
    $region2: #{tpu_custom_call.1} parent=1 // pred_check
      _
    $region3: #{tpu_custom_call.1} parent=1 // pred_check_branch
      %94 = sbr.rel (0) target = $region5
    $region4: #{tpu_custom_call.1} parent=1 // pred_region
      %s96 = ssub.s32 2048, 2048
      %97 = vsyncadd [#allocation3], %s96
      %s98 = sshll.u32 [#allocation2], 4
      %s99 = int_to_ptr.vmem [resolvable:$true] %s98
      %104 = dma.hbm_to_vmem [thread:$0]  %s1, 2048, %s99, [#allocation3], 128, 128, 8
    $region5: #{tpu_custom_call.1} parent=1 // pred_fallthru
      _
    // Predicated region
    $region6: #{tpu_custom_call.1} parent=1 // pred_check
      _
    $region7: #{tpu_custom_call.1} parent=1 // pred_check_branch
      %106 = sbr.rel (0) target = $region9
    $region8: #{tpu_custom_call.1} parent=1 // pred_region
      %s108 = ssub.s32 32, 32
      %109 = vsyncadd [#allocation6], %s108
      %s111 = sshll.u32 [#allocation5], 4
      %s112 = int_to_ptr.vmem [resolvable:$true] %s111
      %114 = dma.hbm_to_vmem [thread:$0]  %s3, 32, %s112, [#allocation6]
    $region9: #{tpu_custom_call.1} parent=1 // pred_fallthru
      _
    // Predicated region
    $region10: #{tpu_custom_call.1} parent=1 // pred_check
      _
    $region11: #{tpu_custom_call.1} parent=1 // pred_check_branch
      %116 = sbr.rel (0) target = $region13
    $region12: #{tpu_custom_call.1} parent=1 // pred_region
      %s118 = ssub.s32 512, 512
      %119 = vsyncadd [#allocation6], %s118
      %s120 = sshll.u32 [#allocation7], 4
      %s121 = int_to_ptr.vmem [resolvable:$true] %s120
      %126 = dma.hbm_to_vmem [thread:$0]  %s5, 512, %s121, [#allocation6], 64, 64, 4
    $region13: #{tpu_custom_call.1} parent=1 // pred_fallthru
      _
    // Predicated region
    $region14: #{tpu_custom_call.1} parent=1 // pred_check
      _
    $region15: #{tpu_custom_call.1} parent=1 // pred_check_branch
      %128 = sbr.rel (0) target = $region17
    $region16: #{tpu_custom_call.1} parent=1 // pred_region
      %s130 = ssub.s32 768, 768
      %131 = vsyncadd [#allocation9], %s130
      %s132 = sshll.u32 [#allocation8], 4
      %s133 = int_to_ptr.vmem [resolvable:$true] %s132
      %138 = dma.hbm_to_vmem [thread:$0]  %s7, 768, %s133, [#allocation9], 64, 64, 4
    $region17: #{tpu_custom_call.1} parent=1 // pred_fallthru
      _
    // Predicated region
    $region18: #{tpu_custom_call.1} parent=1 // pred_check
      _
    $region19: #{tpu_custom_call.1} parent=1 // pred_check_branch
      %140 = sbr.rel (0) target = $region21
    $region20: #{tpu_custom_call.1} parent=1 // pred_region
      %s142 = ssub.s32 1536, 1536
      %143 = vsyncadd [#allocation9], %s142
      %s144 = sshll.u32 [#allocation10], 4
      %s145 = int_to_ptr.vmem [resolvable:$true] %s144
      %150 = dma.hbm_to_vmem [thread:$0]  %s9, 1536, %s145, [#allocation9], 64, 64, 4
    $region21: #{tpu_custom_call.1} parent=1 // pred_fallthru
      _
    // Predicated region
    $region22: #{tpu_custom_call.1} parent=1 // pred_check
      _
    $region23: #{tpu_custom_call.1} parent=1 // pred_check_branch
      %152 = sbr.rel (0) target = $region25
    $region24: #{tpu_custom_call.1} parent=1 // pred_region
      %s154 = ssub.s32 16, 16
      %155 = vsyncadd [#allocation12], %s154
      %s157 = sshll.u32 [#allocation11], 4
      %s158 = int_to_ptr.vmem [resolvable:$true] %s157
      %160 = dma.hbm_to_vmem [thread:$0]  %s11, 16, %s158, [#allocation12]
    $region25: #{tpu_custom_call.1} parent=1 // pred_fallthru
      _
    // Predicated region
    $region26: #{tpu_custom_call.1} parent=1 // pred_check
      _
    $region27: #{tpu_custom_call.1} parent=1 // pred_check_branch
      %162 = sbr.rel (0) target = $region29
    $region28: #{tpu_custom_call.1} parent=1 // pred_region
      %s164 = ssub.s32 768, 768
      %165 = vsyncadd [#allocation12], %s164
      %s166 = sshll.u32 [#allocation13], 4
      %s167 = int_to_ptr.vmem [resolvable:$true] %s166
      %172 = dma.hbm_to_vmem [thread:$0]  %s13, 768, %s167, [#allocation12], 64, 64, 4
    $region29: #{tpu_custom_call.1} parent=1 // pred_fallthru
      _
    // Predicated region
    $region30: #{tpu_custom_call.1} parent=1 // pred_check
      _
    $region31: #{tpu_custom_call.1} parent=1 // pred_check_branch
      %174 = sbr.rel (0) target = $region33
    $region32: #{tpu_custom_call.1} parent=1 // pred_region
      _
    $region33: #{tpu_custom_call.1} parent=1 // pred_fallthru
      _
    // Predicated region
    $region34: #{tpu_custom_call.1} parent=1 // pred_check
      _
    $region35: #{tpu_custom_call.1} parent=1 // pred_check_branch
      %176 = sbr.rel (0) target = $region37
    $region36: #{tpu_custom_call.1} parent=1 // pred_region
      %s178 = ssub.s32 16, 16
      %179 = vsyncadd [#allocation15], %s178
      %s181 = sshll.u32 [#allocation14], 4
      %s182 = int_to_ptr.vmem [resolvable:$true] %s181
      %184 = dma.hbm_to_vmem [thread:$0]  %s17, 16, %s182, [#allocation15]
    $region37: #{tpu_custom_call.1} parent=1 // pred_fallthru
      _
    // Predicated region
    $region38: #{tpu_custom_call.1} parent=1 // pred_check
      _
    $region39: #{tpu_custom_call.1} parent=1 // pred_check_branch
      %186 = sbr.rel (0) target = $region41
    $region40: #{tpu_custom_call.1} parent=1 // pred_region
      %s188 = ssub.s32 384, 384
      %189 = vsyncadd [#allocation15], %s188
      %s190 = sshll.u32 [#allocation16], 4
      %s191 = int_to_ptr.vmem [resolvable:$true] %s190
      %196 = dma.hbm_to_vmem [thread:$0]  %s19, 384, %s191, [#allocation15], 64, 64, 4
    $region41: #{tpu_custom_call.1} parent=1 // pred_fallthru
      _
    // Predicated region
    $region42: #{tpu_custom_call.1} parent=1 // pred_check
      _
    $region43: #{tpu_custom_call.1} parent=1 // pred_check_branch
      %198 = sbr.rel (0) target = $region45
    $region44: #{tpu_custom_call.1} parent=1 // pred_region
      _
    $region45: #{tpu_custom_call.1} parent=1 // pred_fallthru
      _
    // Predicated region
    $region46: #{tpu_custom_call.1} parent=1 // pred_check
      _
    $region47: #{tpu_custom_call.1} parent=1 // pred_check_branch
      %200 = sbr.rel (0) target = $region49
    $region48: #{tpu_custom_call.1} parent=1 // pred_region
      %s202 = ssub.s32 16, 16
      %203 = vsyncadd [#allocation18], %s202
      %s205 = sshll.u32 [#allocation17], 4
      %s206 = int_to_ptr.vmem [resolvable:$true] %s205
      %208 = dma.hbm_to_vmem [thread:$0]  %s23, 16, %s206, [#allocation18]
    $region49: #{tpu_custom_call.1} parent=1 // pred_fallthru
      _
    // Predicated region
    $region50: #{tpu_custom_call.1} parent=1 // pred_check
      _
    $region51: #{tpu_custom_call.1} parent=1 // pred_check_branch
      %210 = sbr.rel (0) target = $region53
    $region52: #{tpu_custom_call.1} parent=1 // pred_region
      %s212 = ssub.s32 192, 192
      %213 = vsyncadd [#allocation18], %s212
      %s214 = sshll.u32 [#allocation19], 4
      %s215 = int_to_ptr.vmem [resolvable:$true] %s214
      %220 = dma.hbm_to_vmem [thread:$0]  %s25, 192, %s215, [#allocation18], 64, 64, 4
    $region53: #{tpu_custom_call.1} parent=1 // pred_fallthru
      _
    // Predicated region
    $region54: #{tpu_custom_call.1} parent=1 // pred_check
      _
    $region55: #{tpu_custom_call.1} parent=1 // pred_check_branch
      %222 = sbr.rel (0) target = $region57
    $region56: #{tpu_custom_call.1} parent=1 // pred_region
      %s224 = ssub.s32 3072, 3072
      %225 = vsyncadd [#allocation21], %s224
      %s226 = sshll.u32 [#allocation20], 4
      %s227 = int_to_ptr.vmem [resolvable:$true] %s226
      %232 = dma.hbm_to_vmem [thread:$0]  %s27, 3072, %s227, [#allocation21], 64, 64, 4
    $region57: #{tpu_custom_call.1} parent=1 // pred_fallthru
      _
    // Predicated region
    $region58: #{tpu_custom_call.1} parent=1 // pred_check
      _
    $region59: #{tpu_custom_call.1} parent=1 // pred_check_branch
      %234 = sbr.rel (0) target = $region61
    $region60: #{tpu_custom_call.1} parent=1 // pred_region
      %s236 = ssub.s32 16, 16
      %237 = vsyncadd [#allocation21], %s236
      %s239 = sshll.u32 [#allocation22], 4
      %s240 = int_to_ptr.vmem [resolvable:$true] %s239
      %242 = dma.hbm_to_vmem [thread:$0]  %s29, 16, %s240, [#allocation21]
    $region61: #{tpu_custom_call.1} parent=1 // pred_fallthru
      _
    // Predicated region
    $region62: #{tpu_custom_call.1} parent=1 // pred_check
      _
    $region63: #{tpu_custom_call.1} parent=1 // pred_check_branch
      %244 = sbr.rel (0) target = $region65
    $region64: #{tpu_custom_call.1} parent=1 // pred_region
      %s246 = ssub.s32 64, 64
      %247 = vsyncadd [#allocation24], %s246
      %s248 = sshll.u32 [#allocation23], 4
      %s249 = int_to_ptr.vmem [resolvable:$true] %s248
      %254 = dma.hbm_to_vmem [thread:$0]  %s31, 64, %s249, [#allocation24], 16, 16, 1
    $region65: #{tpu_custom_call.1} parent=1 // pred_fallthru
      _
    // Predicated region
    $region66: #{tpu_custom_call.1} parent=1 // pred_check
      _
    $region67: #{tpu_custom_call.1} parent=1 // pred_check_branch
      %256 = sbr.rel (0) target = $region69
    $region68: #{tpu_custom_call.1} parent=1 // pred_region
      _
    $region69: #{tpu_custom_call.1} parent=1 // pred_fallthru
      _
    // Predicated region
    $region70: #{tpu_custom_call.1} parent=1 // pred_check
      _
    $region71: #{tpu_custom_call.1} parent=1 // pred_check_branch
      %258 = sbr.rel (0) target = $region73
    $region72: #{tpu_custom_call.1} parent=1 // pred_region
      _
    $region73: #{tpu_custom_call.1} parent=1 // pred_fallthru
      _
    // Predicated region
    $region74: #{tpu_custom_call.1} parent=1 // pred_check
      _
    $region75: #{tpu_custom_call.1} parent=1 // pred_check_branch
      %260 = sbr.rel (0) target = $region77
    $region76: #{tpu_custom_call.1} parent=1 // pred_region
      %s262 = ssub.s32 16, 16
      %263 = vsyncadd [#allocation24], %s262
      %s265 = sshll.u32 [#allocation25], 4
      %s266 = int_to_ptr.vmem [resolvable:$true] %s265
      %268 = dma.hbm_to_vmem [thread:$0]  %s37, 16, %s266, [#allocation24]
    $region77: #{tpu_custom_call.1} parent=1 // pred_fallthru
      _
    // Predicated region
    $region78: #{tpu_custom_call.1} parent=1 // pred_check
      _
    $region79: #{tpu_custom_call.1} parent=1 // pred_check_branch
      %270 = sbr.rel (0) target = $region81
    $region80: #{tpu_custom_call.1} parent=1 // pred_region
      %s272 = ssub.s32 16, 16
      %273 = vsyncadd [#allocation27], %s272
      %s275 = sshll.u32 [#allocation26], 4
      %s276 = int_to_ptr.vmem [resolvable:$true] %s275
      %278 = dma.hbm_to_vmem [thread:$0]  %s39, 16, %s276, [#allocation27]
    $region81: #{tpu_custom_call.1} parent=1 // pred_fallthru
      _
    // Predicated region
    $region82: #{tpu_custom_call.1} parent=1 // pred_check
      _
    $region83: #{tpu_custom_call.1} parent=1 // pred_check_branch
      %280 = sbr.rel (0) target = $region85
    $region84: #{tpu_custom_call.1} parent=1 // pred_region
      _
    $region85: #{tpu_custom_call.1} parent=1 // pred_fallthru
      _
    // Predicated region
    $region86: #{tpu_custom_call.1} parent=1 // pred_check
      _
    $region87: #{tpu_custom_call.1} parent=1 // pred_check_branch
      %282 = sbr.rel (0) target = $region89
    $region88: #{tpu_custom_call.1} parent=1 // pred_region
      %s284 = ssub.s32 512, 512
      %285 = vsyncadd [#allocation27], %s284
      %s286 = sshll.u32 [#allocation28], 4
      %s287 = int_to_ptr.vmem [resolvable:$true] %s286
      %292 = dma.hbm_to_vmem [thread:$0]  %s43, 512, %s287, [#allocation27], 64, 64, 4
    $region89: #{tpu_custom_call.1} parent=1 // pred_fallthru
      _
    // Predicated region
    $region90: #{tpu_custom_call.1} parent=1 // pred_check
      _
    $region91: #{tpu_custom_call.1} parent=1 // pred_check_branch
      %294 = sbr.rel (0) target = $region93
    $region92: #{tpu_custom_call.1} parent=1 // pred_region
      %s296 = ssub.s32 64, 64
      %297 = vsyncadd [#allocation30], %s296
      %s298 = sshll.u32 [#allocation29], 4
      %s299 = int_to_ptr.vmem [resolvable:$true] %s298
      %304 = dma.hbm_to_vmem [thread:$0]  %s45, 64, %s299, [#allocation30], 16, 16, 1
    $region93: #{tpu_custom_call.1} parent=1 // pred_fallthru
      _
    // Predicated region
    $region94: #{tpu_custom_call.1} parent=1 // pred_check
      _
    $region95: #{tpu_custom_call.1} parent=1 // pred_check_branch
      %306 = sbr.rel (0) target = $region97
    $region96: #{tpu_custom_call.1} parent=1 // pred_region
      %s308 = ssub.s32 192, 192
      %309 = vsyncadd [#allocation30], %s308
      %s310 = sshll.u32 [#allocation31], 4
      %s311 = int_to_ptr.vmem [resolvable:$true] %s310
      %316 = dma.hbm_to_vmem [thread:$0]  %s47, 192, %s311, [#allocation30], 64, 64, 4
    $region97: #{tpu_custom_call.1} parent=1 // pred_fallthru
      _
    // Predicated region
    $region98: #{tpu_custom_call.1} parent=1 // pred_check
      _
    $region99: #{tpu_custom_call.1} parent=1 // pred_check_branch
      %318 = sbr.rel (0) target = $region101
    $region100: #{tpu_custom_call.1} parent=1 // pred_region
      _
    $region101: #{tpu_custom_call.1} parent=1 // pred_fallthru
      _
    // Predicated region
    $region102: #{tpu_custom_call.1} parent=1 // pred_check
      _
    $region103: #{tpu_custom_call.1} parent=1 // pred_check_branch
      %320 = sbr.rel (0) target = $region105
    $region104: #{tpu_custom_call.1} parent=1 // pred_region
      %s322 = ssub.s32 32, 32
      %323 = vsyncadd [#allocation33], %s322
      %s325 = sshll.u32 [#allocation32], 4
      %s326 = int_to_ptr.vmem [resolvable:$true] %s325
      %328 = dma.hbm_to_vmem [thread:$0]  %s51, 32, %s326, [#allocation33]
    $region105: #{tpu_custom_call.1} parent=1 // pred_fallthru
      _
    // Predicated region
    $region106: #{tpu_custom_call.1} parent=1 // pred_check
      _
    $region107: #{tpu_custom_call.1} parent=1 // pred_check_branch
      %330 = sbr.rel (0) target = $region109
    $region108: #{tpu_custom_call.1} parent=1 // pred_region
      _
    $region109: #{tpu_custom_call.1} parent=1 // pred_fallthru
      _
    // Predicated region
    $region110: #{tpu_custom_call.1} parent=1 // pred_check
      _
    $region111: #{tpu_custom_call.1} parent=1 // pred_check_branch
      %332 = sbr.rel (0) target = $region113
    $region112: #{tpu_custom_call.1} parent=1 // pred_region
      _
    $region113: #{tpu_custom_call.1} parent=1 // pred_fallthru
      _
    // Predicated region
    $region114: #{tpu_custom_call.1} parent=1 // pred_check
      _
    $region115: #{tpu_custom_call.1} parent=1 // pred_check_branch
      %334 = sbr.rel (0) target = $region117
    $region116: #{tpu_custom_call.1} parent=1 // pred_region
      %s336 = ssub.s32 384, 384
      %337 = vsyncadd [#allocation33], %s336
      %s338 = sshll.u32 [#allocation34], 4
      %s339 = int_to_ptr.vmem [resolvable:$true] %s338
      %344 = dma.hbm_to_vmem [thread:$0]  %s57, 384, %s339, [#allocation33], 64, 64, 4
    $region117: #{tpu_custom_call.1} parent=1 // pred_fallthru
      _
    // Predicated region
    $region118: #{tpu_custom_call.1} parent=1 // pred_check
      _
    $region119: #{tpu_custom_call.1} parent=1 // pred_check_branch
      %346 = sbr.rel (0) target = $region121
    $region120: #{tpu_custom_call.1} parent=1 // pred_region
      %s348 = ssub.s32 3072, 3072
      %349 = vsyncadd [#allocation36], %s348
      %s350 = sshll.u32 [#allocation35], 4
      %s351 = int_to_ptr.vmem [resolvable:$true] %s350
      %356 = dma.hbm_to_vmem [thread:$0]  %s59, 3072, %s351, [#allocation36], 64, 64, 4
    $region121: #{tpu_custom_call.1} parent=1 // pred_fallthru
      _
    // Predicated region
    $region122: #{tpu_custom_call.1} parent=1 // pred_check
      _
    $region123: #{tpu_custom_call.1} parent=1 // pred_check_branch
      %358 = sbr.rel (0) target = $region125
    $region124: #{tpu_custom_call.1} parent=1 // pred_region
      _
    $region125: #{tpu_custom_call.1} parent=1 // pred_fallthru
      _
    // Predicated region
    $region126: #{tpu_custom_call.1} parent=1 // pred_check
      _
    $region127: #{tpu_custom_call.1} parent=1 // pred_check_branch
      %360 = sbr.rel (0) target = $region129
    $region128: #{tpu_custom_call.1} parent=1 // pred_region
      _
    $region129: #{tpu_custom_call.1} parent=1 // pred_fallthru
      _
    // Predicated region
    $region130: #{tpu_custom_call.1} parent=1 // pred_check
      _
    $region131: #{tpu_custom_call.1} parent=1 // pred_check_branch
      %362 = sbr.rel (0) target = $region133
    $region132: #{tpu_custom_call.1} parent=1 // pred_region
      _
    $region133: #{tpu_custom_call.1} parent=1 // pred_fallthru
      _
    // Predicated region
    $region134: #{tpu_custom_call.1} parent=1 // pred_check
      _
    $region135: #{tpu_custom_call.1} parent=1 // pred_check_branch
      %364 = sbr.rel (0) target = $region137
    $region136: #{tpu_custom_call.1} parent=1 // pred_region
      _
    $region137: #{tpu_custom_call.1} parent=1 // pred_fallthru
      _
    // Predicated region
    $region138: #{tpu_custom_call.1} parent=1 // pred_check
      _
    $region139: #{tpu_custom_call.1} parent=1 // pred_check_branch
      %366 = sbr.rel (0) target = $region141
    $region140: #{tpu_custom_call.1} parent=1 // pred_region
      %367 = dma.done [#allocation3], 2048
    $region141: #{tpu_custom_call.1} parent=1 // pred_fallthru
      _
    // Predicated region
    $region142: #{tpu_custom_call.1} parent=1 // pred_check
      _
    $region143: #{tpu_custom_call.1} parent=1 // pred_check_branch
      %369 = sbr.rel (0) target = $region145
    $region144: #{tpu_custom_call.1} parent=1 // pred_region
      %370 = dma.done [#allocation6], 32
    $region145: #{tpu_custom_call.1} parent=1 // pred_fallthru
      _
    // Predicated region
    $region146: #{tpu_custom_call.1} parent=1 // pred_check
      _
    $region147: #{tpu_custom_call.1} parent=1 // pred_check_branch
      %372 = sbr.rel (0) target = $region149
    $region148: #{tpu_custom_call.1} parent=1 // pred_region
      %373 = dma.done [#allocation6], 512
    $region149: #{tpu_custom_call.1} parent=1 // pred_fallthru
      _
    // Predicated region
    $region150: #{tpu_custom_call.1} parent=1 // pred_check
      _
    $region151: #{tpu_custom_call.1} parent=1 // pred_check_branch
      %375 = sbr.rel (0) target = $region153
    $region152: #{tpu_custom_call.1} parent=1 // pred_region
      %376 = dma.done [#allocation9], 768
    $region153: #{tpu_custom_call.1} parent=1 // pred_fallthru
      _
    // Predicated region
    $region154: #{tpu_custom_call.1} parent=1 // pred_check
      _
    $region155: #{tpu_custom_call.1} parent=1 // pred_check_branch
      %378 = sbr.rel (0) target = $region157
    $region156: #{tpu_custom_call.1} parent=1 // pred_region
      %379 = dma.done [#allocation9], 1536
    $region157: #{tpu_custom_call.1} parent=1 // pred_fallthru
      _
    // Predicated region
    $region158: #{tpu_custom_call.1} parent=1 // pred_check
      _
    $region159: #{tpu_custom_call.1} parent=1 // pred_check_branch
      %381 = sbr.rel (0) target = $region161
    $region160: #{tpu_custom_call.1} parent=1 // pred_region
      %382 = dma.done [#allocation12], 16
    $region161: #{tpu_custom_call.1} parent=1 // pred_fallthru
      _
    // Predicated region
    $region162: #{tpu_custom_call.1} parent=1 // pred_check
      _
    $region163: #{tpu_custom_call.1} parent=1 // pred_check_branch
      %384 = sbr.rel (0) target = $region165
    $region164: #{tpu_custom_call.1} parent=1 // pred_region
      %385 = dma.done [#allocation12], 768
    $region165: #{tpu_custom_call.1} parent=1 // pred_fallthru
      _
    // Predicated region
    $region166: #{tpu_custom_call.1} parent=1 // pred_check
      _
    $region167: #{tpu_custom_call.1} parent=1 // pred_check_branch
      %387 = sbr.rel (0) target = $region169
    $region168: #{tpu_custom_call.1} parent=1 // pred_region
      %388 = dma.done [#allocation15], 16
    $region169: #{tpu_custom_call.1} parent=1 // pred_fallthru
      _
    // Predicated region
    $region170: #{tpu_custom_call.1} parent=1 // pred_check
      _
    $region171: #{tpu_custom_call.1} parent=1 // pred_check_branch
      %390 = sbr.rel (0) target = $region173
    $region172: #{tpu_custom_call.1} parent=1 // pred_region
      %391 = dma.done [#allocation15], 384
    $region173: #{tpu_custom_call.1} parent=1 // pred_fallthru
      _
    // Predicated region
    $region174: #{tpu_custom_call.1} parent=1 // pred_check
      _
    $region175: #{tpu_custom_call.1} parent=1 // pred_check_branch
      %393 = sbr.rel (0) target = $region177
    $region176: #{tpu_custom_call.1} parent=1 // pred_region
      %394 = dma.done [#allocation18], 16
    $region177: #{tpu_custom_call.1} parent=1 // pred_fallthru
      _
    // Predicated region
    $region178: #{tpu_custom_call.1} parent=1 // pred_check
      _
    $region179: #{tpu_custom_call.1} parent=1 // pred_check_branch
      %396 = sbr.rel (0) target = $region181
    $region180: #{tpu_custom_call.1} parent=1 // pred_region
      %397 = dma.done [#allocation18], 192
    $region181: #{tpu_custom_call.1} parent=1 // pred_fallthru
      _
    // Predicated region
    $region182: #{tpu_custom_call.1} parent=1 // pred_check
      _
    $region183: #{tpu_custom_call.1} parent=1 // pred_check_branch
      %399 = sbr.rel (0) target = $region185
    $region184: #{tpu_custom_call.1} parent=1 // pred_region
      %400 = dma.done [#allocation21], 3072
    $region185: #{tpu_custom_call.1} parent=1 // pred_fallthru
      _
    // Predicated region
    $region186: #{tpu_custom_call.1} parent=1 // pred_check
      _
    $region187: #{tpu_custom_call.1} parent=1 // pred_check_branch
      %402 = sbr.rel (0) target = $region189
    $region188: #{tpu_custom_call.1} parent=1 // pred_region
      %403 = dma.done [#allocation21], 16
    $region189: #{tpu_custom_call.1} parent=1 // pred_fallthru
      _
    // Predicated region
    $region190: #{tpu_custom_call.1} parent=1 // pred_check
      _
    $region191: #{tpu_custom_call.1} parent=1 // pred_check_branch
      %405 = sbr.rel (0) target = $region193
    $region192: #{tpu_custom_call.1} parent=1 // pred_region
      %406 = dma.done [#allocation24], 64
    $region193: #{tpu_custom_call.1} parent=1 // pred_fallthru
      _
    // Predicated region
    $region194: #{tpu_custom_call.1} parent=1 // pred_check
      _
    $region195: #{tpu_custom_call.1} parent=1 // pred_check_branch
      %408 = sbr.rel (0) target = $region197
    $region196: #{tpu_custom_call.1} parent=1 // pred_region
      %409 = dma.done [#allocation24], 16
    $region197: #{tpu_custom_call.1} parent=1 // pred_fallthru
      _
    // Predicated region
    $region198: #{tpu_custom_call.1} parent=1 // pred_check
      _
    $region199: #{tpu_custom_call.1} parent=1 // pred_check_branch
      %411 = sbr.rel (0) target = $region201
    $region200: #{tpu_custom_call.1} parent=1 // pred_region
      %412 = dma.done [#allocation27], 16
    $region201: #{tpu_custom_call.1} parent=1 // pred_fallthru
      _
    // Predicated region
    $region202: #{tpu_custom_call.1} parent=1 // pred_check
      _
    $region203: #{tpu_custom_call.1} parent=1 // pred_check_branch
      %414 = sbr.rel (0) target = $region205
    $region204: #{tpu_custom_call.1} parent=1 // pred_region
      %415 = dma.done [#allocation27], 512
    $region205: #{tpu_custom_call.1} parent=1 // pred_fallthru
      _
    // Predicated region
    $region206: #{tpu_custom_call.1} parent=1 // pred_check
      _
    $region207: #{tpu_custom_call.1} parent=1 // pred_check_branch
      %417 = sbr.rel (0) target = $region209
    $region208: #{tpu_custom_call.1} parent=1 // pred_region
      %418 = dma.done [#allocation30], 64
    $region209: #{tpu_custom_call.1} parent=1 // pred_fallthru
      _
    // Predicated region
    $region210: #{tpu_custom_call.1} parent=1 // pred_check
      _
    $region211: #{tpu_custom_call.1} parent=1 // pred_check_branch
      %420 = sbr.rel (0) target = $region213
    $region212: #{tpu_custom_call.1} parent=1 // pred_region
      %421 = dma.done [#allocation30], 192
    $region213: #{tpu_custom_call.1} parent=1 // pred_fallthru
      _
    // Predicated region
    $region214: #{tpu_custom_call.1} parent=1 // pred_check
      _
    $region215: #{tpu_custom_call.1} parent=1 // pred_check_branch
      %423 = sbr.rel (0) target = $region217
    $region216: #{tpu_custom_call.1} parent=1 // pred_region
      %424 = dma.done [#allocation33], 32
    $region217: #{tpu_custom_call.1} parent=1 // pred_fallthru
      _
    // Predicated region
    $region218: #{tpu_custom_call.1} parent=1 // pred_check
      _
    $region219: #{tpu_custom_call.1} parent=1 // pred_check_branch
      %426 = sbr.rel (0) target = $region221
    $region220: #{tpu_custom_call.1} parent=1 // pred_region
      %427 = dma.done [#allocation33], 384
    $region221: #{tpu_custom_call.1} parent=1 // pred_fallthru
      _
    // Predicated region
    $region222: #{tpu_custom_call.1} parent=1 // pred_check
      _
    $region223: #{tpu_custom_call.1} parent=1 // pred_check_branch
      %429 = sbr.rel (0) target = $region225
    $region224: #{tpu_custom_call.1} parent=1 // pred_region
      %430 = dma.done [#allocation36], 3072
    $region225: #{tpu_custom_call.1} parent=1 // pred_fallthru
      _
    %v432 = vld [vmem:[#allocation2] sm:$0xff]
    %v433 = vld [vmem:[#allocation2 + $0x8] sm:$0xff]
    %v434 = vld [vmem:[#allocation2 + $0x40] sm:$0xff]
    %v435 = vld [vmem:[#allocation2 + $0x48] sm:$0xff]
    %v436 = vld [vmem:[#allocation7] sm:$0xf]
    %v437 = vld [vmem:[#allocation7 + $0x4] sm:$0xf]
    %v438 = vpack.c.bf16 %v433, %v432
    %v439 = vpack.c.bf16 %v435, %v434
    %s440 = scalar_lea.vmem [#allocation2], 16
    %v441 = vld [vmem:[%s440] sm:$0xff]
    %v442 = vld [vmem:[%s440 + $0x8] sm:$0xff]
    %v443 = vld [vmem:[%s440 + $0x40] sm:$0xff]
    %v444 = vld [vmem:[%s440 + $0x48] sm:$0xff]
    %s445 = scalar_lea.vmem [#allocation7], 8
    %v446 = vld [vmem:[%s445] sm:$0xf]
    %v447 = vld [vmem:[%s445 + $0x4] sm:$0xf]
    %v448 = vpack.c.bf16 %v442, %v441
    %v449 = vpack.c.bf16 %v444, %v443
    %v452 = vunpack.c.l.b16 %v446
    %v453 = vunpack.c.l.b16 %v447
    %v454 = vpack.c.b16 %v453, %v452
    %vm456 = vcmask 130048
    %v458 = vsel %vm456, %v448, 0
    %v461 = vsel %vm456, %v449, 0
    %463 = vmatprep.subr.bf16.mxu0 0
    %464 = vmatpush1.bf16.msra.mxu0 %v454
    %465 = vmatprep.subr.bf16.mxu0 0
    %466 = vmatpush1.bf16.msra.mxu0 0
    %467 = vmatprep.subr.bf16.mxu0 0
    %468 = vmatpush1.bf16.msra.mxu0 0
    %469 = vmatprep.subr.bf16.mxu0 0
    %470 = vmatpush1.bf16.msra.mxu0 0
    %471 = vmatprep.subr.bf16.mxu0 0
    %472 = vmatpush1.bf16.msra.mxu0 0
    %473 = vmatprep.subr.bf16.mxu0 0
    %474 = vmatpush1.bf16.msra.mxu0 0
    %475 = vmatprep.subr.bf16.mxu0 0
    %476 = vmatpush1.bf16.msra.mxu0 0
    %477 = vmatprep.subr.bf16.mxu0 0
    %478 = vmatpush1.bf16.msra.mxu0 0
    %479 = vmatprep.subr.bf16.mxu0 0
    %480 = vmatpush1.bf16.msra.mxu0 0
    %481 = vmatprep.subr.bf16.mxu0 0
    %482 = vmatpush1.bf16.msra.mxu0 0
    %483 = vmatprep.subr.bf16.mxu0 0
    %484 = vmatpush1.bf16.msra.mxu0 0
    %485 = vmatprep.subr.bf16.mxu0 0
    %486 = vmatpush1.bf16.msra.mxu0 0
    %487 = vmatprep.subr.bf16.mxu0 0
    %488 = vmatpush1.bf16.msra.mxu0 0
    %489 = vmatprep.subr.bf16.mxu0 0
    %490 = vmatpush1.bf16.msra.mxu0 0
    %491 = vmatprep.subr.bf16.mxu0 0
    %492 = vmatpush1.bf16.msra.mxu0 0
    %493 = vmatprep.subr.bf16.mxu0 0
    %494 = vmatpush1.bf16.msra.mxu0 0
    %495 = vmatprep.mubr.bf16.mxu0 0
    %496 = vmatmul.mubr.bf16.gmra.mrb[0].mxu0 %v458
    %v497 = vpop.f32.mrb[0].mxu0
    %v498 = vadd.f32 0.0, %v497
    %v499 = vpop.f32.mrb[0].mxu0
    %v500 = vpop.f32.mrb[0].mxu0
    %v501 = vadd.f32 0.0, %v500
    %v502 = vpop.f32.mrb[0].mxu0
    %503 = vmatprep.mubr.bf16.mxu0 0
    %504 = vmatmul.mubr.bf16.gmra.mrb[0].mxu0 %v461
    %v505 = vpop.f32.mrb[0].mxu0
    %v506 = vadd.f32 0.0, %v505
    %v507 = vpop.f32.mrb[0].mxu0
    %v508 = vpop.f32.mrb[0].mxu0
    %v509 = vadd.f32 0.0, %v508
    %v510 = vpop.f32.mrb[0].mxu0
    %511 = vdwg.mxu0
    %v514 = vunpack.c.l.b16 %v436
    %v515 = vunpack.c.l.b16 %v437
    %v516 = vpack.c.b16 %v515, %v514
    %v519 = vsel %vm456, %v438, 0
    %v522 = vsel %vm456, %v439, 0
    %524 = vmatprep.subr.bf16.mxu0 0
    %525 = vmatpush1.bf16.msra.mxu0 %v516
    %526 = vmatprep.subr.bf16.mxu0 0
    %527 = vmatpush1.bf16.msra.mxu0 0
    %528 = vmatprep.subr.bf16.mxu0 0
    %529 = vmatpush1.bf16.msra.mxu0 0
    %530 = vmatprep.subr.bf16.mxu0 0
    %531 = vmatpush1.bf16.msra.mxu0 0
    %532 = vmatprep.subr.bf16.mxu0 0
    %533 = vmatpush1.bf16.msra.mxu0 0
    %534 = vmatprep.subr.bf16.mxu0 0
    %535 = vmatpush1.bf16.msra.mxu0 0
    %536 = vmatprep.subr.bf16.mxu0 0
    %537 = vmatpush1.bf16.msra.mxu0 0
    %538 = vmatprep.subr.bf16.mxu0 0
    %539 = vmatpush1.bf16.msra.mxu0 0
    %540 = vmatprep.subr.bf16.mxu0 0
    %541 = vmatpush1.bf16.msra.mxu0 0
    %542 = vmatprep.subr.bf16.mxu0 0
    %543 = vmatpush1.bf16.msra.mxu0 0
    %544 = vmatprep.subr.bf16.mxu0 0
    %545 = vmatpush1.bf16.msra.mxu0 0
    %546 = vmatprep.subr.bf16.mxu0 0
    %547 = vmatpush1.bf16.msra.mxu0 0
    %548 = vmatprep.subr.bf16.mxu0 0
    %549 = vmatpush1.bf16.msra.mxu0 0
    %550 = vmatprep.subr.bf16.mxu0 0
    %551 = vmatpush1.bf16.msra.mxu0 0
    %552 = vmatprep.subr.bf16.mxu0 0
    %553 = vmatpush1.bf16.msra.mxu0 0
    %554 = vmatprep.subr.bf16.mxu0 0
    %555 = vmatpush1.bf16.msra.mxu0 0
    %556 = vmatprep.mubr.bf16.mxu0 0
    %557 = vmatmul.mubr.bf16.gmra.mrb[0].mxu0 %v519
    %v558 = vpop.f32.mrb[0].mxu0
    %v559 = vadd.f32 %v498, %v558
    %v560 = vpop.f32.mrb[0].mxu0
    %v561 = vpop.f32.mrb[0].mxu0
    %v562 = vadd.f32 %v501, %v561
    %v563 = vpop.f32.mrb[0].mxu0
    %564 = vmatprep.mubr.bf16.mxu0 0
    %565 = vmatmul.mubr.bf16.gmra.mrb[0].mxu0 %v522
    %v566 = vpop.f32.mrb[0].mxu0
    %v567 = vadd.f32 %v506, %v566
    %v568 = vpop.f32.mrb[0].mxu0
    %v569 = vpop.f32.mrb[0].mxu0
    %v570 = vadd.f32 %v509, %v569
    %v571 = vpop.f32.mrb[0].mxu0
    %572 = vdwg.mxu0
    %s573 = scalar_lea.vmem [#allocation2], 32
    %v574 = vld [vmem:[%s573] sm:$0xff]
    %v575 = vld [vmem:[%s573 + $0x8] sm:$0xff]
    %v576 = vld [vmem:[%s573 + $0x40] sm:$0xff]
    %v577 = vld [vmem:[%s573 + $0x48] sm:$0xff]
    %s578 = scalar_lea.vmem [#allocation7], 16
    %v579 = vld [vmem:[%s578] sm:$0xf]
    %v580 = vld [vmem:[%s578 + $0x4] sm:$0xf]
    %v581 = vpack.c.bf16 %v575, %v574
    %v582 = vpack.c.bf16 %v577, %v576
    %v585 = vunpack.c.l.b16 %v579
    %v586 = vunpack.c.l.b16 %v580
    %v587 = vpack.c.b16 %v586, %v585
    %v590 = vsel %vm456, %v581, 0
    %v593 = vsel %vm456, %v582, 0
    %595 = vmatprep.subr.bf16.mxu0 0
    %596 = vmatpush1.bf16.msra.mxu0 %v587
    %597 = vmatprep.subr.bf16.mxu0 0
    %598 = vmatpush1.bf16.msra.mxu0 0
    %599 = vmatprep.subr.bf16.mxu0 0
    %600 = vmatpush1.bf16.msra.mxu0 0
    %601 = vmatprep.subr.bf16.mxu0 0
    %602 = vmatpush1.bf16.msra.mxu0 0
    %603 = vmatprep.subr.bf16.mxu0 0
    %604 = vmatpush1.bf16.msra.mxu0 0
    %605 = vmatprep.subr.bf16.mxu0 0
    %606 = vmatpush1.bf16.msra.mxu0 0
    %607 = vmatprep.subr.bf16.mxu0 0
    %608 = vmatpush1.bf16.msra.mxu0 0
    %609 = vmatprep.subr.bf16.mxu0 0
    %610 = vmatpush1.bf16.msra.mxu0 0
    %611 = vmatprep.subr.bf16.mxu0 0
    %612 = vmatpush1.bf16.msra.mxu0 0
    %613 = vmatprep.subr.bf16.mxu0 0
    %614 = vmatpush1.bf16.msra.mxu0 0
    %615 = vmatprep.subr.bf16.mxu0 0
    %616 = vmatpush1.bf16.msra.mxu0 0
    %617 = vmatprep.subr.bf16.mxu0 0
    %618 = vmatpush1.bf16.msra.mxu0 0
    %619 = vmatprep.subr.bf16.mxu0 0
    %620 = vmatpush1.bf16.msra.mxu0 0
    %621 = vmatprep.subr.bf16.mxu0 0
    %622 = vmatpush1.bf16.msra.mxu0 0
    %623 = vmatprep.subr.bf16.mxu0 0
    %624 = vmatpush1.bf16.msra.mxu0 0
    %625 = vmatprep.subr.bf16.mxu0 0
    %626 = vmatpush1.bf16.msra.mxu0 0
    %627 = vmatprep.mubr.bf16.mxu0 0
    %628 = vmatmul.mubr.bf16.gmra.mrb[0].mxu0 %v590
    %v629 = vpop.f32.mrb[0].mxu0
    %v630 = vadd.f32 0.0, %v629
    %v631 = vpop.f32.mrb[0].mxu0
    %v632 = vpop.f32.mrb[0].mxu0
    %v633 = vadd.f32 0.0, %v632
    %v634 = vpop.f32.mrb[0].mxu0
    %635 = vmatprep.mubr.bf16.mxu0 0
    %636 = vmatmul.mubr.bf16.gmra.mrb[0].mxu0 %v593
    %v637 = vpop.f32.mrb[0].mxu0
    %v638 = vadd.f32 0.0, %v637
    %v639 = vpop.f32.mrb[0].mxu0
    %v640 = vpop.f32.mrb[0].mxu0
    %v641 = vadd.f32 0.0, %v640
    %v642 = vpop.f32.mrb[0].mxu0
    %643 = vdwg.mxu0
    %v644 = vadd.f32 %v559, %v630
    %v645 = vadd.f32 %v562, %v633
    %v646 = vadd.f32 %v567, %v638
    %v647 = vadd.f32 %v570, %v641
    %s648 = scalar_lea.vmem [#allocation2], 48
    %v649 = vld [vmem:[%s648] sm:$0xff]
    %v650 = vld [vmem:[%s648 + $0x8] sm:$0xff]
    %v651 = vld [vmem:[%s648 + $0x40] sm:$0xff]
    %v652 = vld [vmem:[%s648 + $0x48] sm:$0xff]
    %s653 = scalar_lea.vmem [#allocation7], 24
    %v654 = vld [vmem:[%s653] sm:$0xf]
    %v655 = vld [vmem:[%s653 + $0x4] sm:$0xf]
    %v656 = vpack.c.bf16 %v650, %v649
    %v657 = vpack.c.bf16 %v652, %v651
    %v660 = vunpack.c.l.b16 %v654
    %v661 = vunpack.c.l.b16 %v655
    %v662 = vpack.c.b16 %v661, %v660
    %v665 = vsel %vm456, %v656, 0
    %v668 = vsel %vm456, %v657, 0
    %670 = vmatprep.subr.bf16.mxu0 0
    %671 = vmatpush1.bf16.msra.mxu0 %v662
    %672 = vmatprep.subr.bf16.mxu0 0
    %673 = vmatpush1.bf16.msra.mxu0 0
    %674 = vmatprep.subr.bf16.mxu0 0
    %675 = vmatpush1.bf16.msra.mxu0 0
    %676 = vmatprep.subr.bf16.mxu0 0
    %677 = vmatpush1.bf16.msra.mxu0 0
    %678 = vmatprep.subr.bf16.mxu0 0
    %679 = vmatpush1.bf16.msra.mxu0 0
    %680 = vmatprep.subr.bf16.mxu0 0
    %681 = vmatpush1.bf16.msra.mxu0 0
    %682 = vmatprep.subr.bf16.mxu0 0
    %683 = vmatpush1.bf16.msra.mxu0 0
    %684 = vmatprep.subr.bf16.mxu0 0
    %685 = vmatpush1.bf16.msra.mxu0 0
    %686 = vmatprep.subr.bf16.mxu0 0
    %687 = vmatpush1.bf16.msra.mxu0 0
    %688 = vmatprep.subr.bf16.mxu0 0
    %689 = vmatpush1.bf16.msra.mxu0 0
    %690 = vmatprep.subr.bf16.mxu0 0
    %691 = vmatpush1.bf16.msra.mxu0 0
    %692 = vmatprep.subr.bf16.mxu0 0
    %693 = vmatpush1.bf16.msra.mxu0 0
    %694 = vmatprep.subr.bf16.mxu0 0
    %695 = vmatpush1.bf16.msra.mxu0 0
    %696 = vmatprep.subr.bf16.mxu0 0
    %697 = vmatpush1.bf16.msra.mxu0 0
    %698 = vmatprep.subr.bf16.mxu0 0
    %699 = vmatpush1.bf16.msra.mxu0 0
    %700 = vmatprep.subr.bf16.mxu0 0
    %701 = vmatpush1.bf16.msra.mxu0 0
    %702 = vmatprep.mubr.bf16.mxu0 0
    %703 = vmatmul.mubr.bf16.gmra.mrb[0].mxu0 %v665
    %v704 = vpop.f32.mrb[0].mxu0
    %v705 = vadd.f32 0.0, %v704
    %v706 = vpop.f32.mrb[0].mxu0
    %v707 = vpop.f32.mrb[0].mxu0
    %v708 = vadd.f32 0.0, %v707
    %v709 = vpop.f32.mrb[0].mxu0
    %710 = vmatprep.mubr.bf16.mxu0 0
    %711 = vmatmul.mubr.bf16.gmra.mrb[0].mxu0 %v668
    %v712 = vpop.f32.mrb[0].mxu0
    %v713 = vadd.f32 0.0, %v712
    %v714 = vpop.f32.mrb[0].mxu0
    %v715 = vpop.f32.mrb[0].mxu0
    %v716 = vadd.f32 0.0, %v715
    %v717 = vpop.f32.mrb[0].mxu0
    %718 = vdwg.mxu0
    %v719 = vadd.f32 %v644, %v705
    %v720 = vadd.f32 %v645, %v708
    %v721 = vadd.f32 %v646, %v713
    %v722 = vadd.f32 %v647, %v716
    %v723 = vld [vmem:[#allocation8] sm:$0xf]
    %v724 = vld [vmem:[#allocation8 + $0x4] sm:$0xf]
    %v725 = vld [vmem:[#allocation8 + $0x8] sm:$0xf]
    %v726 = vld [vmem:[#allocation8 + $0xc] sm:$0xf]
    %v727 = vpack.c.bf16 %v720, %v719
    %v728 = vpack.c.bf16 %v722, %v721
    %v733 = vunpack.c.l.b16 %v723
    %v734 = vunpack.c.l.b16 %v724
    %v735 = vunpack.c.l.b16 %v725
    %v736 = vunpack.c.l.b16 %v726
    %v737 = vpack.c.b16 %v734, %v733
    %v738 = vpack.c.b16 %v736, %v735
    %vm739 = vcmask 261120
    %v741 = vsel %vm739, %v737, 0
    %v744 = vsel %vm739, %v738, 0
    %746 = vmatprep.subr.bf16.mxu0 0
    %747 = vmatpush1.bf16.msra.mxu0 %v727
    %748 = vmatprep.subr.bf16.mxu0 0
    %749 = vmatpush1.bf16.msra.mxu0 %v728
    %750 = vmatprep.subr.bf16.mxu0 0
    %751 = vmatpush1.bf16.msra.mxu0 0
    %752 = vmatprep.subr.bf16.mxu0 0
    %753 = vmatpush1.bf16.msra.mxu0 0
    %754 = vmatprep.subr.bf16.mxu0 0
    %755 = vmatpush1.bf16.msra.mxu0 0
    %756 = vmatprep.subr.bf16.mxu0 0
    %757 = vmatpush1.bf16.msra.mxu0 0
    %758 = vmatprep.subr.bf16.mxu0 0
    %759 = vmatpush1.bf16.msra.mxu0 0
    %760 = vmatprep.subr.bf16.mxu0 0
    %761 = vmatpush1.bf16.msra.mxu0 0
    %762 = vmatprep.subr.bf16.mxu0 0
    %763 = vmatpush1.bf16.msra.mxu0 0
    %764 = vmatprep.subr.bf16.mxu0 0
    %765 = vmatpush1.bf16.msra.mxu0 0
    %766 = vmatprep.subr.bf16.mxu0 0
    %767 = vmatpush1.bf16.msra.mxu0 0
    %768 = vmatprep.subr.bf16.mxu0 0
    %769 = vmatpush1.bf16.msra.mxu0 0
    %770 = vmatprep.subr.bf16.mxu0 0
    %771 = vmatpush1.bf16.msra.mxu0 0
    %772 = vmatprep.subr.bf16.mxu0 0
    %773 = vmatpush1.bf16.msra.mxu0 0
    %774 = vmatprep.subr.bf16.mxu0 0
    %775 = vmatpush1.bf16.msra.mxu0 0
    %776 = vmatprep.subr.bf16.mxu0 0
    %777 = vmatpush1.bf16.msra.mxu0 0
    %778 = vmatprep.mubr.bf16.mxu0 0
    %779 = vmatmul.mubr.bf16.gmra.mrb[0].mxu0 %v741
    %v780 = vpop.f32.mrb[0].mxu0
    %v781 = vadd.f32 0.0, %v780
    %v782 = vpop.f32.mrb[0].mxu0
    %v783 = vpop.f32.mrb[0].mxu0
    %v784 = vadd.f32 0.0, %v783
    %v785 = vpop.f32.mrb[0].mxu0
    %786 = vmatprep.mubr.bf16.mxu0 0
    %787 = vmatmul.mubr.bf16.gmra.mrb[0].mxu0 %v744
    %v788 = vpop.f32.mrb[0].mxu0
    %v789 = vadd.f32 0.0, %v788
    %v790 = vpop.f32.mrb[0].mxu0
    %v791 = vpop.f32.mrb[0].mxu0
    %v792 = vadd.f32 0.0, %v791
    %v793 = vpop.f32.mrb[0].mxu0
    %794 = vdwg.mxu0
    %v795 = vld [vmem:[#allocation10] sm:$0xf]
    %v796 = vld [vmem:[#allocation10 + $0x4] sm:$0xf]
    %v797 = vld [vmem:[#allocation10 + $0x8] sm:$0xf]
    %v798 = vld [vmem:[#allocation10 + $0xc] sm:$0xf]
    %v799 = vld [vmem:[#allocation10 + $0x10] sm:$0xf]
    %v800 = vld [vmem:[#allocation10 + $0x14] sm:$0xf]
    %v801 = vld [vmem:[#allocation10 + $0x18] sm:$0xf]
    %v802 = vld [vmem:[#allocation10 + $0x1c] sm:$0xf]
    %v803 = vpack.c.bf16 %v784, %v781
    %v804 = vpack.c.bf16 %v792, %v789
    %s805 = scalar_lea.vmem [#allocation8], 16
    %v806 = vld [vmem:[%s805] sm:$0xf]
    %v807 = vld [vmem:[%s805 + $0x4] sm:$0xf]
    %v808 = vld [vmem:[%s805 + $0x8] sm:$0xf]
    %v809 = vld [vmem:[%s805 + $0xc] sm:$0xf]
    %v814 = vunpack.c.l.b16 %v806
    %v815 = vunpack.c.l.b16 %v807
    %v816 = vunpack.c.l.b16 %v808
    %v817 = vunpack.c.l.b16 %v809
    %v818 = vpack.c.b16 %v815, %v814
    %v819 = vpack.c.b16 %v817, %v816
    %v821 = vsel %vm739, %v818, 0
    %v824 = vsel %vm739, %v819, 0
    %826 = vmatprep.subr.bf16.mxu0 0
    %827 = vmatpush1.bf16.msra.mxu0 %v727
    %828 = vmatprep.subr.bf16.mxu0 0
    %829 = vmatpush1.bf16.msra.mxu0 %v728
    %830 = vmatprep.subr.bf16.mxu0 0
    %831 = vmatpush1.bf16.msra.mxu0 0
    %832 = vmatprep.subr.bf16.mxu0 0
    %833 = vmatpush1.bf16.msra.mxu0 0
    %834 = vmatprep.subr.bf16.mxu0 0
    %835 = vmatpush1.bf16.msra.mxu0 0
    %836 = vmatprep.subr.bf16.mxu0 0
    %837 = vmatpush1.bf16.msra.mxu0 0
    %838 = vmatprep.subr.bf16.mxu0 0
    %839 = vmatpush1.bf16.msra.mxu0 0
    %840 = vmatprep.subr.bf16.mxu0 0
    %841 = vmatpush1.bf16.msra.mxu0 0
    %842 = vmatprep.subr.bf16.mxu0 0
    %843 = vmatpush1.bf16.msra.mxu0 0
    %844 = vmatprep.subr.bf16.mxu0 0
    %845 = vmatpush1.bf16.msra.mxu0 0
    %846 = vmatprep.subr.bf16.mxu0 0
    %847 = vmatpush1.bf16.msra.mxu0 0
    %848 = vmatprep.subr.bf16.mxu0 0
    %849 = vmatpush1.bf16.msra.mxu0 0
    %850 = vmatprep.subr.bf16.mxu0 0
    %851 = vmatpush1.bf16.msra.mxu0 0
    %852 = vmatprep.subr.bf16.mxu0 0
    %853 = vmatpush1.bf16.msra.mxu0 0
    %854 = vmatprep.subr.bf16.mxu0 0
    %855 = vmatpush1.bf16.msra.mxu0 0
    %856 = vmatprep.subr.bf16.mxu0 0
    %857 = vmatpush1.bf16.msra.mxu0 0
    %858 = vmatprep.mubr.bf16.mxu0 0
    %859 = vmatmul.mubr.bf16.gmra.mrb[0].mxu0 %v821
    %v860 = vpop.f32.mrb[0].mxu0
    %v861 = vadd.f32 0.0, %v860
    %v862 = vpop.f32.mrb[0].mxu0
    %v863 = vpop.f32.mrb[0].mxu0
    %v864 = vadd.f32 0.0, %v863
    %v865 = vpop.f32.mrb[0].mxu0
    %866 = vmatprep.mubr.bf16.mxu0 0
    %867 = vmatmul.mubr.bf16.gmra.mrb[0].mxu0 %v824
    %v868 = vpop.f32.mrb[0].mxu0
    %v869 = vadd.f32 0.0, %v868
    %v870 = vpop.f32.mrb[0].mxu0
    %v871 = vpop.f32.mrb[0].mxu0
    %v872 = vadd.f32 0.0, %v871
    %v873 = vpop.f32.mrb[0].mxu0
    %874 = vdwg.mxu0
    %s875 = scalar_lea.vmem [#allocation10], 32
    %v876 = vld [vmem:[%s875] sm:$0xf]
    %v877 = vld [vmem:[%s875 + $0x4] sm:$0xf]
    %v878 = vld [vmem:[%s875 + $0x8] sm:$0xf]
    %v879 = vld [vmem:[%s875 + $0xc] sm:$0xf]
    %v880 = vld [vmem:[%s875 + $0x10] sm:$0xf]
    %v881 = vld [vmem:[%s875 + $0x14] sm:$0xf]
    %v882 = vld [vmem:[%s875 + $0x18] sm:$0xf]
    %v883 = vld [vmem:[%s875 + $0x1c] sm:$0xf]
    %v884 = vpack.c.bf16 %v864, %v861
    %v885 = vpack.c.bf16 %v872, %v869
    %v894 = vunpack.c.l.b16 %v876
    %v895 = vunpack.c.l.b16 %v877
    %v896 = vunpack.c.l.b16 %v878
    %v897 = vunpack.c.l.b16 %v879
    %v898 = vunpack.c.l.b16 %v880
    %v899 = vunpack.c.l.b16 %v881
    %v900 = vunpack.c.l.b16 %v882
    %v901 = vunpack.c.l.b16 %v883
    %v902 = vpack.c.b16 %v895, %v894
    %v903 = vpack.c.b16 %v897, %v896
    %v904 = vpack.c.b16 %v899, %v898
    %v905 = vpack.c.b16 %v901, %v900
    %vm910 = vcmask 523264
    %v912 = vsel %vm910, %v884, 0
    %v915 = vsel %vm910, %v885, 0
    %917 = vmatprep.subr.bf16.mxu0 0
    %918 = vmatpush1.bf16.msra.mxu0 %v902
    %919 = vmatprep.subr.bf16.mxu0 0
    %920 = vmatpush1.bf16.msra.mxu0 %v903
    %921 = vmatprep.subr.bf16.mxu0 0
    %922 = vmatpush1.bf16.msra.mxu0 %v904
    %923 = vmatprep.subr.bf16.mxu0 0
    %924 = vmatpush1.bf16.msra.mxu0 %v905
    %925 = vmatprep.subr.bf16.mxu0 0
    %926 = vmatpush1.bf16.msra.mxu0 0
    %927 = vmatprep.subr.bf16.mxu0 0
    %928 = vmatpush1.bf16.msra.mxu0 0
    %929 = vmatprep.subr.bf16.mxu0 0
    %930 = vmatpush1.bf16.msra.mxu0 0
    %931 = vmatprep.subr.bf16.mxu0 0
    %932 = vmatpush1.bf16.msra.mxu0 0
    %933 = vmatprep.subr.bf16.mxu0 0
    %934 = vmatpush1.bf16.msra.mxu0 0
    %935 = vmatprep.subr.bf16.mxu0 0
    %936 = vmatpush1.bf16.msra.mxu0 0
    %937 = vmatprep.subr.bf16.mxu0 0
    %938 = vmatpush1.bf16.msra.mxu0 0
    %939 = vmatprep.subr.bf16.mxu0 0
    %940 = vmatpush1.bf16.msra.mxu0 0
    %941 = vmatprep.subr.bf16.mxu0 0
    %942 = vmatpush1.bf16.msra.mxu0 0
    %943 = vmatprep.subr.bf16.mxu0 0
    %944 = vmatpush1.bf16.msra.mxu0 0
    %945 = vmatprep.subr.bf16.mxu0 0
    %946 = vmatpush1.bf16.msra.mxu0 0
    %947 = vmatprep.subr.bf16.mxu0 0
    %948 = vmatpush1.bf16.msra.mxu0 0
    %949 = vmatprep.mubr.bf16.mxu0 0
    %950 = vmatmul.mubr.bf16.gmra.mrb[0].mxu0 %v912
    %v951 = vpop.f32.mrb[0].mxu0
    %v952 = vadd.f32 0.0, %v951
    %v953 = vpop.f32.mrb[0].mxu0
    %v954 = vpop.f32.mrb[0].mxu0
    %v955 = vadd.f32 0.0, %v954
    %v956 = vpop.f32.mrb[0].mxu0
    %957 = vmatprep.mubr.bf16.mxu0 0
    %958 = vmatmul.mubr.bf16.gmra.mrb[0].mxu0 %v915
    %v959 = vpop.f32.mrb[0].mxu0
    %v960 = vadd.f32 0.0, %v959
    %v961 = vpop.f32.mrb[0].mxu0
    %v962 = vpop.f32.mrb[0].mxu0
    %v963 = vadd.f32 0.0, %v962
    %v964 = vpop.f32.mrb[0].mxu0
    %965 = vdwg.mxu0
    %v974 = vunpack.c.l.b16 %v795
    %v975 = vunpack.c.l.b16 %v796
    %v976 = vunpack.c.l.b16 %v797
    %v977 = vunpack.c.l.b16 %v798
    %v978 = vunpack.c.l.b16 %v799
    %v979 = vunpack.c.l.b16 %v800
    %v980 = vunpack.c.l.b16 %v801
    %v981 = vunpack.c.l.b16 %v802
    %v982 = vpack.c.b16 %v975, %v974
    %v983 = vpack.c.b16 %v977, %v976
    %v984 = vpack.c.b16 %v979, %v978
    %v985 = vpack.c.b16 %v981, %v980
    %v991 = vsel %vm910, %v803, 0
    %v994 = vsel %vm910, %v804, 0
    %996 = vmatprep.subr.bf16.mxu0 0
    %997 = vmatpush1.bf16.msra.mxu0 %v982
    %998 = vmatprep.subr.bf16.mxu0 0
    %999 = vmatpush1.bf16.msra.mxu0 %v983
    %1000 = vmatprep.subr.bf16.mxu0 0
    %1001 = vmatpush1.bf16.msra.mxu0 %v984
    %1002 = vmatprep.subr.bf16.mxu0 0
    %1003 = vmatpush1.bf16.msra.mxu0 %v985
    %1004 = vmatprep.subr.bf16.mxu0 0
    %1005 = vmatpush1.bf16.msra.mxu0 0
    %1006 = vmatprep.subr.bf16.mxu0 0
    %1007 = vmatpush1.bf16.msra.mxu0 0
    %1008 = vmatprep.subr.bf16.mxu0 0
    %1009 = vmatpush1.bf16.msra.mxu0 0
    %1010 = vmatprep.subr.bf16.mxu0 0
    %1011 = vmatpush1.bf16.msra.mxu0 0
    %1012 = vmatprep.subr.bf16.mxu0 0
    %1013 = vmatpush1.bf16.msra.mxu0 0
    %1014 = vmatprep.subr.bf16.mxu0 0
    %1015 = vmatpush1.bf16.msra.mxu0 0
    %1016 = vmatprep.subr.bf16.mxu0 0
    %1017 = vmatpush1.bf16.msra.mxu0 0
    %1018 = vmatprep.subr.bf16.mxu0 0
    %1019 = vmatpush1.bf16.msra.mxu0 0
    %1020 = vmatprep.subr.bf16.mxu0 0
    %1021 = vmatpush1.bf16.msra.mxu0 0
    %1022 = vmatprep.subr.bf16.mxu0 0
    %1023 = vmatpush1.bf16.msra.mxu0 0
    %1024 = vmatprep.subr.bf16.mxu0 0
    %1025 = vmatpush1.bf16.msra.mxu0 0
    %1026 = vmatprep.subr.bf16.mxu0 0
    %1027 = vmatpush1.bf16.msra.mxu0 0
    %1028 = vmatprep.mubr.bf16.mxu0 0
    %1029 = vmatmul.mubr.bf16.gmra.mrb[0].mxu0 %v991
    %v1030 = vpop.f32.mrb[0].mxu0
    %v1031 = vadd.f32 %v952, %v1030
    %v1032 = vpop.f32.mrb[0].mxu0
    %v1033 = vpop.f32.mrb[0].mxu0
    %v1034 = vadd.f32 %v955, %v1033
    %v1035 = vpop.f32.mrb[0].mxu0
    %1036 = vmatprep.mubr.bf16.mxu0 0
    %1037 = vmatmul.mubr.bf16.gmra.mrb[0].mxu0 %v994
    %v1038 = vpop.f32.mrb[0].mxu0
    %v1039 = vadd.f32 %v960, %v1038
    %v1040 = vpop.f32.mrb[0].mxu0
    %v1041 = vpop.f32.mrb[0].mxu0
    %v1042 = vadd.f32 %v963, %v1041
    %v1043 = vpop.f32.mrb[0].mxu0
    %1044 = vdwg.mxu0
    %s1045 = scalar_lea.vmem [#allocation8], 32
    %v1046 = vld [vmem:[%s1045] sm:$0xf]
    %v1047 = vld [vmem:[%s1045 + $0x4] sm:$0xf]
    %v1048 = vld [vmem:[%s1045 + $0x8] sm:$0xf]
    %v1049 = vld [vmem:[%s1045 + $0xc] sm:$0xf]
    %v1054 = vunpack.c.l.b16 %v1046
    %v1055 = vunpack.c.l.b16 %v1047
    %v1056 = vunpack.c.l.b16 %v1048
    %v1057 = vunpack.c.l.b16 %v1049
    %v1058 = vpack.c.b16 %v1055, %v1054
    %v1059 = vpack.c.b16 %v1057, %v1056
    %v1061 = vsel %vm739, %v1058, 0
    %v1064 = vsel %vm739, %v1059, 0
    %1066 = vmatprep.subr.bf16.mxu0 0
    %1067 = vmatpush1.bf16.msra.mxu0 %v727
    %1068 = vmatprep.subr.bf16.mxu0 0
    %1069 = vmatpush1.bf16.msra.mxu0 %v728
    %1070 = vmatprep.subr.bf16.mxu0 0
    %1071 = vmatpush1.bf16.msra.mxu0 0
    %1072 = vmatprep.subr.bf16.mxu0 0
    %1073 = vmatpush1.bf16.msra.mxu0 0
    %1074 = vmatprep.subr.bf16.mxu0 0
    %1075 = vmatpush1.bf16.msra.mxu0 0
    %1076 = vmatprep.subr.bf16.mxu0 0
    %1077 = vmatpush1.bf16.msra.mxu0 0
    %1078 = vmatprep.subr.bf16.mxu0 0
    %1079 = vmatpush1.bf16.msra.mxu0 0
    %1080 = vmatprep.subr.bf16.mxu0 0
    %1081 = vmatpush1.bf16.msra.mxu0 0
    %1082 = vmatprep.subr.bf16.mxu0 0
    %1083 = vmatpush1.bf16.msra.mxu0 0
    %1084 = vmatprep.subr.bf16.mxu0 0
    %1085 = vmatpush1.bf16.msra.mxu0 0
    %1086 = vmatprep.subr.bf16.mxu0 0
    %1087 = vmatpush1.bf16.msra.mxu0 0
    %1088 = vmatprep.subr.bf16.mxu0 0
    %1089 = vmatpush1.bf16.msra.mxu0 0
    %1090 = vmatprep.subr.bf16.mxu0 0
    %1091 = vmatpush1.bf16.msra.mxu0 0
    %1092 = vmatprep.subr.bf16.mxu0 0
    %1093 = vmatpush1.bf16.msra.mxu0 0
    %1094 = vmatprep.subr.bf16.mxu0 0
    %1095 = vmatpush1.bf16.msra.mxu0 0
    %1096 = vmatprep.subr.bf16.mxu0 0
    %1097 = vmatpush1.bf16.msra.mxu0 0
    %1098 = vmatprep.mubr.bf16.mxu0 0
    %1099 = vmatmul.mubr.bf16.gmra.mrb[0].mxu0 %v1061
    %v1100 = vpop.f32.mrb[0].mxu0
    %v1101 = vadd.f32 0.0, %v1100
    %v1102 = vpop.f32.mrb[0].mxu0
    %v1103 = vpop.f32.mrb[0].mxu0
    %v1104 = vadd.f32 0.0, %v1103
    %v1105 = vpop.f32.mrb[0].mxu0
    %1106 = vmatprep.mubr.bf16.mxu0 0
    %1107 = vmatmul.mubr.bf16.gmra.mrb[0].mxu0 %v1064
    %v1108 = vpop.f32.mrb[0].mxu0
    %v1109 = vadd.f32 0.0, %v1108
    %v1110 = vpop.f32.mrb[0].mxu0
    %v1111 = vpop.f32.mrb[0].mxu0
    %v1112 = vadd.f32 0.0, %v1111
    %v1113 = vpop.f32.mrb[0].mxu0
    %1114 = vdwg.mxu0
    %s1115 = scalar_lea.vmem [#allocation10], 64
    %v1116 = vld [vmem:[%s1115] sm:$0xf]
    %v1117 = vld [vmem:[%s1115 + $0x4] sm:$0xf]
    %v1118 = vld [vmem:[%s1115 + $0x8] sm:$0xf]
    %v1119 = vld [vmem:[%s1115 + $0xc] sm:$0xf]
    %v1120 = vld [vmem:[%s1115 + $0x10] sm:$0xf]
    %v1121 = vld [vmem:[%s1115 + $0x14] sm:$0xf]
    %v1122 = vld [vmem:[%s1115 + $0x18] sm:$0xf]
    %v1123 = vld [vmem:[%s1115 + $0x1c] sm:$0xf]
    %v1124 = vpack.c.bf16 %v1104, %v1101
    %v1125 = vpack.c.bf16 %v1112, %v1109
    %v1134 = vunpack.c.l.b16 %v1116
    %v1135 = vunpack.c.l.b16 %v1117
    %v1136 = vunpack.c.l.b16 %v1118
    %v1137 = vunpack.c.l.b16 %v1119
    %v1138 = vunpack.c.l.b16 %v1120
    %v1139 = vunpack.c.l.b16 %v1121
    %v1140 = vunpack.c.l.b16 %v1122
    %v1141 = vunpack.c.l.b16 %v1123
    %v1142 = vpack.c.b16 %v1135, %v1134
    %v1143 = vpack.c.b16 %v1137, %v1136
    %v1144 = vpack.c.b16 %v1139, %v1138
    %v1145 = vpack.c.b16 %v1141, %v1140
    %v1151 = vsel %vm910, %v1124, 0
    %v1154 = vsel %vm910, %v1125, 0
    %1156 = vmatprep.subr.bf16.mxu0 0
    %1157 = vmatpush1.bf16.msra.mxu0 %v1142
    %1158 = vmatprep.subr.bf16.mxu0 0
    %1159 = vmatpush1.bf16.msra.mxu0 %v1143
    %1160 = vmatprep.subr.bf16.mxu0 0
    %1161 = vmatpush1.bf16.msra.mxu0 %v1144
    %1162 = vmatprep.subr.bf16.mxu0 0
    %1163 = vmatpush1.bf16.msra.mxu0 %v1145
    %1164 = vmatprep.subr.bf16.mxu0 0
    %1165 = vmatpush1.bf16.msra.mxu0 0
    %1166 = vmatprep.subr.bf16.mxu0 0
    %1167 = vmatpush1.bf16.msra.mxu0 0
    %1168 = vmatprep.subr.bf16.mxu0 0
    %1169 = vmatpush1.bf16.msra.mxu0 0
    %1170 = vmatprep.subr.bf16.mxu0 0
    %1171 = vmatpush1.bf16.msra.mxu0 0
    %1172 = vmatprep.subr.bf16.mxu0 0
    %1173 = vmatpush1.bf16.msra.mxu0 0
    %1174 = vmatprep.subr.bf16.mxu0 0
    %1175 = vmatpush1.bf16.msra.mxu0 0
    %1176 = vmatprep.subr.bf16.mxu0 0
    %1177 = vmatpush1.bf16.msra.mxu0 0
    %1178 = vmatprep.subr.bf16.mxu0 0
    %1179 = vmatpush1.bf16.msra.mxu0 0
    %1180 = vmatprep.subr.bf16.mxu0 0
    %1181 = vmatpush1.bf16.msra.mxu0 0
    %1182 = vmatprep.subr.bf16.mxu0 0
    %1183 = vmatpush1.bf16.msra.mxu0 0
    %1184 = vmatprep.subr.bf16.mxu0 0
    %1185 = vmatpush1.bf16.msra.mxu0 0
    %1186 = vmatprep.subr.bf16.mxu0 0
    %1187 = vmatpush1.bf16.msra.mxu0 0
    %1188 = vmatprep.mubr.bf16.mxu0 0
    %1189 = vmatmul.mubr.bf16.gmra.mrb[0].mxu0 %v1151
    %v1190 = vpop.f32.mrb[0].mxu0
    %v1191 = vadd.f32 0.0, %v1190
    %v1192 = vpop.f32.mrb[0].mxu0
    %v1193 = vpop.f32.mrb[0].mxu0
    %v1194 = vadd.f32 0.0, %v1193
    %v1195 = vpop.f32.mrb[0].mxu0
    %1196 = vmatprep.mubr.bf16.mxu0 0
    %1197 = vmatmul.mubr.bf16.gmra.mrb[0].mxu0 %v1154
    %v1198 = vpop.f32.mrb[0].mxu0
    %v1199 = vadd.f32 0.0, %v1198
    %v1200 = vpop.f32.mrb[0].mxu0
    %v1201 = vpop.f32.mrb[0].mxu0
    %v1202 = vadd.f32 0.0, %v1201
    %v1203 = vpop.f32.mrb[0].mxu0
    %1204 = vdwg.mxu0
    %v1205 = vadd.f32 %v1031, %v1191
    %v1206 = vadd.f32 %v1034, %v1194
    %v1207 = vadd.f32 %v1039, %v1199
    %v1208 = vadd.f32 %v1042, %v1202
    %v1209 = vld [vmem:[#allocation11] sm:$0x1]
    %v1211 = vlaneseq
    %v1212 = vshrl.u32 %v1211, 7
    %v1213 = vsub.s32 0, %v1212
    %v1214 = vrot.slane %v1209, %v1213
    %v1216 = vadd.f32 %v1205, %v1214
    %v1217 = vadd.f32 %v1206, %v1214
    %v1218 = vadd.f32 %v1207, %v1214
    %v1219 = vadd.f32 %v1208, %v1214
    %v1220 = vmax.f32 %v1216, 0.0
    %v1221 = vmax.f32 %v1217, 0.0
    %v1222 = vmax.f32 %v1218, 0.0
    %v1223 = vmax.f32 %v1219, 0.0
    %v1224 = vld [vmem:[#allocation13] sm:$0xf]
    %v1225 = vld [vmem:[#allocation13 + $0x4] sm:$0xf]
    %v1226 = vld [vmem:[#allocation13 + $0x8] sm:$0xf]
    %v1227 = vld [vmem:[#allocation13 + $0xc] sm:$0xf]
    %v1228 = vpack.c.bf16 %v1221, %v1220
    %v1229 = vpack.c.bf16 %v1223, %v1222
    %v1234 = vunpack.c.l.b16 %v1224
    %v1235 = vunpack.c.l.b16 %v1225
    %v1236 = vunpack.c.l.b16 %v1226
    %v1237 = vunpack.c.l.b16 %v1227
    %v1238 = vpack.c.b16 %v1235, %v1234
    %v1239 = vpack.c.b16 %v1237, %v1236
    %v1241 = vsel %vm739, %v1238, 0
    %v1244 = vsel %vm739, %v1239, 0
    %1246 = vmatprep.subr.bf16.mxu0 0
    %1247 = vmatpush1.bf16.msra.mxu0 %v1228
    %1248 = vmatprep.subr.bf16.mxu0 0
    %1249 = vmatpush1.bf16.msra.mxu0 %v1229
    %1250 = vmatprep.subr.bf16.mxu0 0
    %1251 = vmatpush1.bf16.msra.mxu0 0
    %1252 = vmatprep.subr.bf16.mxu0 0
    %1253 = vmatpush1.bf16.msra.mxu0 0
    %1254 = vmatprep.subr.bf16.mxu0 0
    %1255 = vmatpush1.bf16.msra.mxu0 0
    %1256 = vmatprep.subr.bf16.mxu0 0
    %1257 = vmatpush1.bf16.msra.mxu0 0
    %1258 = vmatprep.subr.bf16.mxu0 0
    %1259 = vmatpush1.bf16.msra.mxu0 0
    %1260 = vmatprep.subr.bf16.mxu0 0
    %1261 = vmatpush1.bf16.msra.mxu0 0
    %1262 = vmatprep.subr.bf16.mxu0 0
    %1263 = vmatpush1.bf16.msra.mxu0 0
    %1264 = vmatprep.subr.bf16.mxu0 0
    %1265 = vmatpush1.bf16.msra.mxu0 0
    %1266 = vmatprep.subr.bf16.mxu0 0
    %1267 = vmatpush1.bf16.msra.mxu0 0
    %1268 = vmatprep.subr.bf16.mxu0 0
    %1269 = vmatpush1.bf16.msra.mxu0 0
    %1270 = vmatprep.subr.bf16.mxu0 0
    %1271 = vmatpush1.bf16.msra.mxu0 0
    %1272 = vmatprep.subr.bf16.mxu0 0
    %1273 = vmatpush1.bf16.msra.mxu0 0
    %1274 = vmatprep.subr.bf16.mxu0 0
    %1275 = vmatpush1.bf16.msra.mxu0 0
    %1276 = vmatprep.subr.bf16.mxu0 0
    %1277 = vmatpush1.bf16.msra.mxu0 0
    %1278 = vmatprep.mubr.bf16.mxu0 0
    %1279 = vmatmul.mubr.bf16.gmra.mrb[0].mxu0 %v1241
    %v1280 = vpop.f32.mrb[0].mxu0
    %v1281 = vadd.f32 0.0, %v1280
    %v1282 = vpop.f32.mrb[0].mxu0
    %v1283 = vpop.f32.mrb[0].mxu0
    %v1284 = vadd.f32 0.0, %v1283
    %v1285 = vpop.f32.mrb[0].mxu0
    %1286 = vmatprep.mubr.bf16.mxu0 0
    %1287 = vmatmul.mubr.bf16.gmra.mrb[0].mxu0 %v1244
    %v1288 = vpop.f32.mrb[0].mxu0
    %v1289 = vadd.f32 0.0, %v1288
    %v1290 = vpop.f32.mrb[0].mxu0
    %v1291 = vpop.f32.mrb[0].mxu0
    %v1292 = vadd.f32 0.0, %v1291
    %v1293 = vpop.f32.mrb[0].mxu0
    %1294 = vdwg.mxu0
    %v1295 = vld [vmem:[%s15] sm:$0xf]
    %v1296 = vld [vmem:[%s15 + $0x4] sm:$0xf]
    %v1297 = vld [vmem:[%s15 + $0x8] sm:$0xf]
    %v1298 = vld [vmem:[%s15 + $0xc] sm:$0xf]
    %v1299 = vld [vmem:[%s15 + $0x10] sm:$0xf]
    %v1300 = vld [vmem:[%s15 + $0x14] sm:$0xf]
    %v1301 = vld [vmem:[%s15 + $0x18] sm:$0xf]
    %v1302 = vld [vmem:[%s15 + $0x1c] sm:$0xf]
    %v1303 = vld [vmem:[%s15 + $0x20] sm:$0xf]
    %v1304 = vld [vmem:[%s15 + $0x24] sm:$0xf]
    %v1305 = vld [vmem:[%s15 + $0x28] sm:$0xf]
    %v1306 = vld [vmem:[%s15 + $0x2c] sm:$0xf]
    %v1307 = vld [vmem:[%s15 + $0x30] sm:$0xf]
    %v1308 = vld [vmem:[%s15 + $0x34] sm:$0xf]
    %v1309 = vld [vmem:[%s15 + $0x38] sm:$0xf]
    %v1310 = vld [vmem:[%s15 + $0x3c] sm:$0xf]
    %v1311 = vpack.c.bf16 %v1284, %v1281
    %v1312 = vpack.c.bf16 %v1292, %v1289
    %s1313 = scalar_lea.vmem [#allocation13], 16
    %v1314 = vld [vmem:[%s1313] sm:$0xf]
    %v1315 = vld [vmem:[%s1313 + $0x4] sm:$0xf]
    %v1316 = vld [vmem:[%s1313 + $0x8] sm:$0xf]
    %v1317 = vld [vmem:[%s1313 + $0xc] sm:$0xf]
    %v1322 = vunpack.c.l.b16 %v1314
    %v1323 = vunpack.c.l.b16 %v1315
    %v1324 = vunpack.c.l.b16 %v1316
    %v1325 = vunpack.c.l.b16 %v1317
    %v1326 = vpack.c.b16 %v1323, %v1322
    %v1327 = vpack.c.b16 %v1325, %v1324
    %v1329 = vsel %vm739, %v1326, 0
    %v1332 = vsel %vm739, %v1327, 0
    %1334 = vmatprep.subr.bf16.mxu0 0
    %1335 = vmatpush1.bf16.msra.mxu0 %v1228
    %1336 = vmatprep.subr.bf16.mxu0 0
    %1337 = vmatpush1.bf16.msra.mxu0 %v1229
    %1338 = vmatprep.subr.bf16.mxu0 0
    %1339 = vmatpush1.bf16.msra.mxu0 0
    %1340 = vmatprep.subr.bf16.mxu0 0
    %1341 = vmatpush1.bf16.msra.mxu0 0
    %1342 = vmatprep.subr.bf16.mxu0 0
    %1343 = vmatpush1.bf16.msra.mxu0 0
    %1344 = vmatprep.subr.bf16.mxu0 0
    %1345 = vmatpush1.bf16.msra.mxu0 0
    %1346 = vmatprep.subr.bf16.mxu0 0
    %1347 = vmatpush1.bf16.msra.mxu0 0
    %1348 = vmatprep.subr.bf16.mxu0 0
    %1349 = vmatpush1.bf16.msra.mxu0 0
    %1350 = vmatprep.subr.bf16.mxu0 0
    %1351 = vmatpush1.bf16.msra.mxu0 0
    %1352 = vmatprep.subr.bf16.mxu0 0
    %1353 = vmatpush1.bf16.msra.mxu0 0
    %1354 = vmatprep.subr.bf16.mxu0 0
    %1355 = vmatpush1.bf16.msra.mxu0 0
    %1356 = vmatprep.subr.bf16.mxu0 0
    %1357 = vmatpush1.bf16.msra.mxu0 0
    %1358 = vmatprep.subr.bf16.mxu0 0
    %1359 = vmatpush1.bf16.msra.mxu0 0
    %1360 = vmatprep.subr.bf16.mxu0 0
    %1361 = vmatpush1.bf16.msra.mxu0 0
    %1362 = vmatprep.subr.bf16.mxu0 0
    %1363 = vmatpush1.bf16.msra.mxu0 0
    %1364 = vmatprep.subr.bf16.mxu0 0
    %1365 = vmatpush1.bf16.msra.mxu0 0
    %1366 = vmatprep.mubr.bf16.mxu0 0
    %1367 = vmatmul.mubr.bf16.gmra.mrb[0].mxu0 %v1329
    %v1368 = vpop.f32.mrb[0].mxu0
    %v1369 = vadd.f32 0.0, %v1368
    %v1370 = vpop.f32.mrb[0].mxu0
    %v1371 = vpop.f32.mrb[0].mxu0
    %v1372 = vadd.f32 0.0, %v1371
    %v1373 = vpop.f32.mrb[0].mxu0
    %1374 = vmatprep.mubr.bf16.mxu0 0
    %1375 = vmatmul.mubr.bf16.gmra.mrb[0].mxu0 %v1332
    %v1376 = vpop.f32.mrb[0].mxu0
    %v1377 = vadd.f32 0.0, %v1376
    %v1378 = vpop.f32.mrb[0].mxu0
    %v1379 = vpop.f32.mrb[0].mxu0
    %v1380 = vadd.f32 0.0, %v1379
    %v1381 = vpop.f32.mrb[0].mxu0
    %1382 = vdwg.mxu0
    %s1383 = scalar_lea.vmem %s15, 64
    %v1384 = vld [vmem:[%s1383] sm:$0xf]
    %v1385 = vld [vmem:[%s1383 + $0x4] sm:$0xf]
    %v1386 = vld [vmem:[%s1383 + $0x8] sm:$0xf]
    %v1387 = vld [vmem:[%s1383 + $0xc] sm:$0xf]
    %v1388 = vld [vmem:[%s1383 + $0x10] sm:$0xf]
    %v1389 = vld [vmem:[%s1383 + $0x14] sm:$0xf]
    %v1390 = vld [vmem:[%s1383 + $0x18] sm:$0xf]
    %v1391 = vld [vmem:[%s1383 + $0x1c] sm:$0xf]
    %v1392 = vld [vmem:[%s1383 + $0x20] sm:$0xf]
    %v1393 = vld [vmem:[%s1383 + $0x24] sm:$0xf]
    %v1394 = vld [vmem:[%s1383 + $0x28] sm:$0xf]
    %v1395 = vld [vmem:[%s1383 + $0x2c] sm:$0xf]
    %v1396 = vld [vmem:[%s1383 + $0x30] sm:$0xf]
    %v1397 = vld [vmem:[%s1383 + $0x34] sm:$0xf]
    %v1398 = vld [vmem:[%s1383 + $0x38] sm:$0xf]
    %v1399 = vld [vmem:[%s1383 + $0x3c] sm:$0xf]
    %v1400 = vpack.c.bf16 %v1372, %v1369
    %v1401 = vpack.c.bf16 %v1380, %v1377
    %v1418 = vunpack.c.l.b16 %v1384
    %v1419 = vunpack.c.l.b16 %v1385
    %v1420 = vunpack.c.l.b16 %v1386
    %v1421 = vunpack.c.l.b16 %v1387
    %v1422 = vunpack.c.l.b16 %v1388
    %v1423 = vunpack.c.l.b16 %v1389
    %v1424 = vunpack.c.l.b16 %v1390
    %v1425 = vunpack.c.l.b16 %v1391
    %v1426 = vunpack.c.l.b16 %v1392
    %v1427 = vunpack.c.l.b16 %v1393
    %v1428 = vunpack.c.l.b16 %v1394
    %v1429 = vunpack.c.l.b16 %v1395
    %v1430 = vunpack.c.l.b16 %v1396
    %v1431 = vunpack.c.l.b16 %v1397
    %v1432 = vunpack.c.l.b16 %v1398
    %v1433 = vunpack.c.l.b16 %v1399
    %v1434 = vpack.c.b16 %v1419, %v1418
    %v1435 = vpack.c.b16 %v1421, %v1420
    %v1436 = vpack.c.b16 %v1423, %v1422
    %v1437 = vpack.c.b16 %v1425, %v1424
    %v1438 = vpack.c.b16 %v1427, %v1426
    %v1439 = vpack.c.b16 %v1429, %v1428
    %v1440 = vpack.c.b16 %v1431, %v1430
    %v1441 = vpack.c.b16 %v1433, %v1432
    %1450 = vmatprep.subr.bf16.mxu0 0
    %1451 = vmatpush1.bf16.msra.mxu0 %v1434
    %1452 = vmatprep.subr.bf16.mxu0 0
    %1453 = vmatpush1.bf16.msra.mxu0 %v1435
    %1454 = vmatprep.subr.bf16.mxu0 0
    %1455 = vmatpush1.bf16.msra.mxu0 %v1436
    %1456 = vmatprep.subr.bf16.mxu0 0
    %1457 = vmatpush1.bf16.msra.mxu0 %v1437
    %1458 = vmatprep.subr.bf16.mxu0 0
    %1459 = vmatpush1.bf16.msra.mxu0 %v1438
    %1460 = vmatprep.subr.bf16.mxu0 0
    %1461 = vmatpush1.bf16.msra.mxu0 %v1439
    %1462 = vmatprep.subr.bf16.mxu0 0
    %1463 = vmatpush1.bf16.msra.mxu0 %v1440
    %1464 = vmatprep.subr.bf16.mxu0 0
    %1465 = vmatpush1.bf16.msra.mxu0 %v1441
    %1466 = vmatprep.subr.bf16.mxu0 0
    %1467 = vmatpush1.bf16.msra.mxu0 0
    %1468 = vmatprep.subr.bf16.mxu0 0
    %1469 = vmatpush1.bf16.msra.mxu0 0
    %1470 = vmatprep.subr.bf16.mxu0 0
    %1471 = vmatpush1.bf16.msra.mxu0 0
    %1472 = vmatprep.subr.bf16.mxu0 0
    %1473 = vmatpush1.bf16.msra.mxu0 0
    %1474 = vmatprep.subr.bf16.mxu0 0
    %1475 = vmatpush1.bf16.msra.mxu0 0
    %1476 = vmatprep.subr.bf16.mxu0 0
    %1477 = vmatpush1.bf16.msra.mxu0 0
    %1478 = vmatprep.subr.bf16.mxu0 0
    %1479 = vmatpush1.bf16.msra.mxu0 0
    %1480 = vmatprep.subr.bf16.mxu0 0
    %1481 = vmatpush1.bf16.msra.mxu0 0
    %1482 = vmatprep.mubr.bf16.mxu0 0
    %1483 = vmatmul.mubr.bf16.gmra.mrb[0].mxu0 %v1400
    %v1484 = vpop.f32.mrb[0].mxu0
    %v1485 = vadd.f32 0.0, %v1484
    %v1486 = vpop.f32.mrb[0].mxu0
    %v1487 = vpop.f32.mrb[0].mxu0
    %v1488 = vadd.f32 0.0, %v1487
    %v1489 = vpop.f32.mrb[0].mxu0
    %1490 = vmatprep.mubr.bf16.mxu0 0
    %1491 = vmatmul.mubr.bf16.gmra.mrb[0].mxu0 %v1401
    %v1492 = vpop.f32.mrb[0].mxu0
    %v1493 = vadd.f32 0.0, %v1492
    %v1494 = vpop.f32.mrb[0].mxu0
    %v1495 = vpop.f32.mrb[0].mxu0
    %v1496 = vadd.f32 0.0, %v1495
    %v1497 = vpop.f32.mrb[0].mxu0
    %1498 = vdwg.mxu0
    %v1515 = vunpack.c.l.b16 %v1295
    %v1516 = vunpack.c.l.b16 %v1296
    %v1517 = vunpack.c.l.b16 %v1297
    %v1518 = vunpack.c.l.b16 %v1298
    %v1519 = vunpack.c.l.b16 %v1299
    %v1520 = vunpack.c.l.b16 %v1300
    %v1521 = vunpack.c.l.b16 %v1301
    %v1522 = vunpack.c.l.b16 %v1302
    %v1523 = vunpack.c.l.b16 %v1303
    %v1524 = vunpack.c.l.b16 %v1304
    %v1525 = vunpack.c.l.b16 %v1305
    %v1526 = vunpack.c.l.b16 %v1306
    %v1527 = vunpack.c.l.b16 %v1307
    %v1528 = vunpack.c.l.b16 %v1308
    %v1529 = vunpack.c.l.b16 %v1309
    %v1530 = vunpack.c.l.b16 %v1310
    %v1531 = vpack.c.b16 %v1516, %v1515
    %v1532 = vpack.c.b16 %v1518, %v1517
    %v1533 = vpack.c.b16 %v1520, %v1519
    %v1534 = vpack.c.b16 %v1522, %v1521
    %v1535 = vpack.c.b16 %v1524, %v1523
    %v1536 = vpack.c.b16 %v1526, %v1525
    %v1537 = vpack.c.b16 %v1528, %v1527
    %v1538 = vpack.c.b16 %v1530, %v1529
    %1547 = vmatprep.subr.bf16.mxu0 0
    %1548 = vmatpush1.bf16.msra.mxu0 %v1531
    %1549 = vmatprep.subr.bf16.mxu0 0
    %1550 = vmatpush1.bf16.msra.mxu0 %v1532
    %1551 = vmatprep.subr.bf16.mxu0 0
    %1552 = vmatpush1.bf16.msra.mxu0 %v1533
    %1553 = vmatprep.subr.bf16.mxu0 0
    %1554 = vmatpush1.bf16.msra.mxu0 %v1534
    %1555 = vmatprep.subr.bf16.mxu0 0
    %1556 = vmatpush1.bf16.msra.mxu0 %v1535
    %1557 = vmatprep.subr.bf16.mxu0 0
    %1558 = vmatpush1.bf16.msra.mxu0 %v1536
    %1559 = vmatprep.subr.bf16.mxu0 0
    %1560 = vmatpush1.bf16.msra.mxu0 %v1537
    %1561 = vmatprep.subr.bf16.mxu0 0
    %1562 = vmatpush1.bf16.msra.mxu0 %v1538
    %1563 = vmatprep.subr.bf16.mxu0 0
    %1564 = vmatpush1.bf16.msra.mxu0 0
    %1565 = vmatprep.subr.bf16.mxu0 0
    %1566 = vmatpush1.bf16.msra.mxu0 0
    %1567 = vmatprep.subr.bf16.mxu0 0
    %1568 = vmatpush1.bf16.msra.mxu0 0
    %1569 = vmatprep.subr.bf16.mxu0 0
    %1570 = vmatpush1.bf16.msra.mxu0 0
    %1571 = vmatprep.subr.bf16.mxu0 0
    %1572 = vmatpush1.bf16.msra.mxu0 0
    %1573 = vmatprep.subr.bf16.mxu0 0
    %1574 = vmatpush1.bf16.msra.mxu0 0
    %1575 = vmatprep.subr.bf16.mxu0 0
    %1576 = vmatpush1.bf16.msra.mxu0 0
    %1577 = vmatprep.subr.bf16.mxu0 0
    %1578 = vmatpush1.bf16.msra.mxu0 0
    %1579 = vmatprep.mubr.bf16.mxu0 0
    %1580 = vmatmul.mubr.bf16.gmra.mrb[0].mxu0 %v1311
    %v1581 = vpop.f32.mrb[0].mxu0
    %v1582 = vadd.f32 %v1485, %v1581
    %v1583 = vpop.f32.mrb[0].mxu0
    %v1584 = vpop.f32.mrb[0].mxu0
    %v1585 = vadd.f32 %v1488, %v1584
    %v1586 = vpop.f32.mrb[0].mxu0
    %1587 = vmatprep.mubr.bf16.mxu0 0
    %1588 = vmatmul.mubr.bf16.gmra.mrb[0].mxu0 %v1312
    %v1589 = vpop.f32.mrb[0].mxu0
    %v1590 = vadd.f32 %v1493, %v1589
    %v1591 = vpop.f32.mrb[0].mxu0
    %v1592 = vpop.f32.mrb[0].mxu0
    %v1593 = vadd.f32 %v1496, %v1592
    %v1594 = vpop.f32.mrb[0].mxu0
    %1595 = vdwg.mxu0
    %s1596 = scalar_lea.vmem [#allocation13], 32
    %v1597 = vld [vmem:[%s1596] sm:$0xf]
    %v1598 = vld [vmem:[%s1596 + $0x4] sm:$0xf]
    %v1599 = vld [vmem:[%s1596 + $0x8] sm:$0xf]
    %v1600 = vld [vmem:[%s1596 + $0xc] sm:$0xf]
    %v1605 = vunpack.c.l.b16 %v1597
    %v1606 = vunpack.c.l.b16 %v1598
    %v1607 = vunpack.c.l.b16 %v1599
    %v1608 = vunpack.c.l.b16 %v1600
    %v1609 = vpack.c.b16 %v1606, %v1605
    %v1610 = vpack.c.b16 %v1608, %v1607
    %v1612 = vsel %vm739, %v1609, 0
    %v1615 = vsel %vm739, %v1610, 0
    %1617 = vmatprep.subr.bf16.mxu0 0
    %1618 = vmatpush1.bf16.msra.mxu0 %v1228
    %1619 = vmatprep.subr.bf16.mxu0 0
    %1620 = vmatpush1.bf16.msra.mxu0 %v1229
    %1621 = vmatprep.subr.bf16.mxu0 0
    %1622 = vmatpush1.bf16.msra.mxu0 0
    %1623 = vmatprep.subr.bf16.mxu0 0
    %1624 = vmatpush1.bf16.msra.mxu0 0
    %1625 = vmatprep.subr.bf16.mxu0 0
    %1626 = vmatpush1.bf16.msra.mxu0 0
    %1627 = vmatprep.subr.bf16.mxu0 0
    %1628 = vmatpush1.bf16.msra.mxu0 0
    %1629 = vmatprep.subr.bf16.mxu0 0
    %1630 = vmatpush1.bf16.msra.mxu0 0
    %1631 = vmatprep.subr.bf16.mxu0 0
    %1632 = vmatpush1.bf16.msra.mxu0 0
    %1633 = vmatprep.subr.bf16.mxu0 0
    %1634 = vmatpush1.bf16.msra.mxu0 0
    %1635 = vmatprep.subr.bf16.mxu0 0
    %1636 = vmatpush1.bf16.msra.mxu0 0
    %1637 = vmatprep.subr.bf16.mxu0 0
    %1638 = vmatpush1.bf16.msra.mxu0 0
    %1639 = vmatprep.subr.bf16.mxu0 0
    %1640 = vmatpush1.bf16.msra.mxu0 0
    %1641 = vmatprep.subr.bf16.mxu0 0
    %1642 = vmatpush1.bf16.msra.mxu0 0
    %1643 = vmatprep.subr.bf16.mxu0 0
    %1644 = vmatpush1.bf16.msra.mxu0 0
    %1645 = vmatprep.subr.bf16.mxu0 0
    %1646 = vmatpush1.bf16.msra.mxu0 0
    %1647 = vmatprep.subr.bf16.mxu0 0
    %1648 = vmatpush1.bf16.msra.mxu0 0
    %1649 = vmatprep.mubr.bf16.mxu0 0
    %1650 = vmatmul.mubr.bf16.gmra.mrb[0].mxu0 %v1612
    %v1651 = vpop.f32.mrb[0].mxu0
    %v1652 = vadd.f32 0.0, %v1651
    %v1653 = vpop.f32.mrb[0].mxu0
    %v1654 = vpop.f32.mrb[0].mxu0
    %v1655 = vadd.f32 0.0, %v1654
    %v1656 = vpop.f32.mrb[0].mxu0
    %1657 = vmatprep.mubr.bf16.mxu0 0
    %1658 = vmatmul.mubr.bf16.gmra.mrb[0].mxu0 %v1615
    %v1659 = vpop.f32.mrb[0].mxu0
    %v1660 = vadd.f32 0.0, %v1659
    %v1661 = vpop.f32.mrb[0].mxu0
    %v1662 = vpop.f32.mrb[0].mxu0
    %v1663 = vadd.f32 0.0, %v1662
    %v1664 = vpop.f32.mrb[0].mxu0
    %1665 = vdwg.mxu0
    %s1666 = scalar_lea.vmem %s15, 128
    %v1667 = vld [vmem:[%s1666] sm:$0xf]
    %v1668 = vld [vmem:[%s1666 + $0x4] sm:$0xf]
    %v1669 = vld [vmem:[%s1666 + $0x8] sm:$0xf]
    %v1670 = vld [vmem:[%s1666 + $0xc] sm:$0xf]
    %v1671 = vld [vmem:[%s1666 + $0x10] sm:$0xf]
    %v1672 = vld [vmem:[%s1666 + $0x14] sm:$0xf]
    %v1673 = vld [vmem:[%s1666 + $0x18] sm:$0xf]
    %v1674 = vld [vmem:[%s1666 + $0x1c] sm:$0xf]
    %v1675 = vld [vmem:[%s1666 + $0x20] sm:$0xf]
    %v1676 = vld [vmem:[%s1666 + $0x24] sm:$0xf]
    %v1677 = vld [vmem:[%s1666 + $0x28] sm:$0xf]
    %v1678 = vld [vmem:[%s1666 + $0x2c] sm:$0xf]
    %v1679 = vld [vmem:[%s1666 + $0x30] sm:$0xf]
    %v1680 = vld [vmem:[%s1666 + $0x34] sm:$0xf]
    %v1681 = vld [vmem:[%s1666 + $0x38] sm:$0xf]
    %v1682 = vld [vmem:[%s1666 + $0x3c] sm:$0xf]
    %v1683 = vpack.c.bf16 %v1655, %v1652
    %v1684 = vpack.c.bf16 %v1663, %v1660
    %v1701 = vunpack.c.l.b16 %v1667
    %v1702 = vunpack.c.l.b16 %v1668
    %v1703 = vunpack.c.l.b16 %v1669
    %v1704 = vunpack.c.l.b16 %v1670
    %v1705 = vunpack.c.l.b16 %v1671
    %v1706 = vunpack.c.l.b16 %v1672
    %v1707 = vunpack.c.l.b16 %v1673
    %v1708 = vunpack.c.l.b16 %v1674
    %v1709 = vunpack.c.l.b16 %v1675
    %v1710 = vunpack.c.l.b16 %v1676
    %v1711 = vunpack.c.l.b16 %v1677
    %v1712 = vunpack.c.l.b16 %v1678
    %v1713 = vunpack.c.l.b16 %v1679
    %v1714 = vunpack.c.l.b16 %v1680
    %v1715 = vunpack.c.l.b16 %v1681
    %v1716 = vunpack.c.l.b16 %v1682
    %v1717 = vpack.c.b16 %v1702, %v1701
    %v1718 = vpack.c.b16 %v1704, %v1703
    %v1719 = vpack.c.b16 %v1706, %v1705
    %v1720 = vpack.c.b16 %v1708, %v1707
    %v1721 = vpack.c.b16 %v1710, %v1709
    %v1722 = vpack.c.b16 %v1712, %v1711
    %v1723 = vpack.c.b16 %v1714, %v1713
    %v1724 = vpack.c.b16 %v1716, %v1715
    %1733 = vmatprep.subr.bf16.mxu0 0
    %1734 = vmatpush1.bf16.msra.mxu0 %v1717
    %1735 = vmatprep.subr.bf16.mxu0 0
    %1736 = vmatpush1.bf16.msra.mxu0 %v1718
    %1737 = vmatprep.subr.bf16.mxu0 0
    %1738 = vmatpush1.bf16.msra.mxu0 %v1719
    %1739 = vmatprep.subr.bf16.mxu0 0
    %1740 = vmatpush1.bf16.msra.mxu0 %v1720
    %1741 = vmatprep.subr.bf16.mxu0 0
    %1742 = vmatpush1.bf16.msra.mxu0 %v1721
    %1743 = vmatprep.subr.bf16.mxu0 0
    %1744 = vmatpush1.bf16.msra.mxu0 %v1722
    %1745 = vmatprep.subr.bf16.mxu0 0
    %1746 = vmatpush1.bf16.msra.mxu0 %v1723
    %1747 = vmatprep.subr.bf16.mxu0 0
    %1748 = vmatpush1.bf16.msra.mxu0 %v1724
    %1749 = vmatprep.subr.bf16.mxu0 0
    %1750 = vmatpush1.bf16.msra.mxu0 0
    %1751 = vmatprep.subr.bf16.mxu0 0
    %1752 = vmatpush1.bf16.msra.mxu0 0
    %1753 = vmatprep.subr.bf16.mxu0 0
    %1754 = vmatpush1.bf16.msra.mxu0 0
    %1755 = vmatprep.subr.bf16.mxu0 0
    %1756 = vmatpush1.bf16.msra.mxu0 0
    %1757 = vmatprep.subr.bf16.mxu0 0
    %1758 = vmatpush1.bf16.msra.mxu0 0
    %1759 = vmatprep.subr.bf16.mxu0 0
    %1760 = vmatpush1.bf16.msra.mxu0 0
    %1761 = vmatprep.subr.bf16.mxu0 0
    %1762 = vmatpush1.bf16.msra.mxu0 0
    %1763 = vmatprep.subr.bf16.mxu0 0
    %1764 = vmatpush1.bf16.msra.mxu0 0
    %1765 = vmatprep.mubr.bf16.mxu0 0
    %1766 = vmatmul.mubr.bf16.gmra.mrb[0].mxu0 %v1683
    %v1767 = vpop.f32.mrb[0].mxu0
    %v1768 = vadd.f32 0.0, %v1767
    %v1769 = vpop.f32.mrb[0].mxu0
    %v1770 = vpop.f32.mrb[0].mxu0
    %v1771 = vadd.f32 0.0, %v1770
    %v1772 = vpop.f32.mrb[0].mxu0
    %1773 = vmatprep.mubr.bf16.mxu0 0
    %1774 = vmatmul.mubr.bf16.gmra.mrb[0].mxu0 %v1684
    %v1775 = vpop.f32.mrb[0].mxu0
    %v1776 = vadd.f32 0.0, %v1775
    %v1777 = vpop.f32.mrb[0].mxu0
    %v1778 = vpop.f32.mrb[0].mxu0
    %v1779 = vadd.f32 0.0, %v1778
    %v1780 = vpop.f32.mrb[0].mxu0
    %1781 = vdwg.mxu0
    %v1782 = vadd.f32 %v1582, %v1768
    %v1783 = vadd.f32 %v1585, %v1771
    %v1784 = vadd.f32 %v1590, %v1776
    %v1785 = vadd.f32 %v1593, %v1779
    %v1786 = vld [vmem:[#allocation14] sm:$0x1]
    %v1788 = vlaneseq
    %v1789 = vshrl.u32 %v1788, 7
    %v1790 = vsub.s32 0, %v1789
    %v1791 = vrot.slane %v1786, %v1790
    %v1793 = vadd.f32 %v1782, %v1791
    %v1794 = vadd.f32 %v1783, %v1791
    %v1795 = vadd.f32 %v1784, %v1791
    %v1796 = vadd.f32 %v1785, %v1791
    %v1797 = vmax.f32 %v1793, 0.0
    %v1798 = vmax.f32 %v1794, 0.0
    %v1799 = vmax.f32 %v1795, 0.0
    %v1800 = vmax.f32 %v1796, 0.0
    %v1801 = vld [vmem:[#allocation16] sm:$0xf]
    %v1802 = vld [vmem:[#allocation16 + $0x4] sm:$0xf]
    %v1803 = vpack.c.bf16 %v1798, %v1797
    %v1804 = vpack.c.bf16 %v1800, %v1799
    %v1807 = vunpack.c.l.b16 %v1801
    %v1808 = vunpack.c.l.b16 %v1802
    %v1809 = vpack.c.b16 %v1808, %v1807
    %v1811 = vsel %vm739, %v1809, 0
    %1813 = vmatprep.subr.bf16.mxu0 0
    %1814 = vmatpush1.bf16.msra.mxu0 %v1803
    %1815 = vmatprep.subr.bf16.mxu0 0
    %1816 = vmatpush1.bf16.msra.mxu0 %v1804
    %1817 = vmatprep.subr.bf16.mxu0 0
    %1818 = vmatpush1.bf16.msra.mxu0 0
    %1819 = vmatprep.subr.bf16.mxu0 0
    %1820 = vmatpush1.bf16.msra.mxu0 0
    %1821 = vmatprep.subr.bf16.mxu0 0
    %1822 = vmatpush1.bf16.msra.mxu0 0
    %1823 = vmatprep.subr.bf16.mxu0 0
    %1824 = vmatpush1.bf16.msra.mxu0 0
    %1825 = vmatprep.subr.bf16.mxu0 0
    %1826 = vmatpush1.bf16.msra.mxu0 0
    %1827 = vmatprep.subr.bf16.mxu0 0
    %1828 = vmatpush1.bf16.msra.mxu0 0
    %1829 = vmatprep.subr.bf16.mxu0 0
    %1830 = vmatpush1.bf16.msra.mxu0 0
    %1831 = vmatprep.subr.bf16.mxu0 0
    %1832 = vmatpush1.bf16.msra.mxu0 0
    %1833 = vmatprep.subr.bf16.mxu0 0
    %1834 = vmatpush1.bf16.msra.mxu0 0
    %1835 = vmatprep.subr.bf16.mxu0 0
    %1836 = vmatpush1.bf16.msra.mxu0 0
    %1837 = vmatprep.subr.bf16.mxu0 0
    %1838 = vmatpush1.bf16.msra.mxu0 0
    %1839 = vmatprep.subr.bf16.mxu0 0
    %1840 = vmatpush1.bf16.msra.mxu0 0
    %1841 = vmatprep.subr.bf16.mxu0 0
    %1842 = vmatpush1.bf16.msra.mxu0 0
    %1843 = vmatprep.subr.bf16.mxu0 0
    %1844 = vmatpush1.bf16.msra.mxu0 0
    %1845 = vmatprep.mubr.bf16.mxu0 0
    %1846 = vmatmul.mubr.bf16.gmra.mrb[0].mxu0 %v1811
    %v1847 = vpop.f32.mrb[0].mxu0
    %v1848 = vadd.f32 0.0, %v1847
    %v1849 = vpop.f32.mrb[0].mxu0
    %v1850 = vpop.f32.mrb[0].mxu0
    %v1851 = vadd.f32 0.0, %v1850
    %v1852 = vpop.f32.mrb[0].mxu0
    %1853 = vdwg.mxu0
    %v1854 = vld [vmem:[%s21] sm:$0xf]
    %v1855 = vld [vmem:[%s21 + $0x4] sm:$0xf]
    %v1856 = vld [vmem:[%s21 + $0x8] sm:$0xf]
    %v1857 = vld [vmem:[%s21 + $0xc] sm:$0xf]
    %v1858 = vld [vmem:[%s21 + $0x10] sm:$0xf]
    %v1859 = vld [vmem:[%s21 + $0x14] sm:$0xf]
    %v1860 = vld [vmem:[%s21 + $0x18] sm:$0xf]
    %v1861 = vld [vmem:[%s21 + $0x1c] sm:$0xf]
    %v1862 = vld [vmem:[%s21 + $0x20] sm:$0xf]
    %v1863 = vld [vmem:[%s21 + $0x24] sm:$0xf]
    %v1864 = vld [vmem:[%s21 + $0x28] sm:$0xf]
    %v1865 = vld [vmem:[%s21 + $0x2c] sm:$0xf]
    %v1866 = vld [vmem:[%s21 + $0x30] sm:$0xf]
    %v1867 = vld [vmem:[%s21 + $0x34] sm:$0xf]
    %v1868 = vld [vmem:[%s21 + $0x38] sm:$0xf]
    %v1869 = vld [vmem:[%s21 + $0x3c] sm:$0xf]
    %v1870 = vpack.c.bf16 %v1851, %v1848
    %s1871 = scalar_lea.vmem [#allocation16], 8
    %v1872 = vld [vmem:[%s1871] sm:$0xf]
    %v1873 = vld [vmem:[%s1871 + $0x4] sm:$0xf]
    %v1876 = vunpack.c.l.b16 %v1872
    %v1877 = vunpack.c.l.b16 %v1873
    %v1878 = vpack.c.b16 %v1877, %v1876
    %v1880 = vsel %vm739, %v1878, 0
    %1882 = vmatprep.subr.bf16.mxu0 0
    %1883 = vmatpush1.bf16.msra.mxu0 %v1803
    %1884 = vmatprep.subr.bf16.mxu0 0
    %1885 = vmatpush1.bf16.msra.mxu0 %v1804
    %1886 = vmatprep.subr.bf16.mxu0 0
    %1887 = vmatpush1.bf16.msra.mxu0 0
    %1888 = vmatprep.subr.bf16.mxu0 0
    %1889 = vmatpush1.bf16.msra.mxu0 0
    %1890 = vmatprep.subr.bf16.mxu0 0
    %1891 = vmatpush1.bf16.msra.mxu0 0
    %1892 = vmatprep.subr.bf16.mxu0 0
    %1893 = vmatpush1.bf16.msra.mxu0 0
    %1894 = vmatprep.subr.bf16.mxu0 0
    %1895 = vmatpush1.bf16.msra.mxu0 0
    %1896 = vmatprep.subr.bf16.mxu0 0
    %1897 = vmatpush1.bf16.msra.mxu0 0
    %1898 = vmatprep.subr.bf16.mxu0 0
    %1899 = vmatpush1.bf16.msra.mxu0 0
    %1900 = vmatprep.subr.bf16.mxu0 0
    %1901 = vmatpush1.bf16.msra.mxu0 0
    %1902 = vmatprep.subr.bf16.mxu0 0
    %1903 = vmatpush1.bf16.msra.mxu0 0
    %1904 = vmatprep.subr.bf16.mxu0 0
    %1905 = vmatpush1.bf16.msra.mxu0 0
    %1906 = vmatprep.subr.bf16.mxu0 0
    %1907 = vmatpush1.bf16.msra.mxu0 0
    %1908 = vmatprep.subr.bf16.mxu0 0
    %1909 = vmatpush1.bf16.msra.mxu0 0
    %1910 = vmatprep.subr.bf16.mxu0 0
    %1911 = vmatpush1.bf16.msra.mxu0 0
    %1912 = vmatprep.subr.bf16.mxu0 0
    %1913 = vmatpush1.bf16.msra.mxu0 0
    %1914 = vmatprep.mubr.bf16.mxu0 0
    %1915 = vmatmul.mubr.bf16.gmra.mrb[0].mxu0 %v1880
    %v1916 = vpop.f32.mrb[0].mxu0
    %v1917 = vadd.f32 0.0, %v1916
    %v1918 = vpop.f32.mrb[0].mxu0
    %v1919 = vpop.f32.mrb[0].mxu0
    %v1920 = vadd.f32 0.0, %v1919
    %v1921 = vpop.f32.mrb[0].mxu0
    %1922 = vdwg.mxu0
    %s1923 = scalar_lea.vmem %s21, 64
    %v1924 = vld [vmem:[%s1923] sm:$0xf]
    %v1925 = vld [vmem:[%s1923 + $0x4] sm:$0xf]
    %v1926 = vld [vmem:[%s1923 + $0x8] sm:$0xf]
    %v1927 = vld [vmem:[%s1923 + $0xc] sm:$0xf]
    %v1928 = vld [vmem:[%s1923 + $0x10] sm:$0xf]
    %v1929 = vld [vmem:[%s1923 + $0x14] sm:$0xf]
    %v1930 = vld [vmem:[%s1923 + $0x18] sm:$0xf]
    %v1931 = vld [vmem:[%s1923 + $0x1c] sm:$0xf]
    %v1932 = vld [vmem:[%s1923 + $0x20] sm:$0xf]
    %v1933 = vld [vmem:[%s1923 + $0x24] sm:$0xf]
    %v1934 = vld [vmem:[%s1923 + $0x28] sm:$0xf]
    %v1935 = vld [vmem:[%s1923 + $0x2c] sm:$0xf]
    %v1936 = vld [vmem:[%s1923 + $0x30] sm:$0xf]
    %v1937 = vld [vmem:[%s1923 + $0x34] sm:$0xf]
    %v1938 = vld [vmem:[%s1923 + $0x38] sm:$0xf]
    %v1939 = vld [vmem:[%s1923 + $0x3c] sm:$0xf]
    %v1940 = vpack.c.bf16 %v1920, %v1917
    %v1957 = vunpack.c.l.b16 %v1924
    %v1958 = vunpack.c.l.b16 %v1925
    %v1959 = vunpack.c.l.b16 %v1926
    %v1960 = vunpack.c.l.b16 %v1927
    %v1961 = vunpack.c.l.b16 %v1928
    %v1962 = vunpack.c.l.b16 %v1929
    %v1963 = vunpack.c.l.b16 %v1930
    %v1964 = vunpack.c.l.b16 %v1931
    %v1965 = vunpack.c.l.b16 %v1932
    %v1966 = vunpack.c.l.b16 %v1933
    %v1967 = vunpack.c.l.b16 %v1934
    %v1968 = vunpack.c.l.b16 %v1935
    %v1969 = vunpack.c.l.b16 %v1936
    %v1970 = vunpack.c.l.b16 %v1937
    %v1971 = vunpack.c.l.b16 %v1938
    %v1972 = vunpack.c.l.b16 %v1939
    %v1973 = vpack.c.b16 %v1958, %v1957
    %v1974 = vpack.c.b16 %v1960, %v1959
    %v1975 = vpack.c.b16 %v1962, %v1961
    %v1976 = vpack.c.b16 %v1964, %v1963
    %v1977 = vpack.c.b16 %v1966, %v1965
    %v1978 = vpack.c.b16 %v1968, %v1967
    %v1979 = vpack.c.b16 %v1970, %v1969
    %v1980 = vpack.c.b16 %v1972, %v1971
    %1989 = vmatprep.subr.bf16.mxu0 0
    %1990 = vmatpush1.bf16.msra.mxu0 %v1973
    %1991 = vmatprep.subr.bf16.mxu0 0
    %1992 = vmatpush1.bf16.msra.mxu0 %v1974
    %1993 = vmatprep.subr.bf16.mxu0 0
    %1994 = vmatpush1.bf16.msra.mxu0 %v1975
    %1995 = vmatprep.subr.bf16.mxu0 0
    %1996 = vmatpush1.bf16.msra.mxu0 %v1976
    %1997 = vmatprep.subr.bf16.mxu0 0
    %1998 = vmatpush1.bf16.msra.mxu0 %v1977
    %1999 = vmatprep.subr.bf16.mxu0 0
    %2000 = vmatpush1.bf16.msra.mxu0 %v1978
    %2001 = vmatprep.subr.bf16.mxu0 0
    %2002 = vmatpush1.bf16.msra.mxu0 %v1979
    %2003 = vmatprep.subr.bf16.mxu0 0
    %2004 = vmatpush1.bf16.msra.mxu0 %v1980
    %2005 = vmatprep.subr.bf16.mxu0 0
    %2006 = vmatpush1.bf16.msra.mxu0 0
    %2007 = vmatprep.subr.bf16.mxu0 0
    %2008 = vmatpush1.bf16.msra.mxu0 0
    %2009 = vmatprep.subr.bf16.mxu0 0
    %2010 = vmatpush1.bf16.msra.mxu0 0
    %2011 = vmatprep.subr.bf16.mxu0 0
    %2012 = vmatpush1.bf16.msra.mxu0 0
    %2013 = vmatprep.subr.bf16.mxu0 0
    %2014 = vmatpush1.bf16.msra.mxu0 0
    %2015 = vmatprep.subr.bf16.mxu0 0
    %2016 = vmatpush1.bf16.msra.mxu0 0
    %2017 = vmatprep.subr.bf16.mxu0 0
    %2018 = vmatpush1.bf16.msra.mxu0 0
    %2019 = vmatprep.subr.bf16.mxu0 0
    %2020 = vmatpush1.bf16.msra.mxu0 0
    %2021 = vmatprep.mubr.bf16.mxu0 0
    %2022 = vmatmul.mubr.bf16.gmra.mrb[0].mxu0 %v1940
    %v2023 = vpop.f32.mrb[0].mxu0
    %v2024 = vadd.f32 0.0, %v2023
    %v2025 = vpop.f32.mrb[0].mxu0
    %v2026 = vpop.f32.mrb[0].mxu0
    %v2027 = vadd.f32 0.0, %v2026
    %v2028 = vpop.f32.mrb[0].mxu0
    %2029 = vdwg.mxu0
    %v2046 = vunpack.c.l.b16 %v1854
    %v2047 = vunpack.c.l.b16 %v1855
    %v2048 = vunpack.c.l.b16 %v1856
    %v2049 = vunpack.c.l.b16 %v1857
    %v2050 = vunpack.c.l.b16 %v1858
    %v2051 = vunpack.c.l.b16 %v1859
    %v2052 = vunpack.c.l.b16 %v1860
    %v2053 = vunpack.c.l.b16 %v1861
    %v2054 = vunpack.c.l.b16 %v1862
    %v2055 = vunpack.c.l.b16 %v1863
    %v2056 = vunpack.c.l.b16 %v1864
    %v2057 = vunpack.c.l.b16 %v1865
    %v2058 = vunpack.c.l.b16 %v1866
    %v2059 = vunpack.c.l.b16 %v1867
    %v2060 = vunpack.c.l.b16 %v1868
    %v2061 = vunpack.c.l.b16 %v1869
    %v2062 = vpack.c.b16 %v2047, %v2046
    %v2063 = vpack.c.b16 %v2049, %v2048
    %v2064 = vpack.c.b16 %v2051, %v2050
    %v2065 = vpack.c.b16 %v2053, %v2052
    %v2066 = vpack.c.b16 %v2055, %v2054
    %v2067 = vpack.c.b16 %v2057, %v2056
    %v2068 = vpack.c.b16 %v2059, %v2058
    %v2069 = vpack.c.b16 %v2061, %v2060
    %2078 = vmatprep.subr.bf16.mxu0 0
    %2079 = vmatpush1.bf16.msra.mxu0 %v2062
    %2080 = vmatprep.subr.bf16.mxu0 0
    %2081 = vmatpush1.bf16.msra.mxu0 %v2063
    %2082 = vmatprep.subr.bf16.mxu0 0
    %2083 = vmatpush1.bf16.msra.mxu0 %v2064
    %2084 = vmatprep.subr.bf16.mxu0 0
    %2085 = vmatpush1.bf16.msra.mxu0 %v2065
    %2086 = vmatprep.subr.bf16.mxu0 0
    %2087 = vmatpush1.bf16.msra.mxu0 %v2066
    %2088 = vmatprep.subr.bf16.mxu0 0
    %2089 = vmatpush1.bf16.msra.mxu0 %v2067
    %2090 = vmatprep.subr.bf16.mxu0 0
    %2091 = vmatpush1.bf16.msra.mxu0 %v2068
    %2092 = vmatprep.subr.bf16.mxu0 0
    %2093 = vmatpush1.bf16.msra.mxu0 %v2069
    %2094 = vmatprep.subr.bf16.mxu0 0
    %2095 = vmatpush1.bf16.msra.mxu0 0
    %2096 = vmatprep.subr.bf16.mxu0 0
    %2097 = vmatpush1.bf16.msra.mxu0 0
    %2098 = vmatprep.subr.bf16.mxu0 0
    %2099 = vmatpush1.bf16.msra.mxu0 0
    %2100 = vmatprep.subr.bf16.mxu0 0
    %2101 = vmatpush1.bf16.msra.mxu0 0
    %2102 = vmatprep.subr.bf16.mxu0 0
    %2103 = vmatpush1.bf16.msra.mxu0 0
    %2104 = vmatprep.subr.bf16.mxu0 0
    %2105 = vmatpush1.bf16.msra.mxu0 0
    %2106 = vmatprep.subr.bf16.mxu0 0
    %2107 = vmatpush1.bf16.msra.mxu0 0
    %2108 = vmatprep.subr.bf16.mxu0 0
    %2109 = vmatpush1.bf16.msra.mxu0 0
    %2110 = vmatprep.mubr.bf16.mxu0 0
    %2111 = vmatmul.mubr.bf16.gmra.mrb[0].mxu0 %v1870
    %v2112 = vpop.f32.mrb[0].mxu0
    %v2113 = vadd.f32 %v2024, %v2112
    %v2114 = vpop.f32.mrb[0].mxu0
    %v2115 = vpop.f32.mrb[0].mxu0
    %v2116 = vadd.f32 %v2027, %v2115
    %v2117 = vpop.f32.mrb[0].mxu0
    %2118 = vdwg.mxu0
    %s2119 = scalar_lea.vmem [#allocation16], 16
    %v2120 = vld [vmem:[%s2119] sm:$0xf]
    %v2121 = vld [vmem:[%s2119 + $0x4] sm:$0xf]
    %v2124 = vunpack.c.l.b16 %v2120
    %v2125 = vunpack.c.l.b16 %v2121
    %v2126 = vpack.c.b16 %v2125, %v2124
    %v2128 = vsel %vm739, %v2126, 0
    %2130 = vmatprep.subr.bf16.mxu0 0
    %2131 = vmatpush1.bf16.msra.mxu0 %v1803
    %2132 = vmatprep.subr.bf16.mxu0 0
    %2133 = vmatpush1.bf16.msra.mxu0 %v1804
    %2134 = vmatprep.subr.bf16.mxu0 0
    %2135 = vmatpush1.bf16.msra.mxu0 0
    %2136 = vmatprep.subr.bf16.mxu0 0
    %2137 = vmatpush1.bf16.msra.mxu0 0
    %2138 = vmatprep.subr.bf16.mxu0 0
    %2139 = vmatpush1.bf16.msra.mxu0 0
    %2140 = vmatprep.subr.bf16.mxu0 0
    %2141 = vmatpush1.bf16.msra.mxu0 0
    %2142 = vmatprep.subr.bf16.mxu0 0
    %2143 = vmatpush1.bf16.msra.mxu0 0
    %2144 = vmatprep.subr.bf16.mxu0 0
    %2145 = vmatpush1.bf16.msra.mxu0 0
    %2146 = vmatprep.subr.bf16.mxu0 0
    %2147 = vmatpush1.bf16.msra.mxu0 0
    %2148 = vmatprep.subr.bf16.mxu0 0
    %2149 = vmatpush1.bf16.msra.mxu0 0
    %2150 = vmatprep.subr.bf16.mxu0 0
    %2151 = vmatpush1.bf16.msra.mxu0 0
    %2152 = vmatprep.subr.bf16.mxu0 0
    %2153 = vmatpush1.bf16.msra.mxu0 0
    %2154 = vmatprep.subr.bf16.mxu0 0
    %2155 = vmatpush1.bf16.msra.mxu0 0
    %2156 = vmatprep.subr.bf16.mxu0 0
    %2157 = vmatpush1.bf16.msra.mxu0 0
    %2158 = vmatprep.subr.bf16.mxu0 0
    %2159 = vmatpush1.bf16.msra.mxu0 0
    %2160 = vmatprep.subr.bf16.mxu0 0
    %2161 = vmatpush1.bf16.msra.mxu0 0
    %2162 = vmatprep.mubr.bf16.mxu0 0
    %2163 = vmatmul.mubr.bf16.gmra.mrb[0].mxu0 %v2128
    %v2164 = vpop.f32.mrb[0].mxu0
    %v2165 = vadd.f32 0.0, %v2164
    %v2166 = vpop.f32.mrb[0].mxu0
    %v2167 = vpop.f32.mrb[0].mxu0
    %v2168 = vadd.f32 0.0, %v2167
    %v2169 = vpop.f32.mrb[0].mxu0
    %2170 = vdwg.mxu0
    %s2171 = scalar_lea.vmem %s21, 128
    %v2172 = vld [vmem:[%s2171] sm:$0xf]
    %v2173 = vld [vmem:[%s2171 + $0x4] sm:$0xf]
    %v2174 = vld [vmem:[%s2171 + $0x8] sm:$0xf]
    %v2175 = vld [vmem:[%s2171 + $0xc] sm:$0xf]
    %v2176 = vld [vmem:[%s2171 + $0x10] sm:$0xf]
    %v2177 = vld [vmem:[%s2171 + $0x14] sm:$0xf]
    %v2178 = vld [vmem:[%s2171 + $0x18] sm:$0xf]
    %v2179 = vld [vmem:[%s2171 + $0x1c] sm:$0xf]
    %v2180 = vld [vmem:[%s2171 + $0x20] sm:$0xf]
    %v2181 = vld [vmem:[%s2171 + $0x24] sm:$0xf]
    %v2182 = vld [vmem:[%s2171 + $0x28] sm:$0xf]
    %v2183 = vld [vmem:[%s2171 + $0x2c] sm:$0xf]
    %v2184 = vld [vmem:[%s2171 + $0x30] sm:$0xf]
    %v2185 = vld [vmem:[%s2171 + $0x34] sm:$0xf]
    %v2186 = vld [vmem:[%s2171 + $0x38] sm:$0xf]
    %v2187 = vld [vmem:[%s2171 + $0x3c] sm:$0xf]
    %v2188 = vpack.c.bf16 %v2168, %v2165
    %v2205 = vunpack.c.l.b16 %v2172
    %v2206 = vunpack.c.l.b16 %v2173
    %v2207 = vunpack.c.l.b16 %v2174
    %v2208 = vunpack.c.l.b16 %v2175
    %v2209 = vunpack.c.l.b16 %v2176
    %v2210 = vunpack.c.l.b16 %v2177
    %v2211 = vunpack.c.l.b16 %v2178
    %v2212 = vunpack.c.l.b16 %v2179
    %v2213 = vunpack.c.l.b16 %v2180
    %v2214 = vunpack.c.l.b16 %v2181
    %v2215 = vunpack.c.l.b16 %v2182
    %v2216 = vunpack.c.l.b16 %v2183
    %v2217 = vunpack.c.l.b16 %v2184
    %v2218 = vunpack.c.l.b16 %v2185
    %v2219 = vunpack.c.l.b16 %v2186
    %v2220 = vunpack.c.l.b16 %v2187
    %v2221 = vpack.c.b16 %v2206, %v2205
    %v2222 = vpack.c.b16 %v2208, %v2207
    %v2223 = vpack.c.b16 %v2210, %v2209
    %v2224 = vpack.c.b16 %v2212, %v2211
    %v2225 = vpack.c.b16 %v2214, %v2213
    %v2226 = vpack.c.b16 %v2216, %v2215
    %v2227 = vpack.c.b16 %v2218, %v2217
    %v2228 = vpack.c.b16 %v2220, %v2219
    %2237 = vmatprep.subr.bf16.mxu0 0
    %2238 = vmatpush1.bf16.msra.mxu0 %v2221
    %2239 = vmatprep.subr.bf16.mxu0 0
    %2240 = vmatpush1.bf16.msra.mxu0 %v2222
    %2241 = vmatprep.subr.bf16.mxu0 0
    %2242 = vmatpush1.bf16.msra.mxu0 %v2223
    %2243 = vmatprep.subr.bf16.mxu0 0
    %2244 = vmatpush1.bf16.msra.mxu0 %v2224
    %2245 = vmatprep.subr.bf16.mxu0 0
    %2246 = vmatpush1.bf16.msra.mxu0 %v2225
    %2247 = vmatprep.subr.bf16.mxu0 0
    %2248 = vmatpush1.bf16.msra.mxu0 %v2226
    %2249 = vmatprep.subr.bf16.mxu0 0
    %2250 = vmatpush1.bf16.msra.mxu0 %v2227
    %2251 = vmatprep.subr.bf16.mxu0 0
    %2252 = vmatpush1.bf16.msra.mxu0 %v2228
    %2253 = vmatprep.subr.bf16.mxu0 0
    %2254 = vmatpush1.bf16.msra.mxu0 0
    %2255 = vmatprep.subr.bf16.mxu0 0
    %2256 = vmatpush1.bf16.msra.mxu0 0
    %2257 = vmatprep.subr.bf16.mxu0 0
    %2258 = vmatpush1.bf16.msra.mxu0 0
    %2259 = vmatprep.subr.bf16.mxu0 0
    %2260 = vmatpush1.bf16.msra.mxu0 0
    %2261 = vmatprep.subr.bf16.mxu0 0
    %2262 = vmatpush1.bf16.msra.mxu0 0
    %2263 = vmatprep.subr.bf16.mxu0 0
    %2264 = vmatpush1.bf16.msra.mxu0 0
    %2265 = vmatprep.subr.bf16.mxu0 0
    %2266 = vmatpush1.bf16.msra.mxu0 0
    %2267 = vmatprep.subr.bf16.mxu0 0
    %2268 = vmatpush1.bf16.msra.mxu0 0
    %2269 = vmatprep.mubr.bf16.mxu0 0
    %2270 = vmatmul.mubr.bf16.gmra.mrb[0].mxu0 %v2188
    %v2271 = vpop.f32.mrb[0].mxu0
    %v2272 = vadd.f32 0.0, %v2271
    %v2273 = vpop.f32.mrb[0].mxu0
    %v2274 = vpop.f32.mrb[0].mxu0
    %v2275 = vadd.f32 0.0, %v2274
    %v2276 = vpop.f32.mrb[0].mxu0
    %2277 = vdwg.mxu0
    %v2278 = vadd.f32 %v2113, %v2272
    %v2279 = vadd.f32 %v2116, %v2275
    %v2280 = vld [vmem:[#allocation17] sm:$0x1]
    %v2282 = vlaneseq
    %v2283 = vshrl.u32 %v2282, 7
    %v2284 = vsub.s32 0, %v2283
    %v2285 = vrot.slane %v2280, %v2284
    %v2287 = vadd.f32 %v2278, %v2285
    %v2288 = vadd.f32 %v2279, %v2285
    %v2289 = vmax.f32 %v2287, 0.0
    %v2290 = vmax.f32 %v2288, 0.0
    %v2291 = vld [vmem:[#allocation19] sm:$0xf]
    %v2292 = vpack.c.bf16 %v2290, %v2289
    %v2294 = vsel %vm456, %v2291, 0
    %2296 = vmatprep.subr.bf16.mxu0 0
    %2297 = vmatpush1.bf16.msra.mxu0 %v2292
    %2298 = vmatprep.subr.bf16.mxu0 0
    %2299 = vmatpush1.bf16.msra.mxu0 0
    %2300 = vmatprep.subr.bf16.mxu0 0
    %2301 = vmatpush1.bf16.msra.mxu0 0
    %2302 = vmatprep.subr.bf16.mxu0 0
    %2303 = vmatpush1.bf16.msra.mxu0 0
    %2304 = vmatprep.subr.bf16.mxu0 0
    %2305 = vmatpush1.bf16.msra.mxu0 0
    %2306 = vmatprep.subr.bf16.mxu0 0
    %2307 = vmatpush1.bf16.msra.mxu0 0
    %2308 = vmatprep.subr.bf16.mxu0 0
    %2309 = vmatpush1.bf16.msra.mxu0 0
    %2310 = vmatprep.subr.bf16.mxu0 0
    %2311 = vmatpush1.bf16.msra.mxu0 0
    %2312 = vmatprep.subr.bf16.mxu0 0
    %2313 = vmatpush1.bf16.msra.mxu0 0
    %2314 = vmatprep.subr.bf16.mxu0 0
    %2315 = vmatpush1.bf16.msra.mxu0 0
    %2316 = vmatprep.subr.bf16.mxu0 0
    %2317 = vmatpush1.bf16.msra.mxu0 0
    %2318 = vmatprep.subr.bf16.mxu0 0
    %2319 = vmatpush1.bf16.msra.mxu0 0
    %2320 = vmatprep.subr.bf16.mxu0 0
    %2321 = vmatpush1.bf16.msra.mxu0 0
    %2322 = vmatprep.subr.bf16.mxu0 0
    %2323 = vmatpush1.bf16.msra.mxu0 0
    %2324 = vmatprep.subr.bf16.mxu0 0
    %2325 = vmatpush1.bf16.msra.mxu0 0
    %2326 = vmatprep.subr.bf16.mxu0 0
    %2327 = vmatpush1.bf16.msra.mxu0 0
    %2328 = vmatprep.mubr.bf16.mxu0 0
    %2329 = vmatmul.mubr.bf16.gmra.mrb[0].mxu0 %v2294
    %v2330 = vpop.f32.mrb[0].mxu0
    %v2331 = vadd.f32 0.0, %v2330
    %v2332 = vpop.f32.mrb[0].mxu0
    %v2333 = vpop.f32.mrb[0].mxu0
    %v2334 = vpop.f32.mrb[0].mxu0
    %2335 = vdwg.mxu0
    %v2336 = vld [vmem:[#allocation20] sm:$0xf]
    %v2337 = vld [vmem:[#allocation20 + $0x4] sm:$0xf]
    %v2338 = vld [vmem:[#allocation20 + $0x8] sm:$0xf]
    %v2339 = vld [vmem:[#allocation20 + $0xc] sm:$0xf]
    %v2340 = vld [vmem:[#allocation20 + $0x10] sm:$0xf]
    %v2341 = vld [vmem:[#allocation20 + $0x14] sm:$0xf]
    %v2342 = vld [vmem:[#allocation20 + $0x18] sm:$0xf]
    %v2343 = vld [vmem:[#allocation20 + $0x1c] sm:$0xf]
    %v2344 = vld [vmem:[#allocation20 + $0x20] sm:$0xf]
    %v2345 = vld [vmem:[#allocation20 + $0x24] sm:$0xf]
    %v2346 = vld [vmem:[#allocation20 + $0x28] sm:$0xf]
    %v2347 = vld [vmem:[#allocation20 + $0x2c] sm:$0xf]
    %v2348 = vld [vmem:[#allocation20 + $0x30] sm:$0xf]
    %v2349 = vld [vmem:[#allocation20 + $0x34] sm:$0xf]
    %v2350 = vld [vmem:[#allocation20 + $0x38] sm:$0xf]
    %v2351 = vld [vmem:[#allocation20 + $0x3c] sm:$0xf]
    %v2352 = vpack.c.bf16 %v2331, %v2331
    %s2353 = scalar_lea.vmem [#allocation19], 4
    %v2354 = vld [vmem:[%s2353] sm:$0xf]
    %v2356 = vsel %vm456, %v2354, 0
    %2358 = vmatprep.subr.bf16.mxu0 0
    %2359 = vmatpush1.bf16.msra.mxu0 %v2292
    %2360 = vmatprep.subr.bf16.mxu0 0
    %2361 = vmatpush1.bf16.msra.mxu0 0
    %2362 = vmatprep.subr.bf16.mxu0 0
    %2363 = vmatpush1.bf16.msra.mxu0 0
    %2364 = vmatprep.subr.bf16.mxu0 0
    %2365 = vmatpush1.bf16.msra.mxu0 0
    %2366 = vmatprep.subr.bf16.mxu0 0
    %2367 = vmatpush1.bf16.msra.mxu0 0
    %2368 = vmatprep.subr.bf16.mxu0 0
    %2369 = vmatpush1.bf16.msra.mxu0 0
    %2370 = vmatprep.subr.bf16.mxu0 0
    %2371 = vmatpush1.bf16.msra.mxu0 0
    %2372 = vmatprep.subr.bf16.mxu0 0
    %2373 = vmatpush1.bf16.msra.mxu0 0
    %2374 = vmatprep.subr.bf16.mxu0 0
    %2375 = vmatpush1.bf16.msra.mxu0 0
    %2376 = vmatprep.subr.bf16.mxu0 0
    %2377 = vmatpush1.bf16.msra.mxu0 0
    %2378 = vmatprep.subr.bf16.mxu0 0
    %2379 = vmatpush1.bf16.msra.mxu0 0
    %2380 = vmatprep.subr.bf16.mxu0 0
    %2381 = vmatpush1.bf16.msra.mxu0 0
    %2382 = vmatprep.subr.bf16.mxu0 0
    %2383 = vmatpush1.bf16.msra.mxu0 0
    %2384 = vmatprep.subr.bf16.mxu0 0
    %2385 = vmatpush1.bf16.msra.mxu0 0
    %2386 = vmatprep.subr.bf16.mxu0 0
    %2387 = vmatpush1.bf16.msra.mxu0 0
    %2388 = vmatprep.subr.bf16.mxu0 0
    %2389 = vmatpush1.bf16.msra.mxu0 0
    %2390 = vmatprep.mubr.bf16.mxu0 0
    %2391 = vmatmul.mubr.bf16.gmra.mrb[0].mxu0 %v2356
    %v2392 = vpop.f32.mrb[0].mxu0
    %v2393 = vadd.f32 0.0, %v2392
    %v2394 = vpop.f32.mrb[0].mxu0
    %v2395 = vpop.f32.mrb[0].mxu0
    %v2396 = vpop.f32.mrb[0].mxu0
    %2397 = vdwg.mxu0
    %s2398 = scalar_lea.vmem [#allocation20], 64
    %v2399 = vld [vmem:[%s2398] sm:$0xf]
    %v2400 = vld [vmem:[%s2398 + $0x4] sm:$0xf]
    %v2401 = vld [vmem:[%s2398 + $0x8] sm:$0xf]
    %v2402 = vld [vmem:[%s2398 + $0xc] sm:$0xf]
    %v2403 = vld [vmem:[%s2398 + $0x10] sm:$0xf]
    %v2404 = vld [vmem:[%s2398 + $0x14] sm:$0xf]
    %v2405 = vld [vmem:[%s2398 + $0x18] sm:$0xf]
    %v2406 = vld [vmem:[%s2398 + $0x1c] sm:$0xf]
    %v2407 = vld [vmem:[%s2398 + $0x20] sm:$0xf]
    %v2408 = vld [vmem:[%s2398 + $0x24] sm:$0xf]
    %v2409 = vld [vmem:[%s2398 + $0x28] sm:$0xf]
    %v2410 = vld [vmem:[%s2398 + $0x2c] sm:$0xf]
    %v2411 = vld [vmem:[%s2398 + $0x30] sm:$0xf]
    %v2412 = vld [vmem:[%s2398 + $0x34] sm:$0xf]
    %v2413 = vld [vmem:[%s2398 + $0x38] sm:$0xf]
    %v2414 = vld [vmem:[%s2398 + $0x3c] sm:$0xf]
    %v2415 = vpack.c.bf16 %v2393, %v2393
    %v2432 = vunpack.c.l.b16 %v2399
    %v2433 = vunpack.c.l.b16 %v2400
    %v2434 = vunpack.c.l.b16 %v2401
    %v2435 = vunpack.c.l.b16 %v2402
    %v2436 = vunpack.c.l.b16 %v2403
    %v2437 = vunpack.c.l.b16 %v2404
    %v2438 = vunpack.c.l.b16 %v2405
    %v2439 = vunpack.c.l.b16 %v2406
    %v2440 = vunpack.c.l.b16 %v2407
    %v2441 = vunpack.c.l.b16 %v2408
    %v2442 = vunpack.c.l.b16 %v2409
    %v2443 = vunpack.c.l.b16 %v2410
    %v2444 = vunpack.c.l.b16 %v2411
    %v2445 = vunpack.c.l.b16 %v2412
    %v2446 = vunpack.c.l.b16 %v2413
    %v2447 = vunpack.c.l.b16 %v2414
    %v2448 = vpack.c.b16 %v2433, %v2432
    %v2449 = vpack.c.b16 %v2435, %v2434
    %v2450 = vpack.c.b16 %v2437, %v2436
    %v2451 = vpack.c.b16 %v2439, %v2438
    %v2452 = vpack.c.b16 %v2441, %v2440
    %v2453 = vpack.c.b16 %v2443, %v2442
    %v2454 = vpack.c.b16 %v2445, %v2444
    %v2455 = vpack.c.b16 %v2447, %v2446
    %2464 = vmatprep.subr.bf16.mxu0 0
    %2465 = vmatpush1.bf16.msra.mxu0 %v2448
    %2466 = vmatprep.subr.bf16.mxu0 0
    %2467 = vmatpush1.bf16.msra.mxu0 %v2449
    %2468 = vmatprep.subr.bf16.mxu0 0
    %2469 = vmatpush1.bf16.msra.mxu0 %v2450
    %2470 = vmatprep.subr.bf16.mxu0 0
    %2471 = vmatpush1.bf16.msra.mxu0 %v2451
    %2472 = vmatprep.subr.bf16.mxu0 0
    %2473 = vmatpush1.bf16.msra.mxu0 %v2452
    %2474 = vmatprep.subr.bf16.mxu0 0
    %2475 = vmatpush1.bf16.msra.mxu0 %v2453
    %2476 = vmatprep.subr.bf16.mxu0 0
    %2477 = vmatpush1.bf16.msra.mxu0 %v2454
    %2478 = vmatprep.subr.bf16.mxu0 0
    %2479 = vmatpush1.bf16.msra.mxu0 %v2455
    %2480 = vmatprep.subr.bf16.mxu0 0
    %2481 = vmatpush1.bf16.msra.mxu0 0
    %2482 = vmatprep.subr.bf16.mxu0 0
    %2483 = vmatpush1.bf16.msra.mxu0 0
    %2484 = vmatprep.subr.bf16.mxu0 0
    %2485 = vmatpush1.bf16.msra.mxu0 0
    %2486 = vmatprep.subr.bf16.mxu0 0
    %2487 = vmatpush1.bf16.msra.mxu0 0
    %2488 = vmatprep.subr.bf16.mxu0 0
    %2489 = vmatpush1.bf16.msra.mxu0 0
    %2490 = vmatprep.subr.bf16.mxu0 0
    %2491 = vmatpush1.bf16.msra.mxu0 0
    %2492 = vmatprep.subr.bf16.mxu0 0
    %2493 = vmatpush1.bf16.msra.mxu0 0
    %2494 = vmatprep.subr.bf16.mxu0 0
    %2495 = vmatpush1.bf16.msra.mxu0 0
    %2496 = vmatprep.mubr.bf16.mxu0 0
    %2497 = vmatmul.mubr.bf16.gmra.mrb[0].mxu0 %v2415
    %v2498 = vpop.f32.mrb[0].mxu0
    %v2499 = vadd.f32 0.0, %v2498
    %v2500 = vpop.f32.mrb[0].mxu0
    %v2501 = vpop.f32.mrb[0].mxu0
    %v2502 = vpop.f32.mrb[0].mxu0
    %2503 = vdwg.mxu0
    %v2520 = vunpack.c.l.b16 %v2336
    %v2521 = vunpack.c.l.b16 %v2337
    %v2522 = vunpack.c.l.b16 %v2338
    %v2523 = vunpack.c.l.b16 %v2339
    %v2524 = vunpack.c.l.b16 %v2340
    %v2525 = vunpack.c.l.b16 %v2341
    %v2526 = vunpack.c.l.b16 %v2342
    %v2527 = vunpack.c.l.b16 %v2343
    %v2528 = vunpack.c.l.b16 %v2344
    %v2529 = vunpack.c.l.b16 %v2345
    %v2530 = vunpack.c.l.b16 %v2346
    %v2531 = vunpack.c.l.b16 %v2347
    %v2532 = vunpack.c.l.b16 %v2348
    %v2533 = vunpack.c.l.b16 %v2349
    %v2534 = vunpack.c.l.b16 %v2350
    %v2535 = vunpack.c.l.b16 %v2351
    %v2536 = vpack.c.b16 %v2521, %v2520
    %v2537 = vpack.c.b16 %v2523, %v2522
    %v2538 = vpack.c.b16 %v2525, %v2524
    %v2539 = vpack.c.b16 %v2527, %v2526
    %v2540 = vpack.c.b16 %v2529, %v2528
    %v2541 = vpack.c.b16 %v2531, %v2530
    %v2542 = vpack.c.b16 %v2533, %v2532
    %v2543 = vpack.c.b16 %v2535, %v2534
    %2552 = vmatprep.subr.bf16.mxu0 0
    %2553 = vmatpush1.bf16.msra.mxu0 %v2536
    %2554 = vmatprep.subr.bf16.mxu0 0
    %2555 = vmatpush1.bf16.msra.mxu0 %v2537
    %2556 = vmatprep.subr.bf16.mxu0 0
    %2557 = vmatpush1.bf16.msra.mxu0 %v2538
    %2558 = vmatprep.subr.bf16.mxu0 0
    %2559 = vmatpush1.bf16.msra.mxu0 %v2539
    %2560 = vmatprep.subr.bf16.mxu0 0
    %2561 = vmatpush1.bf16.msra.mxu0 %v2540
    %2562 = vmatprep.subr.bf16.mxu0 0
    %2563 = vmatpush1.bf16.msra.mxu0 %v2541
    %2564 = vmatprep.subr.bf16.mxu0 0
    %2565 = vmatpush1.bf16.msra.mxu0 %v2542
    %2566 = vmatprep.subr.bf16.mxu0 0
    %2567 = vmatpush1.bf16.msra.mxu0 %v2543
    %2568 = vmatprep.subr.bf16.mxu0 0
    %2569 = vmatpush1.bf16.msra.mxu0 0
    %2570 = vmatprep.subr.bf16.mxu0 0
    %2571 = vmatpush1.bf16.msra.mxu0 0
    %2572 = vmatprep.subr.bf16.mxu0 0
    %2573 = vmatpush1.bf16.msra.mxu0 0
    %2574 = vmatprep.subr.bf16.mxu0 0
    %2575 = vmatpush1.bf16.msra.mxu0 0
    %2576 = vmatprep.subr.bf16.mxu0 0
    %2577 = vmatpush1.bf16.msra.mxu0 0
    %2578 = vmatprep.subr.bf16.mxu0 0
    %2579 = vmatpush1.bf16.msra.mxu0 0
    %2580 = vmatprep.subr.bf16.mxu0 0
    %2581 = vmatpush1.bf16.msra.mxu0 0
    %2582 = vmatprep.subr.bf16.mxu0 0
    %2583 = vmatpush1.bf16.msra.mxu0 0
    %2584 = vmatprep.mubr.bf16.mxu0 0
    %2585 = vmatmul.mubr.bf16.gmra.mrb[0].mxu0 %v2352
    %v2586 = vpop.f32.mrb[0].mxu0
    %v2587 = vadd.f32 %v2499, %v2586
    %v2588 = vpop.f32.mrb[0].mxu0
    %v2589 = vpop.f32.mrb[0].mxu0
    %v2590 = vpop.f32.mrb[0].mxu0
    %2591 = vdwg.mxu0
    %s2592 = scalar_lea.vmem [#allocation19], 8
    %v2593 = vld [vmem:[%s2592] sm:$0xf]
    %v2595 = vsel %vm456, %v2593, 0
    %2597 = vmatprep.subr.bf16.mxu0 0
    %2598 = vmatpush1.bf16.msra.mxu0 %v2292
    %2599 = vmatprep.subr.bf16.mxu0 0
    %2600 = vmatpush1.bf16.msra.mxu0 0
    %2601 = vmatprep.subr.bf16.mxu0 0
    %2602 = vmatpush1.bf16.msra.mxu0 0
    %2603 = vmatprep.subr.bf16.mxu0 0
    %2604 = vmatpush1.bf16.msra.mxu0 0
    %2605 = vmatprep.subr.bf16.mxu0 0
    %2606 = vmatpush1.bf16.msra.mxu0 0
    %2607 = vmatprep.subr.bf16.mxu0 0
    %2608 = vmatpush1.bf16.msra.mxu0 0
    %2609 = vmatprep.subr.bf16.mxu0 0
    %2610 = vmatpush1.bf16.msra.mxu0 0
    %2611 = vmatprep.subr.bf16.mxu0 0
    %2612 = vmatpush1.bf16.msra.mxu0 0
    %2613 = vmatprep.subr.bf16.mxu0 0
    %2614 = vmatpush1.bf16.msra.mxu0 0
    %2615 = vmatprep.subr.bf16.mxu0 0
    %2616 = vmatpush1.bf16.msra.mxu0 0
    %2617 = vmatprep.subr.bf16.mxu0 0
    %2618 = vmatpush1.bf16.msra.mxu0 0
    %2619 = vmatprep.subr.bf16.mxu0 0
    %2620 = vmatpush1.bf16.msra.mxu0 0
    %2621 = vmatprep.subr.bf16.mxu0 0
    %2622 = vmatpush1.bf16.msra.mxu0 0
    %2623 = vmatprep.subr.bf16.mxu0 0
    %2624 = vmatpush1.bf16.msra.mxu0 0
    %2625 = vmatprep.subr.bf16.mxu0 0
    %2626 = vmatpush1.bf16.msra.mxu0 0
    %2627 = vmatprep.subr.bf16.mxu0 0
    %2628 = vmatpush1.bf16.msra.mxu0 0
    %2629 = vmatprep.mubr.bf16.mxu0 0
    %2630 = vmatmul.mubr.bf16.gmra.mrb[0].mxu0 %v2595
    %v2631 = vpop.f32.mrb[0].mxu0
    %v2632 = vadd.f32 0.0, %v2631
    %v2633 = vpop.f32.mrb[0].mxu0
    %v2634 = vpop.f32.mrb[0].mxu0
    %v2635 = vpop.f32.mrb[0].mxu0
    %2636 = vdwg.mxu0
    %s2637 = scalar_lea.vmem [#allocation20], 128
    %v2638 = vld [vmem:[%s2637] sm:$0xf]
    %v2639 = vld [vmem:[%s2637 + $0x4] sm:$0xf]
    %v2640 = vld [vmem:[%s2637 + $0x8] sm:$0xf]
    %v2641 = vld [vmem:[%s2637 + $0xc] sm:$0xf]
    %v2642 = vld [vmem:[%s2637 + $0x10] sm:$0xf]
    %v2643 = vld [vmem:[%s2637 + $0x14] sm:$0xf]
    %v2644 = vld [vmem:[%s2637 + $0x18] sm:$0xf]
    %v2645 = vld [vmem:[%s2637 + $0x1c] sm:$0xf]
    %v2646 = vld [vmem:[%s2637 + $0x20] sm:$0xf]
    %v2647 = vld [vmem:[%s2637 + $0x24] sm:$0xf]
    %v2648 = vld [vmem:[%s2637 + $0x28] sm:$0xf]
    %v2649 = vld [vmem:[%s2637 + $0x2c] sm:$0xf]
    %v2650 = vld [vmem:[%s2637 + $0x30] sm:$0xf]
    %v2651 = vld [vmem:[%s2637 + $0x34] sm:$0xf]
    %v2652 = vld [vmem:[%s2637 + $0x38] sm:$0xf]
    %v2653 = vld [vmem:[%s2637 + $0x3c] sm:$0xf]
    %v2654 = vpack.c.bf16 %v2632, %v2632
    %v2671 = vunpack.c.l.b16 %v2638
    %v2672 = vunpack.c.l.b16 %v2639
    %v2673 = vunpack.c.l.b16 %v2640
    %v2674 = vunpack.c.l.b16 %v2641
    %v2675 = vunpack.c.l.b16 %v2642
    %v2676 = vunpack.c.l.b16 %v2643
    %v2677 = vunpack.c.l.b16 %v2644
    %v2678 = vunpack.c.l.b16 %v2645
    %v2679 = vunpack.c.l.b16 %v2646
    %v2680 = vunpack.c.l.b16 %v2647
    %v2681 = vunpack.c.l.b16 %v2648
    %v2682 = vunpack.c.l.b16 %v2649
    %v2683 = vunpack.c.l.b16 %v2650
    %v2684 = vunpack.c.l.b16 %v2651
    %v2685 = vunpack.c.l.b16 %v2652
    %v2686 = vunpack.c.l.b16 %v2653
    %v2687 = vpack.c.b16 %v2672, %v2671
    %v2688 = vpack.c.b16 %v2674, %v2673
    %v2689 = vpack.c.b16 %v2676, %v2675
    %v2690 = vpack.c.b16 %v2678, %v2677
    %v2691 = vpack.c.b16 %v2680, %v2679
    %v2692 = vpack.c.b16 %v2682, %v2681
    %v2693 = vpack.c.b16 %v2684, %v2683
    %v2694 = vpack.c.b16 %v2686, %v2685
    %2703 = vmatprep.subr.bf16.mxu0 0
    %2704 = vmatpush1.bf16.msra.mxu0 %v2687
    %2705 = vmatprep.subr.bf16.mxu0 0
    %2706 = vmatpush1.bf16.msra.mxu0 %v2688
    %2707 = vmatprep.subr.bf16.mxu0 0
    %2708 = vmatpush1.bf16.msra.mxu0 %v2689
    %2709 = vmatprep.subr.bf16.mxu0 0
    %2710 = vmatpush1.bf16.msra.mxu0 %v2690
    %2711 = vmatprep.subr.bf16.mxu0 0
    %2712 = vmatpush1.bf16.msra.mxu0 %v2691
    %2713 = vmatprep.subr.bf16.mxu0 0
    %2714 = vmatpush1.bf16.msra.mxu0 %v2692
    %2715 = vmatprep.subr.bf16.mxu0 0
    %2716 = vmatpush1.bf16.msra.mxu0 %v2693
    %2717 = vmatprep.subr.bf16.mxu0 0
    %2718 = vmatpush1.bf16.msra.mxu0 %v2694
    %2719 = vmatprep.subr.bf16.mxu0 0
    %2720 = vmatpush1.bf16.msra.mxu0 0
    %2721 = vmatprep.subr.bf16.mxu0 0
    %2722 = vmatpush1.bf16.msra.mxu0 0
    %2723 = vmatprep.subr.bf16.mxu0 0
    %2724 = vmatpush1.bf16.msra.mxu0 0
    %2725 = vmatprep.subr.bf16.mxu0 0
    %2726 = vmatpush1.bf16.msra.mxu0 0
    %2727 = vmatprep.subr.bf16.mxu0 0
    %2728 = vmatpush1.bf16.msra.mxu0 0
    %2729 = vmatprep.subr.bf16.mxu0 0
    %2730 = vmatpush1.bf16.msra.mxu0 0
    %2731 = vmatprep.subr.bf16.mxu0 0
    %2732 = vmatpush1.bf16.msra.mxu0 0
    %2733 = vmatprep.subr.bf16.mxu0 0
    %2734 = vmatpush1.bf16.msra.mxu0 0
    %2735 = vmatprep.mubr.bf16.mxu0 0
    %2736 = vmatmul.mubr.bf16.gmra.mrb[0].mxu0 %v2654
    %v2737 = vpop.f32.mrb[0].mxu0
    %v2738 = vadd.f32 0.0, %v2737
    %v2739 = vpop.f32.mrb[0].mxu0
    %v2740 = vpop.f32.mrb[0].mxu0
    %v2741 = vpop.f32.mrb[0].mxu0
    %2742 = vdwg.mxu0
    %v2743 = vadd.f32 %v2587, %v2738
    %v2744 = vld [vmem:[#allocation22] sm:$0x1]
    %v2746 = vlaneseq
    %v2747 = vshrl.u32 %v2746, 7
    %v2748 = vsub.s32 0, %v2747
    %v2749 = vrot.slane %v2744, %v2748
    %v2751 = vadd.f32 %v2743, %v2749
    %v2752 = vmax.f32 %v2751, 0.0
    %v2753 = vld [vmem:[#allocation23] sm:$0x1]
    %v2754 = vpack.c.bf16 %v2752, %v2752
    %vm2755 = vcmask 64512
    %v2757 = vsel %vm2755, %v2753, 0
    %vm2759 = vcmask 1043456
    %v2761 = vsel %vm2759, %v2754, 0
    %2763 = vmatprep.subr.bf16.mxu0 0
    %2764 = vmatpush1.bf16.msra.mxu0 %v2761
    %2765 = vmatprep.subr.bf16.mxu0 0
    %2766 = vmatpush1.bf16.msra.mxu0 0
    %2767 = vmatprep.subr.bf16.mxu0 0
    %2768 = vmatpush1.bf16.msra.mxu0 0
    %2769 = vmatprep.subr.bf16.mxu0 0
    %2770 = vmatpush1.bf16.msra.mxu0 0
    %2771 = vmatprep.subr.bf16.mxu0 0
    %2772 = vmatpush1.bf16.msra.mxu0 0
    %2773 = vmatprep.subr.bf16.mxu0 0
    %2774 = vmatpush1.bf16.msra.mxu0 0
    %2775 = vmatprep.subr.bf16.mxu0 0
    %2776 = vmatpush1.bf16.msra.mxu0 0
    %2777 = vmatprep.subr.bf16.mxu0 0
    %2778 = vmatpush1.bf16.msra.mxu0 0
    %2779 = vmatprep.subr.bf16.mxu0 0
    %2780 = vmatpush1.bf16.msra.mxu0 0
    %2781 = vmatprep.subr.bf16.mxu0 0
    %2782 = vmatpush1.bf16.msra.mxu0 0
    %2783 = vmatprep.subr.bf16.mxu0 0
    %2784 = vmatpush1.bf16.msra.mxu0 0
    %2785 = vmatprep.subr.bf16.mxu0 0
    %2786 = vmatpush1.bf16.msra.mxu0 0
    %2787 = vmatprep.subr.bf16.mxu0 0
    %2788 = vmatpush1.bf16.msra.mxu0 0
    %2789 = vmatprep.subr.bf16.mxu0 0
    %2790 = vmatpush1.bf16.msra.mxu0 0
    %2791 = vmatprep.subr.bf16.mxu0 0
    %2792 = vmatpush1.bf16.msra.mxu0 0
    %2793 = vmatprep.subr.bf16.mxu0 0
    %2794 = vmatpush1.bf16.msra.mxu0 0
    %2795 = vmatprep.mubr.bf16.mxu0 0
    %2796 = vmatmul.mubr.bf16.gmra.mrb[0].mxu0 %v2757
    %v2797 = vpop.f32.mrb[0].mxu0
    %v2798 = vadd.f32 0.0, %v2797
    %v2799 = vpop.f32.mrb[0].mxu0
    %v2800 = vpop.f32.mrb[0].mxu0
    %v2801 = vpop.f32.mrb[0].mxu0
    %2802 = vdwg.mxu0
    %v2803 = vld [vmem:[%s33] sm:$0xf]
    %v2804 = vld [vmem:[%s33 + $0x4] sm:$0xf]
    %v2805 = vld [vmem:[%s33 + $0x8] sm:$0xf]
    %v2806 = vld [vmem:[%s33 + $0xc] sm:$0xf]
    %v2807 = vld [vmem:[%s33 + $0x10] sm:$0xf]
    %v2808 = vld [vmem:[%s33 + $0x14] sm:$0xf]
    %v2809 = vld [vmem:[%s33 + $0x18] sm:$0xf]
    %v2810 = vld [vmem:[%s33 + $0x1c] sm:$0xf]
    %v2811 = vld [vmem:[%s33 + $0x20] sm:$0xf]
    %v2812 = vld [vmem:[%s33 + $0x24] sm:$0xf]
    %v2813 = vld [vmem:[%s33 + $0x28] sm:$0xf]
    %v2814 = vld [vmem:[%s33 + $0x2c] sm:$0xf]
    %v2815 = vld [vmem:[%s33 + $0x30] sm:$0xf]
    %v2816 = vld [vmem:[%s33 + $0x34] sm:$0xf]
    %v2817 = vld [vmem:[%s33 + $0x38] sm:$0xf]
    %v2818 = vld [vmem:[%s33 + $0x3c] sm:$0xf]
    %v2819 = vpack.c.bf16 %v2798, %v2798
    %v2820 = vld [vmem:[%s35] sm:$0xf]
    %v2821 = vld [vmem:[%s35 + $0x4] sm:$0xf]
    %v2822 = vld [vmem:[%s35 + $0x8] sm:$0xf]
    %v2823 = vld [vmem:[%s35 + $0xc] sm:$0xf]
    %v2824 = vld [vmem:[%s35 + $0x10] sm:$0xf]
    %v2825 = vld [vmem:[%s35 + $0x14] sm:$0xf]
    %v2826 = vld [vmem:[%s35 + $0x18] sm:$0xf]
    %v2827 = vld [vmem:[%s35 + $0x1c] sm:$0xf]
    %v2828 = vld [vmem:[%s35 + $0x20] sm:$0xf]
    %v2829 = vld [vmem:[%s35 + $0x24] sm:$0xf]
    %v2830 = vld [vmem:[%s35 + $0x28] sm:$0xf]
    %v2831 = vld [vmem:[%s35 + $0x2c] sm:$0xf]
    %v2832 = vld [vmem:[%s35 + $0x30] sm:$0xf]
    %v2833 = vld [vmem:[%s35 + $0x34] sm:$0xf]
    %v2834 = vld [vmem:[%s35 + $0x38] sm:$0xf]
    %v2835 = vld [vmem:[%s35 + $0x3c] sm:$0xf]
    %s2836 = scalar_lea.vmem [#allocation23], 1
    %v2837 = vld [vmem:[%s2836] sm:$0x1]
    %v2839 = vsel %vm2755, %v2837, 0
    %2841 = vmatprep.subr.bf16.mxu0 0
    %2842 = vmatpush1.bf16.msra.mxu0 %v2761
    %2843 = vmatprep.subr.bf16.mxu0 0
    %2844 = vmatpush1.bf16.msra.mxu0 0
    %2845 = vmatprep.subr.bf16.mxu0 0
    %2846 = vmatpush1.bf16.msra.mxu0 0
    %2847 = vmatprep.subr.bf16.mxu0 0
    %2848 = vmatpush1.bf16.msra.mxu0 0
    %2849 = vmatprep.subr.bf16.mxu0 0
    %2850 = vmatpush1.bf16.msra.mxu0 0
    %2851 = vmatprep.subr.bf16.mxu0 0
    %2852 = vmatpush1.bf16.msra.mxu0 0
    %2853 = vmatprep.subr.bf16.mxu0 0
    %2854 = vmatpush1.bf16.msra.mxu0 0
    %2855 = vmatprep.subr.bf16.mxu0 0
    %2856 = vmatpush1.bf16.msra.mxu0 0
    %2857 = vmatprep.subr.bf16.mxu0 0
    %2858 = vmatpush1.bf16.msra.mxu0 0
    %2859 = vmatprep.subr.bf16.mxu0 0
    %2860 = vmatpush1.bf16.msra.mxu0 0
    %2861 = vmatprep.subr.bf16.mxu0 0
    %2862 = vmatpush1.bf16.msra.mxu0 0
    %2863 = vmatprep.subr.bf16.mxu0 0
    %2864 = vmatpush1.bf16.msra.mxu0 0
    %2865 = vmatprep.subr.bf16.mxu0 0
    %2866 = vmatpush1.bf16.msra.mxu0 0
    %2867 = vmatprep.subr.bf16.mxu0 0
    %2868 = vmatpush1.bf16.msra.mxu0 0
    %2869 = vmatprep.subr.bf16.mxu0 0
    %2870 = vmatpush1.bf16.msra.mxu0 0
    %2871 = vmatprep.subr.bf16.mxu0 0
    %2872 = vmatpush1.bf16.msra.mxu0 0
    %2873 = vmatprep.mubr.bf16.mxu0 0
    %2874 = vmatmul.mubr.bf16.gmra.mrb[0].mxu0 %v2839
    %v2875 = vpop.f32.mrb[0].mxu0
    %v2876 = vadd.f32 0.0, %v2875
    %v2877 = vpop.f32.mrb[0].mxu0
    %v2878 = vpop.f32.mrb[0].mxu0
    %v2879 = vpop.f32.mrb[0].mxu0
    %2880 = vdwg.mxu0
    %s2881 = scalar_lea.vmem %s33, 64
    %v2882 = vld [vmem:[%s2881] sm:$0xf]
    %v2883 = vld [vmem:[%s2881 + $0x4] sm:$0xf]
    %v2884 = vld [vmem:[%s2881 + $0x8] sm:$0xf]
    %v2885 = vld [vmem:[%s2881 + $0xc] sm:$0xf]
    %v2886 = vld [vmem:[%s2881 + $0x10] sm:$0xf]
    %v2887 = vld [vmem:[%s2881 + $0x14] sm:$0xf]
    %v2888 = vld [vmem:[%s2881 + $0x18] sm:$0xf]
    %v2889 = vld [vmem:[%s2881 + $0x1c] sm:$0xf]
    %v2890 = vld [vmem:[%s2881 + $0x20] sm:$0xf]
    %v2891 = vld [vmem:[%s2881 + $0x24] sm:$0xf]
    %v2892 = vld [vmem:[%s2881 + $0x28] sm:$0xf]
    %v2893 = vld [vmem:[%s2881 + $0x2c] sm:$0xf]
    %v2894 = vld [vmem:[%s2881 + $0x30] sm:$0xf]
    %v2895 = vld [vmem:[%s2881 + $0x34] sm:$0xf]
    %v2896 = vld [vmem:[%s2881 + $0x38] sm:$0xf]
    %v2897 = vld [vmem:[%s2881 + $0x3c] sm:$0xf]
    %v2898 = vpack.c.bf16 %v2876, %v2876
    %v2915 = vunpack.c.l.b16 %v2882
    %v2916 = vunpack.c.l.b16 %v2883
    %v2917 = vunpack.c.l.b16 %v2884
    %v2918 = vunpack.c.l.b16 %v2885
    %v2919 = vunpack.c.l.b16 %v2886
    %v2920 = vunpack.c.l.b16 %v2887
    %v2921 = vunpack.c.l.b16 %v2888
    %v2922 = vunpack.c.l.b16 %v2889
    %v2923 = vunpack.c.l.b16 %v2890
    %v2924 = vunpack.c.l.b16 %v2891
    %v2925 = vunpack.c.l.b16 %v2892
    %v2926 = vunpack.c.l.b16 %v2893
    %v2927 = vunpack.c.l.b16 %v2894
    %v2928 = vunpack.c.l.b16 %v2895
    %v2929 = vunpack.c.l.b16 %v2896
    %v2930 = vunpack.c.l.b16 %v2897
    %v2931 = vpack.c.b16 %v2916, %v2915
    %v2932 = vpack.c.b16 %v2918, %v2917
    %v2933 = vpack.c.b16 %v2920, %v2919
    %v2934 = vpack.c.b16 %v2922, %v2921
    %v2935 = vpack.c.b16 %v2924, %v2923
    %v2936 = vpack.c.b16 %v2926, %v2925
    %v2937 = vpack.c.b16 %v2928, %v2927
    %v2938 = vpack.c.b16 %v2930, %v2929
    %2947 = vmatprep.subr.bf16.mxu0 0
    %2948 = vmatpush1.bf16.msra.mxu0 %v2931
    %2949 = vmatprep.subr.bf16.mxu0 0
    %2950 = vmatpush1.bf16.msra.mxu0 %v2932
    %2951 = vmatprep.subr.bf16.mxu0 0
    %2952 = vmatpush1.bf16.msra.mxu0 %v2933
    %2953 = vmatprep.subr.bf16.mxu0 0
    %2954 = vmatpush1.bf16.msra.mxu0 %v2934
    %2955 = vmatprep.subr.bf16.mxu0 0
    %2956 = vmatpush1.bf16.msra.mxu0 %v2935
    %2957 = vmatprep.subr.bf16.mxu0 0
    %2958 = vmatpush1.bf16.msra.mxu0 %v2936
    %2959 = vmatprep.subr.bf16.mxu0 0
    %2960 = vmatpush1.bf16.msra.mxu0 %v2937
    %2961 = vmatprep.subr.bf16.mxu0 0
    %2962 = vmatpush1.bf16.msra.mxu0 %v2938
    %2963 = vmatprep.subr.bf16.mxu0 0
    %2964 = vmatpush1.bf16.msra.mxu0 0
    %2965 = vmatprep.subr.bf16.mxu0 0
    %2966 = vmatpush1.bf16.msra.mxu0 0
    %2967 = vmatprep.subr.bf16.mxu0 0
    %2968 = vmatpush1.bf16.msra.mxu0 0
    %2969 = vmatprep.subr.bf16.mxu0 0
    %2970 = vmatpush1.bf16.msra.mxu0 0
    %2971 = vmatprep.subr.bf16.mxu0 0
    %2972 = vmatpush1.bf16.msra.mxu0 0
    %2973 = vmatprep.subr.bf16.mxu0 0
    %2974 = vmatpush1.bf16.msra.mxu0 0
    %2975 = vmatprep.subr.bf16.mxu0 0
    %2976 = vmatpush1.bf16.msra.mxu0 0
    %2977 = vmatprep.subr.bf16.mxu0 0
    %2978 = vmatpush1.bf16.msra.mxu0 0
    %2979 = vmatprep.mubr.bf16.mxu0 0
    %2980 = vmatmul.mubr.bf16.gmra.mrb[0].mxu0 %v2898
    %v2981 = vpop.f32.mrb[0].mxu0
    %v2982 = vadd.f32 0.0, %v2981
    %v2983 = vpop.f32.mrb[0].mxu0
    %v2984 = vpop.f32.mrb[0].mxu0
    %v2985 = vpop.f32.mrb[0].mxu0
    %2986 = vdwg.mxu0
    %s2987 = scalar_lea.vmem %s35, 64
    %v2988 = vld [vmem:[%s2987] sm:$0xf]
    %v2989 = vld [vmem:[%s2987 + $0x4] sm:$0xf]
    %v2990 = vld [vmem:[%s2987 + $0x8] sm:$0xf]
    %v2991 = vld [vmem:[%s2987 + $0xc] sm:$0xf]
    %v2992 = vld [vmem:[%s2987 + $0x10] sm:$0xf]
    %v2993 = vld [vmem:[%s2987 + $0x14] sm:$0xf]
    %v2994 = vld [vmem:[%s2987 + $0x18] sm:$0xf]
    %v2995 = vld [vmem:[%s2987 + $0x1c] sm:$0xf]
    %v2996 = vld [vmem:[%s2987 + $0x20] sm:$0xf]
    %v2997 = vld [vmem:[%s2987 + $0x24] sm:$0xf]
    %v2998 = vld [vmem:[%s2987 + $0x28] sm:$0xf]
    %v2999 = vld [vmem:[%s2987 + $0x2c] sm:$0xf]
    %v3000 = vld [vmem:[%s2987 + $0x30] sm:$0xf]
    %v3001 = vld [vmem:[%s2987 + $0x34] sm:$0xf]
    %v3002 = vld [vmem:[%s2987 + $0x38] sm:$0xf]
    %v3003 = vld [vmem:[%s2987 + $0x3c] sm:$0xf]
    %v3020 = vunpack.c.l.b16 %v2988
    %v3021 = vunpack.c.l.b16 %v2989
    %v3022 = vunpack.c.l.b16 %v2990
    %v3023 = vunpack.c.l.b16 %v2991
    %v3024 = vunpack.c.l.b16 %v2992
    %v3025 = vunpack.c.l.b16 %v2993
    %v3026 = vunpack.c.l.b16 %v2994
    %v3027 = vunpack.c.l.b16 %v2995
    %v3028 = vunpack.c.l.b16 %v2996
    %v3029 = vunpack.c.l.b16 %v2997
    %v3030 = vunpack.c.l.b16 %v2998
    %v3031 = vunpack.c.l.b16 %v2999
    %v3032 = vunpack.c.l.b16 %v3000
    %v3033 = vunpack.c.l.b16 %v3001
    %v3034 = vunpack.c.l.b16 %v3002
    %v3035 = vunpack.c.l.b16 %v3003
    %v3036 = vpack.c.b16 %v3021, %v3020
    %v3037 = vpack.c.b16 %v3023, %v3022
    %v3038 = vpack.c.b16 %v3025, %v3024
    %v3039 = vpack.c.b16 %v3027, %v3026
    %v3040 = vpack.c.b16 %v3029, %v3028
    %v3041 = vpack.c.b16 %v3031, %v3030
    %v3042 = vpack.c.b16 %v3033, %v3032
    %v3043 = vpack.c.b16 %v3035, %v3034
    %3052 = vmatprep.subr.bf16.mxu0 0
    %3053 = vmatpush1.bf16.msra.mxu0 %v3036
    %3054 = vmatprep.subr.bf16.mxu0 0
    %3055 = vmatpush1.bf16.msra.mxu0 %v3037
    %3056 = vmatprep.subr.bf16.mxu0 0
    %3057 = vmatpush1.bf16.msra.mxu0 %v3038
    %3058 = vmatprep.subr.bf16.mxu0 0
    %3059 = vmatpush1.bf16.msra.mxu0 %v3039
    %3060 = vmatprep.subr.bf16.mxu0 0
    %3061 = vmatpush1.bf16.msra.mxu0 %v3040
    %3062 = vmatprep.subr.bf16.mxu0 0
    %3063 = vmatpush1.bf16.msra.mxu0 %v3041
    %3064 = vmatprep.subr.bf16.mxu0 0
    %3065 = vmatpush1.bf16.msra.mxu0 %v3042
    %3066 = vmatprep.subr.bf16.mxu0 0
    %3067 = vmatpush1.bf16.msra.mxu0 %v3043
    %3068 = vmatprep.subr.bf16.mxu0 0
    %3069 = vmatpush1.bf16.msra.mxu0 0
    %3070 = vmatprep.subr.bf16.mxu0 0
    %3071 = vmatpush1.bf16.msra.mxu0 0
    %3072 = vmatprep.subr.bf16.mxu0 0
    %3073 = vmatpush1.bf16.msra.mxu0 0
    %3074 = vmatprep.subr.bf16.mxu0 0
    %3075 = vmatpush1.bf16.msra.mxu0 0
    %3076 = vmatprep.subr.bf16.mxu0 0
    %3077 = vmatpush1.bf16.msra.mxu0 0
    %3078 = vmatprep.subr.bf16.mxu0 0
    %3079 = vmatpush1.bf16.msra.mxu0 0
    %3080 = vmatprep.subr.bf16.mxu0 0
    %3081 = vmatpush1.bf16.msra.mxu0 0
    %3082 = vmatprep.subr.bf16.mxu0 0
    %3083 = vmatpush1.bf16.msra.mxu0 0
    %3084 = vmatprep.mubr.bf16.mxu0 0
    %3085 = vmatmul.mubr.bf16.gmra.mrb[0].mxu0 %v2898
    %v3086 = vpop.f32.mrb[0].mxu0
    %v3087 = vadd.f32 0.0, %v3086
    %v3088 = vpop.f32.mrb[0].mxu0
    %v3089 = vpop.f32.mrb[0].mxu0
    %v3090 = vpop.f32.mrb[0].mxu0
    %3091 = vdwg.mxu0
    %v3108 = vunpack.c.l.b16 %v2803
    %v3109 = vunpack.c.l.b16 %v2804
    %v3110 = vunpack.c.l.b16 %v2805
    %v3111 = vunpack.c.l.b16 %v2806
    %v3112 = vunpack.c.l.b16 %v2807
    %v3113 = vunpack.c.l.b16 %v2808
    %v3114 = vunpack.c.l.b16 %v2809
    %v3115 = vunpack.c.l.b16 %v2810
    %v3116 = vunpack.c.l.b16 %v2811
    %v3117 = vunpack.c.l.b16 %v2812
    %v3118 = vunpack.c.l.b16 %v2813
    %v3119 = vunpack.c.l.b16 %v2814
    %v3120 = vunpack.c.l.b16 %v2815
    %v3121 = vunpack.c.l.b16 %v2816
    %v3122 = vunpack.c.l.b16 %v2817
    %v3123 = vunpack.c.l.b16 %v2818
    %v3124 = vpack.c.b16 %v3109, %v3108
    %v3125 = vpack.c.b16 %v3111, %v3110
    %v3126 = vpack.c.b16 %v3113, %v3112
    %v3127 = vpack.c.b16 %v3115, %v3114
    %v3128 = vpack.c.b16 %v3117, %v3116
    %v3129 = vpack.c.b16 %v3119, %v3118
    %v3130 = vpack.c.b16 %v3121, %v3120
    %v3131 = vpack.c.b16 %v3123, %v3122
    %3140 = vmatprep.subr.bf16.mxu0 0
    %3141 = vmatpush1.bf16.msra.mxu0 %v3124
    %3142 = vmatprep.subr.bf16.mxu0 0
    %3143 = vmatpush1.bf16.msra.mxu0 %v3125
    %3144 = vmatprep.subr.bf16.mxu0 0
    %3145 = vmatpush1.bf16.msra.mxu0 %v3126
    %3146 = vmatprep.subr.bf16.mxu0 0
    %3147 = vmatpush1.bf16.msra.mxu0 %v3127
    %3148 = vmatprep.subr.bf16.mxu0 0
    %3149 = vmatpush1.bf16.msra.mxu0 %v3128
    %3150 = vmatprep.subr.bf16.mxu0 0
    %3151 = vmatpush1.bf16.msra.mxu0 %v3129
    %3152 = vmatprep.subr.bf16.mxu0 0
    %3153 = vmatpush1.bf16.msra.mxu0 %v3130
    %3154 = vmatprep.subr.bf16.mxu0 0
    %3155 = vmatpush1.bf16.msra.mxu0 %v3131
    %3156 = vmatprep.subr.bf16.mxu0 0
    %3157 = vmatpush1.bf16.msra.mxu0 0
    %3158 = vmatprep.subr.bf16.mxu0 0
    %3159 = vmatpush1.bf16.msra.mxu0 0
    %3160 = vmatprep.subr.bf16.mxu0 0
    %3161 = vmatpush1.bf16.msra.mxu0 0
    %3162 = vmatprep.subr.bf16.mxu0 0
    %3163 = vmatpush1.bf16.msra.mxu0 0
    %3164 = vmatprep.subr.bf16.mxu0 0
    %3165 = vmatpush1.bf16.msra.mxu0 0
    %3166 = vmatprep.subr.bf16.mxu0 0
    %3167 = vmatpush1.bf16.msra.mxu0 0
    %3168 = vmatprep.subr.bf16.mxu0 0
    %3169 = vmatpush1.bf16.msra.mxu0 0
    %3170 = vmatprep.subr.bf16.mxu0 0
    %3171 = vmatpush1.bf16.msra.mxu0 0
    %3172 = vmatprep.mubr.bf16.mxu0 0
    %3173 = vmatmul.mubr.bf16.gmra.mrb[0].mxu0 %v2819
    %v3174 = vpop.f32.mrb[0].mxu0
    %v3175 = vadd.f32 %v2982, %v3174
    %v3176 = vpop.f32.mrb[0].mxu0
    %v3177 = vpop.f32.mrb[0].mxu0
    %v3178 = vpop.f32.mrb[0].mxu0
    %3179 = vdwg.mxu0
    %v3196 = vunpack.c.l.b16 %v2820
    %v3197 = vunpack.c.l.b16 %v2821
    %v3198 = vunpack.c.l.b16 %v2822
    %v3199 = vunpack.c.l.b16 %v2823
    %v3200 = vunpack.c.l.b16 %v2824
    %v3201 = vunpack.c.l.b16 %v2825
    %v3202 = vunpack.c.l.b16 %v2826
    %v3203 = vunpack.c.l.b16 %v2827
    %v3204 = vunpack.c.l.b16 %v2828
    %v3205 = vunpack.c.l.b16 %v2829
    %v3206 = vunpack.c.l.b16 %v2830
    %v3207 = vunpack.c.l.b16 %v2831
    %v3208 = vunpack.c.l.b16 %v2832
    %v3209 = vunpack.c.l.b16 %v2833
    %v3210 = vunpack.c.l.b16 %v2834
    %v3211 = vunpack.c.l.b16 %v2835
    %v3212 = vpack.c.b16 %v3197, %v3196
    %v3213 = vpack.c.b16 %v3199, %v3198
    %v3214 = vpack.c.b16 %v3201, %v3200
    %v3215 = vpack.c.b16 %v3203, %v3202
    %v3216 = vpack.c.b16 %v3205, %v3204
    %v3217 = vpack.c.b16 %v3207, %v3206
    %v3218 = vpack.c.b16 %v3209, %v3208
    %v3219 = vpack.c.b16 %v3211, %v3210
    %3228 = vmatprep.subr.bf16.mxu0 0
    %3229 = vmatpush1.bf16.msra.mxu0 %v3212
    %3230 = vmatprep.subr.bf16.mxu0 0
    %3231 = vmatpush1.bf16.msra.mxu0 %v3213
    %3232 = vmatprep.subr.bf16.mxu0 0
    %3233 = vmatpush1.bf16.msra.mxu0 %v3214
    %3234 = vmatprep.subr.bf16.mxu0 0
    %3235 = vmatpush1.bf16.msra.mxu0 %v3215
    %3236 = vmatprep.subr.bf16.mxu0 0
    %3237 = vmatpush1.bf16.msra.mxu0 %v3216
    %3238 = vmatprep.subr.bf16.mxu0 0
    %3239 = vmatpush1.bf16.msra.mxu0 %v3217
    %3240 = vmatprep.subr.bf16.mxu0 0
    %3241 = vmatpush1.bf16.msra.mxu0 %v3218
    %3242 = vmatprep.subr.bf16.mxu0 0
    %3243 = vmatpush1.bf16.msra.mxu0 %v3219
    %3244 = vmatprep.subr.bf16.mxu0 0
    %3245 = vmatpush1.bf16.msra.mxu0 0
    %3246 = vmatprep.subr.bf16.mxu0 0
    %3247 = vmatpush1.bf16.msra.mxu0 0
    %3248 = vmatprep.subr.bf16.mxu0 0
    %3249 = vmatpush1.bf16.msra.mxu0 0
    %3250 = vmatprep.subr.bf16.mxu0 0
    %3251 = vmatpush1.bf16.msra.mxu0 0
    %3252 = vmatprep.subr.bf16.mxu0 0
    %3253 = vmatpush1.bf16.msra.mxu0 0
    %3254 = vmatprep.subr.bf16.mxu0 0
    %3255 = vmatpush1.bf16.msra.mxu0 0
    %3256 = vmatprep.subr.bf16.mxu0 0
    %3257 = vmatpush1.bf16.msra.mxu0 0
    %3258 = vmatprep.subr.bf16.mxu0 0
    %3259 = vmatpush1.bf16.msra.mxu0 0
    %3260 = vmatprep.mubr.bf16.mxu0 0
    %3261 = vmatmul.mubr.bf16.gmra.mrb[0].mxu0 %v2819
    %v3262 = vpop.f32.mrb[0].mxu0
    %v3263 = vadd.f32 %v3087, %v3262
    %v3264 = vpop.f32.mrb[0].mxu0
    %v3265 = vpop.f32.mrb[0].mxu0
    %v3266 = vpop.f32.mrb[0].mxu0
    %3267 = vdwg.mxu0
    %s3268 = scalar_lea.vmem [#allocation23], 2
    %v3269 = vld [vmem:[%s3268] sm:$0x1]
    %v3271 = vsel %vm2755, %v3269, 0
    %3273 = vmatprep.subr.bf16.mxu0 0
    %3274 = vmatpush1.bf16.msra.mxu0 %v2761
    %3275 = vmatprep.subr.bf16.mxu0 0
    %3276 = vmatpush1.bf16.msra.mxu0 0
    %3277 = vmatprep.subr.bf16.mxu0 0
    %3278 = vmatpush1.bf16.msra.mxu0 0
    %3279 = vmatprep.subr.bf16.mxu0 0
    %3280 = vmatpush1.bf16.msra.mxu0 0
    %3281 = vmatprep.subr.bf16.mxu0 0
    %3282 = vmatpush1.bf16.msra.mxu0 0
    %3283 = vmatprep.subr.bf16.mxu0 0
    %3284 = vmatpush1.bf16.msra.mxu0 0
    %3285 = vmatprep.subr.bf16.mxu0 0
    %3286 = vmatpush1.bf16.msra.mxu0 0
    %3287 = vmatprep.subr.bf16.mxu0 0
    %3288 = vmatpush1.bf16.msra.mxu0 0
    %3289 = vmatprep.subr.bf16.mxu0 0
    %3290 = vmatpush1.bf16.msra.mxu0 0
    %3291 = vmatprep.subr.bf16.mxu0 0
    %3292 = vmatpush1.bf16.msra.mxu0 0
    %3293 = vmatprep.subr.bf16.mxu0 0
    %3294 = vmatpush1.bf16.msra.mxu0 0
    %3295 = vmatprep.subr.bf16.mxu0 0
    %3296 = vmatpush1.bf16.msra.mxu0 0
    %3297 = vmatprep.subr.bf16.mxu0 0
    %3298 = vmatpush1.bf16.msra.mxu0 0
    %3299 = vmatprep.subr.bf16.mxu0 0
    %3300 = vmatpush1.bf16.msra.mxu0 0
    %3301 = vmatprep.subr.bf16.mxu0 0
    %3302 = vmatpush1.bf16.msra.mxu0 0
    %3303 = vmatprep.subr.bf16.mxu0 0
    %3304 = vmatpush1.bf16.msra.mxu0 0
    %3305 = vmatprep.mubr.bf16.mxu0 0
    %3306 = vmatmul.mubr.bf16.gmra.mrb[0].mxu0 %v3271
    %v3307 = vpop.f32.mrb[0].mxu0
    %v3308 = vadd.f32 0.0, %v3307
    %v3309 = vpop.f32.mrb[0].mxu0
    %v3310 = vpop.f32.mrb[0].mxu0
    %v3311 = vpop.f32.mrb[0].mxu0
    %3312 = vdwg.mxu0
    %s3313 = scalar_lea.vmem %s33, 128
    %v3314 = vld [vmem:[%s3313] sm:$0xf]
    %v3315 = vld [vmem:[%s3313 + $0x4] sm:$0xf]
    %v3316 = vld [vmem:[%s3313 + $0x8] sm:$0xf]
    %v3317 = vld [vmem:[%s3313 + $0xc] sm:$0xf]
    %v3318 = vld [vmem:[%s3313 + $0x10] sm:$0xf]
    %v3319 = vld [vmem:[%s3313 + $0x14] sm:$0xf]
    %v3320 = vld [vmem:[%s3313 + $0x18] sm:$0xf]
    %v3321 = vld [vmem:[%s3313 + $0x1c] sm:$0xf]
    %v3322 = vld [vmem:[%s3313 + $0x20] sm:$0xf]
    %v3323 = vld [vmem:[%s3313 + $0x24] sm:$0xf]
    %v3324 = vld [vmem:[%s3313 + $0x28] sm:$0xf]
    %v3325 = vld [vmem:[%s3313 + $0x2c] sm:$0xf]
    %v3326 = vld [vmem:[%s3313 + $0x30] sm:$0xf]
    %v3327 = vld [vmem:[%s3313 + $0x34] sm:$0xf]
    %v3328 = vld [vmem:[%s3313 + $0x38] sm:$0xf]
    %v3329 = vld [vmem:[%s3313 + $0x3c] sm:$0xf]
    %v3330 = vpack.c.bf16 %v3308, %v3308
    %v3347 = vunpack.c.l.b16 %v3314
    %v3348 = vunpack.c.l.b16 %v3315
    %v3349 = vunpack.c.l.b16 %v3316
    %v3350 = vunpack.c.l.b16 %v3317
    %v3351 = vunpack.c.l.b16 %v3318
    %v3352 = vunpack.c.l.b16 %v3319
    %v3353 = vunpack.c.l.b16 %v3320
    %v3354 = vunpack.c.l.b16 %v3321
    %v3355 = vunpack.c.l.b16 %v3322
    %v3356 = vunpack.c.l.b16 %v3323
    %v3357 = vunpack.c.l.b16 %v3324
    %v3358 = vunpack.c.l.b16 %v3325
    %v3359 = vunpack.c.l.b16 %v3326
    %v3360 = vunpack.c.l.b16 %v3327
    %v3361 = vunpack.c.l.b16 %v3328
    %v3362 = vunpack.c.l.b16 %v3329
    %v3363 = vpack.c.b16 %v3348, %v3347
    %v3364 = vpack.c.b16 %v3350, %v3349
    %v3365 = vpack.c.b16 %v3352, %v3351
    %v3366 = vpack.c.b16 %v3354, %v3353
    %v3367 = vpack.c.b16 %v3356, %v3355
    %v3368 = vpack.c.b16 %v3358, %v3357
    %v3369 = vpack.c.b16 %v3360, %v3359
    %v3370 = vpack.c.b16 %v3362, %v3361
    %3379 = vmatprep.subr.bf16.mxu0 0
    %3380 = vmatpush1.bf16.msra.mxu0 %v3363
    %3381 = vmatprep.subr.bf16.mxu0 0
    %3382 = vmatpush1.bf16.msra.mxu0 %v3364
    %3383 = vmatprep.subr.bf16.mxu0 0
    %3384 = vmatpush1.bf16.msra.mxu0 %v3365
    %3385 = vmatprep.subr.bf16.mxu0 0
    %3386 = vmatpush1.bf16.msra.mxu0 %v3366
    %3387 = vmatprep.subr.bf16.mxu0 0
    %3388 = vmatpush1.bf16.msra.mxu0 %v3367
    %3389 = vmatprep.subr.bf16.mxu0 0
    %3390 = vmatpush1.bf16.msra.mxu0 %v3368
    %3391 = vmatprep.subr.bf16.mxu0 0
    %3392 = vmatpush1.bf16.msra.mxu0 %v3369
    %3393 = vmatprep.subr.bf16.mxu0 0
    %3394 = vmatpush1.bf16.msra.mxu0 %v3370
    %3395 = vmatprep.subr.bf16.mxu0 0
    %3396 = vmatpush1.bf16.msra.mxu0 0
    %3397 = vmatprep.subr.bf16.mxu0 0
    %3398 = vmatpush1.bf16.msra.mxu0 0
    %3399 = vmatprep.subr.bf16.mxu0 0
    %3400 = vmatpush1.bf16.msra.mxu0 0
    %3401 = vmatprep.subr.bf16.mxu0 0
    %3402 = vmatpush1.bf16.msra.mxu0 0
    %3403 = vmatprep.subr.bf16.mxu0 0
    %3404 = vmatpush1.bf16.msra.mxu0 0
    %3405 = vmatprep.subr.bf16.mxu0 0
    %3406 = vmatpush1.bf16.msra.mxu0 0
    %3407 = vmatprep.subr.bf16.mxu0 0
    %3408 = vmatpush1.bf16.msra.mxu0 0
    %3409 = vmatprep.subr.bf16.mxu0 0
    %3410 = vmatpush1.bf16.msra.mxu0 0
    %3411 = vmatprep.mubr.bf16.mxu0 0
    %3412 = vmatmul.mubr.bf16.gmra.mrb[0].mxu0 %v3330
    %v3413 = vpop.f32.mrb[0].mxu0
    %v3414 = vadd.f32 0.0, %v3413
    %v3415 = vpop.f32.mrb[0].mxu0
    %v3416 = vpop.f32.mrb[0].mxu0
    %v3417 = vpop.f32.mrb[0].mxu0
    %3418 = vdwg.mxu0
    %s3419 = scalar_lea.vmem %s35, 128
    %v3420 = vld [vmem:[%s3419] sm:$0xf]
    %v3421 = vld [vmem:[%s3419 + $0x4] sm:$0xf]
    %v3422 = vld [vmem:[%s3419 + $0x8] sm:$0xf]
    %v3423 = vld [vmem:[%s3419 + $0xc] sm:$0xf]
    %v3424 = vld [vmem:[%s3419 + $0x10] sm:$0xf]
    %v3425 = vld [vmem:[%s3419 + $0x14] sm:$0xf]
    %v3426 = vld [vmem:[%s3419 + $0x18] sm:$0xf]
    %v3427 = vld [vmem:[%s3419 + $0x1c] sm:$0xf]
    %v3428 = vld [vmem:[%s3419 + $0x20] sm:$0xf]
    %v3429 = vld [vmem:[%s3419 + $0x24] sm:$0xf]
    %v3430 = vld [vmem:[%s3419 + $0x28] sm:$0xf]
    %v3431 = vld [vmem:[%s3419 + $0x2c] sm:$0xf]
    %v3432 = vld [vmem:[%s3419 + $0x30] sm:$0xf]
    %v3433 = vld [vmem:[%s3419 + $0x34] sm:$0xf]
    %v3434 = vld [vmem:[%s3419 + $0x38] sm:$0xf]
    %v3435 = vld [vmem:[%s3419 + $0x3c] sm:$0xf]
    %v3452 = vunpack.c.l.b16 %v3420
    %v3453 = vunpack.c.l.b16 %v3421
    %v3454 = vunpack.c.l.b16 %v3422
    %v3455 = vunpack.c.l.b16 %v3423
    %v3456 = vunpack.c.l.b16 %v3424
    %v3457 = vunpack.c.l.b16 %v3425
    %v3458 = vunpack.c.l.b16 %v3426
    %v3459 = vunpack.c.l.b16 %v3427
    %v3460 = vunpack.c.l.b16 %v3428
    %v3461 = vunpack.c.l.b16 %v3429
    %v3462 = vunpack.c.l.b16 %v3430
    %v3463 = vunpack.c.l.b16 %v3431
    %v3464 = vunpack.c.l.b16 %v3432
    %v3465 = vunpack.c.l.b16 %v3433
    %v3466 = vunpack.c.l.b16 %v3434
    %v3467 = vunpack.c.l.b16 %v3435
    %v3468 = vpack.c.b16 %v3453, %v3452
    %v3469 = vpack.c.b16 %v3455, %v3454
    %v3470 = vpack.c.b16 %v3457, %v3456
    %v3471 = vpack.c.b16 %v3459, %v3458
    %v3472 = vpack.c.b16 %v3461, %v3460
    %v3473 = vpack.c.b16 %v3463, %v3462
    %v3474 = vpack.c.b16 %v3465, %v3464
    %v3475 = vpack.c.b16 %v3467, %v3466
    %3484 = vmatprep.subr.bf16.mxu0 0
    %3485 = vmatpush1.bf16.msra.mxu0 %v3468
    %3486 = vmatprep.subr.bf16.mxu0 0
    %3487 = vmatpush1.bf16.msra.mxu0 %v3469
    %3488 = vmatprep.subr.bf16.mxu0 0
    %3489 = vmatpush1.bf16.msra.mxu0 %v3470
    %3490 = vmatprep.subr.bf16.mxu0 0
    %3491 = vmatpush1.bf16.msra.mxu0 %v3471
    %3492 = vmatprep.subr.bf16.mxu0 0
    %3493 = vmatpush1.bf16.msra.mxu0 %v3472
    %3494 = vmatprep.subr.bf16.mxu0 0
    %3495 = vmatpush1.bf16.msra.mxu0 %v3473
    %3496 = vmatprep.subr.bf16.mxu0 0
    %3497 = vmatpush1.bf16.msra.mxu0 %v3474
    %3498 = vmatprep.subr.bf16.mxu0 0
    %3499 = vmatpush1.bf16.msra.mxu0 %v3475
    %3500 = vmatprep.subr.bf16.mxu0 0
    %3501 = vmatpush1.bf16.msra.mxu0 0
    %3502 = vmatprep.subr.bf16.mxu0 0
    %3503 = vmatpush1.bf16.msra.mxu0 0
    %3504 = vmatprep.subr.bf16.mxu0 0
    %3505 = vmatpush1.bf16.msra.mxu0 0
    %3506 = vmatprep.subr.bf16.mxu0 0
    %3507 = vmatpush1.bf16.msra.mxu0 0
    %3508 = vmatprep.subr.bf16.mxu0 0
    %3509 = vmatpush1.bf16.msra.mxu0 0
    %3510 = vmatprep.subr.bf16.mxu0 0
    %3511 = vmatpush1.bf16.msra.mxu0 0
    %3512 = vmatprep.subr.bf16.mxu0 0
    %3513 = vmatpush1.bf16.msra.mxu0 0
    %3514 = vmatprep.subr.bf16.mxu0 0
    %3515 = vmatpush1.bf16.msra.mxu0 0
    %3516 = vmatprep.mubr.bf16.mxu0 0
    %3517 = vmatmul.mubr.bf16.gmra.mrb[0].mxu0 %v3330
    %v3518 = vpop.f32.mrb[0].mxu0
    %v3519 = vadd.f32 0.0, %v3518
    %v3520 = vpop.f32.mrb[0].mxu0
    %v3521 = vpop.f32.mrb[0].mxu0
    %v3522 = vpop.f32.mrb[0].mxu0
    %3523 = vdwg.mxu0
    %v3524 = vadd.f32 %v3175, %v3414
    %v3525 = vadd.f32 %v3263, %v3519
    %s3526 = scalar_lea.vmem [#allocation23], 3
    %v3527 = vld [vmem:[%s3526] sm:$0x1]
    %v3529 = vsel %vm2755, %v3527, 0
    %3531 = vmatprep.subr.bf16.mxu0 0
    %3532 = vmatpush1.bf16.msra.mxu0 %v2761
    %3533 = vmatprep.subr.bf16.mxu0 0
    %3534 = vmatpush1.bf16.msra.mxu0 0
    %3535 = vmatprep.subr.bf16.mxu0 0
    %3536 = vmatpush1.bf16.msra.mxu0 0
    %3537 = vmatprep.subr.bf16.mxu0 0
    %3538 = vmatpush1.bf16.msra.mxu0 0
    %3539 = vmatprep.subr.bf16.mxu0 0
    %3540 = vmatpush1.bf16.msra.mxu0 0
    %3541 = vmatprep.subr.bf16.mxu0 0
    %3542 = vmatpush1.bf16.msra.mxu0 0
    %3543 = vmatprep.subr.bf16.mxu0 0
    %3544 = vmatpush1.bf16.msra.mxu0 0
    %3545 = vmatprep.subr.bf16.mxu0 0
    %3546 = vmatpush1.bf16.msra.mxu0 0
    %3547 = vmatprep.subr.bf16.mxu0 0
    %3548 = vmatpush1.bf16.msra.mxu0 0
    %3549 = vmatprep.subr.bf16.mxu0 0
    %3550 = vmatpush1.bf16.msra.mxu0 0
    %3551 = vmatprep.subr.bf16.mxu0 0
    %3552 = vmatpush1.bf16.msra.mxu0 0
    %3553 = vmatprep.subr.bf16.mxu0 0
    %3554 = vmatpush1.bf16.msra.mxu0 0
    %3555 = vmatprep.subr.bf16.mxu0 0
    %3556 = vmatpush1.bf16.msra.mxu0 0
    %3557 = vmatprep.subr.bf16.mxu0 0
    %3558 = vmatpush1.bf16.msra.mxu0 0
    %3559 = vmatprep.subr.bf16.mxu0 0
    %3560 = vmatpush1.bf16.msra.mxu0 0
    %3561 = vmatprep.subr.bf16.mxu0 0
    %3562 = vmatpush1.bf16.msra.mxu0 0
    %3563 = vmatprep.mubr.bf16.mxu0 0
    %3564 = vmatmul.mubr.bf16.gmra.mrb[0].mxu0 %v3529
    %v3565 = vpop.f32.mrb[0].mxu0
    %v3566 = vadd.f32 0.0, %v3565
    %v3567 = vpop.f32.mrb[0].mxu0
    %v3568 = vpop.f32.mrb[0].mxu0
    %v3569 = vpop.f32.mrb[0].mxu0
    %3570 = vdwg.mxu0
    %s3571 = scalar_lea.vmem %s33, 192
    %v3572 = vld [vmem:[%s3571] sm:$0xf]
    %v3573 = vld [vmem:[%s3571 + $0x4] sm:$0xf]
    %v3574 = vld [vmem:[%s3571 + $0x8] sm:$0xf]
    %v3575 = vld [vmem:[%s3571 + $0xc] sm:$0xf]
    %v3576 = vld [vmem:[%s3571 + $0x10] sm:$0xf]
    %v3577 = vld [vmem:[%s3571 + $0x14] sm:$0xf]
    %v3578 = vld [vmem:[%s3571 + $0x18] sm:$0xf]
    %v3579 = vld [vmem:[%s3571 + $0x1c] sm:$0xf]
    %v3580 = vld [vmem:[%s3571 + $0x20] sm:$0xf]
    %v3581 = vld [vmem:[%s3571 + $0x24] sm:$0xf]
    %v3582 = vld [vmem:[%s3571 + $0x28] sm:$0xf]
    %v3583 = vld [vmem:[%s3571 + $0x2c] sm:$0xf]
    %v3584 = vld [vmem:[%s3571 + $0x30] sm:$0xf]
    %v3585 = vld [vmem:[%s3571 + $0x34] sm:$0xf]
    %v3586 = vld [vmem:[%s3571 + $0x38] sm:$0xf]
    %v3587 = vld [vmem:[%s3571 + $0x3c] sm:$0xf]
    %v3588 = vpack.c.bf16 %v3566, %v3566
    %v3605 = vunpack.c.l.b16 %v3572
    %v3606 = vunpack.c.l.b16 %v3573
    %v3607 = vunpack.c.l.b16 %v3574
    %v3608 = vunpack.c.l.b16 %v3575
    %v3609 = vunpack.c.l.b16 %v3576
    %v3610 = vunpack.c.l.b16 %v3577
    %v3611 = vunpack.c.l.b16 %v3578
    %v3612 = vunpack.c.l.b16 %v3579
    %v3613 = vunpack.c.l.b16 %v3580
    %v3614 = vunpack.c.l.b16 %v3581
    %v3615 = vunpack.c.l.b16 %v3582
    %v3616 = vunpack.c.l.b16 %v3583
    %v3617 = vunpack.c.l.b16 %v3584
    %v3618 = vunpack.c.l.b16 %v3585
    %v3619 = vunpack.c.l.b16 %v3586
    %v3620 = vunpack.c.l.b16 %v3587
    %v3621 = vpack.c.b16 %v3606, %v3605
    %v3622 = vpack.c.b16 %v3608, %v3607
    %v3623 = vpack.c.b16 %v3610, %v3609
    %v3624 = vpack.c.b16 %v3612, %v3611
    %v3625 = vpack.c.b16 %v3614, %v3613
    %v3626 = vpack.c.b16 %v3616, %v3615
    %v3627 = vpack.c.b16 %v3618, %v3617
    %v3628 = vpack.c.b16 %v3620, %v3619
    %3637 = vmatprep.subr.bf16.mxu0 0
    %3638 = vmatpush1.bf16.msra.mxu0 %v3621
    %3639 = vmatprep.subr.bf16.mxu0 0
    %3640 = vmatpush1.bf16.msra.mxu0 %v3622
    %3641 = vmatprep.subr.bf16.mxu0 0
    %3642 = vmatpush1.bf16.msra.mxu0 %v3623
    %3643 = vmatprep.subr.bf16.mxu0 0
    %3644 = vmatpush1.bf16.msra.mxu0 %v3624
    %3645 = vmatprep.subr.bf16.mxu0 0
    %3646 = vmatpush1.bf16.msra.mxu0 %v3625
    %3647 = vmatprep.subr.bf16.mxu0 0
    %3648 = vmatpush1.bf16.msra.mxu0 %v3626
    %3649 = vmatprep.subr.bf16.mxu0 0
    %3650 = vmatpush1.bf16.msra.mxu0 %v3627
    %3651 = vmatprep.subr.bf16.mxu0 0
    %3652 = vmatpush1.bf16.msra.mxu0 %v3628
    %3653 = vmatprep.subr.bf16.mxu0 0
    %3654 = vmatpush1.bf16.msra.mxu0 0
    %3655 = vmatprep.subr.bf16.mxu0 0
    %3656 = vmatpush1.bf16.msra.mxu0 0
    %3657 = vmatprep.subr.bf16.mxu0 0
    %3658 = vmatpush1.bf16.msra.mxu0 0
    %3659 = vmatprep.subr.bf16.mxu0 0
    %3660 = vmatpush1.bf16.msra.mxu0 0
    %3661 = vmatprep.subr.bf16.mxu0 0
    %3662 = vmatpush1.bf16.msra.mxu0 0
    %3663 = vmatprep.subr.bf16.mxu0 0
    %3664 = vmatpush1.bf16.msra.mxu0 0
    %3665 = vmatprep.subr.bf16.mxu0 0
    %3666 = vmatpush1.bf16.msra.mxu0 0
    %3667 = vmatprep.subr.bf16.mxu0 0
    %3668 = vmatpush1.bf16.msra.mxu0 0
    %3669 = vmatprep.mubr.bf16.mxu0 0
    %3670 = vmatmul.mubr.bf16.gmra.mrb[0].mxu0 %v3588
    %v3671 = vpop.f32.mrb[0].mxu0
    %v3672 = vadd.f32 0.0, %v3671
    %v3673 = vpop.f32.mrb[0].mxu0
    %v3674 = vpop.f32.mrb[0].mxu0
    %v3675 = vpop.f32.mrb[0].mxu0
    %3676 = vdwg.mxu0
    %s3677 = scalar_lea.vmem %s35, 192
    %v3678 = vld [vmem:[%s3677] sm:$0xf]
    %v3679 = vld [vmem:[%s3677 + $0x4] sm:$0xf]
    %v3680 = vld [vmem:[%s3677 + $0x8] sm:$0xf]
    %v3681 = vld [vmem:[%s3677 + $0xc] sm:$0xf]
    %v3682 = vld [vmem:[%s3677 + $0x10] sm:$0xf]
    %v3683 = vld [vmem:[%s3677 + $0x14] sm:$0xf]
    %v3684 = vld [vmem:[%s3677 + $0x18] sm:$0xf]
    %v3685 = vld [vmem:[%s3677 + $0x1c] sm:$0xf]
    %v3686 = vld [vmem:[%s3677 + $0x20] sm:$0xf]
    %v3687 = vld [vmem:[%s3677 + $0x24] sm:$0xf]
    %v3688 = vld [vmem:[%s3677 + $0x28] sm:$0xf]
    %v3689 = vld [vmem:[%s3677 + $0x2c] sm:$0xf]
    %v3690 = vld [vmem:[%s3677 + $0x30] sm:$0xf]
    %v3691 = vld [vmem:[%s3677 + $0x34] sm:$0xf]
    %v3692 = vld [vmem:[%s3677 + $0x38] sm:$0xf]
    %v3693 = vld [vmem:[%s3677 + $0x3c] sm:$0xf]
    %v3710 = vunpack.c.l.b16 %v3678
    %v3711 = vunpack.c.l.b16 %v3679
    %v3712 = vunpack.c.l.b16 %v3680
    %v3713 = vunpack.c.l.b16 %v3681
    %v3714 = vunpack.c.l.b16 %v3682
    %v3715 = vunpack.c.l.b16 %v3683
    %v3716 = vunpack.c.l.b16 %v3684
    %v3717 = vunpack.c.l.b16 %v3685
    %v3718 = vunpack.c.l.b16 %v3686
    %v3719 = vunpack.c.l.b16 %v3687
    %v3720 = vunpack.c.l.b16 %v3688
    %v3721 = vunpack.c.l.b16 %v3689
    %v3722 = vunpack.c.l.b16 %v3690
    %v3723 = vunpack.c.l.b16 %v3691
    %v3724 = vunpack.c.l.b16 %v3692
    %v3725 = vunpack.c.l.b16 %v3693
    %v3726 = vpack.c.b16 %v3711, %v3710
    %v3727 = vpack.c.b16 %v3713, %v3712
    %v3728 = vpack.c.b16 %v3715, %v3714
    %v3729 = vpack.c.b16 %v3717, %v3716
    %v3730 = vpack.c.b16 %v3719, %v3718
    %v3731 = vpack.c.b16 %v3721, %v3720
    %v3732 = vpack.c.b16 %v3723, %v3722
    %v3733 = vpack.c.b16 %v3725, %v3724
    %3742 = vmatprep.subr.bf16.mxu0 0
    %3743 = vmatpush1.bf16.msra.mxu0 %v3726
    %3744 = vmatprep.subr.bf16.mxu0 0
    %3745 = vmatpush1.bf16.msra.mxu0 %v3727
    %3746 = vmatprep.subr.bf16.mxu0 0
    %3747 = vmatpush1.bf16.msra.mxu0 %v3728
    %3748 = vmatprep.subr.bf16.mxu0 0
    %3749 = vmatpush1.bf16.msra.mxu0 %v3729
    %3750 = vmatprep.subr.bf16.mxu0 0
    %3751 = vmatpush1.bf16.msra.mxu0 %v3730
    %3752 = vmatprep.subr.bf16.mxu0 0
    %3753 = vmatpush1.bf16.msra.mxu0 %v3731
    %3754 = vmatprep.subr.bf16.mxu0 0
    %3755 = vmatpush1.bf16.msra.mxu0 %v3732
    %3756 = vmatprep.subr.bf16.mxu0 0
    %3757 = vmatpush1.bf16.msra.mxu0 %v3733
    %3758 = vmatprep.subr.bf16.mxu0 0
    %3759 = vmatpush1.bf16.msra.mxu0 0
    %3760 = vmatprep.subr.bf16.mxu0 0
    %3761 = vmatpush1.bf16.msra.mxu0 0
    %3762 = vmatprep.subr.bf16.mxu0 0
    %3763 = vmatpush1.bf16.msra.mxu0 0
    %3764 = vmatprep.subr.bf16.mxu0 0
    %3765 = vmatpush1.bf16.msra.mxu0 0
    %3766 = vmatprep.subr.bf16.mxu0 0
    %3767 = vmatpush1.bf16.msra.mxu0 0
    %3768 = vmatprep.subr.bf16.mxu0 0
    %3769 = vmatpush1.bf16.msra.mxu0 0
    %3770 = vmatprep.subr.bf16.mxu0 0
    %3771 = vmatpush1.bf16.msra.mxu0 0
    %3772 = vmatprep.subr.bf16.mxu0 0
    %3773 = vmatpush1.bf16.msra.mxu0 0
    %3774 = vmatprep.mubr.bf16.mxu0 0
    %3775 = vmatmul.mubr.bf16.gmra.mrb[0].mxu0 %v3588
    %v3776 = vpop.f32.mrb[0].mxu0
    %v3777 = vadd.f32 0.0, %v3776
    %v3778 = vpop.f32.mrb[0].mxu0
    %v3779 = vpop.f32.mrb[0].mxu0
    %v3780 = vpop.f32.mrb[0].mxu0
    %3781 = vdwg.mxu0
    %v3782 = vadd.f32 %v3524, %v3672
    %v3783 = vadd.f32 %v3525, %v3777
    %v3784 = vld [vmem:[#allocation25] sm:$0x1]
    %v3786 = vlaneseq
    %v3787 = vshrl.u32 %v3786, 7
    %v3788 = vsub.s32 0, %v3787
    %v3789 = vrot.slane %v3784, %v3788
    %v3791 = vadd.f32 %v3782, %v3789
    %v3792 = vld [vmem:[#allocation26] sm:$0x1]
    %v3794 = vlaneseq
    %v3795 = vshrl.u32 %v3794, 7
    %v3796 = vsub.s32 0, %v3795
    %v3797 = vrot.slane %v3792, %v3796
    %v3799 = vadd.f32 %v3783, %v3797
    %vm3800 = vcmask 123904
    %3801 = vst.msk [vmem:[#allocation38] sm:$0x3] %vm3800, %v3791
    %3802 = vst.msk [vmem:[#allocation40] sm:$0x3] %vm3800, %v3799
    %v3803 = vld [vmem:[#allocation5] sm:$0x3]
    %v3804 = vmul.f32 %v3799, 0.5
    %v3805 = vmul.f32 %v3804, 1.442695
    %v3806 = vpow.pop %v3805
    %v3807 = vmul.f32 %v3803, %v3806
    %v3808 = vadd.f32 %v3807, %v3791
    %v3809 = vld [vmem:[#allocation28] sm:$0xf]
    %v3810 = vld [vmem:[#allocation28 + $0x4] sm:$0xf]
    %v3811 = vpack.c.bf16 %v3808, %v3808
    %v3812 = vld [vmem:[#allocation29] sm:$0x1]
    %v3814 = vlaneseq
    %v3815 = vshrl.u32 %v3814, 7
    %v3816 = vsub.s32 0, %v3815
    %v3817 = vrot.slane %v3812, %v3816
    %v3821 = vunpack.c.l.b16 %v3809
    %v3822 = vunpack.c.l.b16 %v3810
    %v3823 = vpack.c.b16 %v3822, %v3821
    %v3826 = vsel %vm456, %v3811, 0
    %3828 = vmatprep.subr.bf16.mxu0 0
    %3829 = vmatpush1.bf16.msra.mxu0 %v3823
    %3830 = vmatprep.subr.bf16.mxu0 0
    %3831 = vmatpush1.bf16.msra.mxu0 0
    %3832 = vmatprep.subr.bf16.mxu0 0
    %3833 = vmatpush1.bf16.msra.mxu0 0
    %3834 = vmatprep.subr.bf16.mxu0 0
    %3835 = vmatpush1.bf16.msra.mxu0 0
    %3836 = vmatprep.subr.bf16.mxu0 0
    %3837 = vmatpush1.bf16.msra.mxu0 0
    %3838 = vmatprep.subr.bf16.mxu0 0
    %3839 = vmatpush1.bf16.msra.mxu0 0
    %3840 = vmatprep.subr.bf16.mxu0 0
    %3841 = vmatpush1.bf16.msra.mxu0 0
    %3842 = vmatprep.subr.bf16.mxu0 0
    %3843 = vmatpush1.bf16.msra.mxu0 0
    %3844 = vmatprep.subr.bf16.mxu0 0
    %3845 = vmatpush1.bf16.msra.mxu0 0
    %3846 = vmatprep.subr.bf16.mxu0 0
    %3847 = vmatpush1.bf16.msra.mxu0 0
    %3848 = vmatprep.subr.bf16.mxu0 0
    %3849 = vmatpush1.bf16.msra.mxu0 0
    %3850 = vmatprep.subr.bf16.mxu0 0
    %3851 = vmatpush1.bf16.msra.mxu0 0
    %3852 = vmatprep.subr.bf16.mxu0 0
    %3853 = vmatpush1.bf16.msra.mxu0 0
    %3854 = vmatprep.subr.bf16.mxu0 0
    %3855 = vmatpush1.bf16.msra.mxu0 0
    %3856 = vmatprep.subr.bf16.mxu0 0
    %3857 = vmatpush1.bf16.msra.mxu0 0
    %3858 = vmatprep.subr.bf16.mxu0 0
    %3859 = vmatpush1.bf16.msra.mxu0 0
    %3860 = vmatprep.mubr.bf16.mxu0 0
    %3861 = vmatmul.mubr.bf16.gmra.mrb[0].mxu0 %v3826
    %v3862 = vpop.f32.mrb[0].mxu0
    %v3863 = vadd.f32 %v3817, %v3862
    %v3864 = vpop.f32.mrb[0].mxu0
    %v3865 = vpop.f32.mrb[0].mxu0
    %v3866 = vpop.f32.mrb[0].mxu0
    %3867 = vdwg.mxu0
    %v3868 = vld [vmem:[%s41] sm:$0xf]
    %v3869 = vpack.c.bf16 %v3863, %v3863
    %s3870 = scalar_lea.vmem [#allocation28], 8
    %v3871 = vld [vmem:[%s3870] sm:$0xf]
    %v3872 = vld [vmem:[%s3870 + $0x4] sm:$0xf]
    %s3873 = scalar_lea.vmem [#allocation29], 1
    %v3874 = vld [vmem:[%s3873] sm:$0x1]
    %v3876 = vlaneseq
    %v3877 = vshrl.u32 %v3876, 7
    %v3878 = vsub.s32 0, %v3877
    %v3879 = vrot.slane %v3874, %v3878
    %v3883 = vunpack.c.l.b16 %v3871
    %v3884 = vunpack.c.l.b16 %v3872
    %v3885 = vpack.c.b16 %v3884, %v3883
    %3887 = vmatprep.subr.bf16.mxu0 0
    %3888 = vmatpush1.bf16.msra.mxu0 %v3885
    %3889 = vmatprep.subr.bf16.mxu0 0
    %3890 = vmatpush1.bf16.msra.mxu0 0
    %3891 = vmatprep.subr.bf16.mxu0 0
    %3892 = vmatpush1.bf16.msra.mxu0 0
    %3893 = vmatprep.subr.bf16.mxu0 0
    %3894 = vmatpush1.bf16.msra.mxu0 0
    %3895 = vmatprep.subr.bf16.mxu0 0
    %3896 = vmatpush1.bf16.msra.mxu0 0
    %3897 = vmatprep.subr.bf16.mxu0 0
    %3898 = vmatpush1.bf16.msra.mxu0 0
    %3899 = vmatprep.subr.bf16.mxu0 0
    %3900 = vmatpush1.bf16.msra.mxu0 0
    %3901 = vmatprep.subr.bf16.mxu0 0
    %3902 = vmatpush1.bf16.msra.mxu0 0
    %3903 = vmatprep.subr.bf16.mxu0 0
    %3904 = vmatpush1.bf16.msra.mxu0 0
    %3905 = vmatprep.subr.bf16.mxu0 0
    %3906 = vmatpush1.bf16.msra.mxu0 0
    %3907 = vmatprep.subr.bf16.mxu0 0
    %3908 = vmatpush1.bf16.msra.mxu0 0
    %3909 = vmatprep.subr.bf16.mxu0 0
    %3910 = vmatpush1.bf16.msra.mxu0 0
    %3911 = vmatprep.subr.bf16.mxu0 0
    %3912 = vmatpush1.bf16.msra.mxu0 0
    %3913 = vmatprep.subr.bf16.mxu0 0
    %3914 = vmatpush1.bf16.msra.mxu0 0
    %3915 = vmatprep.subr.bf16.mxu0 0
    %3916 = vmatpush1.bf16.msra.mxu0 0
    %3917 = vmatprep.subr.bf16.mxu0 0
    %3918 = vmatpush1.bf16.msra.mxu0 0
    %3919 = vmatprep.mubr.bf16.mxu0 0
    %3920 = vmatmul.mubr.bf16.gmra.mrb[0].mxu0 %v3826
    %v3921 = vpop.f32.mrb[0].mxu0
    %v3922 = vadd.f32 %v3879, %v3921
    %v3923 = vpop.f32.mrb[0].mxu0
    %v3924 = vpop.f32.mrb[0].mxu0
    %v3925 = vpop.f32.mrb[0].mxu0
    %3926 = vdwg.mxu0
    %s3927 = scalar_lea.vmem %s41, 4
    %v3928 = vld [vmem:[%s3927] sm:$0xf]
    %v3929 = vpack.c.bf16 %v3922, %v3922
    %vm3930 = vcmask 15360
    %v3932 = vsel %vm3930, %v3928, 0
    %vm3934 = vcmask 1040384
    %v3936 = vsel %vm3934, %v3929, 0
    %3938 = vmatprep.subr.bf16.mxu0 0
    %3939 = vmatpush1.bf16.msra.mxu0 %v3936
    %3940 = vmatprep.subr.bf16.mxu0 0
    %3941 = vmatpush1.bf16.msra.mxu0 0
    %3942 = vmatprep.subr.bf16.mxu0 0
    %3943 = vmatpush1.bf16.msra.mxu0 0
    %3944 = vmatprep.subr.bf16.mxu0 0
    %3945 = vmatpush1.bf16.msra.mxu0 0
    %3946 = vmatprep.subr.bf16.mxu0 0
    %3947 = vmatpush1.bf16.msra.mxu0 0
    %3948 = vmatprep.subr.bf16.mxu0 0
    %3949 = vmatpush1.bf16.msra.mxu0 0
    %3950 = vmatprep.subr.bf16.mxu0 0
    %3951 = vmatpush1.bf16.msra.mxu0 0
    %3952 = vmatprep.subr.bf16.mxu0 0
    %3953 = vmatpush1.bf16.msra.mxu0 0
    %3954 = vmatprep.subr.bf16.mxu0 0
    %3955 = vmatpush1.bf16.msra.mxu0 0
    %3956 = vmatprep.subr.bf16.mxu0 0
    %3957 = vmatpush1.bf16.msra.mxu0 0
    %3958 = vmatprep.subr.bf16.mxu0 0
    %3959 = vmatpush1.bf16.msra.mxu0 0
    %3960 = vmatprep.subr.bf16.mxu0 0
    %3961 = vmatpush1.bf16.msra.mxu0 0
    %3962 = vmatprep.subr.bf16.mxu0 0
    %3963 = vmatpush1.bf16.msra.mxu0 0
    %3964 = vmatprep.subr.bf16.mxu0 0
    %3965 = vmatpush1.bf16.msra.mxu0 0
    %3966 = vmatprep.subr.bf16.mxu0 0
    %3967 = vmatpush1.bf16.msra.mxu0 0
    %3968 = vmatprep.subr.bf16.mxu0 0
    %3969 = vmatpush1.bf16.msra.mxu0 0
    %3970 = vmatprep.mubr.bf16.mxu0 0
    %3971 = vmatmul.mubr.bf16.gmra.mrb[0].mxu0 %v3932
    %v3972 = vpop.f32.mrb[0].mxu0
    %v3973 = vadd.f32 0.0, %v3972
    %v3974 = vpop.f32.mrb[0].mxu0
    %v3975 = vpop.f32.mrb[0].mxu0
    %v3976 = vpop.f32.mrb[0].mxu0
    %3977 = vdwg.mxu0
    %v3979 = vsel %vm3930, %v3868, 0
    %v3982 = vsel %vm3934, %v3869, 0
    %3984 = vmatprep.subr.bf16.mxu0 0
    %3985 = vmatpush1.bf16.msra.mxu0 %v3982
    %3986 = vmatprep.subr.bf16.mxu0 0
    %3987 = vmatpush1.bf16.msra.mxu0 0
    %3988 = vmatprep.subr.bf16.mxu0 0
    %3989 = vmatpush1.bf16.msra.mxu0 0
    %3990 = vmatprep.subr.bf16.mxu0 0
    %3991 = vmatpush1.bf16.msra.mxu0 0
    %3992 = vmatprep.subr.bf16.mxu0 0
    %3993 = vmatpush1.bf16.msra.mxu0 0
    %3994 = vmatprep.subr.bf16.mxu0 0
    %3995 = vmatpush1.bf16.msra.mxu0 0
    %3996 = vmatprep.subr.bf16.mxu0 0
    %3997 = vmatpush1.bf16.msra.mxu0 0
    %3998 = vmatprep.subr.bf16.mxu0 0
    %3999 = vmatpush1.bf16.msra.mxu0 0
    %4000 = vmatprep.subr.bf16.mxu0 0
    %4001 = vmatpush1.bf16.msra.mxu0 0
    %4002 = vmatprep.subr.bf16.mxu0 0
    %4003 = vmatpush1.bf16.msra.mxu0 0
    %4004 = vmatprep.subr.bf16.mxu0 0
    %4005 = vmatpush1.bf16.msra.mxu0 0
    %4006 = vmatprep.subr.bf16.mxu0 0
    %4007 = vmatpush1.bf16.msra.mxu0 0
    %4008 = vmatprep.subr.bf16.mxu0 0
    %4009 = vmatpush1.bf16.msra.mxu0 0
    %4010 = vmatprep.subr.bf16.mxu0 0
    %4011 = vmatpush1.bf16.msra.mxu0 0
    %4012 = vmatprep.subr.bf16.mxu0 0
    %4013 = vmatpush1.bf16.msra.mxu0 0
    %4014 = vmatprep.subr.bf16.mxu0 0
    %4015 = vmatpush1.bf16.msra.mxu0 0
    %4016 = vmatprep.mubr.bf16.mxu0 0
    %4017 = vmatmul.mubr.bf16.gmra.mrb[0].mxu0 %v3979
    %v4018 = vpop.f32.mrb[0].mxu0
    %v4019 = vadd.f32 %v3973, %v4018
    %v4020 = vpop.f32.mrb[0].mxu0
    %v4021 = vpop.f32.mrb[0].mxu0
    %v4022 = vpop.f32.mrb[0].mxu0
    %4023 = vdwg.mxu0
    %s4024 = scalar_lea.vmem [#allocation28], 16
    %v4025 = vld [vmem:[%s4024] sm:$0xf]
    %v4026 = vld [vmem:[%s4024 + $0x4] sm:$0xf]
    %s4027 = scalar_lea.vmem [#allocation29], 2
    %v4028 = vld [vmem:[%s4027] sm:$0x1]
    %v4030 = vlaneseq
    %v4031 = vshrl.u32 %v4030, 7
    %v4032 = vsub.s32 0, %v4031
    %v4033 = vrot.slane %v4028, %v4032
    %v4037 = vunpack.c.l.b16 %v4025
    %v4038 = vunpack.c.l.b16 %v4026
    %v4039 = vpack.c.b16 %v4038, %v4037
    %4041 = vmatprep.subr.bf16.mxu0 0
    %4042 = vmatpush1.bf16.msra.mxu0 %v4039
    %4043 = vmatprep.subr.bf16.mxu0 0
    %4044 = vmatpush1.bf16.msra.mxu0 0
    %4045 = vmatprep.subr.bf16.mxu0 0
    %4046 = vmatpush1.bf16.msra.mxu0 0
    %4047 = vmatprep.subr.bf16.mxu0 0
    %4048 = vmatpush1.bf16.msra.mxu0 0
    %4049 = vmatprep.subr.bf16.mxu0 0
    %4050 = vmatpush1.bf16.msra.mxu0 0
    %4051 = vmatprep.subr.bf16.mxu0 0
    %4052 = vmatpush1.bf16.msra.mxu0 0
    %4053 = vmatprep.subr.bf16.mxu0 0
    %4054 = vmatpush1.bf16.msra.mxu0 0
    %4055 = vmatprep.subr.bf16.mxu0 0
    %4056 = vmatpush1.bf16.msra.mxu0 0
    %4057 = vmatprep.subr.bf16.mxu0 0
    %4058 = vmatpush1.bf16.msra.mxu0 0
    %4059 = vmatprep.subr.bf16.mxu0 0
    %4060 = vmatpush1.bf16.msra.mxu0 0
    %4061 = vmatprep.subr.bf16.mxu0 0
    %4062 = vmatpush1.bf16.msra.mxu0 0
    %4063 = vmatprep.subr.bf16.mxu0 0
    %4064 = vmatpush1.bf16.msra.mxu0 0
    %4065 = vmatprep.subr.bf16.mxu0 0
    %4066 = vmatpush1.bf16.msra.mxu0 0
    %4067 = vmatprep.subr.bf16.mxu0 0
    %4068 = vmatpush1.bf16.msra.mxu0 0
    %4069 = vmatprep.subr.bf16.mxu0 0
    %4070 = vmatpush1.bf16.msra.mxu0 0
    %4071 = vmatprep.subr.bf16.mxu0 0
    %4072 = vmatpush1.bf16.msra.mxu0 0
    %4073 = vmatprep.mubr.bf16.mxu0 0
    %4074 = vmatmul.mubr.bf16.gmra.mrb[0].mxu0 %v3826
    %v4075 = vpop.f32.mrb[0].mxu0
    %v4076 = vadd.f32 %v4033, %v4075
    %v4077 = vpop.f32.mrb[0].mxu0
    %v4078 = vpop.f32.mrb[0].mxu0
    %v4079 = vpop.f32.mrb[0].mxu0
    %4080 = vdwg.mxu0
    %s4081 = scalar_lea.vmem %s41, 8
    %v4082 = vld [vmem:[%s4081] sm:$0xf]
    %v4083 = vpack.c.bf16 %v4076, %v4076
    %v4085 = vsel %vm3930, %v4082, 0
    %v4088 = vsel %vm3934, %v4083, 0
    %4090 = vmatprep.subr.bf16.mxu0 0
    %4091 = vmatpush1.bf16.msra.mxu0 %v4088
    %4092 = vmatprep.subr.bf16.mxu0 0
    %4093 = vmatpush1.bf16.msra.mxu0 0
    %4094 = vmatprep.subr.bf16.mxu0 0
    %4095 = vmatpush1.bf16.msra.mxu0 0
    %4096 = vmatprep.subr.bf16.mxu0 0
    %4097 = vmatpush1.bf16.msra.mxu0 0
    %4098 = vmatprep.subr.bf16.mxu0 0
    %4099 = vmatpush1.bf16.msra.mxu0 0
    %4100 = vmatprep.subr.bf16.mxu0 0
    %4101 = vmatpush1.bf16.msra.mxu0 0
    %4102 = vmatprep.subr.bf16.mxu0 0
    %4103 = vmatpush1.bf16.msra.mxu0 0
    %4104 = vmatprep.subr.bf16.mxu0 0
    %4105 = vmatpush1.bf16.msra.mxu0 0
    %4106 = vmatprep.subr.bf16.mxu0 0
    %4107 = vmatpush1.bf16.msra.mxu0 0
    %4108 = vmatprep.subr.bf16.mxu0 0
    %4109 = vmatpush1.bf16.msra.mxu0 0
    %4110 = vmatprep.subr.bf16.mxu0 0
    %4111 = vmatpush1.bf16.msra.mxu0 0
    %4112 = vmatprep.subr.bf16.mxu0 0
    %4113 = vmatpush1.bf16.msra.mxu0 0
    %4114 = vmatprep.subr.bf16.mxu0 0
    %4115 = vmatpush1.bf16.msra.mxu0 0
    %4116 = vmatprep.subr.bf16.mxu0 0
    %4117 = vmatpush1.bf16.msra.mxu0 0
    %4118 = vmatprep.subr.bf16.mxu0 0
    %4119 = vmatpush1.bf16.msra.mxu0 0
    %4120 = vmatprep.subr.bf16.mxu0 0
    %4121 = vmatpush1.bf16.msra.mxu0 0
    %4122 = vmatprep.mubr.bf16.mxu0 0
    %4123 = vmatmul.mubr.bf16.gmra.mrb[0].mxu0 %v4085
    %v4124 = vpop.f32.mrb[0].mxu0
    %v4125 = vadd.f32 0.0, %v4124
    %v4126 = vpop.f32.mrb[0].mxu0
    %v4127 = vpop.f32.mrb[0].mxu0
    %v4128 = vpop.f32.mrb[0].mxu0
    %4129 = vdwg.mxu0
    %v4130 = vadd.f32 %v4019, %v4125
    %s4131 = scalar_lea.vmem [#allocation28], 24
    %v4132 = vld [vmem:[%s4131] sm:$0xf]
    %v4133 = vld [vmem:[%s4131 + $0x4] sm:$0xf]
    %s4134 = scalar_lea.vmem [#allocation29], 3
    %v4135 = vld [vmem:[%s4134] sm:$0x1]
    %v4137 = vlaneseq
    %v4138 = vshrl.u32 %v4137, 7
    %v4139 = vsub.s32 0, %v4138
    %v4140 = vrot.slane %v4135, %v4139
    %v4144 = vunpack.c.l.b16 %v4132
    %v4145 = vunpack.c.l.b16 %v4133
    %v4146 = vpack.c.b16 %v4145, %v4144
    %4148 = vmatprep.subr.bf16.mxu0 0
    %4149 = vmatpush1.bf16.msra.mxu0 %v4146
    %4150 = vmatprep.subr.bf16.mxu0 0
    %4151 = vmatpush1.bf16.msra.mxu0 0
    %4152 = vmatprep.subr.bf16.mxu0 0
    %4153 = vmatpush1.bf16.msra.mxu0 0
    %4154 = vmatprep.subr.bf16.mxu0 0
    %4155 = vmatpush1.bf16.msra.mxu0 0
    %4156 = vmatprep.subr.bf16.mxu0 0
    %4157 = vmatpush1.bf16.msra.mxu0 0
    %4158 = vmatprep.subr.bf16.mxu0 0
    %4159 = vmatpush1.bf16.msra.mxu0 0
    %4160 = vmatprep.subr.bf16.mxu0 0
    %4161 = vmatpush1.bf16.msra.mxu0 0
    %4162 = vmatprep.subr.bf16.mxu0 0
    %4163 = vmatpush1.bf16.msra.mxu0 0
    %4164 = vmatprep.subr.bf16.mxu0 0
    %4165 = vmatpush1.bf16.msra.mxu0 0
    %4166 = vmatprep.subr.bf16.mxu0 0
    %4167 = vmatpush1.bf16.msra.mxu0 0
    %4168 = vmatprep.subr.bf16.mxu0 0
    %4169 = vmatpush1.bf16.msra.mxu0 0
    %4170 = vmatprep.subr.bf16.mxu0 0
    %4171 = vmatpush1.bf16.msra.mxu0 0
    %4172 = vmatprep.subr.bf16.mxu0 0
    %4173 = vmatpush1.bf16.msra.mxu0 0
    %4174 = vmatprep.subr.bf16.mxu0 0
    %4175 = vmatpush1.bf16.msra.mxu0 0
    %4176 = vmatprep.subr.bf16.mxu0 0
    %4177 = vmatpush1.bf16.msra.mxu0 0
    %4178 = vmatprep.subr.bf16.mxu0 0
    %4179 = vmatpush1.bf16.msra.mxu0 0
    %4180 = vmatprep.mubr.bf16.mxu0 0
    %4181 = vmatmul.mubr.bf16.gmra.mrb[0].mxu0 %v3826
    %v4182 = vpop.f32.mrb[0].mxu0
    %v4183 = vadd.f32 %v4140, %v4182
    %v4184 = vpop.f32.mrb[0].mxu0
    %v4185 = vpop.f32.mrb[0].mxu0
    %v4186 = vpop.f32.mrb[0].mxu0
    %4187 = vdwg.mxu0
    %s4188 = scalar_lea.vmem %s41, 12
    %v4189 = vld [vmem:[%s4188] sm:$0xf]
    %v4190 = vpack.c.bf16 %v4183, %v4183
    %v4192 = vsel %vm3930, %v4189, 0
    %v4195 = vsel %vm3934, %v4190, 0
    %4197 = vmatprep.subr.bf16.mxu0 0
    %4198 = vmatpush1.bf16.msra.mxu0 %v4195
    %4199 = vmatprep.subr.bf16.mxu0 0
    %4200 = vmatpush1.bf16.msra.mxu0 0
    %4201 = vmatprep.subr.bf16.mxu0 0
    %4202 = vmatpush1.bf16.msra.mxu0 0
    %4203 = vmatprep.subr.bf16.mxu0 0
    %4204 = vmatpush1.bf16.msra.mxu0 0
    %4205 = vmatprep.subr.bf16.mxu0 0
    %4206 = vmatpush1.bf16.msra.mxu0 0
    %4207 = vmatprep.subr.bf16.mxu0 0
    %4208 = vmatpush1.bf16.msra.mxu0 0
    %4209 = vmatprep.subr.bf16.mxu0 0
    %4210 = vmatpush1.bf16.msra.mxu0 0
    %4211 = vmatprep.subr.bf16.mxu0 0
    %4212 = vmatpush1.bf16.msra.mxu0 0
    %4213 = vmatprep.subr.bf16.mxu0 0
    %4214 = vmatpush1.bf16.msra.mxu0 0
    %4215 = vmatprep.subr.bf16.mxu0 0
    %4216 = vmatpush1.bf16.msra.mxu0 0
    %4217 = vmatprep.subr.bf16.mxu0 0
    %4218 = vmatpush1.bf16.msra.mxu0 0
    %4219 = vmatprep.subr.bf16.mxu0 0
    %4220 = vmatpush1.bf16.msra.mxu0 0
    %4221 = vmatprep.subr.bf16.mxu0 0
    %4222 = vmatpush1.bf16.msra.mxu0 0
    %4223 = vmatprep.subr.bf16.mxu0 0
    %4224 = vmatpush1.bf16.msra.mxu0 0
    %4225 = vmatprep.subr.bf16.mxu0 0
    %4226 = vmatpush1.bf16.msra.mxu0 0
    %4227 = vmatprep.subr.bf16.mxu0 0
    %4228 = vmatpush1.bf16.msra.mxu0 0
    %4229 = vmatprep.mubr.bf16.mxu0 0
    %4230 = vmatmul.mubr.bf16.gmra.mrb[0].mxu0 %v4192
    %v4231 = vpop.f32.mrb[0].mxu0
    %v4232 = vadd.f32 0.0, %v4231
    %v4233 = vpop.f32.mrb[0].mxu0
    %v4234 = vpop.f32.mrb[0].mxu0
    %v4235 = vpop.f32.mrb[0].mxu0
    %4236 = vdwg.mxu0
    %v4237 = vadd.f32 %v4130, %v4232
    %v4238 = vld [vmem:[#allocation31] sm:$0xf]
    %v4239 = vpack.c.bf16 %v4237, %v4237
    %v4241 = vsel %vm2755, %v4238, 0
    %v4244 = vsel %vm2759, %v4239, 0
    %4246 = vmatprep.subr.bf16.mxu0 0
    %4247 = vmatpush1.bf16.msra.mxu0 %v4244
    %4248 = vmatprep.subr.bf16.mxu0 0
    %4249 = vmatpush1.bf16.msra.mxu0 0
    %4250 = vmatprep.subr.bf16.mxu0 0
    %4251 = vmatpush1.bf16.msra.mxu0 0
    %4252 = vmatprep.subr.bf16.mxu0 0
    %4253 = vmatpush1.bf16.msra.mxu0 0
    %4254 = vmatprep.subr.bf16.mxu0 0
    %4255 = vmatpush1.bf16.msra.mxu0 0
    %4256 = vmatprep.subr.bf16.mxu0 0
    %4257 = vmatpush1.bf16.msra.mxu0 0
    %4258 = vmatprep.subr.bf16.mxu0 0
    %4259 = vmatpush1.bf16.msra.mxu0 0
    %4260 = vmatprep.subr.bf16.mxu0 0
    %4261 = vmatpush1.bf16.msra.mxu0 0
    %4262 = vmatprep.subr.bf16.mxu0 0
    %4263 = vmatpush1.bf16.msra.mxu0 0
    %4264 = vmatprep.subr.bf16.mxu0 0
    %4265 = vmatpush1.bf16.msra.mxu0 0
    %4266 = vmatprep.subr.bf16.mxu0 0
    %4267 = vmatpush1.bf16.msra.mxu0 0
    %4268 = vmatprep.subr.bf16.mxu0 0
    %4269 = vmatpush1.bf16.msra.mxu0 0
    %4270 = vmatprep.subr.bf16.mxu0 0
    %4271 = vmatpush1.bf16.msra.mxu0 0
    %4272 = vmatprep.subr.bf16.mxu0 0
    %4273 = vmatpush1.bf16.msra.mxu0 0
    %4274 = vmatprep.subr.bf16.mxu0 0
    %4275 = vmatpush1.bf16.msra.mxu0 0
    %4276 = vmatprep.subr.bf16.mxu0 0
    %4277 = vmatpush1.bf16.msra.mxu0 0
    %4278 = vmatprep.mubr.bf16.mxu0 0
    %4279 = vmatmul.mubr.bf16.gmra.mrb[0].mxu0 %v4241
    %v4280 = vpop.f32.mrb[0].mxu0
    %v4281 = vadd.f32 0.0, %v4280
    %v4282 = vpop.f32.mrb[0].mxu0
    %v4283 = vpop.f32.mrb[0].mxu0
    %v4284 = vpop.f32.mrb[0].mxu0
    %4285 = vdwg.mxu0
    %v4286 = vld [vmem:[%s49] sm:$0xff]
    %v4287 = vld [vmem:[%s49 + $0x8] sm:$0xff]
    %v4288 = vld [vmem:[%s49 + $0x10] sm:$0xff]
    %v4289 = vld [vmem:[%s49 + $0x18] sm:$0xff]
    %v4290 = vld [vmem:[%s49 + $0x20] sm:$0xff]
    %v4291 = vld [vmem:[%s49 + $0x28] sm:$0xff]
    %v4292 = vld [vmem:[%s49 + $0x30] sm:$0xff]
    %v4293 = vld [vmem:[%s49 + $0x38] sm:$0xff]
    %v4294 = vld [vmem:[%s49 + $0x40] sm:$0xff]
    %v4295 = vld [vmem:[%s49 + $0x48] sm:$0xff]
    %v4296 = vld [vmem:[%s49 + $0x50] sm:$0xff]
    %v4297 = vld [vmem:[%s49 + $0x58] sm:$0xff]
    %v4298 = vld [vmem:[%s49 + $0x60] sm:$0xff]
    %v4299 = vld [vmem:[%s49 + $0x68] sm:$0xff]
    %v4300 = vld [vmem:[%s49 + $0x70] sm:$0xff]
    %v4301 = vld [vmem:[%s49 + $0x78] sm:$0xff]
    %v4302 = vpack.c.bf16 %v4281, %v4281
    %s4303 = scalar_lea.vmem [#allocation31], 4
    %v4304 = vld [vmem:[%s4303] sm:$0xf]
    %v4306 = vsel %vm2755, %v4304, 0
    %4308 = vmatprep.subr.bf16.mxu0 0
    %4309 = vmatpush1.bf16.msra.mxu0 %v4244
    %4310 = vmatprep.subr.bf16.mxu0 0
    %4311 = vmatpush1.bf16.msra.mxu0 0
    %4312 = vmatprep.subr.bf16.mxu0 0
    %4313 = vmatpush1.bf16.msra.mxu0 0
    %4314 = vmatprep.subr.bf16.mxu0 0
    %4315 = vmatpush1.bf16.msra.mxu0 0
    %4316 = vmatprep.subr.bf16.mxu0 0
    %4317 = vmatpush1.bf16.msra.mxu0 0
    %4318 = vmatprep.subr.bf16.mxu0 0
    %4319 = vmatpush1.bf16.msra.mxu0 0
    %4320 = vmatprep.subr.bf16.mxu0 0
    %4321 = vmatpush1.bf16.msra.mxu0 0
    %4322 = vmatprep.subr.bf16.mxu0 0
    %4323 = vmatpush1.bf16.msra.mxu0 0
    %4324 = vmatprep.subr.bf16.mxu0 0
    %4325 = vmatpush1.bf16.msra.mxu0 0
    %4326 = vmatprep.subr.bf16.mxu0 0
    %4327 = vmatpush1.bf16.msra.mxu0 0
    %4328 = vmatprep.subr.bf16.mxu0 0
    %4329 = vmatpush1.bf16.msra.mxu0 0
    %4330 = vmatprep.subr.bf16.mxu0 0
    %4331 = vmatpush1.bf16.msra.mxu0 0
    %4332 = vmatprep.subr.bf16.mxu0 0
    %4333 = vmatpush1.bf16.msra.mxu0 0
    %4334 = vmatprep.subr.bf16.mxu0 0
    %4335 = vmatpush1.bf16.msra.mxu0 0
    %4336 = vmatprep.subr.bf16.mxu0 0
    %4337 = vmatpush1.bf16.msra.mxu0 0
    %4338 = vmatprep.subr.bf16.mxu0 0
    %4339 = vmatpush1.bf16.msra.mxu0 0
    %4340 = vmatprep.mubr.bf16.mxu0 0
    %4341 = vmatmul.mubr.bf16.gmra.mrb[0].mxu0 %v4306
    %v4342 = vpop.f32.mrb[0].mxu0
    %v4343 = vadd.f32 0.0, %v4342
    %v4344 = vpop.f32.mrb[0].mxu0
    %v4345 = vpop.f32.mrb[0].mxu0
    %v4346 = vpop.f32.mrb[0].mxu0
    %4347 = vdwg.mxu0
    %s4348 = scalar_lea.vmem %s49, 128
    %v4349 = vld [vmem:[%s4348] sm:$0xff]
    %v4350 = vld [vmem:[%s4348 + $0x8] sm:$0xff]
    %v4351 = vld [vmem:[%s4348 + $0x10] sm:$0xff]
    %v4352 = vld [vmem:[%s4348 + $0x18] sm:$0xff]
    %v4353 = vld [vmem:[%s4348 + $0x20] sm:$0xff]
    %v4354 = vld [vmem:[%s4348 + $0x28] sm:$0xff]
    %v4355 = vld [vmem:[%s4348 + $0x30] sm:$0xff]
    %v4356 = vld [vmem:[%s4348 + $0x38] sm:$0xff]
    %v4357 = vld [vmem:[%s4348 + $0x40] sm:$0xff]
    %v4358 = vld [vmem:[%s4348 + $0x48] sm:$0xff]
    %v4359 = vld [vmem:[%s4348 + $0x50] sm:$0xff]
    %v4360 = vld [vmem:[%s4348 + $0x58] sm:$0xff]
    %v4361 = vld [vmem:[%s4348 + $0x60] sm:$0xff]
    %v4362 = vld [vmem:[%s4348 + $0x68] sm:$0xff]
    %v4363 = vld [vmem:[%s4348 + $0x70] sm:$0xff]
    %v4364 = vld [vmem:[%s4348 + $0x78] sm:$0xff]
    %v4365 = vpack.c.bf16 %v4343, %v4343
    %v4382 = vunpack.c.l.b16 %v4349
    %v4383 = vunpack.c.h.b16 %v4349
    %v4384 = vunpack.c.l.b16 %v4350
    %v4385 = vunpack.c.h.b16 %v4350
    %v4386 = vunpack.c.l.b16 %v4351
    %v4387 = vunpack.c.h.b16 %v4351
    %v4388 = vunpack.c.l.b16 %v4352
    %v4389 = vunpack.c.h.b16 %v4352
    %v4390 = vunpack.c.l.b16 %v4353
    %v4391 = vunpack.c.h.b16 %v4353
    %v4392 = vunpack.c.l.b16 %v4354
    %v4393 = vunpack.c.h.b16 %v4354
    %v4394 = vunpack.c.l.b16 %v4355
    %v4395 = vunpack.c.h.b16 %v4355
    %v4396 = vunpack.c.l.b16 %v4356
    %v4397 = vunpack.c.h.b16 %v4356
    %v4398 = vunpack.c.l.b16 %v4357
    %v4399 = vunpack.c.h.b16 %v4357
    %v4400 = vunpack.c.l.b16 %v4358
    %v4401 = vunpack.c.h.b16 %v4358
    %v4402 = vunpack.c.l.b16 %v4359
    %v4403 = vunpack.c.h.b16 %v4359
    %v4404 = vunpack.c.l.b16 %v4360
    %v4405 = vunpack.c.h.b16 %v4360
    %v4406 = vunpack.c.l.b16 %v4361
    %v4407 = vunpack.c.h.b16 %v4361
    %v4408 = vunpack.c.l.b16 %v4362
    %v4409 = vunpack.c.h.b16 %v4362
    %v4410 = vunpack.c.l.b16 %v4363
    %v4411 = vunpack.c.h.b16 %v4363
    %v4412 = vunpack.c.l.b16 %v4364
    %v4413 = vunpack.c.h.b16 %v4364
    %v4414 = vpack.c.b16 %v4384, %v4382
    %v4415 = vpack.c.b16 %v4385, %v4383
    %v4416 = vpack.c.b16 %v4388, %v4386
    %v4417 = vpack.c.b16 %v4389, %v4387
    %v4418 = vpack.c.b16 %v4392, %v4390
    %v4419 = vpack.c.b16 %v4393, %v4391
    %v4420 = vpack.c.b16 %v4396, %v4394
    %v4421 = vpack.c.b16 %v4397, %v4395
    %v4422 = vpack.c.b16 %v4400, %v4398
    %v4423 = vpack.c.b16 %v4401, %v4399
    %v4424 = vpack.c.b16 %v4404, %v4402
    %v4425 = vpack.c.b16 %v4405, %v4403
    %v4426 = vpack.c.b16 %v4408, %v4406
    %v4427 = vpack.c.b16 %v4409, %v4407
    %v4428 = vpack.c.b16 %v4412, %v4410
    %v4429 = vpack.c.b16 %v4413, %v4411
    %4446 = vmatprep.subr.bf16.mxu0 %v4415
    %4447 = vmatpush1.bf16.msra.mxu0 %v4414
    %4448 = vmatprep.subr.bf16.mxu0 %v4417
    %4449 = vmatpush1.bf16.msra.mxu0 %v4416
    %4450 = vmatprep.subr.bf16.mxu0 %v4419
    %4451 = vmatpush1.bf16.msra.mxu0 %v4418
    %4452 = vmatprep.subr.bf16.mxu0 %v4421
    %4453 = vmatpush1.bf16.msra.mxu0 %v4420
    %4454 = vmatprep.subr.bf16.mxu0 %v4423
    %4455 = vmatpush1.bf16.msra.mxu0 %v4422
    %4456 = vmatprep.subr.bf16.mxu0 %v4425
    %4457 = vmatpush1.bf16.msra.mxu0 %v4424
    %4458 = vmatprep.subr.bf16.mxu0 %v4427
    %4459 = vmatpush1.bf16.msra.mxu0 %v4426
    %4460 = vmatprep.subr.bf16.mxu0 %v4429
    %4461 = vmatpush1.bf16.msra.mxu0 %v4428
    %4462 = vmatprep.subr.bf16.mxu0 0
    %4463 = vmatpush1.bf16.msra.mxu0 0
    %4464 = vmatprep.subr.bf16.mxu0 0
    %4465 = vmatpush1.bf16.msra.mxu0 0
    %4466 = vmatprep.subr.bf16.mxu0 0
    %4467 = vmatpush1.bf16.msra.mxu0 0
    %4468 = vmatprep.subr.bf16.mxu0 0
    %4469 = vmatpush1.bf16.msra.mxu0 0
    %4470 = vmatprep.subr.bf16.mxu0 0
    %4471 = vmatpush1.bf16.msra.mxu0 0
    %4472 = vmatprep.subr.bf16.mxu0 0
    %4473 = vmatpush1.bf16.msra.mxu0 0
    %4474 = vmatprep.subr.bf16.mxu0 0
    %4475 = vmatpush1.bf16.msra.mxu0 0
    %4476 = vmatprep.subr.bf16.mxu0 0
    %4477 = vmatpush1.bf16.msra.mxu0 0
    %4478 = vmatprep.mubr.bf16.mxu0 0
    %4479 = vmatmul.mubr.bf16.gmra.mrb[0].mxu0 %v4365
    %v4480 = vpop.f32.mrb[0].mxu0
    %v4481 = vadd.f32 0.0, %v4480
    %v4482 = vpop.f32.mrb[0].mxu0
    %v4483 = vadd.f32 0.0, %v4482
    %v4484 = vpop.f32.mrb[0].mxu0
    %v4485 = vpop.f32.mrb[0].mxu0
    %4486 = vdwg.mxu0
    %v4503 = vunpack.c.l.b16 %v4286
    %v4504 = vunpack.c.h.b16 %v4286
    %v4505 = vunpack.c.l.b16 %v4287
    %v4506 = vunpack.c.h.b16 %v4287
    %v4507 = vunpack.c.l.b16 %v4288
    %v4508 = vunpack.c.h.b16 %v4288
    %v4509 = vunpack.c.l.b16 %v4289
    %v4510 = vunpack.c.h.b16 %v4289
    %v4511 = vunpack.c.l.b16 %v4290
    %v4512 = vunpack.c.h.b16 %v4290
    %v4513 = vunpack.c.l.b16 %v4291
    %v4514 = vunpack.c.h.b16 %v4291
    %v4515 = vunpack.c.l.b16 %v4292
    %v4516 = vunpack.c.h.b16 %v4292
    %v4517 = vunpack.c.l.b16 %v4293
    %v4518 = vunpack.c.h.b16 %v4293
    %v4519 = vunpack.c.l.b16 %v4294
    %v4520 = vunpack.c.h.b16 %v4294
    %v4521 = vunpack.c.l.b16 %v4295
    %v4522 = vunpack.c.h.b16 %v4295
    %v4523 = vunpack.c.l.b16 %v4296
    %v4524 = vunpack.c.h.b16 %v4296
    %v4525 = vunpack.c.l.b16 %v4297
    %v4526 = vunpack.c.h.b16 %v4297
    %v4527 = vunpack.c.l.b16 %v4298
    %v4528 = vunpack.c.h.b16 %v4298
    %v4529 = vunpack.c.l.b16 %v4299
    %v4530 = vunpack.c.h.b16 %v4299
    %v4531 = vunpack.c.l.b16 %v4300
    %v4532 = vunpack.c.h.b16 %v4300
    %v4533 = vunpack.c.l.b16 %v4301
    %v4534 = vunpack.c.h.b16 %v4301
    %v4535 = vpack.c.b16 %v4505, %v4503
    %v4536 = vpack.c.b16 %v4506, %v4504
    %v4537 = vpack.c.b16 %v4509, %v4507
    %v4538 = vpack.c.b16 %v4510, %v4508
    %v4539 = vpack.c.b16 %v4513, %v4511
    %v4540 = vpack.c.b16 %v4514, %v4512
    %v4541 = vpack.c.b16 %v4517, %v4515
    %v4542 = vpack.c.b16 %v4518, %v4516
    %v4543 = vpack.c.b16 %v4521, %v4519
    %v4544 = vpack.c.b16 %v4522, %v4520
    %v4545 = vpack.c.b16 %v4525, %v4523
    %v4546 = vpack.c.b16 %v4526, %v4524
    %v4547 = vpack.c.b16 %v4529, %v4527
    %v4548 = vpack.c.b16 %v4530, %v4528
    %v4549 = vpack.c.b16 %v4533, %v4531
    %v4550 = vpack.c.b16 %v4534, %v4532
    %4567 = vmatprep.subr.bf16.mxu0 %v4536
    %4568 = vmatpush1.bf16.msra.mxu0 %v4535
    %4569 = vmatprep.subr.bf16.mxu0 %v4538
    %4570 = vmatpush1.bf16.msra.mxu0 %v4537
    %4571 = vmatprep.subr.bf16.mxu0 %v4540
    %4572 = vmatpush1.bf16.msra.mxu0 %v4539
    %4573 = vmatprep.subr.bf16.mxu0 %v4542
    %4574 = vmatpush1.bf16.msra.mxu0 %v4541
    %4575 = vmatprep.subr.bf16.mxu0 %v4544
    %4576 = vmatpush1.bf16.msra.mxu0 %v4543
    %4577 = vmatprep.subr.bf16.mxu0 %v4546
    %4578 = vmatpush1.bf16.msra.mxu0 %v4545
    %4579 = vmatprep.subr.bf16.mxu0 %v4548
    %4580 = vmatpush1.bf16.msra.mxu0 %v4547
    %4581 = vmatprep.subr.bf16.mxu0 %v4550
    %4582 = vmatpush1.bf16.msra.mxu0 %v4549
    %4583 = vmatprep.subr.bf16.mxu0 0
    %4584 = vmatpush1.bf16.msra.mxu0 0
    %4585 = vmatprep.subr.bf16.mxu0 0
    %4586 = vmatpush1.bf16.msra.mxu0 0
    %4587 = vmatprep.subr.bf16.mxu0 0
    %4588 = vmatpush1.bf16.msra.mxu0 0
    %4589 = vmatprep.subr.bf16.mxu0 0
    %4590 = vmatpush1.bf16.msra.mxu0 0
    %4591 = vmatprep.subr.bf16.mxu0 0
    %4592 = vmatpush1.bf16.msra.mxu0 0
    %4593 = vmatprep.subr.bf16.mxu0 0
    %4594 = vmatpush1.bf16.msra.mxu0 0
    %4595 = vmatprep.subr.bf16.mxu0 0
    %4596 = vmatpush1.bf16.msra.mxu0 0
    %4597 = vmatprep.subr.bf16.mxu0 0
    %4598 = vmatpush1.bf16.msra.mxu0 0
    %4599 = vmatprep.mubr.bf16.mxu0 0
    %4600 = vmatmul.mubr.bf16.gmra.mrb[0].mxu0 %v4302
    %v4601 = vpop.f32.mrb[0].mxu0
    %v4602 = vadd.f32 %v4481, %v4601
    %v4603 = vpop.f32.mrb[0].mxu0
    %v4604 = vadd.f32 %v4483, %v4603
    %v4605 = vpop.f32.mrb[0].mxu0
    %v4606 = vpop.f32.mrb[0].mxu0
    %4607 = vdwg.mxu0
    %s4608 = scalar_lea.vmem [#allocation31], 8
    %v4609 = vld [vmem:[%s4608] sm:$0xf]
    %v4611 = vsel %vm2755, %v4609, 0
    %4613 = vmatprep.subr.bf16.mxu0 0
    %4614 = vmatpush1.bf16.msra.mxu0 %v4244
    %4615 = vmatprep.subr.bf16.mxu0 0
    %4616 = vmatpush1.bf16.msra.mxu0 0
    %4617 = vmatprep.subr.bf16.mxu0 0
    %4618 = vmatpush1.bf16.msra.mxu0 0
    %4619 = vmatprep.subr.bf16.mxu0 0
    %4620 = vmatpush1.bf16.msra.mxu0 0
    %4621 = vmatprep.subr.bf16.mxu0 0
    %4622 = vmatpush1.bf16.msra.mxu0 0
    %4623 = vmatprep.subr.bf16.mxu0 0
    %4624 = vmatpush1.bf16.msra.mxu0 0
    %4625 = vmatprep.subr.bf16.mxu0 0
    %4626 = vmatpush1.bf16.msra.mxu0 0
    %4627 = vmatprep.subr.bf16.mxu0 0
    %4628 = vmatpush1.bf16.msra.mxu0 0
    %4629 = vmatprep.subr.bf16.mxu0 0
    %4630 = vmatpush1.bf16.msra.mxu0 0
    %4631 = vmatprep.subr.bf16.mxu0 0
    %4632 = vmatpush1.bf16.msra.mxu0 0
    %4633 = vmatprep.subr.bf16.mxu0 0
    %4634 = vmatpush1.bf16.msra.mxu0 0
    %4635 = vmatprep.subr.bf16.mxu0 0
    %4636 = vmatpush1.bf16.msra.mxu0 0
    %4637 = vmatprep.subr.bf16.mxu0 0
    %4638 = vmatpush1.bf16.msra.mxu0 0
    %4639 = vmatprep.subr.bf16.mxu0 0
    %4640 = vmatpush1.bf16.msra.mxu0 0
    %4641 = vmatprep.subr.bf16.mxu0 0
    %4642 = vmatpush1.bf16.msra.mxu0 0
    %4643 = vmatprep.subr.bf16.mxu0 0
    %4644 = vmatpush1.bf16.msra.mxu0 0
    %4645 = vmatprep.mubr.bf16.mxu0 0
    %4646 = vmatmul.mubr.bf16.gmra.mrb[0].mxu0 %v4611
    %v4647 = vpop.f32.mrb[0].mxu0
    %v4648 = vadd.f32 0.0, %v4647
    %v4649 = vpop.f32.mrb[0].mxu0
    %v4650 = vpop.f32.mrb[0].mxu0
    %v4651 = vpop.f32.mrb[0].mxu0
    %4652 = vdwg.mxu0
    %s4653 = scalar_lea.vmem %s49, 256
    %v4654 = vld [vmem:[%s4653] sm:$0xff]
    %v4655 = vld [vmem:[%s4653 + $0x8] sm:$0xff]
    %v4656 = vld [vmem:[%s4653 + $0x10] sm:$0xff]
    %v4657 = vld [vmem:[%s4653 + $0x18] sm:$0xff]
    %v4658 = vld [vmem:[%s4653 + $0x20] sm:$0xff]
    %v4659 = vld [vmem:[%s4653 + $0x28] sm:$0xff]
    %v4660 = vld [vmem:[%s4653 + $0x30] sm:$0xff]
    %v4661 = vld [vmem:[%s4653 + $0x38] sm:$0xff]
    %v4662 = vld [vmem:[%s4653 + $0x40] sm:$0xff]
    %v4663 = vld [vmem:[%s4653 + $0x48] sm:$0xff]
    %v4664 = vld [vmem:[%s4653 + $0x50] sm:$0xff]
    %v4665 = vld [vmem:[%s4653 + $0x58] sm:$0xff]
    %v4666 = vld [vmem:[%s4653 + $0x60] sm:$0xff]
    %v4667 = vld [vmem:[%s4653 + $0x68] sm:$0xff]
    %v4668 = vld [vmem:[%s4653 + $0x70] sm:$0xff]
    %v4669 = vld [vmem:[%s4653 + $0x78] sm:$0xff]
    %v4670 = vpack.c.bf16 %v4648, %v4648
    %v4687 = vunpack.c.l.b16 %v4654
    %v4688 = vunpack.c.h.b16 %v4654
    %v4689 = vunpack.c.l.b16 %v4655
    %v4690 = vunpack.c.h.b16 %v4655
    %v4691 = vunpack.c.l.b16 %v4656
    %v4692 = vunpack.c.h.b16 %v4656
    %v4693 = vunpack.c.l.b16 %v4657
    %v4694 = vunpack.c.h.b16 %v4657
    %v4695 = vunpack.c.l.b16 %v4658
    %v4696 = vunpack.c.h.b16 %v4658
    %v4697 = vunpack.c.l.b16 %v4659
    %v4698 = vunpack.c.h.b16 %v4659
    %v4699 = vunpack.c.l.b16 %v4660
    %v4700 = vunpack.c.h.b16 %v4660
    %v4701 = vunpack.c.l.b16 %v4661
    %v4702 = vunpack.c.h.b16 %v4661
    %v4703 = vunpack.c.l.b16 %v4662
    %v4704 = vunpack.c.h.b16 %v4662
    %v4705 = vunpack.c.l.b16 %v4663
    %v4706 = vunpack.c.h.b16 %v4663
    %v4707 = vunpack.c.l.b16 %v4664
    %v4708 = vunpack.c.h.b16 %v4664
    %v4709 = vunpack.c.l.b16 %v4665
    %v4710 = vunpack.c.h.b16 %v4665
    %v4711 = vunpack.c.l.b16 %v4666
    %v4712 = vunpack.c.h.b16 %v4666
    %v4713 = vunpack.c.l.b16 %v4667
    %v4714 = vunpack.c.h.b16 %v4667
    %v4715 = vunpack.c.l.b16 %v4668
    %v4716 = vunpack.c.h.b16 %v4668
    %v4717 = vunpack.c.l.b16 %v4669
    %v4718 = vunpack.c.h.b16 %v4669
    %v4719 = vpack.c.b16 %v4689, %v4687
    %v4720 = vpack.c.b16 %v4690, %v4688
    %v4721 = vpack.c.b16 %v4693, %v4691
    %v4722 = vpack.c.b16 %v4694, %v4692
    %v4723 = vpack.c.b16 %v4697, %v4695
    %v4724 = vpack.c.b16 %v4698, %v4696
    %v4725 = vpack.c.b16 %v4701, %v4699
    %v4726 = vpack.c.b16 %v4702, %v4700
    %v4727 = vpack.c.b16 %v4705, %v4703
    %v4728 = vpack.c.b16 %v4706, %v4704
    %v4729 = vpack.c.b16 %v4709, %v4707
    %v4730 = vpack.c.b16 %v4710, %v4708
    %v4731 = vpack.c.b16 %v4713, %v4711
    %v4732 = vpack.c.b16 %v4714, %v4712
    %v4733 = vpack.c.b16 %v4717, %v4715
    %v4734 = vpack.c.b16 %v4718, %v4716
    %4751 = vmatprep.subr.bf16.mxu0 %v4720
    %4752 = vmatpush1.bf16.msra.mxu0 %v4719
    %4753 = vmatprep.subr.bf16.mxu0 %v4722
    %4754 = vmatpush1.bf16.msra.mxu0 %v4721
    %4755 = vmatprep.subr.bf16.mxu0 %v4724
    %4756 = vmatpush1.bf16.msra.mxu0 %v4723
    %4757 = vmatprep.subr.bf16.mxu0 %v4726
    %4758 = vmatpush1.bf16.msra.mxu0 %v4725
    %4759 = vmatprep.subr.bf16.mxu0 %v4728
    %4760 = vmatpush1.bf16.msra.mxu0 %v4727
    %4761 = vmatprep.subr.bf16.mxu0 %v4730
    %4762 = vmatpush1.bf16.msra.mxu0 %v4729
    %4763 = vmatprep.subr.bf16.mxu0 %v4732
    %4764 = vmatpush1.bf16.msra.mxu0 %v4731
    %4765 = vmatprep.subr.bf16.mxu0 %v4734
    %4766 = vmatpush1.bf16.msra.mxu0 %v4733
    %4767 = vmatprep.subr.bf16.mxu0 0
    %4768 = vmatpush1.bf16.msra.mxu0 0
    %4769 = vmatprep.subr.bf16.mxu0 0
    %4770 = vmatpush1.bf16.msra.mxu0 0
    %4771 = vmatprep.subr.bf16.mxu0 0
    %4772 = vmatpush1.bf16.msra.mxu0 0
    %4773 = vmatprep.subr.bf16.mxu0 0
    %4774 = vmatpush1.bf16.msra.mxu0 0
    %4775 = vmatprep.subr.bf16.mxu0 0
    %4776 = vmatpush1.bf16.msra.mxu0 0
    %4777 = vmatprep.subr.bf16.mxu0 0
    %4778 = vmatpush1.bf16.msra.mxu0 0
    %4779 = vmatprep.subr.bf16.mxu0 0
    %4780 = vmatpush1.bf16.msra.mxu0 0
    %4781 = vmatprep.subr.bf16.mxu0 0
    %4782 = vmatpush1.bf16.msra.mxu0 0
    %4783 = vmatprep.mubr.bf16.mxu0 0
    %4784 = vmatmul.mubr.bf16.gmra.mrb[0].mxu0 %v4670
    %v4785 = vpop.f32.mrb[0].mxu0
    %v4786 = vadd.f32 0.0, %v4785
    %v4787 = vpop.f32.mrb[0].mxu0
    %v4788 = vadd.f32 0.0, %v4787
    %v4789 = vpop.f32.mrb[0].mxu0
    %v4790 = vpop.f32.mrb[0].mxu0
    %4791 = vdwg.mxu0
    %v4792 = vadd.f32 %v4602, %v4786
    %v4793 = vadd.f32 %v4604, %v4788
    %v4794 = vld [vmem:[#allocation32] sm:$0x3]
    %v4796 = vlaneseq
    %v4797 = vshrl.u32 %v4796, 7
    %v4798 = vsub.s32 0, %v4797
    %v4799 = vrot.slane %v4794, %v4798
    %v4800 = vlaneseq
    %v4801 = vshrl.u32 %v4800, 7
    %v4802 = vsub.s32 1, %v4801
    %v4803 = vrot.slane %v4794, %v4802
    %v4806 = vadd.f32 %v4792, %v4799
    %v4807 = vadd.f32 %v4793, %v4803
    %v4808 = vld [vmem:[%s55] sm:$0xf]
    %v4809 = vld [vmem:[%s55 + $0x4] sm:$0xf]
    %v4810 = vld [vmem:[%s53] sm:$0xf]
    %v4811 = vld [vmem:[%s53 + $0x4] sm:$0xf]
    %v4812 = vld [vmem:[%s53 + $0x8] sm:$0xf]
    %v4813 = vld [vmem:[%s53 + $0xc] sm:$0xf]
    %v4814 = vld [vmem:[%s53 + $0x10] sm:$0xf]
    %v4815 = vld [vmem:[%s53 + $0x14] sm:$0xf]
    %v4816 = vld [vmem:[%s53 + $0x18] sm:$0xf]
    %v4817 = vld [vmem:[%s53 + $0x1c] sm:$0xf]
    %v4818 = vld [vmem:[%s53 + $0x20] sm:$0xf]
    %v4819 = vld [vmem:[%s53 + $0x24] sm:$0xf]
    %v4820 = vld [vmem:[%s53 + $0x28] sm:$0xf]
    %v4821 = vld [vmem:[%s53 + $0x2c] sm:$0xf]
    %v4822 = vld [vmem:[%s53 + $0x30] sm:$0xf]
    %v4823 = vld [vmem:[%s53 + $0x34] sm:$0xf]
    %v4824 = vld [vmem:[%s53 + $0x38] sm:$0xf]
    %v4825 = vld [vmem:[%s53 + $0x3c] sm:$0xf]
    %v4826 = vld [vmem:[%s53 + $0x40] sm:$0xf]
    %v4827 = vld [vmem:[%s53 + $0x44] sm:$0xf]
    %v4828 = vld [vmem:[%s53 + $0x48] sm:$0xf]
    %v4829 = vld [vmem:[%s53 + $0x4c] sm:$0xf]
    %v4830 = vld [vmem:[%s53 + $0x50] sm:$0xf]
    %v4831 = vld [vmem:[%s53 + $0x54] sm:$0xf]
    %v4832 = vld [vmem:[%s53 + $0x58] sm:$0xf]
    %v4833 = vld [vmem:[%s53 + $0x5c] sm:$0xf]
    %v4834 = vld [vmem:[%s53 + $0x60] sm:$0xf]
    %v4835 = vld [vmem:[%s53 + $0x64] sm:$0xf]
    %v4836 = vld [vmem:[%s53 + $0x68] sm:$0xf]
    %v4837 = vld [vmem:[%s53 + $0x6c] sm:$0xf]
    %v4838 = vld [vmem:[%s53 + $0x70] sm:$0xf]
    %v4839 = vld [vmem:[%s53 + $0x74] sm:$0xf]
    %v4840 = vld [vmem:[%s53 + $0x78] sm:$0xf]
    %v4841 = vld [vmem:[%s53 + $0x7c] sm:$0xf]
    %v4842 = vpack.c.bf16 %v4806, %v4806
    %v4843 = vpack.c.bf16 %v4807, %v4807
    %v4876 = vunpack.c.l.b16 %v4810
    %v4877 = vunpack.c.l.b16 %v4811
    %v4878 = vunpack.c.l.b16 %v4812
    %v4879 = vunpack.c.l.b16 %v4813
    %v4880 = vunpack.c.l.b16 %v4814
    %v4881 = vunpack.c.l.b16 %v4815
    %v4882 = vunpack.c.l.b16 %v4816
    %v4883 = vunpack.c.l.b16 %v4817
    %v4884 = vunpack.c.l.b16 %v4818
    %v4885 = vunpack.c.l.b16 %v4819
    %v4886 = vunpack.c.l.b16 %v4820
    %v4887 = vunpack.c.l.b16 %v4821
    %v4888 = vunpack.c.l.b16 %v4822
    %v4889 = vunpack.c.l.b16 %v4823
    %v4890 = vunpack.c.l.b16 %v4824
    %v4891 = vunpack.c.l.b16 %v4825
    %v4892 = vunpack.c.l.b16 %v4826
    %v4893 = vunpack.c.l.b16 %v4827
    %v4894 = vunpack.c.l.b16 %v4828
    %v4895 = vunpack.c.l.b16 %v4829
    %v4896 = vunpack.c.l.b16 %v4830
    %v4897 = vunpack.c.l.b16 %v4831
    %v4898 = vunpack.c.l.b16 %v4832
    %v4899 = vunpack.c.l.b16 %v4833
    %v4900 = vunpack.c.l.b16 %v4834
    %v4901 = vunpack.c.l.b16 %v4835
    %v4902 = vunpack.c.l.b16 %v4836
    %v4903 = vunpack.c.l.b16 %v4837
    %v4904 = vunpack.c.l.b16 %v4838
    %v4905 = vunpack.c.l.b16 %v4839
    %v4906 = vunpack.c.l.b16 %v4840
    %v4907 = vunpack.c.l.b16 %v4841
    %v4908 = vpack.c.b16 %v4877, %v4876
    %v4909 = vpack.c.b16 %v4879, %v4878
    %v4910 = vpack.c.b16 %v4881, %v4880
    %v4911 = vpack.c.b16 %v4883, %v4882
    %v4912 = vpack.c.b16 %v4885, %v4884
    %v4913 = vpack.c.b16 %v4887, %v4886
    %v4914 = vpack.c.b16 %v4889, %v4888
    %v4915 = vpack.c.b16 %v4891, %v4890
    %v4916 = vpack.c.b16 %v4893, %v4892
    %v4917 = vpack.c.b16 %v4895, %v4894
    %v4918 = vpack.c.b16 %v4897, %v4896
    %v4919 = vpack.c.b16 %v4899, %v4898
    %v4920 = vpack.c.b16 %v4901, %v4900
    %v4921 = vpack.c.b16 %v4903, %v4902
    %v4922 = vpack.c.b16 %v4905, %v4904
    %v4923 = vpack.c.b16 %v4907, %v4906
    %4940 = vmatprep.subr.bf16.mxu0 0
    %4941 = vmatpush1.bf16.msra.mxu0 %v4908
    %4942 = vmatprep.subr.bf16.mxu0 0
    %4943 = vmatpush1.bf16.msra.mxu0 %v4909
    %4944 = vmatprep.subr.bf16.mxu0 0
    %4945 = vmatpush1.bf16.msra.mxu0 %v4910
    %4946 = vmatprep.subr.bf16.mxu0 0
    %4947 = vmatpush1.bf16.msra.mxu0 %v4911
    %4948 = vmatprep.subr.bf16.mxu0 0
    %4949 = vmatpush1.bf16.msra.mxu0 %v4912
    %4950 = vmatprep.subr.bf16.mxu0 0
    %4951 = vmatpush1.bf16.msra.mxu0 %v4913
    %4952 = vmatprep.subr.bf16.mxu0 0
    %4953 = vmatpush1.bf16.msra.mxu0 %v4914
    %4954 = vmatprep.subr.bf16.mxu0 0
    %4955 = vmatpush1.bf16.msra.mxu0 %v4915
    %4956 = vmatprep.subr.bf16.mxu0 0
    %4957 = vmatpush1.bf16.msra.mxu0 %v4916
    %4958 = vmatprep.subr.bf16.mxu0 0
    %4959 = vmatpush1.bf16.msra.mxu0 %v4917
    %4960 = vmatprep.subr.bf16.mxu0 0
    %4961 = vmatpush1.bf16.msra.mxu0 %v4918
    %4962 = vmatprep.subr.bf16.mxu0 0
    %4963 = vmatpush1.bf16.msra.mxu0 %v4919
    %4964 = vmatprep.subr.bf16.mxu0 0
    %4965 = vmatpush1.bf16.msra.mxu0 %v4920
    %4966 = vmatprep.subr.bf16.mxu0 0
    %4967 = vmatpush1.bf16.msra.mxu0 %v4921
    %4968 = vmatprep.subr.bf16.mxu0 0
    %4969 = vmatpush1.bf16.msra.mxu0 %v4922
    %4970 = vmatprep.subr.bf16.mxu0 0
    %4971 = vmatpush1.bf16.msra.mxu0 %v4923
    %4972 = vmatprep.mubr.bf16.mxu0 %v4843
    %4973 = vmatmul.mubr.bf16.gmra.mrb[0].mxu0 %v4842
    %v4974 = vpop.f32.mrb[0].mxu0
    %v4975 = vadd.f32 0.0, %v4974
    %v4976 = vpop.f32.mrb[0].mxu0
    %v4977 = vpop.f32.mrb[0].mxu0
    %v4978 = vpop.f32.mrb[0].mxu0
    %4979 = vdwg.mxu0
    %v4980 = vpack.c.bf16 %v4975, %v4975
    %s4981 = scalar_lea.vmem %s55, 8
    %v4982 = vld [vmem:[%s4981] sm:$0xf]
    %v4983 = vld [vmem:[%s4981 + $0x4] sm:$0xf]
    %s4984 = scalar_lea.vmem %s53, 128
    %v4985 = vld [vmem:[%s4984] sm:$0xf]
    %v4986 = vld [vmem:[%s4984 + $0x4] sm:$0xf]
    %v4987 = vld [vmem:[%s4984 + $0x8] sm:$0xf]
    %v4988 = vld [vmem:[%s4984 + $0xc] sm:$0xf]
    %v4989 = vld [vmem:[%s4984 + $0x10] sm:$0xf]
    %v4990 = vld [vmem:[%s4984 + $0x14] sm:$0xf]
    %v4991 = vld [vmem:[%s4984 + $0x18] sm:$0xf]
    %v4992 = vld [vmem:[%s4984 + $0x1c] sm:$0xf]
    %v4993 = vld [vmem:[%s4984 + $0x20] sm:$0xf]
    %v4994 = vld [vmem:[%s4984 + $0x24] sm:$0xf]
    %v4995 = vld [vmem:[%s4984 + $0x28] sm:$0xf]
    %v4996 = vld [vmem:[%s4984 + $0x2c] sm:$0xf]
    %v4997 = vld [vmem:[%s4984 + $0x30] sm:$0xf]
    %v4998 = vld [vmem:[%s4984 + $0x34] sm:$0xf]
    %v4999 = vld [vmem:[%s4984 + $0x38] sm:$0xf]
    %v5000 = vld [vmem:[%s4984 + $0x3c] sm:$0xf]
    %v5001 = vld [vmem:[%s4984 + $0x40] sm:$0xf]
    %v5002 = vld [vmem:[%s4984 + $0x44] sm:$0xf]
    %v5003 = vld [vmem:[%s4984 + $0x48] sm:$0xf]
    %v5004 = vld [vmem:[%s4984 + $0x4c] sm:$0xf]
    %v5005 = vld [vmem:[%s4984 + $0x50] sm:$0xf]
    %v5006 = vld [vmem:[%s4984 + $0x54] sm:$0xf]
    %v5007 = vld [vmem:[%s4984 + $0x58] sm:$0xf]
    %v5008 = vld [vmem:[%s4984 + $0x5c] sm:$0xf]
    %v5009 = vld [vmem:[%s4984 + $0x60] sm:$0xf]
    %v5010 = vld [vmem:[%s4984 + $0x64] sm:$0xf]
    %v5011 = vld [vmem:[%s4984 + $0x68] sm:$0xf]
    %v5012 = vld [vmem:[%s4984 + $0x6c] sm:$0xf]
    %v5013 = vld [vmem:[%s4984 + $0x70] sm:$0xf]
    %v5014 = vld [vmem:[%s4984 + $0x74] sm:$0xf]
    %v5015 = vld [vmem:[%s4984 + $0x78] sm:$0xf]
    %v5016 = vld [vmem:[%s4984 + $0x7c] sm:$0xf]
    %v5049 = vunpack.c.l.b16 %v4985
    %v5050 = vunpack.c.l.b16 %v4986
    %v5051 = vunpack.c.l.b16 %v4987
    %v5052 = vunpack.c.l.b16 %v4988
    %v5053 = vunpack.c.l.b16 %v4989
    %v5054 = vunpack.c.l.b16 %v4990
    %v5055 = vunpack.c.l.b16 %v4991
    %v5056 = vunpack.c.l.b16 %v4992
    %v5057 = vunpack.c.l.b16 %v4993
    %v5058 = vunpack.c.l.b16 %v4994
    %v5059 = vunpack.c.l.b16 %v4995
    %v5060 = vunpack.c.l.b16 %v4996
    %v5061 = vunpack.c.l.b16 %v4997
    %v5062 = vunpack.c.l.b16 %v4998
    %v5063 = vunpack.c.l.b16 %v4999
    %v5064 = vunpack.c.l.b16 %v5000
    %v5065 = vunpack.c.l.b16 %v5001
    %v5066 = vunpack.c.l.b16 %v5002
    %v5067 = vunpack.c.l.b16 %v5003
    %v5068 = vunpack.c.l.b16 %v5004
    %v5069 = vunpack.c.l.b16 %v5005
    %v5070 = vunpack.c.l.b16 %v5006
    %v5071 = vunpack.c.l.b16 %v5007
    %v5072 = vunpack.c.l.b16 %v5008
    %v5073 = vunpack.c.l.b16 %v5009
    %v5074 = vunpack.c.l.b16 %v5010
    %v5075 = vunpack.c.l.b16 %v5011
    %v5076 = vunpack.c.l.b16 %v5012
    %v5077 = vunpack.c.l.b16 %v5013
    %v5078 = vunpack.c.l.b16 %v5014
    %v5079 = vunpack.c.l.b16 %v5015
    %v5080 = vunpack.c.l.b16 %v5016
    %v5081 = vpack.c.b16 %v5050, %v5049
    %v5082 = vpack.c.b16 %v5052, %v5051
    %v5083 = vpack.c.b16 %v5054, %v5053
    %v5084 = vpack.c.b16 %v5056, %v5055
    %v5085 = vpack.c.b16 %v5058, %v5057
    %v5086 = vpack.c.b16 %v5060, %v5059
    %v5087 = vpack.c.b16 %v5062, %v5061
    %v5088 = vpack.c.b16 %v5064, %v5063
    %v5089 = vpack.c.b16 %v5066, %v5065
    %v5090 = vpack.c.b16 %v5068, %v5067
    %v5091 = vpack.c.b16 %v5070, %v5069
    %v5092 = vpack.c.b16 %v5072, %v5071
    %v5093 = vpack.c.b16 %v5074, %v5073
    %v5094 = vpack.c.b16 %v5076, %v5075
    %v5095 = vpack.c.b16 %v5078, %v5077
    %v5096 = vpack.c.b16 %v5080, %v5079
    %5113 = vmatprep.subr.bf16.mxu0 0
    %5114 = vmatpush1.bf16.msra.mxu0 %v5081
    %5115 = vmatprep.subr.bf16.mxu0 0
    %5116 = vmatpush1.bf16.msra.mxu0 %v5082
    %5117 = vmatprep.subr.bf16.mxu0 0
    %5118 = vmatpush1.bf16.msra.mxu0 %v5083
    %5119 = vmatprep.subr.bf16.mxu0 0
    %5120 = vmatpush1.bf16.msra.mxu0 %v5084
    %5121 = vmatprep.subr.bf16.mxu0 0
    %5122 = vmatpush1.bf16.msra.mxu0 %v5085
    %5123 = vmatprep.subr.bf16.mxu0 0
    %5124 = vmatpush1.bf16.msra.mxu0 %v5086
    %5125 = vmatprep.subr.bf16.mxu0 0
    %5126 = vmatpush1.bf16.msra.mxu0 %v5087
    %5127 = vmatprep.subr.bf16.mxu0 0
    %5128 = vmatpush1.bf16.msra.mxu0 %v5088
    %5129 = vmatprep.subr.bf16.mxu0 0
    %5130 = vmatpush1.bf16.msra.mxu0 %v5089
    %5131 = vmatprep.subr.bf16.mxu0 0
    %5132 = vmatpush1.bf16.msra.mxu0 %v5090
    %5133 = vmatprep.subr.bf16.mxu0 0
    %5134 = vmatpush1.bf16.msra.mxu0 %v5091
    %5135 = vmatprep.subr.bf16.mxu0 0
    %5136 = vmatpush1.bf16.msra.mxu0 %v5092
    %5137 = vmatprep.subr.bf16.mxu0 0
    %5138 = vmatpush1.bf16.msra.mxu0 %v5093
    %5139 = vmatprep.subr.bf16.mxu0 0
    %5140 = vmatpush1.bf16.msra.mxu0 %v5094
    %5141 = vmatprep.subr.bf16.mxu0 0
    %5142 = vmatpush1.bf16.msra.mxu0 %v5095
    %5143 = vmatprep.subr.bf16.mxu0 0
    %5144 = vmatpush1.bf16.msra.mxu0 %v5096
    %5145 = vmatprep.mubr.bf16.mxu0 %v4843
    %5146 = vmatmul.mubr.bf16.gmra.mrb[0].mxu0 %v4842
    %v5147 = vpop.f32.mrb[0].mxu0
    %v5148 = vadd.f32 0.0, %v5147
    %v5149 = vpop.f32.mrb[0].mxu0
    %v5150 = vpop.f32.mrb[0].mxu0
    %v5151 = vpop.f32.mrb[0].mxu0
    %5152 = vdwg.mxu0
    %v5153 = vpack.c.bf16 %v5148, %v5148
    %v5156 = vunpack.c.l.b16 %v4982
    %v5157 = vunpack.c.l.b16 %v4983
    %v5158 = vpack.c.b16 %v5157, %v5156
    %v5160 = vsel %vm2755, %v5158, 0
    %v5163 = vsel %vm2759, %v5153, 0
    %5165 = vmatprep.subr.bf16.mxu0 0
    %5166 = vmatpush1.bf16.msra.mxu0 %v5163
    %5167 = vmatprep.subr.bf16.mxu0 0
    %5168 = vmatpush1.bf16.msra.mxu0 0
    %5169 = vmatprep.subr.bf16.mxu0 0
    %5170 = vmatpush1.bf16.msra.mxu0 0
    %5171 = vmatprep.subr.bf16.mxu0 0
    %5172 = vmatpush1.bf16.msra.mxu0 0
    %5173 = vmatprep.subr.bf16.mxu0 0
    %5174 = vmatpush1.bf16.msra.mxu0 0
    %5175 = vmatprep.subr.bf16.mxu0 0
    %5176 = vmatpush1.bf16.msra.mxu0 0
    %5177 = vmatprep.subr.bf16.mxu0 0
    %5178 = vmatpush1.bf16.msra.mxu0 0
    %5179 = vmatprep.subr.bf16.mxu0 0
    %5180 = vmatpush1.bf16.msra.mxu0 0
    %5181 = vmatprep.subr.bf16.mxu0 0
    %5182 = vmatpush1.bf16.msra.mxu0 0
    %5183 = vmatprep.subr.bf16.mxu0 0
    %5184 = vmatpush1.bf16.msra.mxu0 0
    %5185 = vmatprep.subr.bf16.mxu0 0
    %5186 = vmatpush1.bf16.msra.mxu0 0
    %5187 = vmatprep.subr.bf16.mxu0 0
    %5188 = vmatpush1.bf16.msra.mxu0 0
    %5189 = vmatprep.subr.bf16.mxu0 0
    %5190 = vmatpush1.bf16.msra.mxu0 0
    %5191 = vmatprep.subr.bf16.mxu0 0
    %5192 = vmatpush1.bf16.msra.mxu0 0
    %5193 = vmatprep.subr.bf16.mxu0 0
    %5194 = vmatpush1.bf16.msra.mxu0 0
    %5195 = vmatprep.subr.bf16.mxu0 0
    %5196 = vmatpush1.bf16.msra.mxu0 0
    %5197 = vmatprep.mubr.bf16.mxu0 0
    %5198 = vmatmul.mubr.bf16.gmra.mrb[0].mxu0 %v5160
    %v5199 = vpop.f32.mrb[0].mxu0
    %v5200 = vadd.f32 0.0, %v5199
    %v5201 = vpop.f32.mrb[0].mxu0
    %v5202 = vpop.f32.mrb[0].mxu0
    %v5203 = vadd.f32 0.0, %v5202
    %v5204 = vpop.f32.mrb[0].mxu0
    %5205 = vdwg.mxu0
    %v5208 = vunpack.c.l.b16 %v4808
    %v5209 = vunpack.c.l.b16 %v4809
    %v5210 = vpack.c.b16 %v5209, %v5208
    %v5212 = vsel %vm2755, %v5210, 0
    %v5215 = vsel %vm2759, %v4980, 0
    %5217 = vmatprep.subr.bf16.mxu0 0
    %5218 = vmatpush1.bf16.msra.mxu0 %v5215
    %5219 = vmatprep.subr.bf16.mxu0 0
    %5220 = vmatpush1.bf16.msra.mxu0 0
    %5221 = vmatprep.subr.bf16.mxu0 0
    %5222 = vmatpush1.bf16.msra.mxu0 0
    %5223 = vmatprep.subr.bf16.mxu0 0
    %5224 = vmatpush1.bf16.msra.mxu0 0
    %5225 = vmatprep.subr.bf16.mxu0 0
    %5226 = vmatpush1.bf16.msra.mxu0 0
    %5227 = vmatprep.subr.bf16.mxu0 0
    %5228 = vmatpush1.bf16.msra.mxu0 0
    %5229 = vmatprep.subr.bf16.mxu0 0
    %5230 = vmatpush1.bf16.msra.mxu0 0
    %5231 = vmatprep.subr.bf16.mxu0 0
    %5232 = vmatpush1.bf16.msra.mxu0 0
    %5233 = vmatprep.subr.bf16.mxu0 0
    %5234 = vmatpush1.bf16.msra.mxu0 0
    %5235 = vmatprep.subr.bf16.mxu0 0
    %5236 = vmatpush1.bf16.msra.mxu0 0
    %5237 = vmatprep.subr.bf16.mxu0 0
    %5238 = vmatpush1.bf16.msra.mxu0 0
    %5239 = vmatprep.subr.bf16.mxu0 0
    %5240 = vmatpush1.bf16.msra.mxu0 0
    %5241 = vmatprep.subr.bf16.mxu0 0
    %5242 = vmatpush1.bf16.msra.mxu0 0
    %5243 = vmatprep.subr.bf16.mxu0 0
    %5244 = vmatpush1.bf16.msra.mxu0 0
    %5245 = vmatprep.subr.bf16.mxu0 0
    %5246 = vmatpush1.bf16.msra.mxu0 0
    %5247 = vmatprep.subr.bf16.mxu0 0
    %5248 = vmatpush1.bf16.msra.mxu0 0
    %5249 = vmatprep.mubr.bf16.mxu0 0
    %5250 = vmatmul.mubr.bf16.gmra.mrb[0].mxu0 %v5212
    %v5251 = vpop.f32.mrb[0].mxu0
    %v5252 = vadd.f32 %v5200, %v5251
    %v5253 = vpop.f32.mrb[0].mxu0
    %v5254 = vpop.f32.mrb[0].mxu0
    %v5255 = vadd.f32 %v5203, %v5254
    %v5256 = vpop.f32.mrb[0].mxu0
    %5257 = vdwg.mxu0
    %v5258 = vld [vmem:[#allocation34] sm:$0xf]
    %v5259 = vld [vmem:[#allocation34 + $0x4] sm:$0xf]
    %v5260 = vpack.c.bf16 %v5255, %v5252
    %v5263 = vunpack.c.l.b16 %v5258
    %v5264 = vunpack.c.l.b16 %v5259
    %v5265 = vpack.c.b16 %v5264, %v5263
    %v5267 = vsel %vm456, %v5265, 0
    %5269 = vmatprep.subr.bf16.mxu0 0
    %5270 = vmatpush1.bf16.msra.mxu0 %v5260
    %5271 = vmatprep.subr.bf16.mxu0 0
    %5272 = vmatpush1.bf16.msra.mxu0 0
    %5273 = vmatprep.subr.bf16.mxu0 0
    %5274 = vmatpush1.bf16.msra.mxu0 0
    %5275 = vmatprep.subr.bf16.mxu0 0
    %5276 = vmatpush1.bf16.msra.mxu0 0
    %5277 = vmatprep.subr.bf16.mxu0 0
    %5278 = vmatpush1.bf16.msra.mxu0 0
    %5279 = vmatprep.subr.bf16.mxu0 0
    %5280 = vmatpush1.bf16.msra.mxu0 0
    %5281 = vmatprep.subr.bf16.mxu0 0
    %5282 = vmatpush1.bf16.msra.mxu0 0
    %5283 = vmatprep.subr.bf16.mxu0 0
    %5284 = vmatpush1.bf16.msra.mxu0 0
    %5285 = vmatprep.subr.bf16.mxu0 0
    %5286 = vmatpush1.bf16.msra.mxu0 0
    %5287 = vmatprep.subr.bf16.mxu0 0
    %5288 = vmatpush1.bf16.msra.mxu0 0
    %5289 = vmatprep.subr.bf16.mxu0 0
    %5290 = vmatpush1.bf16.msra.mxu0 0
    %5291 = vmatprep.subr.bf16.mxu0 0
    %5292 = vmatpush1.bf16.msra.mxu0 0
    %5293 = vmatprep.subr.bf16.mxu0 0
    %5294 = vmatpush1.bf16.msra.mxu0 0
    %5295 = vmatprep.subr.bf16.mxu0 0
    %5296 = vmatpush1.bf16.msra.mxu0 0
    %5297 = vmatprep.subr.bf16.mxu0 0
    %5298 = vmatpush1.bf16.msra.mxu0 0
    %5299 = vmatprep.subr.bf16.mxu0 0
    %5300 = vmatpush1.bf16.msra.mxu0 0
    %5301 = vmatprep.mubr.bf16.mxu0 0
    %5302 = vmatmul.mubr.bf16.gmra.mrb[0].mxu0 %v5267
    %v5303 = vpop.f32.mrb[0].mxu0
    %v5304 = vadd.f32 0.0, %v5303
    %v5305 = vpop.f32.mrb[0].mxu0
    %v5306 = vpop.f32.mrb[0].mxu0
    %v5307 = vadd.f32 0.0, %v5306
    %v5308 = vpop.f32.mrb[0].mxu0
    %5309 = vdwg.mxu0
    %v5310 = vld [vmem:[#allocation35] sm:$0xf]
    %v5311 = vld [vmem:[#allocation35 + $0x4] sm:$0xf]
    %v5312 = vld [vmem:[#allocation35 + $0x8] sm:$0xf]
    %v5313 = vld [vmem:[#allocation35 + $0xc] sm:$0xf]
    %v5314 = vld [vmem:[#allocation35 + $0x10] sm:$0xf]
    %v5315 = vld [vmem:[#allocation35 + $0x14] sm:$0xf]
    %v5316 = vld [vmem:[#allocation35 + $0x18] sm:$0xf]
    %v5317 = vld [vmem:[#allocation35 + $0x1c] sm:$0xf]
    %v5318 = vld [vmem:[#allocation35 + $0x20] sm:$0xf]
    %v5319 = vld [vmem:[#allocation35 + $0x24] sm:$0xf]
    %v5320 = vld [vmem:[#allocation35 + $0x28] sm:$0xf]
    %v5321 = vld [vmem:[#allocation35 + $0x2c] sm:$0xf]
    %v5322 = vld [vmem:[#allocation35 + $0x30] sm:$0xf]
    %v5323 = vld [vmem:[#allocation35 + $0x34] sm:$0xf]
    %v5324 = vld [vmem:[#allocation35 + $0x38] sm:$0xf]
    %v5325 = vld [vmem:[#allocation35 + $0x3c] sm:$0xf]
    %v5326 = vpack.c.bf16 %v5307, %v5304
    %s5327 = scalar_lea.vmem [#allocation34], 8
    %v5328 = vld [vmem:[%s5327] sm:$0xf]
    %v5329 = vld [vmem:[%s5327 + $0x4] sm:$0xf]
    %v5332 = vunpack.c.l.b16 %v5328
    %v5333 = vunpack.c.l.b16 %v5329
    %v5334 = vpack.c.b16 %v5333, %v5332
    %v5336 = vsel %vm456, %v5334, 0
    %5338 = vmatprep.subr.bf16.mxu0 0
    %5339 = vmatpush1.bf16.msra.mxu0 %v5260
    %5340 = vmatprep.subr.bf16.mxu0 0
    %5341 = vmatpush1.bf16.msra.mxu0 0
    %5342 = vmatprep.subr.bf16.mxu0 0
    %5343 = vmatpush1.bf16.msra.mxu0 0
    %5344 = vmatprep.subr.bf16.mxu0 0
    %5345 = vmatpush1.bf16.msra.mxu0 0
    %5346 = vmatprep.subr.bf16.mxu0 0
    %5347 = vmatpush1.bf16.msra.mxu0 0
    %5348 = vmatprep.subr.bf16.mxu0 0
    %5349 = vmatpush1.bf16.msra.mxu0 0
    %5350 = vmatprep.subr.bf16.mxu0 0
    %5351 = vmatpush1.bf16.msra.mxu0 0
    %5352 = vmatprep.subr.bf16.mxu0 0
    %5353 = vmatpush1.bf16.msra.mxu0 0
    %5354 = vmatprep.subr.bf16.mxu0 0
    %5355 = vmatpush1.bf16.msra.mxu0 0
    %5356 = vmatprep.subr.bf16.mxu0 0
    %5357 = vmatpush1.bf16.msra.mxu0 0
    %5358 = vmatprep.subr.bf16.mxu0 0
    %5359 = vmatpush1.bf16.msra.mxu0 0
    %5360 = vmatprep.subr.bf16.mxu0 0
    %5361 = vmatpush1.bf16.msra.mxu0 0
    %5362 = vmatprep.subr.bf16.mxu0 0
    %5363 = vmatpush1.bf16.msra.mxu0 0
    %5364 = vmatprep.subr.bf16.mxu0 0
    %5365 = vmatpush1.bf16.msra.mxu0 0
    %5366 = vmatprep.subr.bf16.mxu0 0
    %5367 = vmatpush1.bf16.msra.mxu0 0
    %5368 = vmatprep.subr.bf16.mxu0 0
    %5369 = vmatpush1.bf16.msra.mxu0 0
    %5370 = vmatprep.mubr.bf16.mxu0 0
    %5371 = vmatmul.mubr.bf16.gmra.mrb[0].mxu0 %v5336
    %v5372 = vpop.f32.mrb[0].mxu0
    %v5373 = vadd.f32 0.0, %v5372
    %v5374 = vpop.f32.mrb[0].mxu0
    %v5375 = vpop.f32.mrb[0].mxu0
    %v5376 = vadd.f32 0.0, %v5375
    %v5377 = vpop.f32.mrb[0].mxu0
    %5378 = vdwg.mxu0
    %s5379 = scalar_lea.vmem [#allocation35], 64
    %v5380 = vld [vmem:[%s5379] sm:$0xf]
    %v5381 = vld [vmem:[%s5379 + $0x4] sm:$0xf]
    %v5382 = vld [vmem:[%s5379 + $0x8] sm:$0xf]
    %v5383 = vld [vmem:[%s5379 + $0xc] sm:$0xf]
    %v5384 = vld [vmem:[%s5379 + $0x10] sm:$0xf]
    %v5385 = vld [vmem:[%s5379 + $0x14] sm:$0xf]
    %v5386 = vld [vmem:[%s5379 + $0x18] sm:$0xf]
    %v5387 = vld [vmem:[%s5379 + $0x1c] sm:$0xf]
    %v5388 = vld [vmem:[%s5379 + $0x20] sm:$0xf]
    %v5389 = vld [vmem:[%s5379 + $0x24] sm:$0xf]
    %v5390 = vld [vmem:[%s5379 + $0x28] sm:$0xf]
    %v5391 = vld [vmem:[%s5379 + $0x2c] sm:$0xf]
    %v5392 = vld [vmem:[%s5379 + $0x30] sm:$0xf]
    %v5393 = vld [vmem:[%s5379 + $0x34] sm:$0xf]
    %v5394 = vld [vmem:[%s5379 + $0x38] sm:$0xf]
    %v5395 = vld [vmem:[%s5379 + $0x3c] sm:$0xf]
    %v5396 = vpack.c.bf16 %v5376, %v5373
    %v5413 = vunpack.c.l.b16 %v5380
    %v5414 = vunpack.c.l.b16 %v5381
    %v5415 = vunpack.c.l.b16 %v5382
    %v5416 = vunpack.c.l.b16 %v5383
    %v5417 = vunpack.c.l.b16 %v5384
    %v5418 = vunpack.c.l.b16 %v5385
    %v5419 = vunpack.c.l.b16 %v5386
    %v5420 = vunpack.c.l.b16 %v5387
    %v5421 = vunpack.c.l.b16 %v5388
    %v5422 = vunpack.c.l.b16 %v5389
    %v5423 = vunpack.c.l.b16 %v5390
    %v5424 = vunpack.c.l.b16 %v5391
    %v5425 = vunpack.c.l.b16 %v5392
    %v5426 = vunpack.c.l.b16 %v5393
    %v5427 = vunpack.c.l.b16 %v5394
    %v5428 = vunpack.c.l.b16 %v5395
    %v5429 = vpack.c.b16 %v5414, %v5413
    %v5430 = vpack.c.b16 %v5416, %v5415
    %v5431 = vpack.c.b16 %v5418, %v5417
    %v5432 = vpack.c.b16 %v5420, %v5419
    %v5433 = vpack.c.b16 %v5422, %v5421
    %v5434 = vpack.c.b16 %v5424, %v5423
    %v5435 = vpack.c.b16 %v5426, %v5425
    %v5436 = vpack.c.b16 %v5428, %v5427
    %5445 = vmatprep.subr.bf16.mxu0 0
    %5446 = vmatpush1.bf16.msra.mxu0 %v5429
    %5447 = vmatprep.subr.bf16.mxu0 0
    %5448 = vmatpush1.bf16.msra.mxu0 %v5430
    %5449 = vmatprep.subr.bf16.mxu0 0
    %5450 = vmatpush1.bf16.msra.mxu0 %v5431
    %5451 = vmatprep.subr.bf16.mxu0 0
    %5452 = vmatpush1.bf16.msra.mxu0 %v5432
    %5453 = vmatprep.subr.bf16.mxu0 0
    %5454 = vmatpush1.bf16.msra.mxu0 %v5433
    %5455 = vmatprep.subr.bf16.mxu0 0
    %5456 = vmatpush1.bf16.msra.mxu0 %v5434
    %5457 = vmatprep.subr.bf16.mxu0 0
    %5458 = vmatpush1.bf16.msra.mxu0 %v5435
    %5459 = vmatprep.subr.bf16.mxu0 0
    %5460 = vmatpush1.bf16.msra.mxu0 %v5436
    %5461 = vmatprep.subr.bf16.mxu0 0
    %5462 = vmatpush1.bf16.msra.mxu0 0
    %5463 = vmatprep.subr.bf16.mxu0 0
    %5464 = vmatpush1.bf16.msra.mxu0 0
    %5465 = vmatprep.subr.bf16.mxu0 0
    %5466 = vmatpush1.bf16.msra.mxu0 0
    %5467 = vmatprep.subr.bf16.mxu0 0
    %5468 = vmatpush1.bf16.msra.mxu0 0
    %5469 = vmatprep.subr.bf16.mxu0 0
    %5470 = vmatpush1.bf16.msra.mxu0 0
    %5471 = vmatprep.subr.bf16.mxu0 0
    %5472 = vmatpush1.bf16.msra.mxu0 0
    %5473 = vmatprep.subr.bf16.mxu0 0
    %5474 = vmatpush1.bf16.msra.mxu0 0
    %5475 = vmatprep.subr.bf16.mxu0 0
    %5476 = vmatpush1.bf16.msra.mxu0 0
    %5477 = vmatprep.mubr.bf16.mxu0 0
    %5478 = vmatmul.mubr.bf16.gmra.mrb[0].mxu0 %v5396
    %v5479 = vpop.f32.mrb[0].mxu0
    %v5480 = vadd.f32 0.0, %v5479
    %v5481 = vpop.f32.mrb[0].mxu0
    %v5482 = vpop.f32.mrb[0].mxu0
    %v5483 = vadd.f32 0.0, %v5482
    %v5484 = vpop.f32.mrb[0].mxu0
    %5485 = vdwg.mxu0
    %v5502 = vunpack.c.l.b16 %v5310
    %v5503 = vunpack.c.l.b16 %v5311
    %v5504 = vunpack.c.l.b16 %v5312
    %v5505 = vunpack.c.l.b16 %v5313
    %v5506 = vunpack.c.l.b16 %v5314
    %v5507 = vunpack.c.l.b16 %v5315
    %v5508 = vunpack.c.l.b16 %v5316
    %v5509 = vunpack.c.l.b16 %v5317
    %v5510 = vunpack.c.l.b16 %v5318
    %v5511 = vunpack.c.l.b16 %v5319
    %v5512 = vunpack.c.l.b16 %v5320
    %v5513 = vunpack.c.l.b16 %v5321
    %v5514 = vunpack.c.l.b16 %v5322
    %v5515 = vunpack.c.l.b16 %v5323
    %v5516 = vunpack.c.l.b16 %v5324
    %v5517 = vunpack.c.l.b16 %v5325
    %v5518 = vpack.c.b16 %v5503, %v5502
    %v5519 = vpack.c.b16 %v5505, %v5504
    %v5520 = vpack.c.b16 %v5507, %v5506
    %v5521 = vpack.c.b16 %v5509, %v5508
    %v5522 = vpack.c.b16 %v5511, %v5510
    %v5523 = vpack.c.b16 %v5513, %v5512
    %v5524 = vpack.c.b16 %v5515, %v5514
    %v5525 = vpack.c.b16 %v5517, %v5516
    %5534 = vmatprep.subr.bf16.mxu0 0
    %5535 = vmatpush1.bf16.msra.mxu0 %v5518
    %5536 = vmatprep.subr.bf16.mxu0 0
    %5537 = vmatpush1.bf16.msra.mxu0 %v5519
    %5538 = vmatprep.subr.bf16.mxu0 0
    %5539 = vmatpush1.bf16.msra.mxu0 %v5520
    %5540 = vmatprep.subr.bf16.mxu0 0
    %5541 = vmatpush1.bf16.msra.mxu0 %v5521
    %5542 = vmatprep.subr.bf16.mxu0 0
    %5543 = vmatpush1.bf16.msra.mxu0 %v5522
    %5544 = vmatprep.subr.bf16.mxu0 0
    %5545 = vmatpush1.bf16.msra.mxu0 %v5523
    %5546 = vmatprep.subr.bf16.mxu0 0
    %5547 = vmatpush1.bf16.msra.mxu0 %v5524
    %5548 = vmatprep.subr.bf16.mxu0 0
    %5549 = vmatpush1.bf16.msra.mxu0 %v5525
    %5550 = vmatprep.subr.bf16.mxu0 0
    %5551 = vmatpush1.bf16.msra.mxu0 0
    %5552 = vmatprep.subr.bf16.mxu0 0
    %5553 = vmatpush1.bf16.msra.mxu0 0
    %5554 = vmatprep.subr.bf16.mxu0 0
    %5555 = vmatpush1.bf16.msra.mxu0 0
    %5556 = vmatprep.subr.bf16.mxu0 0
    %5557 = vmatpush1.bf16.msra.mxu0 0
    %5558 = vmatprep.subr.bf16.mxu0 0
    %5559 = vmatpush1.bf16.msra.mxu0 0
    %5560 = vmatprep.subr.bf16.mxu0 0
    %5561 = vmatpush1.bf16.msra.mxu0 0
    %5562 = vmatprep.subr.bf16.mxu0 0
    %5563 = vmatpush1.bf16.msra.mxu0 0
    %5564 = vmatprep.subr.bf16.mxu0 0
    %5565 = vmatpush1.bf16.msra.mxu0 0
    %5566 = vmatprep.mubr.bf16.mxu0 0
    %5567 = vmatmul.mubr.bf16.gmra.mrb[0].mxu0 %v5326
    %v5568 = vpop.f32.mrb[0].mxu0
    %v5569 = vadd.f32 %v5480, %v5568
    %v5570 = vpop.f32.mrb[0].mxu0
    %v5571 = vpop.f32.mrb[0].mxu0
    %v5572 = vadd.f32 %v5483, %v5571
    %v5573 = vpop.f32.mrb[0].mxu0
    %5574 = vdwg.mxu0
    %s5575 = scalar_lea.vmem [#allocation34], 16
    %v5576 = vld [vmem:[%s5575] sm:$0xf]
    %v5577 = vld [vmem:[%s5575 + $0x4] sm:$0xf]
    %v5580 = vunpack.c.l.b16 %v5576
    %v5581 = vunpack.c.l.b16 %v5577
    %v5582 = vpack.c.b16 %v5581, %v5580
    %v5584 = vsel %vm456, %v5582, 0
    %5586 = vmatprep.subr.bf16.mxu0 0
    %5587 = vmatpush1.bf16.msra.mxu0 %v5260
    %5588 = vmatprep.subr.bf16.mxu0 0
    %5589 = vmatpush1.bf16.msra.mxu0 0
    %5590 = vmatprep.subr.bf16.mxu0 0
    %5591 = vmatpush1.bf16.msra.mxu0 0
    %5592 = vmatprep.subr.bf16.mxu0 0
    %5593 = vmatpush1.bf16.msra.mxu0 0
    %5594 = vmatprep.subr.bf16.mxu0 0
    %5595 = vmatpush1.bf16.msra.mxu0 0
    %5596 = vmatprep.subr.bf16.mxu0 0
    %5597 = vmatpush1.bf16.msra.mxu0 0
    %5598 = vmatprep.subr.bf16.mxu0 0
    %5599 = vmatpush1.bf16.msra.mxu0 0
    %5600 = vmatprep.subr.bf16.mxu0 0
    %5601 = vmatpush1.bf16.msra.mxu0 0
    %5602 = vmatprep.subr.bf16.mxu0 0
    %5603 = vmatpush1.bf16.msra.mxu0 0
    %5604 = vmatprep.subr.bf16.mxu0 0
    %5605 = vmatpush1.bf16.msra.mxu0 0
    %5606 = vmatprep.subr.bf16.mxu0 0
    %5607 = vmatpush1.bf16.msra.mxu0 0
    %5608 = vmatprep.subr.bf16.mxu0 0
    %5609 = vmatpush1.bf16.msra.mxu0 0
    %5610 = vmatprep.subr.bf16.mxu0 0
    %5611 = vmatpush1.bf16.msra.mxu0 0
    %5612 = vmatprep.subr.bf16.mxu0 0
    %5613 = vmatpush1.bf16.msra.mxu0 0
    %5614 = vmatprep.subr.bf16.mxu0 0
    %5615 = vmatpush1.bf16.msra.mxu0 0
    %5616 = vmatprep.subr.bf16.mxu0 0
    %5617 = vmatpush1.bf16.msra.mxu0 0
    %5618 = vmatprep.mubr.bf16.mxu0 0
    %5619 = vmatmul.mubr.bf16.gmra.mrb[0].mxu0 %v5584
    %v5620 = vpop.f32.mrb[0].mxu0
    %v5621 = vadd.f32 0.0, %v5620
    %v5622 = vpop.f32.mrb[0].mxu0
    %v5623 = vpop.f32.mrb[0].mxu0
    %v5624 = vadd.f32 0.0, %v5623
    %v5625 = vpop.f32.mrb[0].mxu0
    %5626 = vdwg.mxu0
    %s5627 = scalar_lea.vmem [#allocation35], 128
    %v5628 = vld [vmem:[%s5627] sm:$0xf]
    %v5629 = vld [vmem:[%s5627 + $0x4] sm:$0xf]
    %v5630 = vld [vmem:[%s5627 + $0x8] sm:$0xf]
    %v5631 = vld [vmem:[%s5627 + $0xc] sm:$0xf]
    %v5632 = vld [vmem:[%s5627 + $0x10] sm:$0xf]
    %v5633 = vld [vmem:[%s5627 + $0x14] sm:$0xf]
    %v5634 = vld [vmem:[%s5627 + $0x18] sm:$0xf]
    %v5635 = vld [vmem:[%s5627 + $0x1c] sm:$0xf]
    %v5636 = vld [vmem:[%s5627 + $0x20] sm:$0xf]
    %v5637 = vld [vmem:[%s5627 + $0x24] sm:$0xf]
    %v5638 = vld [vmem:[%s5627 + $0x28] sm:$0xf]
    %v5639 = vld [vmem:[%s5627 + $0x2c] sm:$0xf]
    %v5640 = vld [vmem:[%s5627 + $0x30] sm:$0xf]
    %v5641 = vld [vmem:[%s5627 + $0x34] sm:$0xf]
    %v5642 = vld [vmem:[%s5627 + $0x38] sm:$0xf]
    %v5643 = vld [vmem:[%s5627 + $0x3c] sm:$0xf]
    %v5644 = vpack.c.bf16 %v5624, %v5621
    %v5661 = vunpack.c.l.b16 %v5628
    %v5662 = vunpack.c.l.b16 %v5629
    %v5663 = vunpack.c.l.b16 %v5630
    %v5664 = vunpack.c.l.b16 %v5631
    %v5665 = vunpack.c.l.b16 %v5632
    %v5666 = vunpack.c.l.b16 %v5633
    %v5667 = vunpack.c.l.b16 %v5634
    %v5668 = vunpack.c.l.b16 %v5635
    %v5669 = vunpack.c.l.b16 %v5636
    %v5670 = vunpack.c.l.b16 %v5637
    %v5671 = vunpack.c.l.b16 %v5638
    %v5672 = vunpack.c.l.b16 %v5639
    %v5673 = vunpack.c.l.b16 %v5640
    %v5674 = vunpack.c.l.b16 %v5641
    %v5675 = vunpack.c.l.b16 %v5642
    %v5676 = vunpack.c.l.b16 %v5643
    %v5677 = vpack.c.b16 %v5662, %v5661
    %v5678 = vpack.c.b16 %v5664, %v5663
    %v5679 = vpack.c.b16 %v5666, %v5665
    %v5680 = vpack.c.b16 %v5668, %v5667
    %v5681 = vpack.c.b16 %v5670, %v5669
    %v5682 = vpack.c.b16 %v5672, %v5671
    %v5683 = vpack.c.b16 %v5674, %v5673
    %v5684 = vpack.c.b16 %v5676, %v5675
    %5693 = vmatprep.subr.bf16.mxu0 0
    %5694 = vmatpush1.bf16.msra.mxu0 %v5677
    %5695 = vmatprep.subr.bf16.mxu0 0
    %5696 = vmatpush1.bf16.msra.mxu0 %v5678
    %5697 = vmatprep.subr.bf16.mxu0 0
    %5698 = vmatpush1.bf16.msra.mxu0 %v5679
    %5699 = vmatprep.subr.bf16.mxu0 0
    %5700 = vmatpush1.bf16.msra.mxu0 %v5680
    %5701 = vmatprep.subr.bf16.mxu0 0
    %5702 = vmatpush1.bf16.msra.mxu0 %v5681
    %5703 = vmatprep.subr.bf16.mxu0 0
    %5704 = vmatpush1.bf16.msra.mxu0 %v5682
    %5705 = vmatprep.subr.bf16.mxu0 0
    %5706 = vmatpush1.bf16.msra.mxu0 %v5683
    %5707 = vmatprep.subr.bf16.mxu0 0
    %5708 = vmatpush1.bf16.msra.mxu0 %v5684
    %5709 = vmatprep.subr.bf16.mxu0 0
    %5710 = vmatpush1.bf16.msra.mxu0 0
    %5711 = vmatprep.subr.bf16.mxu0 0
    %5712 = vmatpush1.bf16.msra.mxu0 0
    %5713 = vmatprep.subr.bf16.mxu0 0
    %5714 = vmatpush1.bf16.msra.mxu0 0
    %5715 = vmatprep.subr.bf16.mxu0 0
    %5716 = vmatpush1.bf16.msra.mxu0 0
    %5717 = vmatprep.subr.bf16.mxu0 0
    %5718 = vmatpush1.bf16.msra.mxu0 0
    %5719 = vmatprep.subr.bf16.mxu0 0
    %5720 = vmatpush1.bf16.msra.mxu0 0
    %5721 = vmatprep.subr.bf16.mxu0 0
    %5722 = vmatpush1.bf16.msra.mxu0 0
    %5723 = vmatprep.subr.bf16.mxu0 0
    %5724 = vmatpush1.bf16.msra.mxu0 0
    %5725 = vmatprep.mubr.bf16.mxu0 0
    %5726 = vmatmul.mubr.bf16.gmra.mrb[0].mxu0 %v5644
    %v5727 = vpop.f32.mrb[0].mxu0
    %v5728 = vadd.f32 0.0, %v5727
    %v5729 = vpop.f32.mrb[0].mxu0
    %v5730 = vpop.f32.mrb[0].mxu0
    %v5731 = vadd.f32 0.0, %v5730
    %v5732 = vpop.f32.mrb[0].mxu0
    %5733 = vdwg.mxu0
    %v5734 = vadd.f32 %v5569, %v5728
    %v5735 = vadd.f32 %v5572, %v5731
    %v5736 = vld [vmem:[%s61] sm:$0x1]
    %v5738 = vlaneseq
    %v5739 = vshrl.u32 %v5738, 7
    %v5740 = vsub.s32 0, %v5739
    %v5741 = vrot.slane %v5736, %v5740
    %v5743 = vadd.f32 %v5734, %v5741
    %v5744 = vadd.f32 %v5735, %v5741
    %v5745 = vld [vmem:[%s65] sm:$0xf]
    %v5746 = vld [vmem:[%s65 + $0x4] sm:$0xf]
    %v5747 = vld [vmem:[%s65 + $0x8] sm:$0xf]
    %v5748 = vld [vmem:[%s65 + $0xc] sm:$0xf]
    %v5749 = vld [vmem:[%s63] sm:$0xf]
    %v5750 = vld [vmem:[%s63 + $0x4] sm:$0xf]
    %v5751 = vld [vmem:[%s63 + $0x8] sm:$0xf]
    %v5752 = vld [vmem:[%s63 + $0xc] sm:$0xf]
    %v5753 = vld [vmem:[%s63 + $0x10] sm:$0xf]
    %v5754 = vld [vmem:[%s63 + $0x14] sm:$0xf]
    %v5755 = vld [vmem:[%s63 + $0x18] sm:$0xf]
    %v5756 = vld [vmem:[%s63 + $0x1c] sm:$0xf]
    %v5757 = vld [vmem:[%s63 + $0x20] sm:$0xf]
    %v5758 = vld [vmem:[%s63 + $0x24] sm:$0xf]
    %v5759 = vld [vmem:[%s63 + $0x28] sm:$0xf]
    %v5760 = vld [vmem:[%s63 + $0x2c] sm:$0xf]
    %v5761 = vld [vmem:[%s63 + $0x30] sm:$0xf]
    %v5762 = vld [vmem:[%s63 + $0x34] sm:$0xf]
    %v5763 = vld [vmem:[%s63 + $0x38] sm:$0xf]
    %v5764 = vld [vmem:[%s63 + $0x3c] sm:$0xf]
    %v5765 = vpack.c.bf16 %v5744, %v5743
    %v5782 = vunpack.c.l.b16 %v5749
    %v5783 = vunpack.c.l.b16 %v5750
    %v5784 = vunpack.c.l.b16 %v5751
    %v5785 = vunpack.c.l.b16 %v5752
    %v5786 = vunpack.c.l.b16 %v5753
    %v5787 = vunpack.c.l.b16 %v5754
    %v5788 = vunpack.c.l.b16 %v5755
    %v5789 = vunpack.c.l.b16 %v5756
    %v5790 = vunpack.c.l.b16 %v5757
    %v5791 = vunpack.c.l.b16 %v5758
    %v5792 = vunpack.c.l.b16 %v5759
    %v5793 = vunpack.c.l.b16 %v5760
    %v5794 = vunpack.c.l.b16 %v5761
    %v5795 = vunpack.c.l.b16 %v5762
    %v5796 = vunpack.c.l.b16 %v5763
    %v5797 = vunpack.c.l.b16 %v5764
    %v5798 = vpack.c.b16 %v5783, %v5782
    %v5799 = vpack.c.b16 %v5785, %v5784
    %v5800 = vpack.c.b16 %v5787, %v5786
    %v5801 = vpack.c.b16 %v5789, %v5788
    %v5802 = vpack.c.b16 %v5791, %v5790
    %v5803 = vpack.c.b16 %v5793, %v5792
    %v5804 = vpack.c.b16 %v5795, %v5794
    %v5805 = vpack.c.b16 %v5797, %v5796
    %5814 = vmatprep.subr.bf16.mxu0 0
    %5815 = vmatpush1.bf16.msra.mxu0 %v5798
    %5816 = vmatprep.subr.bf16.mxu0 0
    %5817 = vmatpush1.bf16.msra.mxu0 %v5799
    %5818 = vmatprep.subr.bf16.mxu0 0
    %5819 = vmatpush1.bf16.msra.mxu0 %v5800
    %5820 = vmatprep.subr.bf16.mxu0 0
    %5821 = vmatpush1.bf16.msra.mxu0 %v5801
    %5822 = vmatprep.subr.bf16.mxu0 0
    %5823 = vmatpush1.bf16.msra.mxu0 %v5802
    %5824 = vmatprep.subr.bf16.mxu0 0
    %5825 = vmatpush1.bf16.msra.mxu0 %v5803
    %5826 = vmatprep.subr.bf16.mxu0 0
    %5827 = vmatpush1.bf16.msra.mxu0 %v5804
    %5828 = vmatprep.subr.bf16.mxu0 0
    %5829 = vmatpush1.bf16.msra.mxu0 %v5805
    %5830 = vmatprep.subr.bf16.mxu0 0
    %5831 = vmatpush1.bf16.msra.mxu0 0
    %5832 = vmatprep.subr.bf16.mxu0 0
    %5833 = vmatpush1.bf16.msra.mxu0 0
    %5834 = vmatprep.subr.bf16.mxu0 0
    %5835 = vmatpush1.bf16.msra.mxu0 0
    %5836 = vmatprep.subr.bf16.mxu0 0
    %5837 = vmatpush1.bf16.msra.mxu0 0
    %5838 = vmatprep.subr.bf16.mxu0 0
    %5839 = vmatpush1.bf16.msra.mxu0 0
    %5840 = vmatprep.subr.bf16.mxu0 0
    %5841 = vmatpush1.bf16.msra.mxu0 0
    %5842 = vmatprep.subr.bf16.mxu0 0
    %5843 = vmatpush1.bf16.msra.mxu0 0
    %5844 = vmatprep.subr.bf16.mxu0 0
    %5845 = vmatpush1.bf16.msra.mxu0 0
    %5846 = vmatprep.mubr.bf16.mxu0 0
    %5847 = vmatmul.mubr.bf16.gmra.mrb[0].mxu0 %v5765
    %v5848 = vpop.f32.mrb[0].mxu0
    %v5849 = vadd.f32 0.0, %v5848
    %v5850 = vpop.f32.mrb[0].mxu0
    %v5851 = vpop.f32.mrb[0].mxu0
    %v5852 = vadd.f32 0.0, %v5851
    %v5853 = vpop.f32.mrb[0].mxu0
    %5854 = vdwg.mxu0
    %v5855 = vpack.c.bf16 %v5852, %v5849
    %s5856 = scalar_lea.vmem %s65, 16
    %v5857 = vld [vmem:[%s5856] sm:$0xf]
    %v5858 = vld [vmem:[%s5856 + $0x4] sm:$0xf]
    %v5859 = vld [vmem:[%s5856 + $0x8] sm:$0xf]
    %v5860 = vld [vmem:[%s5856 + $0xc] sm:$0xf]
    %s5861 = scalar_lea.vmem %s63, 64
    %v5862 = vld [vmem:[%s5861] sm:$0xf]
    %v5863 = vld [vmem:[%s5861 + $0x4] sm:$0xf]
    %v5864 = vld [vmem:[%s5861 + $0x8] sm:$0xf]
    %v5865 = vld [vmem:[%s5861 + $0xc] sm:$0xf]
    %v5866 = vld [vmem:[%s5861 + $0x10] sm:$0xf]
    %v5867 = vld [vmem:[%s5861 + $0x14] sm:$0xf]
    %v5868 = vld [vmem:[%s5861 + $0x18] sm:$0xf]
    %v5869 = vld [vmem:[%s5861 + $0x1c] sm:$0xf]
    %v5870 = vld [vmem:[%s5861 + $0x20] sm:$0xf]
    %v5871 = vld [vmem:[%s5861 + $0x24] sm:$0xf]
    %v5872 = vld [vmem:[%s5861 + $0x28] sm:$0xf]
    %v5873 = vld [vmem:[%s5861 + $0x2c] sm:$0xf]
    %v5874 = vld [vmem:[%s5861 + $0x30] sm:$0xf]
    %v5875 = vld [vmem:[%s5861 + $0x34] sm:$0xf]
    %v5876 = vld [vmem:[%s5861 + $0x38] sm:$0xf]
    %v5877 = vld [vmem:[%s5861 + $0x3c] sm:$0xf]
    %v5894 = vunpack.c.l.b16 %v5862
    %v5895 = vunpack.c.l.b16 %v5863
    %v5896 = vunpack.c.l.b16 %v5864
    %v5897 = vunpack.c.l.b16 %v5865
    %v5898 = vunpack.c.l.b16 %v5866
    %v5899 = vunpack.c.l.b16 %v5867
    %v5900 = vunpack.c.l.b16 %v5868
    %v5901 = vunpack.c.l.b16 %v5869
    %v5902 = vunpack.c.l.b16 %v5870
    %v5903 = vunpack.c.l.b16 %v5871
    %v5904 = vunpack.c.l.b16 %v5872
    %v5905 = vunpack.c.l.b16 %v5873
    %v5906 = vunpack.c.l.b16 %v5874
    %v5907 = vunpack.c.l.b16 %v5875
    %v5908 = vunpack.c.l.b16 %v5876
    %v5909 = vunpack.c.l.b16 %v5877
    %v5910 = vpack.c.b16 %v5895, %v5894
    %v5911 = vpack.c.b16 %v5897, %v5896
    %v5912 = vpack.c.b16 %v5899, %v5898
    %v5913 = vpack.c.b16 %v5901, %v5900
    %v5914 = vpack.c.b16 %v5903, %v5902
    %v5915 = vpack.c.b16 %v5905, %v5904
    %v5916 = vpack.c.b16 %v5907, %v5906
    %v5917 = vpack.c.b16 %v5909, %v5908
    %5926 = vmatprep.subr.bf16.mxu0 0
    %5927 = vmatpush1.bf16.msra.mxu0 %v5910
    %5928 = vmatprep.subr.bf16.mxu0 0
    %5929 = vmatpush1.bf16.msra.mxu0 %v5911
    %5930 = vmatprep.subr.bf16.mxu0 0
    %5931 = vmatpush1.bf16.msra.mxu0 %v5912
    %5932 = vmatprep.subr.bf16.mxu0 0
    %5933 = vmatpush1.bf16.msra.mxu0 %v5913
    %5934 = vmatprep.subr.bf16.mxu0 0
    %5935 = vmatpush1.bf16.msra.mxu0 %v5914
    %5936 = vmatprep.subr.bf16.mxu0 0
    %5937 = vmatpush1.bf16.msra.mxu0 %v5915
    %5938 = vmatprep.subr.bf16.mxu0 0
    %5939 = vmatpush1.bf16.msra.mxu0 %v5916
    %5940 = vmatprep.subr.bf16.mxu0 0
    %5941 = vmatpush1.bf16.msra.mxu0 %v5917
    %5942 = vmatprep.subr.bf16.mxu0 0
    %5943 = vmatpush1.bf16.msra.mxu0 0
    %5944 = vmatprep.subr.bf16.mxu0 0
    %5945 = vmatpush1.bf16.msra.mxu0 0
    %5946 = vmatprep.subr.bf16.mxu0 0
    %5947 = vmatpush1.bf16.msra.mxu0 0
    %5948 = vmatprep.subr.bf16.mxu0 0
    %5949 = vmatpush1.bf16.msra.mxu0 0
    %5950 = vmatprep.subr.bf16.mxu0 0
    %5951 = vmatpush1.bf16.msra.mxu0 0
    %5952 = vmatprep.subr.bf16.mxu0 0
    %5953 = vmatpush1.bf16.msra.mxu0 0
    %5954 = vmatprep.subr.bf16.mxu0 0
    %5955 = vmatpush1.bf16.msra.mxu0 0
    %5956 = vmatprep.subr.bf16.mxu0 0
    %5957 = vmatpush1.bf16.msra.mxu0 0
    %5958 = vmatprep.mubr.bf16.mxu0 0
    %5959 = vmatmul.mubr.bf16.gmra.mrb[0].mxu0 %v5765
    %v5960 = vpop.f32.mrb[0].mxu0
    %v5961 = vadd.f32 0.0, %v5960
    %v5962 = vpop.f32.mrb[0].mxu0
    %v5963 = vpop.f32.mrb[0].mxu0
    %v5964 = vadd.f32 0.0, %v5963
    %v5965 = vpop.f32.mrb[0].mxu0
    %5966 = vdwg.mxu0
    %v5967 = vpack.c.bf16 %v5964, %v5961
    %v5972 = vunpack.c.l.b16 %v5857
    %v5973 = vunpack.c.l.b16 %v5858
    %v5974 = vunpack.c.l.b16 %v5859
    %v5975 = vunpack.c.l.b16 %v5860
    %v5976 = vpack.c.b16 %v5973, %v5972
    %v5977 = vpack.c.b16 %v5975, %v5974
    %v5979 = vsel %vm456, %v5976, 0
    %v5982 = vsel %vm456, %v5977, 0
    %5984 = vmatprep.subr.bf16.mxu0 0
    %5985 = vmatpush1.bf16.msra.mxu0 %v5967
    %5986 = vmatprep.subr.bf16.mxu0 0
    %5987 = vmatpush1.bf16.msra.mxu0 0
    %5988 = vmatprep.subr.bf16.mxu0 0
    %5989 = vmatpush1.bf16.msra.mxu0 0
    %5990 = vmatprep.subr.bf16.mxu0 0
    %5991 = vmatpush1.bf16.msra.mxu0 0
    %5992 = vmatprep.subr.bf16.mxu0 0
    %5993 = vmatpush1.bf16.msra.mxu0 0
    %5994 = vmatprep.subr.bf16.mxu0 0
    %5995 = vmatpush1.bf16.msra.mxu0 0
    %5996 = vmatprep.subr.bf16.mxu0 0
    %5997 = vmatpush1.bf16.msra.mxu0 0
    %5998 = vmatprep.subr.bf16.mxu0 0
    %5999 = vmatpush1.bf16.msra.mxu0 0
    %6000 = vmatprep.subr.bf16.mxu0 0
    %6001 = vmatpush1.bf16.msra.mxu0 0
    %6002 = vmatprep.subr.bf16.mxu0 0
    %6003 = vmatpush1.bf16.msra.mxu0 0
    %6004 = vmatprep.subr.bf16.mxu0 0
    %6005 = vmatpush1.bf16.msra.mxu0 0
    %6006 = vmatprep.subr.bf16.mxu0 0
    %6007 = vmatpush1.bf16.msra.mxu0 0
    %6008 = vmatprep.subr.bf16.mxu0 0
    %6009 = vmatpush1.bf16.msra.mxu0 0
    %6010 = vmatprep.subr.bf16.mxu0 0
    %6011 = vmatpush1.bf16.msra.mxu0 0
    %6012 = vmatprep.subr.bf16.mxu0 0
    %6013 = vmatpush1.bf16.msra.mxu0 0
    %6014 = vmatprep.subr.bf16.mxu0 0
    %6015 = vmatpush1.bf16.msra.mxu0 0
    %6016 = vmatprep.mubr.bf16.mxu0 0
    %6017 = vmatmul.mubr.bf16.gmra.mrb[0].mxu0 %v5979
    %v6018 = vpop.f32.mrb[0].mxu0
    %v6019 = vadd.f32 0.0, %v6018
    %v6020 = vpop.f32.mrb[0].mxu0
    %v6021 = vpop.f32.mrb[0].mxu0
    %v6022 = vadd.f32 0.0, %v6021
    %v6023 = vpop.f32.mrb[0].mxu0
    %6024 = vmatprep.mubr.bf16.mxu0 0
    %6025 = vmatmul.mubr.bf16.gmra.mrb[0].mxu0 %v5982
    %v6026 = vpop.f32.mrb[0].mxu0
    %v6027 = vadd.f32 0.0, %v6026
    %v6028 = vpop.f32.mrb[0].mxu0
    %v6029 = vpop.f32.mrb[0].mxu0
    %v6030 = vadd.f32 0.0, %v6029
    %v6031 = vpop.f32.mrb[0].mxu0
    %6032 = vdwg.mxu0
    %v6037 = vunpack.c.l.b16 %v5745
    %v6038 = vunpack.c.l.b16 %v5746
    %v6039 = vunpack.c.l.b16 %v5747
    %v6040 = vunpack.c.l.b16 %v5748
    %v6041 = vpack.c.b16 %v6038, %v6037
    %v6042 = vpack.c.b16 %v6040, %v6039
    %v6044 = vsel %vm456, %v6041, 0
    %v6047 = vsel %vm456, %v6042, 0
    %6049 = vmatprep.subr.bf16.mxu0 0
    %6050 = vmatpush1.bf16.msra.mxu0 %v5855
    %6051 = vmatprep.subr.bf16.mxu0 0
    %6052 = vmatpush1.bf16.msra.mxu0 0
    %6053 = vmatprep.subr.bf16.mxu0 0
    %6054 = vmatpush1.bf16.msra.mxu0 0
    %6055 = vmatprep.subr.bf16.mxu0 0
    %6056 = vmatpush1.bf16.msra.mxu0 0
    %6057 = vmatprep.subr.bf16.mxu0 0
    %6058 = vmatpush1.bf16.msra.mxu0 0
    %6059 = vmatprep.subr.bf16.mxu0 0
    %6060 = vmatpush1.bf16.msra.mxu0 0
    %6061 = vmatprep.subr.bf16.mxu0 0
    %6062 = vmatpush1.bf16.msra.mxu0 0
    %6063 = vmatprep.subr.bf16.mxu0 0
    %6064 = vmatpush1.bf16.msra.mxu0 0
    %6065 = vmatprep.subr.bf16.mxu0 0
    %6066 = vmatpush1.bf16.msra.mxu0 0
    %6067 = vmatprep.subr.bf16.mxu0 0
    %6068 = vmatpush1.bf16.msra.mxu0 0
    %6069 = vmatprep.subr.bf16.mxu0 0
    %6070 = vmatpush1.bf16.msra.mxu0 0
    %6071 = vmatprep.subr.bf16.mxu0 0
    %6072 = vmatpush1.bf16.msra.mxu0 0
    %6073 = vmatprep.subr.bf16.mxu0 0
    %6074 = vmatpush1.bf16.msra.mxu0 0
    %6075 = vmatprep.subr.bf16.mxu0 0
    %6076 = vmatpush1.bf16.msra.mxu0 0
    %6077 = vmatprep.subr.bf16.mxu0 0
    %6078 = vmatpush1.bf16.msra.mxu0 0
    %6079 = vmatprep.subr.bf16.mxu0 0
    %6080 = vmatpush1.bf16.msra.mxu0 0
    %6081 = vmatprep.mubr.bf16.mxu0 0
    %6082 = vmatmul.mubr.bf16.gmra.mrb[0].mxu0 %v6044
    %v6083 = vpop.f32.mrb[0].mxu0
    %v6084 = vadd.f32 %v6019, %v6083
    %v6085 = vpop.f32.mrb[0].mxu0
    %v6086 = vpop.f32.mrb[0].mxu0
    %v6087 = vadd.f32 %v6022, %v6086
    %v6088 = vpop.f32.mrb[0].mxu0
    %6089 = vmatprep.mubr.bf16.mxu0 0
    %6090 = vmatmul.mubr.bf16.gmra.mrb[0].mxu0 %v6047
    %v6091 = vpop.f32.mrb[0].mxu0
    %v6092 = vadd.f32 %v6027, %v6091
    %v6093 = vpop.f32.mrb[0].mxu0
    %v6094 = vpop.f32.mrb[0].mxu0
    %v6095 = vadd.f32 %v6030, %v6094
    %v6096 = vpop.f32.mrb[0].mxu0
    %6097 = vdwg.mxu0
    %v6098 = vld [vmem:[%s67] sm:$0xf]
    %v6099 = vld [vmem:[%s67 + $0x4] sm:$0xf]
    %v6100 = vld [vmem:[%s67 + $0x8] sm:$0xf]
    %v6101 = vld [vmem:[%s67 + $0xc] sm:$0xf]
    %v6102 = vld [vmem:[%s67 + $0x10] sm:$0xf]
    %v6103 = vld [vmem:[%s67 + $0x14] sm:$0xf]
    %v6104 = vld [vmem:[%s67 + $0x18] sm:$0xf]
    %v6105 = vld [vmem:[%s67 + $0x1c] sm:$0xf]
    %v6106 = vpack.c.bf16 %v6087, %v6084
    %v6107 = vpack.c.bf16 %v6095, %v6092
    %v6116 = vunpack.c.l.b16 %v6098
    %v6117 = vunpack.c.l.b16 %v6099
    %v6118 = vunpack.c.l.b16 %v6100
    %v6119 = vunpack.c.l.b16 %v6101
    %v6120 = vunpack.c.l.b16 %v6102
    %v6121 = vunpack.c.l.b16 %v6103
    %v6122 = vunpack.c.l.b16 %v6104
    %v6123 = vunpack.c.l.b16 %v6105
    %v6124 = vpack.c.b16 %v6117, %v6116
    %v6125 = vpack.c.b16 %v6119, %v6118
    %v6126 = vpack.c.b16 %v6121, %v6120
    %v6127 = vpack.c.b16 %v6123, %v6122
    %v6133 = vsel %vm910, %v6106, 0
    %v6136 = vsel %vm910, %v6107, 0
    %6138 = vmatprep.subr.bf16.mxu0 0
    %6139 = vmatpush1.bf16.msra.mxu0 %v6124
    %6140 = vmatprep.subr.bf16.mxu0 0
    %6141 = vmatpush1.bf16.msra.mxu0 %v6125
    %6142 = vmatprep.subr.bf16.mxu0 0
    %6143 = vmatpush1.bf16.msra.mxu0 %v6126
    %6144 = vmatprep.subr.bf16.mxu0 0
    %6145 = vmatpush1.bf16.msra.mxu0 %v6127
    %6146 = vmatprep.subr.bf16.mxu0 0
    %6147 = vmatpush1.bf16.msra.mxu0 0
    %6148 = vmatprep.subr.bf16.mxu0 0
    %6149 = vmatpush1.bf16.msra.mxu0 0
    %6150 = vmatprep.subr.bf16.mxu0 0
    %6151 = vmatpush1.bf16.msra.mxu0 0
    %6152 = vmatprep.subr.bf16.mxu0 0
    %6153 = vmatpush1.bf16.msra.mxu0 0
    %6154 = vmatprep.subr.bf16.mxu0 0
    %6155 = vmatpush1.bf16.msra.mxu0 0
    %6156 = vmatprep.subr.bf16.mxu0 0
    %6157 = vmatpush1.bf16.msra.mxu0 0
    %6158 = vmatprep.subr.bf16.mxu0 0
    %6159 = vmatpush1.bf16.msra.mxu0 0
    %6160 = vmatprep.subr.bf16.mxu0 0
    %6161 = vmatpush1.bf16.msra.mxu0 0
    %6162 = vmatprep.subr.bf16.mxu0 0
    %6163 = vmatpush1.bf16.msra.mxu0 0
    %6164 = vmatprep.subr.bf16.mxu0 0
    %6165 = vmatpush1.bf16.msra.mxu0 0
    %6166 = vmatprep.subr.bf16.mxu0 0
    %6167 = vmatpush1.bf16.msra.mxu0 0
    %6168 = vmatprep.subr.bf16.mxu0 0
    %6169 = vmatpush1.bf16.msra.mxu0 0
    %6170 = vmatprep.mubr.bf16.mxu0 0
    %6171 = vmatmul.mubr.bf16.gmra.mrb[0].mxu0 %v6133
    %v6172 = vpop.f32.mrb[0].mxu0
    %v6173 = vadd.f32 0.0, %v6172
    %v6174 = vpop.f32.mrb[0].mxu0
    %v6175 = vpop.f32.mrb[0].mxu0
    %v6176 = vadd.f32 0.0, %v6175
    %v6177 = vpop.f32.mrb[0].mxu0
    %6178 = vmatprep.mubr.bf16.mxu0 0
    %6179 = vmatmul.mubr.bf16.gmra.mrb[0].mxu0 %v6136
    %v6180 = vpop.f32.mrb[0].mxu0
    %v6181 = vadd.f32 0.0, %v6180
    %v6182 = vpop.f32.mrb[0].mxu0
    %v6183 = vpop.f32.mrb[0].mxu0
    %v6184 = vadd.f32 0.0, %v6183
    %v6185 = vpop.f32.mrb[0].mxu0
    %6186 = vdwg.mxu0
    %6187 = vst.msk [vmem:[#allocation37] sm:$0xff] %vm456, %v6173
    %6188 = vst.msk [vmem:[#allocation37 + $0x8] sm:$0xff] %vm456, %v6176
    %6189 = vst.msk [vmem:[#allocation37 + $0x40] sm:$0xff] %vm456, %v6181
    %6190 = vst.msk [vmem:[#allocation37 + $0x48] sm:$0xff] %vm456, %v6184
    %s6191 = scalar_lea.vmem %s67, 32
    %v6192 = vld [vmem:[%s6191] sm:$0xf]
    %v6193 = vld [vmem:[%s6191 + $0x4] sm:$0xf]
    %v6194 = vld [vmem:[%s6191 + $0x8] sm:$0xf]
    %v6195 = vld [vmem:[%s6191 + $0xc] sm:$0xf]
    %v6196 = vld [vmem:[%s6191 + $0x10] sm:$0xf]
    %v6197 = vld [vmem:[%s6191 + $0x14] sm:$0xf]
    %v6198 = vld [vmem:[%s6191 + $0x18] sm:$0xf]
    %v6199 = vld [vmem:[%s6191 + $0x1c] sm:$0xf]
    %v6208 = vunpack.c.l.b16 %v6192
    %v6209 = vunpack.c.l.b16 %v6193
    %v6210 = vunpack.c.l.b16 %v6194
    %v6211 = vunpack.c.l.b16 %v6195
    %v6212 = vunpack.c.l.b16 %v6196
    %v6213 = vunpack.c.l.b16 %v6197
    %v6214 = vunpack.c.l.b16 %v6198
    %v6215 = vunpack.c.l.b16 %v6199
    %v6216 = vpack.c.b16 %v6209, %v6208
    %v6217 = vpack.c.b16 %v6211, %v6210
    %v6218 = vpack.c.b16 %v6213, %v6212
    %v6219 = vpack.c.b16 %v6215, %v6214
    %6224 = vmatprep.subr.bf16.mxu0 0
    %6225 = vmatpush1.bf16.msra.mxu0 %v6216
    %6226 = vmatprep.subr.bf16.mxu0 0
    %6227 = vmatpush1.bf16.msra.mxu0 %v6217
    %6228 = vmatprep.subr.bf16.mxu0 0
    %6229 = vmatpush1.bf16.msra.mxu0 %v6218
    %6230 = vmatprep.subr.bf16.mxu0 0
    %6231 = vmatpush1.bf16.msra.mxu0 %v6219
    %6232 = vmatprep.subr.bf16.mxu0 0
    %6233 = vmatpush1.bf16.msra.mxu0 0
    %6234 = vmatprep.subr.bf16.mxu0 0
    %6235 = vmatpush1.bf16.msra.mxu0 0
    %6236 = vmatprep.subr.bf16.mxu0 0
    %6237 = vmatpush1.bf16.msra.mxu0 0
    %6238 = vmatprep.subr.bf16.mxu0 0
    %6239 = vmatpush1.bf16.msra.mxu0 0
    %6240 = vmatprep.subr.bf16.mxu0 0
    %6241 = vmatpush1.bf16.msra.mxu0 0
    %6242 = vmatprep.subr.bf16.mxu0 0
    %6243 = vmatpush1.bf16.msra.mxu0 0
    %6244 = vmatprep.subr.bf16.mxu0 0
    %6245 = vmatpush1.bf16.msra.mxu0 0
    %6246 = vmatprep.subr.bf16.mxu0 0
    %6247 = vmatpush1.bf16.msra.mxu0 0
    %6248 = vmatprep.subr.bf16.mxu0 0
    %6249 = vmatpush1.bf16.msra.mxu0 0
    %6250 = vmatprep.subr.bf16.mxu0 0
    %6251 = vmatpush1.bf16.msra.mxu0 0
    %6252 = vmatprep.subr.bf16.mxu0 0
    %6253 = vmatpush1.bf16.msra.mxu0 0
    %6254 = vmatprep.subr.bf16.mxu0 0
    %6255 = vmatpush1.bf16.msra.mxu0 0
    %6256 = vmatprep.mubr.bf16.mxu0 0
    %6257 = vmatmul.mubr.bf16.gmra.mrb[0].mxu0 %v6133
    %v6258 = vpop.f32.mrb[0].mxu0
    %v6259 = vadd.f32 0.0, %v6258
    %v6260 = vpop.f32.mrb[0].mxu0
    %v6261 = vpop.f32.mrb[0].mxu0
    %v6262 = vadd.f32 0.0, %v6261
    %v6263 = vpop.f32.mrb[0].mxu0
    %6264 = vmatprep.mubr.bf16.mxu0 0
    %6265 = vmatmul.mubr.bf16.gmra.mrb[0].mxu0 %v6136
    %v6266 = vpop.f32.mrb[0].mxu0
    %v6267 = vadd.f32 0.0, %v6266
    %v6268 = vpop.f32.mrb[0].mxu0
    %v6269 = vpop.f32.mrb[0].mxu0
    %v6270 = vadd.f32 0.0, %v6269
    %v6271 = vpop.f32.mrb[0].mxu0
    %6272 = vdwg.mxu0
    %s6273 = scalar_lea.vmem [#allocation37], 16
    %6274 = vst.msk [vmem:[%s6273] sm:$0xff] %vm456, %v6259
    %6275 = vst.msk [vmem:[%s6273 + $0x8] sm:$0xff] %vm456, %v6262
    %6276 = vst.msk [vmem:[%s6273 + $0x40] sm:$0xff] %vm456, %v6267
    %6277 = vst.msk [vmem:[%s6273 + $0x48] sm:$0xff] %vm456, %v6270
    %s6278 = scalar_lea.vmem %s67, 64
    %v6279 = vld [vmem:[%s6278] sm:$0xf]
    %v6280 = vld [vmem:[%s6278 + $0x4] sm:$0xf]
    %v6281 = vld [vmem:[%s6278 + $0x8] sm:$0xf]
    %v6282 = vld [vmem:[%s6278 + $0xc] sm:$0xf]
    %v6283 = vld [vmem:[%s6278 + $0x10] sm:$0xf]
    %v6284 = vld [vmem:[%s6278 + $0x14] sm:$0xf]
    %v6285 = vld [vmem:[%s6278 + $0x18] sm:$0xf]
    %v6286 = vld [vmem:[%s6278 + $0x1c] sm:$0xf]
    %v6295 = vunpack.c.l.b16 %v6279
    %v6296 = vunpack.c.l.b16 %v6280
    %v6297 = vunpack.c.l.b16 %v6281
    %v6298 = vunpack.c.l.b16 %v6282
    %v6299 = vunpack.c.l.b16 %v6283
    %v6300 = vunpack.c.l.b16 %v6284
    %v6301 = vunpack.c.l.b16 %v6285
    %v6302 = vunpack.c.l.b16 %v6286
    %v6303 = vpack.c.b16 %v6296, %v6295
    %v6304 = vpack.c.b16 %v6298, %v6297
    %v6305 = vpack.c.b16 %v6300, %v6299
    %v6306 = vpack.c.b16 %v6302, %v6301
    %6311 = vmatprep.subr.bf16.mxu0 0
    %6312 = vmatpush1.bf16.msra.mxu0 %v6303
    %6313 = vmatprep.subr.bf16.mxu0 0
    %6314 = vmatpush1.bf16.msra.mxu0 %v6304
    %6315 = vmatprep.subr.bf16.mxu0 0
    %6316 = vmatpush1.bf16.msra.mxu0 %v6305
    %6317 = vmatprep.subr.bf16.mxu0 0
    %6318 = vmatpush1.bf16.msra.mxu0 %v6306
    %6319 = vmatprep.subr.bf16.mxu0 0
    %6320 = vmatpush1.bf16.msra.mxu0 0
    %6321 = vmatprep.subr.bf16.mxu0 0
    %6322 = vmatpush1.bf16.msra.mxu0 0
    %6323 = vmatprep.subr.bf16.mxu0 0
    %6324 = vmatpush1.bf16.msra.mxu0 0
    %6325 = vmatprep.subr.bf16.mxu0 0
    %6326 = vmatpush1.bf16.msra.mxu0 0
    %6327 = vmatprep.subr.bf16.mxu0 0
    %6328 = vmatpush1.bf16.msra.mxu0 0
    %6329 = vmatprep.subr.bf16.mxu0 0
    %6330 = vmatpush1.bf16.msra.mxu0 0
    %6331 = vmatprep.subr.bf16.mxu0 0
    %6332 = vmatpush1.bf16.msra.mxu0 0
    %6333 = vmatprep.subr.bf16.mxu0 0
    %6334 = vmatpush1.bf16.msra.mxu0 0
    %6335 = vmatprep.subr.bf16.mxu0 0
    %6336 = vmatpush1.bf16.msra.mxu0 0
    %6337 = vmatprep.subr.bf16.mxu0 0
    %6338 = vmatpush1.bf16.msra.mxu0 0
    %6339 = vmatprep.subr.bf16.mxu0 0
    %6340 = vmatpush1.bf16.msra.mxu0 0
    %6341 = vmatprep.subr.bf16.mxu0 0
    %6342 = vmatpush1.bf16.msra.mxu0 0
    %6343 = vmatprep.mubr.bf16.mxu0 0
    %6344 = vmatmul.mubr.bf16.gmra.mrb[0].mxu0 %v6133
    %v6345 = vpop.f32.mrb[0].mxu0
    %v6346 = vadd.f32 0.0, %v6345
    %v6347 = vpop.f32.mrb[0].mxu0
    %v6348 = vpop.f32.mrb[0].mxu0
    %v6349 = vadd.f32 0.0, %v6348
    %v6350 = vpop.f32.mrb[0].mxu0
    %6351 = vmatprep.mubr.bf16.mxu0 0
    %6352 = vmatmul.mubr.bf16.gmra.mrb[0].mxu0 %v6136
    %v6353 = vpop.f32.mrb[0].mxu0
    %v6354 = vadd.f32 0.0, %v6353
    %v6355 = vpop.f32.mrb[0].mxu0
    %v6356 = vpop.f32.mrb[0].mxu0
    %v6357 = vadd.f32 0.0, %v6356
    %v6358 = vpop.f32.mrb[0].mxu0
    %6359 = vdwg.mxu0
    %s6360 = scalar_lea.vmem [#allocation37], 32
    %6361 = vst.msk [vmem:[%s6360] sm:$0xff] %vm456, %v6346
    %6362 = vst.msk [vmem:[%s6360 + $0x8] sm:$0xff] %vm456, %v6349
    %6363 = vst.msk [vmem:[%s6360 + $0x40] sm:$0xff] %vm456, %v6354
    %6364 = vst.msk [vmem:[%s6360 + $0x48] sm:$0xff] %vm456, %v6357
    %s6365 = scalar_lea.vmem %s67, 96
    %v6366 = vld [vmem:[%s6365] sm:$0xf]
    %v6367 = vld [vmem:[%s6365 + $0x4] sm:$0xf]
    %v6368 = vld [vmem:[%s6365 + $0x8] sm:$0xf]
    %v6369 = vld [vmem:[%s6365 + $0xc] sm:$0xf]
    %v6370 = vld [vmem:[%s6365 + $0x10] sm:$0xf]
    %v6371 = vld [vmem:[%s6365 + $0x14] sm:$0xf]
    %v6372 = vld [vmem:[%s6365 + $0x18] sm:$0xf]
    %v6373 = vld [vmem:[%s6365 + $0x1c] sm:$0xf]
    %v6382 = vunpack.c.l.b16 %v6366
    %v6383 = vunpack.c.l.b16 %v6367
    %v6384 = vunpack.c.l.b16 %v6368
    %v6385 = vunpack.c.l.b16 %v6369
    %v6386 = vunpack.c.l.b16 %v6370
    %v6387 = vunpack.c.l.b16 %v6371
    %v6388 = vunpack.c.l.b16 %v6372
    %v6389 = vunpack.c.l.b16 %v6373
    %v6390 = vpack.c.b16 %v6383, %v6382
    %v6391 = vpack.c.b16 %v6385, %v6384
    %v6392 = vpack.c.b16 %v6387, %v6386
    %v6393 = vpack.c.b16 %v6389, %v6388
    %6398 = vmatprep.subr.bf16.mxu0 0
    %6399 = vmatpush1.bf16.msra.mxu0 %v6390
    %6400 = vmatprep.subr.bf16.mxu0 0
    %6401 = vmatpush1.bf16.msra.mxu0 %v6391
    %6402 = vmatprep.subr.bf16.mxu0 0
    %6403 = vmatpush1.bf16.msra.mxu0 %v6392
    %6404 = vmatprep.subr.bf16.mxu0 0
    %6405 = vmatpush1.bf16.msra.mxu0 %v6393
    %6406 = vmatprep.subr.bf16.mxu0 0
    %6407 = vmatpush1.bf16.msra.mxu0 0
    %6408 = vmatprep.subr.bf16.mxu0 0
    %6409 = vmatpush1.bf16.msra.mxu0 0
    %6410 = vmatprep.subr.bf16.mxu0 0
    %6411 = vmatpush1.bf16.msra.mxu0 0
    %6412 = vmatprep.subr.bf16.mxu0 0
    %6413 = vmatpush1.bf16.msra.mxu0 0
    %6414 = vmatprep.subr.bf16.mxu0 0
    %6415 = vmatpush1.bf16.msra.mxu0 0
    %6416 = vmatprep.subr.bf16.mxu0 0
    %6417 = vmatpush1.bf16.msra.mxu0 0
    %6418 = vmatprep.subr.bf16.mxu0 0
    %6419 = vmatpush1.bf16.msra.mxu0 0
    %6420 = vmatprep.subr.bf16.mxu0 0
    %6421 = vmatpush1.bf16.msra.mxu0 0
    %6422 = vmatprep.subr.bf16.mxu0 0
    %6423 = vmatpush1.bf16.msra.mxu0 0
    %6424 = vmatprep.subr.bf16.mxu0 0
    %6425 = vmatpush1.bf16.msra.mxu0 0
    %6426 = vmatprep.subr.bf16.mxu0 0
    %6427 = vmatpush1.bf16.msra.mxu0 0
    %6428 = vmatprep.subr.bf16.mxu0 0
    %6429 = vmatpush1.bf16.msra.mxu0 0
    %6430 = vmatprep.mubr.bf16.mxu0 0
    %6431 = vmatmul.mubr.bf16.gmra.mrb[0].mxu0 %v6133
    %v6432 = vpop.f32.mrb[0].mxu0
    %v6433 = vadd.f32 0.0, %v6432
    %v6434 = vpop.f32.mrb[0].mxu0
    %v6435 = vpop.f32.mrb[0].mxu0
    %v6436 = vadd.f32 0.0, %v6435
    %v6437 = vpop.f32.mrb[0].mxu0
    %6438 = vmatprep.mubr.bf16.mxu0 0
    %6439 = vmatmul.mubr.bf16.gmra.mrb[0].mxu0 %v6136
    %v6440 = vpop.f32.mrb[0].mxu0
    %v6441 = vadd.f32 0.0, %v6440
    %v6442 = vpop.f32.mrb[0].mxu0
    %v6443 = vpop.f32.mrb[0].mxu0
    %v6444 = vadd.f32 0.0, %v6443
    %v6445 = vpop.f32.mrb[0].mxu0
    %6446 = vdwg.mxu0
    %s6447 = scalar_lea.vmem [#allocation37], 48
    %6448 = vst.msk [vmem:[%s6447] sm:$0xff] %vm456, %v6433
    %6449 = vst.msk [vmem:[%s6447 + $0x8] sm:$0xff] %vm456, %v6436
    %6450 = vst.msk [vmem:[%s6447 + $0x40] sm:$0xff] %vm456, %v6441
    %6451 = vst.msk [vmem:[%s6447 + $0x48] sm:$0xff] %vm456, %v6444
    // Predicated region
    $region226: #{tpu_custom_call.1} parent=1 // pred_check
      _
    $region227: #{tpu_custom_call.1} parent=1 // pred_check_branch
      %6453 = sbr.rel (0) target = $region229
    $region228: #{tpu_custom_call.1} parent=1 // pred_region
      %s6455 = ssub.s32 2048, 2048
      %6456 = vsyncadd [#allocation4], %s6455
      %s6457 = sshll.u32 [#allocation37], 4
      %s6458 = int_to_ptr.vmem [resolvable:$true] %s6457
      %6463 = dma.vmem_to_hbm [thread:$0]  %s6458, 2048, %s69, [#allocation4], 128, 128, 8
    $region229: #{tpu_custom_call.1} parent=1 // pred_fallthru
      _
    // Predicated region
    $region230: #{tpu_custom_call.1} parent=1 // pred_check
      _
    $region231: #{tpu_custom_call.1} parent=1 // pred_check_branch
      %6465 = sbr.rel (0) target = $region233
    $region232: #{tpu_custom_call.1} parent=1 // pred_region
      %s6467 = ssub.s32 32, 32
      %6468 = vsyncadd [#allocation39], %s6467
      %s6470 = sshll.u32 [#allocation38], 4
      %s6471 = int_to_ptr.vmem [resolvable:$true] %s6470
      %6473 = dma.vmem_to_hbm [thread:$0]  %s6471, 32, %s71, [#allocation39]
    $region233: #{tpu_custom_call.1} parent=1 // pred_fallthru
      _
    // Predicated region
    $region234: #{tpu_custom_call.1} parent=1 // pred_check
      _
    $region235: #{tpu_custom_call.1} parent=1 // pred_check_branch
      %6475 = sbr.rel (0) target = $region237
    $region236: #{tpu_custom_call.1} parent=1 // pred_region
      %s6477 = ssub.s32 32, 32
      %6478 = vsyncadd [#allocation39], %s6477
      %s6480 = sshll.u32 [#allocation40], 4
      %s6481 = int_to_ptr.vmem [resolvable:$true] %s6480
      %6483 = dma.vmem_to_hbm [thread:$0]  %s6481, 32, %s73, [#allocation39]
    $region237: #{tpu_custom_call.1} parent=1 // pred_fallthru
      _
    // Predicated region
    $region238: #{tpu_custom_call.1} parent=1 // pred_check
      _
    $region239: #{tpu_custom_call.1} parent=1 // pred_check_branch
      %6485 = sbr.rel (0) target = $region241
    $region240: #{tpu_custom_call.1} parent=1 // pred_region
      %6486 = dma.done [#allocation4], 2048
    $region241: #{tpu_custom_call.1} parent=1 // pred_fallthru
      _
    // Predicated region
    $region242: #{tpu_custom_call.1} parent=1 // pred_check
      _
    $region243: #{tpu_custom_call.1} parent=1 // pred_check_branch
      %6488 = sbr.rel (0) target = $region245
    $region244: #{tpu_custom_call.1} parent=1 // pred_region
      %6489 = dma.done [#allocation39], 32
    $region245: #{tpu_custom_call.1} parent=1 // pred_fallthru
      _
    // Predicated region
    $region246: #{tpu_custom_call.1} parent=1 // pred_check
      _
    $region247: #{tpu_custom_call.1} parent=1 // pred_check_branch
      %6491 = sbr.rel (0) target = $region249
    $region248: #{tpu_custom_call.1} parent=1 // pred_region
      %6492 = dma.done [#allocation39], 32
    $region249: #{tpu_custom_call.1} parent=1 // pred_fallthru
      _
    %6493 = vsyncpa [#allocation3], 1
    %6494 = vsyncpa [#allocation6], 1
    %6495 = vsyncpa [#allocation9], 1
    %6496 = vsyncpa [#allocation12], 1
    %6497 = vsyncpa [#allocation15], 1
    %6498 = vsyncpa [#allocation18], 1
    %6499 = vsyncpa [#allocation21], 1
    %6500 = vsyncpa [#allocation24], 1
    %6501 = vsyncpa [#allocation27], 1
    %6502 = vsyncpa [#allocation30], 1
    %6503 = vsyncpa [#allocation33], 1
    %6504 = vsyncpa [#allocation36], 1
    %6505 = vsyncpa [#allocation4], 1
    %6506 = vsyncpa [#allocation39], 1

</llo_original>
